<compile_context>
chip_gen: v5e
topology: v5e:2x2
jax: 0.10.0
libtpu: 0.0.40
codegen_flags: <defaults>
</compile_context>

<pallas_src>
import functools

import jax
import jax.numpy as jnp
from jax.experimental import pallas as pl
from jax.experimental.pallas import tpu as pltpu

F32 = jnp.float32
BF16 = jnp.bfloat16

# LocalResponseNorm constants: LRN(k=2, size=5, alpha=0.001, beta=0.75)
LRN_K = 2.0
LRN_SIZE = 5
LRN_ALPHA = 0.001
LRN_BETA = 0.75
BN_EPS = 1e-5

# Per-conv-block static config: kernel, stride, padding, pooling, lrnorm
CONV_CFG = (
    dict(k=11, stride=4, pad=3, pool=True, lrn=True),
    dict(k=5, stride=1, pad=2, pool=True, lrn=True),
    dict(k=3, stride=1, pad=1, pool=False, lrn=False),
    dict(k=3, stride=1, pad=1, pool=False, lrn=False),
    dict(k=3, stride=1, pad=1, pool=True, lrn=False),
)
CHANNELS_TAIL = (48, 128, 192, 192, 128)
CROSSOVER = (False, False, True, False, False)
CONV_BIASES = (0.0, 1.0, 0.0, 1.0, 1.0)
# Streams a/b share the same input at conv layers 0 and 2 -> fuse along N.
FUSED_CONV = (True, False, True, False, False)


# ----------------------------------------------------------------------------
# helpers (glue)
# ----------------------------------------------------------------------------
def _round_up(x, m):
    return (x + m - 1) // m * m


def _pad_to(x, shape):
    pads = tuple((0, t - s) for s, t in zip(x.shape, shape))
    if all(p == (0, 0) for p in pads):
        return x
    return jnp.pad(x, pads)


def im2col_nhwc(x, k, stride, pad):
    """x: (N, H, W, C) -> patches (N*OH*OW, k*k*C); feature index = (kh, kw, cin)."""
    N, H, W, C = x.shape
    xp = jnp.pad(x, ((0, 0), (pad, pad), (pad, pad), (0, 0)))
    OH = (H + 2 * pad - k) // stride + 1
    OW = (W + 2 * pad - k) // stride + 1
    cols = []
    for i in range(k):
        for j in range(k):
            patch = xp[:, i:i + stride * (OH - 1) + 1:stride,
                       j:j + stride * (OW - 1) + 1:stride, :]   # (N, OH, OW, C)
            cols.append(patch)
    patches = jnp.stack(cols, axis=3)                           # (N, OH, OW, k*k, C)
    patches = patches.reshape(N * OH * OW, k * k * C)
    return patches, OH, OW


# ----------------------------------------------------------------------------
# Pallas kernel 1: matmul (single K step, bf16 operands, f32 accumulate)
#                  + fused bias (+ optional ReLU) (+ optional per-channel affine)
# ----------------------------------------------------------------------------
def _matmul_kernel(a_ref, b_ref, bias_ref, *rest, relu, affine):
    if affine:
        scale_ref, shift_ref, o_ref = rest
    else:
        (o_ref,) = rest
    acc = jnp.dot(a_ref[...], b_ref[...], preferred_element_type=jnp.float32)
    acc = acc + bias_ref[...]
    if relu:
        acc = jnp.maximum(acc, 0.0)
    if affine:
        acc = acc * scale_ref[...] + shift_ref[...]
    o_ref[...] = acc.astype(o_ref.dtype)


def matmul_bias(a, w, b, *, relu=False, scale=None, shift=None):
    """a: (M, K) @ w: (K, N) + b, then optional ReLU, then optional (scale, shift).

    Operands are zero-padded to tile multiples and cast to bf16; output is f32.
    """
    M, K = a.shape
    K2, N = w.shape
    assert K == K2
    Kp = _round_up(K, 128)
    if N <= 512:
        Np = _round_up(N, 128)
        tn = Np
    else:
        tn = 256
        Np = _round_up(N, tn)
    if M <= 256:
        tm = _round_up(max(M, 16), 16)
        Mp = tm
    else:
        tm = 128
        Mp = _round_up(M, tm)

    a_p = _pad_to(a.astype(BF16), (Mp, Kp))
    w_p = _pad_to(w.astype(BF16), (Kp, Np))
    b_p = _pad_to(b.astype(F32).reshape(1, N), (1, Np))

    affine = scale is not None
    inputs = [a_p, w_p, b_p]
    in_specs = [
        pl.BlockSpec((tm, Kp), lambda i, j: (i, 0)),
        pl.BlockSpec((Kp, tn), lambda i, j: (0, j)),
        pl.BlockSpec((1, tn), lambda i, j: (0, j)),
    ]
    if affine:
        inputs.append(_pad_to(scale.astype(F32).reshape(1, N), (1, Np)))
        inputs.append(_pad_to(shift.astype(F32).reshape(1, N), (1, Np)))
        in_specs += [pl.BlockSpec((1, tn), lambda i, j: (0, j)),
                     pl.BlockSpec((1, tn), lambda i, j: (0, j))]

    grid = (Mp // tm, Np // tn)
    out = pl.pallas_call(
        functools.partial(_matmul_kernel, relu=relu, affine=affine),
        out_shape=jax.ShapeDtypeStruct((Mp, Np), F32),
        grid_spec=pltpu.PrefetchScalarGridSpec(
            num_scalar_prefetch=0,
            grid=grid,
            in_specs=in_specs,
            out_specs=pl.BlockSpec((tm, tn), lambda i, j: (i, j)),
        ),
        compiler_params=pltpu.CompilerParams(
            dimension_semantics=("parallel", "parallel")),
    )(*inputs)
    if (Mp, Np) != (M, N):
        out = out[:M, :N]
    return out


# ----------------------------------------------------------------------------
# Pallas kernel 2: fused [vertical MaxPool taps reduce] + ReLU + (LRN) + BN affine
#   x_ref:     (P, rt, C)  -- P stacked pooling taps (P=1 when no pooling)
#   band_ref:  (C, C)      -- block-banded 0/1 matrix for the LRN window sum
#                             (block-diagonal across fused a/b streams)
#   scale_ref: (1, C)      -- gamma / sqrt(running_var + eps)
#   shift_ref: (1, C)      -- beta - running_mean * scale
# ----------------------------------------------------------------------------
def _postconv_kernel(x_ref, *rest, n_taps, lrn):
    if lrn:
        band_ref, scale_ref, shift_ref, o_ref = rest
    else:
        scale_ref, shift_ref, o_ref = rest
    y = x_ref[0]
    for s in range(1, n_taps):                 # MaxPool2d(3, 2) vertical reduction
        y = jnp.maximum(y, x_ref[s])
    y = jnp.maximum(y, 0.0)                    # ReLU
    if lrn:                                    # LocalResponseNorm(k=2, size=5, ...)
        sq = y * y
        win = jnp.dot(sq, band_ref[...], preferred_element_type=jnp.float32)
        base = LRN_K + (LRN_ALPHA / LRN_SIZE) * win
        y = y * jnp.exp(-LRN_BETA * jnp.log(base))
    o_ref[...] = (y * scale_ref[...] + shift_ref[...]).astype(o_ref.dtype)


def post_conv(stacked, scale, shift, band):
    """stacked: (P, R, C) f32 -> (R, C) f32.  band=None disables LRN."""
    P, R, C = stacked.shape
    Cp = _round_up(C, 128)
    rt = min(512, _round_up(R, 8))
    Rp = _round_up(R, rt)
    x = _pad_to(stacked.astype(F32), (P, Rp, Cp))
    scale_p = _pad_to(scale.astype(F32).reshape(1, C), (1, Cp))
    shift_p = _pad_to(shift.astype(F32).reshape(1, C), (1, Cp))

    inputs = [x]
    in_specs = [pl.BlockSpec((P, rt, Cp), lambda r: (0, r, 0))]
    if band is not None:
        assert band.shape == (Cp, Cp)
        inputs.append(band)
        in_specs.append(pl.BlockSpec((Cp, Cp), lambda r: (0, 0)))
    inputs += [scale_p, shift_p]
    in_specs += [pl.BlockSpec((1, Cp), lambda r: (0, 0)),
                 pl.BlockSpec((1, Cp), lambda r: (0, 0))]

    out = pl.pallas_call(
        functools.partial(_postconv_kernel, n_taps=P, lrn=band is not None),
        out_shape=jax.ShapeDtypeStruct((Rp, Cp), F32),
        grid_spec=pltpu.PrefetchScalarGridSpec(
            num_scalar_prefetch=0,
            grid=(Rp // rt,),
            in_specs=in_specs,
            out_specs=pl.BlockSpec((rt, Cp), lambda r: (r, 0)),
        ),
        compiler_params=pltpu.CompilerParams(dimension_semantics=("parallel",)),
    )(*inputs)
    if (Rp, Cp) != (R, C):
        out = out[:R, :C]
    return out


def _make_band(c_total, blocks):
    """0/1 (Cp, Cp) matrix: band[c, c'] = 1 iff |c-c'| <= 2 and c, c' in the same block."""
    Cp = _round_up(c_total, 128)
    idx = jnp.arange(Cp)
    near = jnp.abs(idx[:, None] - idx[None, :]) <= (LRN_SIZE // 2)
    mask = jnp.zeros((Cp, Cp), dtype=bool)
    for (s, l) in blocks:
        inb = (idx >= s) & (idx < s + l)
        mask = mask | (inb[:, None] & inb[None, :])
    return jnp.where(near & mask, 1.0, 0.0).astype(F32)


# ----------------------------------------------------------------------------
# one conv block: Conv2d -> [MaxPool2d(3,2)] -> ReLU -> [LRN] -> BatchNorm2d
# (weights may already hold both a/b streams concatenated along output channels)
# ----------------------------------------------------------------------------
def conv_block(x, p, cfg):
    k, stride, pad = cfg["k"], cfg["stride"], cfg["pad"]
    pool, lrn = cfg["pool"], cfg["lrn"]
    N = x.shape[0]
    patches, OH, OW = im2col_nhwc(x, k, stride, pad)          # (N*OH*OW, k*k*Cin)
    Cout = p["w"].shape[1]

    if not pool and not lrn:
        # ReLU + BatchNorm affine folded into the matmul epilogue.
        out = matmul_bias(patches, p["w"], p["b"], relu=True,
                          scale=p["scale"], shift=p["shift"])
        return out.reshape(N, OH, OW, Cout)

    conv = matmul_bias(patches, p["w"], p["b"], relu=False)   # (N*OH*OW, Cout) f32
    if pool:
        feat = conv.reshape(N, OH, OW, Cout)
        PH = (OH - 3) // 2 + 1
        PW = (OW - 3) // 2 + 1
        # Horizontal 3-tap stride-2 max in plain JAX (XLA fuses the strided slices);
        # vertical 3-tap reduction + ReLU + LRN + BN happen in the Pallas kernel.
        span = 2 * (PW - 1) + 1
        h = feat[:, :, 0:span:2, :]
        h = jnp.maximum(h, feat[:, :, 1:1 + span:2, :])
        h = jnp.maximum(h, feat[:, :, 2:2 + span:2, :])       # (N, OH, PW, Cout)
        vspan = 2 * (PH - 1) + 1
        taps = [h[:, di:di + vspan:2, :, :].reshape(N * PH * PW, Cout)
                for di in range(3)]
        stacked = jnp.stack(taps, axis=0)                     # (3, N*PH*PW, Cout)
        OH, OW = PH, PW
    else:
        stacked = conv[None]

    out = post_conv(stacked, p["scale"], p["shift"],
                    p["band"] if lrn else None)               # (rows, Cout)
    return out.reshape(N, OH, OW, Cout)


# ----------------------------------------------------------------------------
# full forward (mirrors AlexLikeNet.forward, two streams a/b with crossovers)
# ----------------------------------------------------------------------------
def alexlike_forward(prep, x_nchw, vector_input=None):
    x = x_nchw.transpose(0, 2, 3, 1)          # NHWC internally
    y = x
    for i in range(5):
        cfg = CONV_CFG[i]
        co = CHANNELS_TAIL[i]
        if FUSED_CONV[i]:                     # x is y here -> one fused call
            out = conv_block(x, prep["conv"][i], cfg)
            x, y = out[..., :co], out[..., co:]
        else:
            pa, pb = prep["conv"][i]
            x = conv_block(x, pa, cfg)
            y = conv_block(y, pb, cfg)
        if i + 1 < len(CROSSOVER) and CROSSOVER[i + 1]:
            x = jnp.concatenate([x, y], axis=-1)
            y = x

    # i == 4: flatten (PyTorch NCHW ordering) + concat (+ optional vector input)
    def flat(t):
        return t.transpose(0, 3, 1, 2).reshape(t.shape[0], -1)
    if vector_input is None:
        x = jnp.concatenate([flat(x), flat(y)], axis=1)
    else:
        x = jnp.concatenate([flat(x), flat(y), vector_input], axis=1)

    # i == 5 / i == 6: fused a/b linear pairs (Linear + ReLU + Dropout[eval=id]);
    # fused output IS the concatenated [a(x) | b(x)] the reference computes.
    w, b = prep["lin"][0]
    x = matmul_bias(x, w, b, relu=True)
    w, b = prep["lin"][1]
    x = matmul_bias(x, w, b, relu=True)
    # classifier: Linear + ReLU (skip_last_relu=False)
    w, b = prep["cls"]
    return matmul_bias(x, w, b, relu=True)


# ----------------------------------------------------------------------------
# deterministic parameter construction (shapes from AlexLikeNet.__init__)
# ----------------------------------------------------------------------------
def final_spatial(hw):
    s = hw
    for cfg in CONV_CFG:
        s = (s + 2 * cfg["pad"] - cfg["k"]) // cfg["stride"] + 1
        if cfg["pool"]:
            s = (s - 3) // 2 + 1
    return s


def init_params(key, in_channels, out_classes, linear_size, hw):
    channels = (in_channels,) + CHANNELS_TAIL
    keys = iter(jax.random.split(key, 64))
    params = {"conv_a": [], "conv_b": []}
    for stream in ("conv_a", "conv_b"):
        for i in range(5):
            cin = channels[i] * (2 if CROSSOVER[i] else 1)
            cout = channels[i + 1]
            kk = CONV_CFG[i]["k"]
            fan_in = cin * kk * kk
            w = jax.random.normal(next(keys), (cout, cin, kk, kk), F32) / jnp.sqrt(fan_in)
            b = jnp.full((cout,), CONV_BIASES[i], F32)
            gamma = 1.0 + 0.1 * jax.random.normal(next(keys), (cout,), F32)
            beta = 0.1 * jax.random.normal(next(keys), (cout,), F32)
            run_mean = jnp.zeros((cout,), F32)
            run_var = jnp.ones((cout,), F32)
            scale = gamma / jnp.sqrt(run_var + BN_EPS)
            shift = beta - run_mean * scale
            params[stream].append((w, b, scale, shift))
    s = final_spatial(hw)
    lin_in0 = s * s * channels[-1] * 2          # vector_input_size = 0
    for stream in ("lin_a", "lin_b"):
        w1 = jax.random.normal(next(keys), (lin_in0, linear_size), F32) / jnp.sqrt(lin_in0)
        b1 = jnp.full((linear_size,), 1.0, F32)
        w2 = jax.random.normal(next(keys), (2 * linear_size, linear_size), F32) / jnp.sqrt(2 * linear_size)
        b2 = jnp.full((linear_size,), 1.0, F32)
        params[stream] = [(w1, b1), (w2, b2)]
    wc = jax.random.normal(next(keys), (2 * linear_size, out_classes), F32) / jnp.sqrt(2 * linear_size)
    bc = jnp.full((out_classes,), 1.0, F32)
    params["cls"] = (wc, bc)
    return params


def prepare_params(params):
    """Hoist weight reshape/transpose, a/b-stream fusion, LRN band matrices and
    bf16 casts out of the forward (runs once, eagerly)."""
    def cvt(w):  # (Cout, Cin, kh, kw) -> (kh*kw*Cin, Cout) matching im2col_nhwc ordering
        co, ci, kh, kw = w.shape
        return w.transpose(2, 3, 1, 0).reshape(kh * kw * ci, co)

    prep = {"conv": []}
    for i in range(5):
        wa, ba, sca, sha = params["conv_a"][i]
        wb, bb, scb, shb = params["conv_b"][i]
        lrn = CONV_CFG[i]["lrn"]
        co = CHANNELS_TAIL[i]
        if FUSED_CONV[i]:
            d = dict(
                w=jnp.concatenate([cvt(wa), cvt(wb)], axis=1).astype(BF16),
                b=jnp.concatenate([ba, bb]),
                scale=jnp.concatenate([sca, scb]),
                shift=jnp.concatenate([sha, shb]),
            )
            if lrn:
                d["band"] = _make_band(2 * co, ((0, co), (co, co)))
            prep["conv"].append(d)
        else:
            da = dict(w=cvt(wa).astype(BF16), b=ba, scale=sca, shift=sha)
            db = dict(w=cvt(wb).astype(BF16), b=bb, scale=scb, shift=shb)
            if lrn:
                band = _make_band(co, ((0, co),))
                da["band"] = band
                db["band"] = band
            prep["conv"].append((da, db))
    (wa1, ba1), (wa2, ba2) = params["lin_a"]
    (wb1, bb1), (wb2, bb2) = params["lin_b"]
    prep["lin"] = [
        (jnp.concatenate([wa1, wb1], axis=1).astype(BF16), jnp.concatenate([ba1, bb1])),
        (jnp.concatenate([wa2, wb2], axis=1).astype(BF16), jnp.concatenate([ba2, bb2])),
    ]
    wc, bc = params["cls"]
    prep["cls"] = (wc.astype(BF16), bc)
    return prep


if __name__ == "__main__":
    key = jax.random.PRNGKey(0)
    batch, in_ch, hw = 2, 3, 64           # in_dimensions = (3, 64, 64)
    out_classes, linear_size = 10, 64     # small linear_size for a compact run

    params = init_params(key, in_ch, out_classes, linear_size, hw)
    prep = prepare_params(params)
    x = jax.random.normal(jax.random.fold_in(key, 123), (batch, in_ch, hw, hw), F32)

    fwd = jax.jit(alexlike_forward)
    out = fwd(prep, x)
    out = jax.block_until_ready(out)
    assert out.shape == (batch, out_classes), out.shape
    assert bool(jnp.all(jnp.isfinite(out)))
    print("KERNEL_OK")
</pallas_src>

<mosaic_0001>
module attributes {stable_mosaic.version = 11 : i64} {
  func.func @_matmul_kernel(%arg0: i32, %arg1: i32, %arg2: memref<128x384xbf16, #tpu.memory_space<vmem>>, %arg3: memref<384x128xbf16, #tpu.memory_space<vmem>>, %arg4: memref<1x128xf32, #tpu.memory_space<vmem>>, %arg5: memref<128x128xf32, #tpu.memory_space<vmem>>) attributes {dimension_semantics = [#tpu.dimension_semantics<parallel>, #tpu.dimension_semantics<parallel>], iteration_bounds = array<i64: 4, 1>, scalar_prefetch = 0 : i64, scratch_operands = 0 : i64, tpu.core_type = #tpu.core_type<tc>, window_params = [{transform_indices = @transform_0, window_bounds = array<i64: 128, 384>}, {transform_indices = @transform_1, window_bounds = array<i64: 384, 128>}, {transform_indices = @transform_2, window_bounds = array<i64: 1, 128>}, {transform_indices = @transform_3, window_bounds = array<i64: 128, 128>}]} {
    %c0 = arith.constant 0 : index
    %c0_0 = arith.constant 0 : index
    %0 = vector.load %arg2[%c0, %c0_0] : memref<128x384xbf16, #tpu.memory_space<vmem>>, vector<128x384xbf16>
    %c0_1 = arith.constant 0 : index
    %c0_2 = arith.constant 0 : index
    %1 = vector.load %arg3[%c0_1, %c0_2] : memref<384x128xbf16, #tpu.memory_space<vmem>>, vector<384x128xbf16>
    %cst = arith.constant dense<0.000000e+00> : vector<128x128xf32>
    %2 = tpu.matmul %0, %1, %cst {dimension_numbers = #tpu.dot_dimension_numbers<[1], [0], [0], [1], [0, 0, 1, 1], [], []>} : vector<128x384xbf16>, vector<384x128xbf16>, vector<128x128xf32> -> vector<128x128xf32>
    %c0_3 = arith.constant 0 : index
    %c0_4 = arith.constant 0 : index
    %3 = vector.load %arg4[%c0_3, %c0_4] : memref<1x128xf32, #tpu.memory_space<vmem>>, vector<1x128xf32>
    %4 = vector.broadcast %3 : vector<1x128xf32> to vector<128x128xf32>
    %5 = arith.addf %2, %4 : vector<128x128xf32>
    %c0_5 = arith.constant 0 : index
    %c0_6 = arith.constant 0 : index
    %6 = vector.load %arg5[%c0_5, %c0_6] : memref<128x128xf32, #tpu.memory_space<vmem>>, vector<128x128xf32>
    tpu.vector_store %arg5[%c0_5, %c0_6], %5 {strides = array<i32>} : memref<128x128xf32, #tpu.memory_space<vmem>>, vector<128x128xf32>,
    return
  }
  func.func @transform_0(%arg0: i32, %arg1: i32) -> (i32, i32) {
    %c0_i32 = arith.constant 0 : i32
    %c0_i32_0 = arith.constant 0 : i32
    return %arg0, %c0_i32 : i32, i32
  }
  func.func @transform_1(%arg0: i32, %arg1: i32) -> (i32, i32) {
    %c0_i32 = arith.constant 0 : i32
    %c0_i32_0 = arith.constant 0 : i32
    return %c0_i32, %arg1 : i32, i32
  }
  func.func @transform_2(%arg0: i32, %arg1: i32) -> (i32, i32) {
    %c0_i32 = arith.constant 0 : i32
    %c0_i32_0 = arith.constant 0 : i32
    return %c0_i32, %arg1 : i32, i32
  }
  func.func @transform_3(%arg0: i32, %arg1: i32) -> (i32, i32) {
    %c0_i32 = arith.constant 0 : i32
    return %arg0, %arg1 : i32, i32
  }
}

module attributes {stable_mosaic.version = 11 : i64} {
  func.func @_postconv_kernel(%arg0: i32, %arg1: memref<3x104x128xf32, #tpu.memory_space<vmem>>, %arg2: memref<128x128xf32, #tpu.memory_space<vmem>>, %arg3: memref<1x128xf32, #tpu.memory_space<vmem>>, %arg4: memref<1x128xf32, #tpu.memory_space<vmem>>, %arg5: memref<104x128xf32, #tpu.memory_space<vmem>>) attributes {dimension_semantics = [#tpu.dimension_semantics<parallel>], iteration_bounds = array<i64: 1>, scalar_prefetch = 0 : i64, scratch_operands = 0 : i64, tpu.core_type = #tpu.core_type<tc>, window_params = [{transform_indices = @transform_0, window_bounds = array<i64: 3, 104, 128>}, {pipeline_mode = #tpu.pipeline_mode<synchronous>, transform_indices = @transform_1, window_bounds = array<i64: 128, 128>}, {pipeline_mode = #tpu.pipeline_mode<synchronous>, transform_indices = @transform_2, window_bounds = array<i64: 1, 128>}, {pipeline_mode = #tpu.pipeline_mode<synchronous>, transform_indices = @transform_3, window_bounds = array<i64: 1, 128>}, {transform_indices = @transform_4, window_bounds = array<i64: 104, 128>}]} {
    %c0 = arith.constant 0 : index
    %c0_0 = arith.constant 0 : index
    %c0_1 = arith.constant 0 : index
    %0 = vector.load %arg1[%c0, %c0_0, %c0_1] : memref<3x104x128xf32, #tpu.memory_space<vmem>>, vector<1x104x128xf32>
    %1 = vector.shape_cast %0 : vector<1x104x128xf32> to vector<104x128xf32>
    %c1 = arith.constant 1 : index
    %c0_2 = arith.constant 0 : index
    %c0_3 = arith.constant 0 : index
    %2 = vector.load %arg1[%c1, %c0_2, %c0_3] : memref<3x104x128xf32, #tpu.memory_space<vmem>>, vector<1x104x128xf32>
    %3 = vector.shape_cast %2 : vector<1x104x128xf32> to vector<104x128xf32>
    %4 = arith.maximumf %1, %3 : vector<104x128xf32>
    %c2 = arith.constant 2 : index
    %c0_4 = arith.constant 0 : index
    %c0_5 = arith.constant 0 : index
    %5 = vector.load %arg1[%c2, %c0_4, %c0_5] : memref<3x104x128xf32, #tpu.memory_space<vmem>>, vector<1x104x128xf32>
    %6 = vector.shape_cast %5 : vector<1x104x128xf32> to vector<104x128xf32>
    %7 = arith.maximumf %4, %6 : vector<104x128xf32>
    %cst = arith.constant 0.000000e+00 : f32
    %8 = vector.broadcast %cst : f32 to vector<104x128xf32>
    %9 = arith.maximumf %7, %8 : vector<104x128xf32>
    %10 = arith.mulf %9, %9 : vector<104x128xf32>
    %c0_6 = arith.constant 0 : index
    %c0_7 = arith.constant 0 : index
    %11 = vector.load %arg2[%c0_6, %c0_7] : memref<128x128xf32, #tpu.memory_space<vmem>>, vector<128x128xf32>
    %cst_8 = arith.constant dense<0.000000e+00> : vector<104x128xf32>
    %12 = tpu.matmul %10, %11, %cst_8 {dimension_numbers = #tpu.dot_dimension_numbers<[1], [0], [0], [1], [0, 0, 1, 1], [], []>} : vector<104x128xf32>, vector<128x128xf32>, vector<104x128xf32> -> vector<104x128xf32>
    %cst_9 = arith.constant 2.000000e-04 : f32
    %13 = vector.broadcast %cst_9 : f32 to vector<104x128xf32>
    %14 = arith.mulf %13, %12 : vector<104x128xf32>
    %cst_10 = arith.constant 2.000000e+00 : f32
    %15 = vector.broadcast %cst_10 : f32 to vector<104x128xf32>
    %16 = arith.addf %15, %14 : vector<104x128xf32>
    %17 = math.log %16 : vector<104x128xf32>
    %cst_11 = arith.constant -7.500000e-01 : f32
    %18 = vector.broadcast %cst_11 : f32 to vector<104x128xf32>
    %19 = arith.mulf %18, %17 : vector<104x128xf32>
    %20 = math.exp %19 : vector<104x128xf32>
    %21 = arith.mulf %9, %20 : vector<104x128xf32>
    %c0_12 = arith.constant 0 : index
    %c0_13 = arith.constant 0 : index
    %22 = vector.load %arg3[%c0_12, %c0_13] : memref<1x128xf32, #tpu.memory_space<vmem>>, vector<1x128xf32>
    %23 = vector.broadcast %22 : vector<1x128xf32> to vector<104x128xf32>
    %24 = arith.mulf %21, %23 : vector<104x128xf32>
    %c0_14 = arith.constant 0 : index
    %c0_15 = arith.constant 0 : index
    %25 = vector.load %arg4[%c0_14, %c0_15] : memref<1x128xf32, #tpu.memory_space<vmem>>, vector<1x128xf32>
    %26 = vector.broadcast %25 : vector<1x128xf32> to vector<104x128xf32>
    %27 = arith.addf %24, %26 : vector<104x128xf32>
    %c0_16 = arith.constant 0 : index
    %c0_17 = arith.constant 0 : index
    %28 = vector.load %arg5[%c0_16, %c0_17] : memref<104x128xf32, #tpu.memory_space<vmem>>, vector<104x128xf32>
    tpu.vector_store %arg5[%c0_16, %c0_17], %27 {strides = array<i32>} : memref<104x128xf32, #tpu.memory_space<vmem>>, vector<104x128xf32>,
    return
  }
  func.func @transform_0(%arg0: i32) -> (i32, i32, i32) {
    %c0_i32 = arith.constant 0 : i32
    %c0_i32_0 = arith.constant 0 : i32
    %c0_i32_1 = arith.constant 0 : i32
    return %c0_i32, %arg0, %c0_i32_0 : i32, i32, i32
  }
  func.func @transform_1(%arg0: i32) -> (i32, i32) {
    %c0_i32 = arith.constant 0 : i32
    %c0_i32_0 = arith.constant 0 : i32
    %c0_i32_1 = arith.constant 0 : i32
    return %c0_i32, %c0_i32_0 : i32, i32
  }
  func.func @transform_2(%arg0: i32) -> (i32, i32) {
    %c0_i32 = arith.constant 0 : i32
    %c0_i32_0 = arith.constant 0 : i32
    %c0_i32_1 = arith.constant 0 : i32
    return %c0_i32, %c0_i32_0 : i32, i32
  }
  func.func @transform_3(%arg0: i32) -> (i32, i32) {
    %c0_i32 = arith.constant 0 : i32
    %c0_i32_0 = arith.constant 0 : i32
    %c0_i32_1 = arith.constant 0 : i32
    return %c0_i32, %c0_i32_0 : i32, i32
  }
  func.func @transform_4(%arg0: i32) -> (i32, i32) {
    %c0_i32 = arith.constant 0 : i32
    %c0_i32_0 = arith.constant 0 : i32
    return %arg0, %c0_i32 : i32, i32
  }
}

module attributes {stable_mosaic.version = 11 : i64} {
  func.func @_matmul_kernel(%arg0: i32, %arg1: i32, %arg2: memref<112x1280xbf16, #tpu.memory_space<vmem>>, %arg3: memref<1280x128xbf16, #tpu.memory_space<vmem>>, %arg4: memref<1x128xf32, #tpu.memory_space<vmem>>, %arg5: memref<112x128xf32, #tpu.memory_space<vmem>>) attributes {dimension_semantics = [#tpu.dimension_semantics<parallel>, #tpu.dimension_semantics<parallel>], iteration_bounds = array<i64: 1, 1>, scalar_prefetch = 0 : i64, scratch_operands = 0 : i64, tpu.core_type = #tpu.core_type<tc>, window_params = [{transform_indices = @transform_0, window_bounds = array<i64: 112, 1280>}, {transform_indices = @transform_1, window_bounds = array<i64: 1280, 128>}, {transform_indices = @transform_2, window_bounds = array<i64: 1, 128>}, {transform_indices = @transform_3, window_bounds = array<i64: 112, 128>}]} {
    %c0 = arith.constant 0 : index
    %c0_0 = arith.constant 0 : index
    %0 = vector.load %arg2[%c0, %c0_0] : memref<112x1280xbf16, #tpu.memory_space<vmem>>, vector<112x1280xbf16>
    %c0_1 = arith.constant 0 : index
    %c0_2 = arith.constant 0 : index
    %1 = vector.load %arg3[%c0_1, %c0_2] : memref<1280x128xbf16, #tpu.memory_space<vmem>>, vector<1280x128xbf16>
    %cst = arith.constant dense<0.000000e+00> : vector<112x128xf32>
    %2 = tpu.matmul %0, %1, %cst {dimension_numbers = #tpu.dot_dimension_numbers<[1], [0], [0], [1], [0, 0, 1, 1], [], []>} : vector<112x1280xbf16>, vector<1280x128xbf16>, vector<112x128xf32> -> vector<112x128xf32>
    %c0_3 = arith.constant 0 : index
    %c0_4 = arith.constant 0 : index
    %3 = vector.load %arg4[%c0_3, %c0_4] : memref<1x128xf32, #tpu.memory_space<vmem>>, vector<1x128xf32>
    %4 = vector.broadcast %3 : vector<1x128xf32> to vector<112x128xf32>
    %5 = arith.addf %2, %4 : vector<112x128xf32>
    %c0_5 = arith.constant 0 : index
    %c0_6 = arith.constant 0 : index
    %6 = vector.load %arg5[%c0_5, %c0_6] : memref<112x128xf32, #tpu.memory_space<vmem>>, vector<112x128xf32>
    tpu.vector_store %arg5[%c0_5, %c0_6], %5 {strides = array<i32>} : memref<112x128xf32, #tpu.memory_space<vmem>>, vector<112x128xf32>,
    return
  }
  func.func @transform_0(%arg0: i32, %arg1: i32) -> (i32, i32) {
    %c0_i32 = arith.constant 0 : i32
    %c0_i32_0 = arith.constant 0 : i32
    return %arg0, %c0_i32 : i32, i32
  }
  func.func @transform_1(%arg0: i32, %arg1: i32) -> (i32, i32) {
    %c0_i32 = arith.constant 0 : i32
    %c0_i32_0 = arith.constant 0 : i32
    return %c0_i32, %arg1 : i32, i32
  }
  func.func @transform_2(%arg0: i32, %arg1: i32) -> (i32, i32) {
    %c0_i32 = arith.constant 0 : i32
    %c0_i32_0 = arith.constant 0 : i32
    return %c0_i32, %arg1 : i32, i32
  }
  func.func @transform_3(%arg0: i32, %arg1: i32) -> (i32, i32) {
    %c0_i32 = arith.constant 0 : i32
    return %arg0, %arg1 : i32, i32
  }
}

module attributes {stable_mosaic.version = 11 : i64} {
  func.func @_postconv_kernel(%arg0: i32, %arg1: memref<3x24x128xf32, #tpu.memory_space<vmem>>, %arg2: memref<128x128xf32, #tpu.memory_space<vmem>>, %arg3: memref<1x128xf32, #tpu.memory_space<vmem>>, %arg4: memref<1x128xf32, #tpu.memory_space<vmem>>, %arg5: memref<24x128xf32, #tpu.memory_space<vmem>>) attributes {dimension_semantics = [#tpu.dimension_semantics<parallel>], iteration_bounds = array<i64: 1>, scalar_prefetch = 0 : i64, scratch_operands = 0 : i64, tpu.core_type = #tpu.core_type<tc>, window_params = [{transform_indices = @transform_0, window_bounds = array<i64: 3, 24, 128>}, {pipeline_mode = #tpu.pipeline_mode<synchronous>, transform_indices = @transform_1, window_bounds = array<i64: 128, 128>}, {pipeline_mode = #tpu.pipeline_mode<synchronous>, transform_indices = @transform_2, window_bounds = array<i64: 1, 128>}, {pipeline_mode = #tpu.pipeline_mode<synchronous>, transform_indices = @transform_3, window_bounds = array<i64: 1, 128>}, {transform_indices = @transform_4, window_bounds = array<i64: 24, 128>}]} {
    %c0 = arith.constant 0 : index
    %c0_0 = arith.constant 0 : index
    %c0_1 = arith.constant 0 : index
    %0 = vector.load %arg1[%c0, %c0_0, %c0_1] : memref<3x24x128xf32, #tpu.memory_space<vmem>>, vector<1x24x128xf32>
    %1 = vector.shape_cast %0 : vector<1x24x128xf32> to vector<24x128xf32>
    %c1 = arith.constant 1 : index
    %c0_2 = arith.constant 0 : index
    %c0_3 = arith.constant 0 : index
    %2 = vector.load %arg1[%c1, %c0_2, %c0_3] : memref<3x24x128xf32, #tpu.memory_space<vmem>>, vector<1x24x128xf32>
    %3 = vector.shape_cast %2 : vector<1x24x128xf32> to vector<24x128xf32>
    %4 = arith.maximumf %1, %3 : vector<24x128xf32>
    %c2 = arith.constant 2 : index
    %c0_4 = arith.constant 0 : index
    %c0_5 = arith.constant 0 : index
    %5 = vector.load %arg1[%c2, %c0_4, %c0_5] : memref<3x24x128xf32, #tpu.memory_space<vmem>>, vector<1x24x128xf32>
    %6 = vector.shape_cast %5 : vector<1x24x128xf32> to vector<24x128xf32>
    %7 = arith.maximumf %4, %6 : vector<24x128xf32>
    %cst = arith.constant 0.000000e+00 : f32
    %8 = vector.broadcast %cst : f32 to vector<24x128xf32>
    %9 = arith.maximumf %7, %8 : vector<24x128xf32>
    %10 = arith.mulf %9, %9 : vector<24x128xf32>
    %c0_6 = arith.constant 0 : index
    %c0_7 = arith.constant 0 : index
    %11 = vector.load %arg2[%c0_6, %c0_7] : memref<128x128xf32, #tpu.memory_space<vmem>>, vector<128x128xf32>
    %cst_8 = arith.constant dense<0.000000e+00> : vector<24x128xf32>
    %12 = tpu.matmul %10, %11, %cst_8 {dimension_numbers = #tpu.dot_dimension_numbers<[1], [0], [0], [1], [0, 0, 1, 1], [], []>} : vector<24x128xf32>, vector<128x128xf32>, vector<24x128xf32> -> vector<24x128xf32>
    %cst_9 = arith.constant 2.000000e-04 : f32
    %13 = vector.broadcast %cst_9 : f32 to vector<24x128xf32>
    %14 = arith.mulf %13, %12 : vector<24x128xf32>
    %cst_10 = arith.constant 2.000000e+00 : f32
    %15 = vector.broadcast %cst_10 : f32 to vector<24x128xf32>
    %16 = arith.addf %15, %14 : vector<24x128xf32>
    %17 = math.log %16 : vector<24x128xf32>
    %cst_11 = arith.constant -7.500000e-01 : f32
    %18 = vector.broadcast %cst_11 : f32 to vector<24x128xf32>
    %19 = arith.mulf %18, %17 : vector<24x128xf32>
    %20 = math.exp %19 : vector<24x128xf32>
    %21 = arith.mulf %9, %20 : vector<24x128xf32>
    %c0_12 = arith.constant 0 : index
    %c0_13 = arith.constant 0 : index
    %22 = vector.load %arg3[%c0_12, %c0_13] : memref<1x128xf32, #tpu.memory_space<vmem>>, vector<1x128xf32>
    %23 = vector.broadcast %22 : vector<1x128xf32> to vector<24x128xf32>
    %24 = arith.mulf %21, %23 : vector<24x128xf32>
    %c0_14 = arith.constant 0 : index
    %c0_15 = arith.constant 0 : index
    %25 = vector.load %arg4[%c0_14, %c0_15] : memref<1x128xf32, #tpu.memory_space<vmem>>, vector<1x128xf32>
    %26 = vector.broadcast %25 : vector<1x128xf32> to vector<24x128xf32>
    %27 = arith.addf %24, %26 : vector<24x128xf32>
    %c0_16 = arith.constant 0 : index
    %c0_17 = arith.constant 0 : index
    %28 = vector.load %arg5[%c0_16, %c0_17] : memref<24x128xf32, #tpu.memory_space<vmem>>, vector<24x128xf32>
    tpu.vector_store %arg5[%c0_16, %c0_17], %27 {strides = array<i32>} : memref<24x128xf32, #tpu.memory_space<vmem>>, vector<24x128xf32>,
    return
  }
  func.func @transform_0(%arg0: i32) -> (i32, i32, i32) {
    %c0_i32 = arith.constant 0 : i32
    %c0_i32_0 = arith.constant 0 : i32
    %c0_i32_1 = arith.constant 0 : i32
    return %c0_i32, %arg0, %c0_i32_0 : i32, i32, i32
  }
  func.func @transform_1(%arg0: i32) -> (i32, i32) {
    %c0_i32 = arith.constant 0 : i32
    %c0_i32_0 = arith.constant 0 : i32
    %c0_i32_1 = arith.constant 0 : i32
    return %c0_i32, %c0_i32_0 : i32, i32
  }
  func.func @transform_2(%arg0: i32) -> (i32, i32) {
    %c0_i32 = arith.constant 0 : i32
    %c0_i32_0 = arith.constant 0 : i32
    %c0_i32_1 = arith.constant 0 : i32
    return %c0_i32, %c0_i32_0 : i32, i32
  }
  func.func @transform_3(%arg0: i32) -> (i32, i32) {
    %c0_i32 = arith.constant 0 : i32
    %c0_i32_0 = arith.constant 0 : i32
    %c0_i32_1 = arith.constant 0 : i32
    return %c0_i32, %c0_i32_0 : i32, i32
  }
  func.func @transform_4(%arg0: i32) -> (i32, i32) {
    %c0_i32 = arith.constant 0 : i32
    %c0_i32_0 = arith.constant 0 : i32
    return %arg0, %c0_i32 : i32, i32
  }
}

module attributes {stable_mosaic.version = 11 : i64} {
  func.func @_matmul_kernel(%arg0: i32, %arg1: i32, %arg2: memref<32x2304xbf16, #tpu.memory_space<vmem>>, %arg3: memref<2304x384xbf16, #tpu.memory_space<vmem>>, %arg4: memref<1x384xf32, #tpu.memory_space<vmem>>, %arg5: memref<1x384xf32, #tpu.memory_space<vmem>>, %arg6: memref<1x384xf32, #tpu.memory_space<vmem>>, %arg7: memref<32x384xf32, #tpu.memory_space<vmem>>) attributes {dimension_semantics = [#tpu.dimension_semantics<parallel>, #tpu.dimension_semantics<parallel>], iteration_bounds = array<i64: 1, 1>, scalar_prefetch = 0 : i64, scratch_operands = 0 : i64, tpu.core_type = #tpu.core_type<tc>, window_params = [{transform_indices = @transform_0, window_bounds = array<i64: 32, 2304>}, {transform_indices = @transform_1, window_bounds = array<i64: 2304, 384>}, {transform_indices = @transform_2, window_bounds = array<i64: 1, 384>}, {transform_indices = @transform_3, window_bounds = array<i64: 1, 384>}, {transform_indices = @transform_4, window_bounds = array<i64: 1, 384>}, {transform_indices = @transform_5, window_bounds = array<i64: 32, 384>}]} {
    %c0 = arith.constant 0 : index
    %c0_0 = arith.constant 0 : index
    %0 = vector.load %arg2[%c0, %c0_0] : memref<32x2304xbf16, #tpu.memory_space<vmem>>, vector<32x2304xbf16>
    %c0_1 = arith.constant 0 : index
    %c0_2 = arith.constant 0 : index
    %1 = vector.load %arg3[%c0_1, %c0_2] : memref<2304x384xbf16, #tpu.memory_space<vmem>>, vector<2304x384xbf16>
    %cst = arith.constant dense<0.000000e+00> : vector<32x384xf32>
    %2 = tpu.matmul %0, %1, %cst {dimension_numbers = #tpu.dot_dimension_numbers<[1], [0], [0], [1], [0, 0, 1, 1], [], []>} : vector<32x2304xbf16>, vector<2304x384xbf16>, vector<32x384xf32> -> vector<32x384xf32>
    %c0_3 = arith.constant 0 : index
    %c0_4 = arith.constant 0 : index
    %3 = vector.load %arg4[%c0_3, %c0_4] : memref<1x384xf32, #tpu.memory_space<vmem>>, vector<1x384xf32>
    %4 = vector.broadcast %3 : vector<1x384xf32> to vector<32x384xf32>
    %5 = arith.addf %2, %4 : vector<32x384xf32>
    %cst_5 = arith.constant 0.000000e+00 : f32
    %6 = vector.broadcast %cst_5 : f32 to vector<32x384xf32>
    %7 = arith.maximumf %5, %6 : vector<32x384xf32>
    %c0_6 = arith.constant 0 : index
    %c0_7 = arith.constant 0 : index
    %8 = vector.load %arg5[%c0_6, %c0_7] : memref<1x384xf32, #tpu.memory_space<vmem>>, vector<1x384xf32>
    %9 = vector.broadcast %8 : vector<1x384xf32> to vector<32x384xf32>
    %10 = arith.mulf %7, %9 : vector<32x384xf32>
    %c0_8 = arith.constant 0 : index
    %c0_9 = arith.constant 0 : index
    %11 = vector.load %arg6[%c0_8, %c0_9] : memref<1x384xf32, #tpu.memory_space<vmem>>, vector<1x384xf32>
    %12 = vector.broadcast %11 : vector<1x384xf32> to vector<32x384xf32>
    %13 = arith.addf %10, %12 : vector<32x384xf32>
    %c0_10 = arith.constant 0 : index
    %c0_11 = arith.constant 0 : index
    %14 = vector.load %arg7[%c0_10, %c0_11] : memref<32x384xf32, #tpu.memory_space<vmem>>, vector<32x384xf32>
    tpu.vector_store %arg7[%c0_10, %c0_11], %13 {strides = array<i32>} : memref<32x384xf32, #tpu.memory_space<vmem>>, vector<32x384xf32>,
    return
  }
  func.func @transform_0(%arg0: i32, %arg1: i32) -> (i32, i32) {
    %c0_i32 = arith.constant 0 : i32
    %c0_i32_0 = arith.constant 0 : i32
    return %arg0, %c0_i32 : i32, i32
  }
  func.func @transform_1(%arg0: i32, %arg1: i32) -> (i32, i32) {
    %c0_i32 = arith.constant 0 : i32
    %c0_i32_0 = arith.constant 0 : i32
    return %c0_i32, %arg1 : i32, i32
  }
  func.func @transform_2(%arg0: i32, %arg1: i32) -> (i32, i32) {
    %c0_i32 = arith.constant 0 : i32
    %c0_i32_0 = arith.constant 0 : i32
    return %c0_i32, %arg1 : i32, i32
  }
  func.func @transform_3(%arg0: i32, %arg1: i32) -> (i32, i32) {
    %c0_i32 = arith.constant 0 : i32
    %c0_i32_0 = arith.constant 0 : i32
    return %c0_i32, %arg1 : i32, i32
  }
  func.func @transform_4(%arg0: i32, %arg1: i32) -> (i32, i32) {
    %c0_i32 = arith.constant 0 : i32
    %c0_i32_0 = arith.constant 0 : i32
    return %c0_i32, %arg1 : i32, i32
  }
  func.func @transform_5(%arg0: i32, %arg1: i32) -> (i32, i32) {
    %c0_i32 = arith.constant 0 : i32
    return %arg0, %arg1 : i32, i32
  }
}

module attributes {stable_mosaic.version = 11 : i64} {
  func.func @_matmul_kernel(%arg0: i32, %arg1: i32, %arg2: memref<32x1792xbf16, #tpu.memory_space<vmem>>, %arg3: memref<1792x256xbf16, #tpu.memory_space<vmem>>, %arg4: memref<1x256xf32, #tpu.memory_space<vmem>>, %arg5: memref<1x256xf32, #tpu.memory_space<vmem>>, %arg6: memref<1x256xf32, #tpu.memory_space<vmem>>, %arg7: memref<32x256xf32, #tpu.memory_space<vmem>>) attributes {dimension_semantics = [#tpu.dimension_semantics<parallel>, #tpu.dimension_semantics<parallel>], iteration_bounds = array<i64: 1, 1>, scalar_prefetch = 0 : i64, scratch_operands = 0 : i64, tpu.core_type = #tpu.core_type<tc>, window_params = [{transform_indices = @transform_0, window_bounds = array<i64: 32, 1792>}, {transform_indices = @transform_1, window_bounds = array<i64: 1792, 256>}, {transform_indices = @transform_2, window_bounds = array<i64: 1, 256>}, {transform_indices = @transform_3, window_bounds = array<i64: 1, 256>}, {transform_indices = @transform_4, window_bounds = array<i64: 1, 256>}, {transform_indices = @transform_5, window_bounds = array<i64: 32, 256>}]} {
    %c0 = arith.constant 0 : index
    %c0_0 = arith.constant 0 : index
    %0 = vector.load %arg2[%c0, %c0_0] : memref<32x1792xbf16, #tpu.memory_space<vmem>>, vector<32x1792xbf16>
    %c0_1 = arith.constant 0 : index
    %c0_2 = arith.constant 0 : index
    %1 = vector.load %arg3[%c0_1, %c0_2] : memref<1792x256xbf16, #tpu.memory_space<vmem>>, vector<1792x256xbf16>
    %cst = arith.constant dense<0.000000e+00> : vector<32x256xf32>
    %2 = tpu.matmul %0, %1, %cst {dimension_numbers = #tpu.dot_dimension_numbers<[1], [0], [0], [1], [0, 0, 1, 1], [], []>} : vector<32x1792xbf16>, vector<1792x256xbf16>, vector<32x256xf32> -> vector<32x256xf32>
    %c0_3 = arith.constant 0 : index
    %c0_4 = arith.constant 0 : index
    %3 = vector.load %arg4[%c0_3, %c0_4] : memref<1x256xf32, #tpu.memory_space<vmem>>, vector<1x256xf32>
    %4 = vector.broadcast %3 : vector<1x256xf32> to vector<32x256xf32>
    %5 = arith.addf %2, %4 : vector<32x256xf32>
    %cst_5 = arith.constant 0.000000e+00 : f32
    %6 = vector.broadcast %cst_5 : f32 to vector<32x256xf32>
    %7 = arith.maximumf %5, %6 : vector<32x256xf32>
    %c0_6 = arith.constant 0 : index
    %c0_7 = arith.constant 0 : index
    %8 = vector.load %arg5[%c0_6, %c0_7] : memref<1x256xf32, #tpu.memory_space<vmem>>, vector<1x256xf32>
    %9 = vector.broadcast %8 : vector<1x256xf32> to vector<32x256xf32>
    %10 = arith.mulf %7, %9 : vector<32x256xf32>
    %c0_8 = arith.constant 0 : index
    %c0_9 = arith.constant 0 : index
    %11 = vector.load %arg6[%c0_8, %c0_9] : memref<1x256xf32, #tpu.memory_space<vmem>>, vector<1x256xf32>
    %12 = vector.broadcast %11 : vector<1x256xf32> to vector<32x256xf32>
    %13 = arith.addf %10, %12 : vector<32x256xf32>
    %c0_10 = arith.constant 0 : index
    %c0_11 = arith.constant 0 : index
    %14 = vector.load %arg7[%c0_10, %c0_11] : memref<32x256xf32, #tpu.memory_space<vmem>>, vector<32x256xf32>
    tpu.vector_store %arg7[%c0_10, %c0_11], %13 {strides = array<i32>} : memref<32x256xf32, #tpu.memory_space<vmem>>, vector<32x256xf32>,
    return
  }
  func.func @transform_0(%arg0: i32, %arg1: i32) -> (i32, i32) {
    %c0_i32 = arith.constant 0 : i32
    %c0_i32_0 = arith.constant 0 : i32
    return %arg0, %c0_i32 : i32, i32
  }
  func.func @transform_1(%arg0: i32, %arg1: i32) -> (i32, i32) {
    %c0_i32 = arith.constant 0 : i32
    %c0_i32_0 = arith.constant 0 : i32
    return %c0_i32, %arg1 : i32, i32
  }
  func.func @transform_2(%arg0: i32, %arg1: i32) -> (i32, i32) {
    %c0_i32 = arith.constant 0 : i32
    %c0_i32_0 = arith.constant 0 : i32
    return %c0_i32, %arg1 : i32, i32
  }
  func.func @transform_3(%arg0: i32, %arg1: i32) -> (i32, i32) {
    %c0_i32 = arith.constant 0 : i32
    %c0_i32_0 = arith.constant 0 : i32
    return %c0_i32, %arg1 : i32, i32
  }
  func.func @transform_4(%arg0: i32, %arg1: i32) -> (i32, i32) {
    %c0_i32 = arith.constant 0 : i32
    %c0_i32_0 = arith.constant 0 : i32
    return %c0_i32, %arg1 : i32, i32
  }
  func.func @transform_5(%arg0: i32, %arg1: i32) -> (i32, i32) {
    %c0_i32 = arith.constant 0 : i32
    return %arg0, %arg1 : i32, i32
  }
}

module attributes {stable_mosaic.version = 11 : i64} {
  func.func @_matmul_kernel(%arg0: i32, %arg1: i32, %arg2: memref<32x1792xbf16, #tpu.memory_space<vmem>>, %arg3: memref<1792x128xbf16, #tpu.memory_space<vmem>>, %arg4: memref<1x128xf32, #tpu.memory_space<vmem>>, %arg5: memref<32x128xf32, #tpu.memory_space<vmem>>) attributes {dimension_semantics = [#tpu.dimension_semantics<parallel>, #tpu.dimension_semantics<parallel>], iteration_bounds = array<i64: 1, 1>, scalar_prefetch = 0 : i64, scratch_operands = 0 : i64, tpu.core_type = #tpu.core_type<tc>, window_params = [{transform_indices = @transform_0, window_bounds = array<i64: 32, 1792>}, {transform_indices = @transform_1, window_bounds = array<i64: 1792, 128>}, {transform_indices = @transform_2, window_bounds = array<i64: 1, 128>}, {transform_indices = @transform_3, window_bounds = array<i64: 32, 128>}]} {
    %c0 = arith.constant 0 : index
    %c0_0 = arith.constant 0 : index
    %0 = vector.load %arg2[%c0, %c0_0] : memref<32x1792xbf16, #tpu.memory_space<vmem>>, vector<32x1792xbf16>
    %c0_1 = arith.constant 0 : index
    %c0_2 = arith.constant 0 : index
    %1 = vector.load %arg3[%c0_1, %c0_2] : memref<1792x128xbf16, #tpu.memory_space<vmem>>, vector<1792x128xbf16>
    %cst = arith.constant dense<0.000000e+00> : vector<32x128xf32>
    %2 = tpu.matmul %0, %1, %cst {dimension_numbers = #tpu.dot_dimension_numbers<[1], [0], [0], [1], [0, 0, 1, 1], [], []>} : vector<32x1792xbf16>, vector<1792x128xbf16>, vector<32x128xf32> -> vector<32x128xf32>
    %c0_3 = arith.constant 0 : index
    %c0_4 = arith.constant 0 : index
    %3 = vector.load %arg4[%c0_3, %c0_4] : memref<1x128xf32, #tpu.memory_space<vmem>>, vector<1x128xf32>
    %4 = vector.broadcast %3 : vector<1x128xf32> to vector<32x128xf32>
    %5 = arith.addf %2, %4 : vector<32x128xf32>
    %c0_5 = arith.constant 0 : index
    %c0_6 = arith.constant 0 : index
    %6 = vector.load %arg5[%c0_5, %c0_6] : memref<32x128xf32, #tpu.memory_space<vmem>>, vector<32x128xf32>
    tpu.vector_store %arg5[%c0_5, %c0_6], %5 {strides = array<i32>} : memref<32x128xf32, #tpu.memory_space<vmem>>, vector<32x128xf32>,
    return
  }
  func.func @transform_0(%arg0: i32, %arg1: i32) -> (i32, i32) {
    %c0_i32 = arith.constant 0 : i32
    %c0_i32_0 = arith.constant 0 : i32
    return %arg0, %c0_i32 : i32, i32
  }
  func.func @transform_1(%arg0: i32, %arg1: i32) -> (i32, i32) {
    %c0_i32 = arith.constant 0 : i32
    %c0_i32_0 = arith.constant 0 : i32
    return %c0_i32, %arg1 : i32, i32
  }
  func.func @transform_2(%arg0: i32, %arg1: i32) -> (i32, i32) {
    %c0_i32 = arith.constant 0 : i32
    %c0_i32_0 = arith.constant 0 : i32
    return %c0_i32, %arg1 : i32, i32
  }
  func.func @transform_3(%arg0: i32, %arg1: i32) -> (i32, i32) {
    %c0_i32 = arith.constant 0 : i32
    return %arg0, %arg1 : i32, i32
  }
}

module attributes {stable_mosaic.version = 11 : i64} {
  func.func @_postconv_kernel(%arg0: i32, %arg1: memref<3x8x128xf32, #tpu.memory_space<vmem>>, %arg2: memref<1x128xf32, #tpu.memory_space<vmem>>, %arg3: memref<1x128xf32, #tpu.memory_space<vmem>>, %arg4: memref<8x128xf32, #tpu.memory_space<vmem>>) attributes {dimension_semantics = [#tpu.dimension_semantics<parallel>], iteration_bounds = array<i64: 1>, scalar_prefetch = 0 : i64, scratch_operands = 0 : i64, tpu.core_type = #tpu.core_type<tc>, window_params = [{transform_indices = @transform_0, window_bounds = array<i64: 3, 8, 128>}, {pipeline_mode = #tpu.pipeline_mode<synchronous>, transform_indices = @transform_1, window_bounds = array<i64: 1, 128>}, {pipeline_mode = #tpu.pipeline_mode<synchronous>, transform_indices = @transform_2, window_bounds = array<i64: 1, 128>}, {transform_indices = @transform_3, window_bounds = array<i64: 8, 128>}]} {
    %c0 = arith.constant 0 : index
    %c0_0 = arith.constant 0 : index
    %c0_1 = arith.constant 0 : index
    %0 = vector.load %arg1[%c0, %c0_0, %c0_1] : memref<3x8x128xf32, #tpu.memory_space<vmem>>, vector<1x8x128xf32>
    %1 = vector.shape_cast %0 : vector<1x8x128xf32> to vector<8x128xf32>
    %c1 = arith.constant 1 : index
    %c0_2 = arith.constant 0 : index
    %c0_3 = arith.constant 0 : index
    %2 = vector.load %arg1[%c1, %c0_2, %c0_3] : memref<3x8x128xf32, #tpu.memory_space<vmem>>, vector<1x8x128xf32>
    %3 = vector.shape_cast %2 : vector<1x8x128xf32> to vector<8x128xf32>
    %4 = arith.maximumf %1, %3 : vector<8x128xf32>
    %c2 = arith.constant 2 : index
    %c0_4 = arith.constant 0 : index
    %c0_5 = arith.constant 0 : index
    %5 = vector.load %arg1[%c2, %c0_4, %c0_5] : memref<3x8x128xf32, #tpu.memory_space<vmem>>, vector<1x8x128xf32>
    %6 = vector.shape_cast %5 : vector<1x8x128xf32> to vector<8x128xf32>
    %7 = arith.maximumf %4, %6 : vector<8x128xf32>
    %cst = arith.constant 0.000000e+00 : f32
    %8 = vector.broadcast %cst : f32 to vector<8x128xf32>
    %9 = arith.maximumf %7, %8 : vector<8x128xf32>
    %c0_6 = arith.constant 0 : index
    %c0_7 = arith.constant 0 : index
    %10 = vector.load %arg2[%c0_6, %c0_7] : memref<1x128xf32, #tpu.memory_space<vmem>>, vector<1x128xf32>
    %11 = vector.broadcast %10 : vector<1x128xf32> to vector<8x128xf32>
    %12 = arith.mulf %9, %11 : vector<8x128xf32>
    %c0_8 = arith.constant 0 : index
    %c0_9 = arith.constant 0 : index
    %13 = vector.load %arg3[%c0_8, %c0_9] : memref<1x128xf32, #tpu.memory_space<vmem>>, vector<1x128xf32>
    %14 = vector.broadcast %13 : vector<1x128xf32> to vector<8x128xf32>
    %15 = arith.addf %12, %14 : vector<8x128xf32>
    %c0_10 = arith.constant 0 : index
    %c0_11 = arith.constant 0 : index
    %16 = vector.load %arg4[%c0_10, %c0_11] : memref<8x128xf32, #tpu.memory_space<vmem>>, vector<8x128xf32>
    tpu.vector_store %arg4[%c0_10, %c0_11], %15 {strides = array<i32>} : memref<8x128xf32, #tpu.memory_space<vmem>>, vector<8x128xf32>,
    return
  }
  func.func @transform_0(%arg0: i32) -> (i32, i32, i32) {
    %c0_i32 = arith.constant 0 : i32
    %c0_i32_0 = arith.constant 0 : i32
    %c0_i32_1 = arith.constant 0 : i32
    return %c0_i32, %arg0, %c0_i32_0 : i32, i32, i32
  }
  func.func @transform_1(%arg0: i32) -> (i32, i32) {
    %c0_i32 = arith.constant 0 : i32
    %c0_i32_0 = arith.constant 0 : i32
    %c0_i32_1 = arith.constant 0 : i32
    return %c0_i32, %c0_i32_0 : i32, i32
  }
  func.func @transform_2(%arg0: i32) -> (i32, i32) {
    %c0_i32 = arith.constant 0 : i32
    %c0_i32_0 = arith.constant 0 : i32
    %c0_i32_1 = arith.constant 0 : i32
    return %c0_i32, %c0_i32_0 : i32, i32
  }
  func.func @transform_3(%arg0: i32) -> (i32, i32) {
    %c0_i32 = arith.constant 0 : i32
    %c0_i32_0 = arith.constant 0 : i32
    return %arg0, %c0_i32 : i32, i32
  }
}

module attributes {stable_mosaic.version = 11 : i64} {
  func.func @_matmul_kernel(%arg0: i32, %arg1: i32, %arg2: memref<16x256xbf16, #tpu.memory_space<vmem>>, %arg3: memref<256x128xbf16, #tpu.memory_space<vmem>>, %arg4: memref<1x128xf32, #tpu.memory_space<vmem>>, %arg5: memref<16x128xf32, #tpu.memory_space<vmem>>) attributes {dimension_semantics = [#tpu.dimension_semantics<parallel>, #tpu.dimension_semantics<parallel>], iteration_bounds = array<i64: 1, 1>, scalar_prefetch = 0 : i64, scratch_operands = 0 : i64, tpu.core_type = #tpu.core_type<tc>, window_params = [{transform_indices = @transform_0, window_bounds = array<i64: 16, 256>}, {transform_indices = @transform_1, window_bounds = array<i64: 256, 128>}, {transform_indices = @transform_2, window_bounds = array<i64: 1, 128>}, {transform_indices = @transform_3, window_bounds = array<i64: 16, 128>}]} {
    %c0 = arith.constant 0 : index
    %c0_0 = arith.constant 0 : index
    %0 = vector.load %arg2[%c0, %c0_0] : memref<16x256xbf16, #tpu.memory_space<vmem>>, vector<16x256xbf16>
    %c0_1 = arith.constant 0 : index
    %c0_2 = arith.constant 0 : index
    %1 = vector.load %arg3[%c0_1, %c0_2] : memref<256x128xbf16, #tpu.memory_space<vmem>>, vector<256x128xbf16>
    %cst = arith.constant dense<0.000000e+00> : vector<16x128xf32>
    %2 = tpu.matmul %0, %1, %cst {dimension_numbers = #tpu.dot_dimension_numbers<[1], [0], [0], [1], [0, 0, 1, 1], [], []>} : vector<16x256xbf16>, vector<256x128xbf16>, vector<16x128xf32> -> vector<16x128xf32>
    %c0_3 = arith.constant 0 : index
    %c0_4 = arith.constant 0 : index
    %3 = vector.load %arg4[%c0_3, %c0_4] : memref<1x128xf32, #tpu.memory_space<vmem>>, vector<1x128xf32>
    %4 = vector.broadcast %3 : vector<1x128xf32> to vector<16x128xf32>
    %5 = arith.addf %2, %4 : vector<16x128xf32>
    %cst_5 = arith.constant 0.000000e+00 : f32
    %6 = vector.broadcast %cst_5 : f32 to vector<16x128xf32>
    %7 = arith.maximumf %5, %6 : vector<16x128xf32>
    %c0_6 = arith.constant 0 : index
    %c0_7 = arith.constant 0 : index
    %8 = vector.load %arg5[%c0_6, %c0_7] : memref<16x128xf32, #tpu.memory_space<vmem>>, vector<16x128xf32>
    tpu.vector_store %arg5[%c0_6, %c0_7], %7 {strides = array<i32>} : memref<16x128xf32, #tpu.memory_space<vmem>>, vector<16x128xf32>,
    return
  }
  func.func @transform_0(%arg0: i32, %arg1: i32) -> (i32, i32) {
    %c0_i32 = arith.constant 0 : i32
    %c0_i32_0 = arith.constant 0 : i32
    return %arg0, %c0_i32 : i32, i32
  }
  func.func @transform_1(%arg0: i32, %arg1: i32) -> (i32, i32) {
    %c0_i32 = arith.constant 0 : i32
    %c0_i32_0 = arith.constant 0 : i32
    return %c0_i32, %arg1 : i32, i32
  }
  func.func @transform_2(%arg0: i32, %arg1: i32) -> (i32, i32) {
    %c0_i32 = arith.constant 0 : i32
    %c0_i32_0 = arith.constant 0 : i32
    return %c0_i32, %arg1 : i32, i32
  }
  func.func @transform_3(%arg0: i32, %arg1: i32) -> (i32, i32) {
    %c0_i32 = arith.constant 0 : i32
    return %arg0, %arg1 : i32, i32
  }
}

module attributes {stable_mosaic.version = 11 : i64} {
  func.func @_matmul_kernel(%arg0: i32, %arg1: i32, %arg2: memref<16x128xbf16, #tpu.memory_space<vmem>>, %arg3: memref<128x128xbf16, #tpu.memory_space<vmem>>, %arg4: memref<1x128xf32, #tpu.memory_space<vmem>>, %arg5: memref<16x128xf32, #tpu.memory_space<vmem>>) attributes {dimension_semantics = [#tpu.dimension_semantics<parallel>, #tpu.dimension_semantics<parallel>], iteration_bounds = array<i64: 1, 1>, scalar_prefetch = 0 : i64, scratch_operands = 0 : i64, tpu.core_type = #tpu.core_type<tc>, window_params = [{transform_indices = @transform_0, window_bounds = array<i64: 16, 128>}, {transform_indices = @transform_1, window_bounds = array<i64: 128, 128>}, {transform_indices = @transform_2, window_bounds = array<i64: 1, 128>}, {transform_indices = @transform_3, window_bounds = array<i64: 16, 128>}]} {
    %c0 = arith.constant 0 : index
    %c0_0 = arith.constant 0 : index
    %0 = vector.load %arg2[%c0, %c0_0] : memref<16x128xbf16, #tpu.memory_space<vmem>>, vector<16x128xbf16>
    %c0_1 = arith.constant 0 : index
    %c0_2 = arith.constant 0 : index
    %1 = vector.load %arg3[%c0_1, %c0_2] : memref<128x128xbf16, #tpu.memory_space<vmem>>, vector<128x128xbf16>
    %cst = arith.constant dense<0.000000e+00> : vector<16x128xf32>
    %2 = tpu.matmul %0, %1, %cst {dimension_numbers = #tpu.dot_dimension_numbers<[1], [0], [0], [1], [0, 0, 1, 1], [], []>} : vector<16x128xbf16>, vector<128x128xbf16>, vector<16x128xf32> -> vector<16x128xf32>
    %c0_3 = arith.constant 0 : index
    %c0_4 = arith.constant 0 : index
    %3 = vector.load %arg4[%c0_3, %c0_4] : memref<1x128xf32, #tpu.memory_space<vmem>>, vector<1x128xf32>
    %4 = vector.broadcast %3 : vector<1x128xf32> to vector<16x128xf32>
    %5 = arith.addf %2, %4 : vector<16x128xf32>
    %cst_5 = arith.constant 0.000000e+00 : f32
    %6 = vector.broadcast %cst_5 : f32 to vector<16x128xf32>
    %7 = arith.maximumf %5, %6 : vector<16x128xf32>
    %c0_6 = arith.constant 0 : index
    %c0_7 = arith.constant 0 : index
    %8 = vector.load %arg5[%c0_6, %c0_7] : memref<16x128xf32, #tpu.memory_space<vmem>>, vector<16x128xf32>
    tpu.vector_store %arg5[%c0_6, %c0_7], %7 {strides = array<i32>} : memref<16x128xf32, #tpu.memory_space<vmem>>, vector<16x128xf32>,
    return
  }
  func.func @transform_0(%arg0: i32, %arg1: i32) -> (i32, i32) {
    %c0_i32 = arith.constant 0 : i32
    %c0_i32_0 = arith.constant 0 : i32
    return %arg0, %c0_i32 : i32, i32
  }
  func.func @transform_1(%arg0: i32, %arg1: i32) -> (i32, i32) {
    %c0_i32 = arith.constant 0 : i32
    %c0_i32_0 = arith.constant 0 : i32
    return %c0_i32, %arg1 : i32, i32
  }
  func.func @transform_2(%arg0: i32, %arg1: i32) -> (i32, i32) {
    %c0_i32 = arith.constant 0 : i32
    %c0_i32_0 = arith.constant 0 : i32
    return %c0_i32, %arg1 : i32, i32
  }
  func.func @transform_3(%arg0: i32, %arg1: i32) -> (i32, i32) {
    %c0_i32 = arith.constant 0 : i32
    return %arg0, %arg1 : i32, i32
  }
}

</mosaic_0001>

<llo_original>
// kernel: alexlike_forward.16
$region0: #{alexlike_forward.16}
  #allocation0 [shape = 'u32[]', space=smem, size = 0x4, offset = 0x4, fixed_abs, tag = 'smem constant byte address 0x4 - core index']
  #allocation1 [shape = 'u32[72,128]{1,0:T(1,128)}', space=vmem, size = 0x9000, scoped, tag = 'internal scratch']
  %s0 = inlined_call_operand.vmem [shape: bf16[512,384], index: 0, kind: input, shape index: {}]
  %s1 = inlined_call_operand.vmem [shape: bf16[384,128], index: 1, kind: input, shape index: {}]
  %s2 = inlined_call_operand.vmem [shape: f32[1,128], index: 2, kind: input, shape index: {}]
  %s3 = inlined_call_operand.vmem [shape: f32[512,128], index: 3, kind: output, shape index: {}]
  %s4 = sld [smem:[#allocation0]]
  $region45: #{alexlike_forward.16} parent=0
    _
  %s6 = ssub.s32 1, %s4
  %s7 = scalar_select 0, %s6, %s4
  loop: start=0, step=1, limit=6
  $region2: #{alexlike_forward.16} parent=0 // loop_pre_header
    _
  $region3: #{alexlike_forward.16} parent=0 // loop_header
    %s9 = sphi 0, %s13
    %p10 = scmp.ge.s32.totalorder %s9, 6
    %s16 = sphi 0, %s28
    %s17 = sphi 0, %s24
    %s18 = sphi 0, %s16
    %s19 = sphi 0, %s17
    %s20 = sphi 0, %s18
    %s21 = sphi 0, %s19
    %s31 = sphi 0, %s33
    %s34 = sphi 0, %s31
    %s35 = sphi 0, %s34
    %s51 = sphi 0, %s35
    %s57 = sphi 0, %s59
    %s60 = sphi 0, %s57
    %s61 = sphi 0, %s60
    %s77 = sphi 0, %s61
    %s83 = sphi 0, %s85
    %s86 = sphi 0, %s83
    %s87 = sphi 0, %s86
    %s103 = sphi 0, %s87
    %s111 = sphi 0, %s113
    %s114 = sphi 0, %s111
    %s115 = sphi 0, %s114
    %s131 = sphi 0, %s115
  $region4: #{alexlike_forward.16} parent=0 // loop_header_branch
    %12 = sbr.rel (%p10) target = $region8
  $region5: #{alexlike_forward.16} parent=0 // loop_body
    %s14 = ssub.s32 %s9, 1
    %s15 = ssub.s32 %s9, 2
    %s22 = sadd.s32 1, %s17
    %p23 = scmp.ge.s32.totalorder %s22, 1
    %s24 = scalar_select %p23, 0, %s22
    %s25 = sadd.s32 1, %s16
    %s26 = scalar_select %p23, %s25, %s16
    %p27 = scmp.ge.s32.totalorder %s26, 4
    %s28 = scalar_select %p27, 0, %s26
    %s29 = ssub.s32 %s16, %s28
    %p30 = scmp.eq.s32.totalorder %s29, 0
    %s32 = sadd.s32 %s31, 1
    %s33 = scalar_select %p30, %s31, %s32
    %p36 = pneg %p30
    %p37 = scmp.eq.s32.totalorder %s9, 3
    %p38 = por %p36, %p37
    %p39 = scmp.ne.s32.totalorder %s31, %s34
    %p40 = scmp.eq.s32.totalorder %s9, 0
    %p41 = por %p39, %p40
    %p42 = scmp.ne.s32.totalorder %s31, %s34
    %p43 = scmp.eq.s32.totalorder %s14, 3
    %p44 = por %p42, %p43
    %p45 = scmp.ne.s32.totalorder %s34, %s35
    %p46 = scmp.eq.s32.totalorder %s14, 0
    %p47 = por %p45, %p46
    %p48 = scmp.ne.s32.totalorder %s34, %s35
    %p49 = scmp.eq.s32.totalorder %s15, 3
    %p50 = por %p48, %p49
    %p52 = scmp.ne.s32.totalorder %s35, %s51
    %p53 = scmp.eq.s32.totalorder %s15, 0
    %p54 = por %p52, %p53
    %s55 = ssub.s32 %s17, %s24
    %p56 = scmp.eq.s32.totalorder %s55, 0
    %s58 = sadd.s32 %s57, 1
    %s59 = scalar_select %p56, %s57, %s58
    %p62 = pneg %p56
    %p63 = scmp.eq.s32.totalorder %s9, 3
    %p64 = por %p62, %p63
    %p65 = scmp.ne.s32.totalorder %s57, %s60
    %p66 = scmp.eq.s32.totalorder %s9, 0
    %p67 = por %p65, %p66
    %p68 = scmp.ne.s32.totalorder %s57, %s60
    %p69 = scmp.eq.s32.totalorder %s14, 3
    %p70 = por %p68, %p69
    %p71 = scmp.ne.s32.totalorder %s60, %s61
    %p72 = scmp.eq.s32.totalorder %s14, 0
    %p73 = por %p71, %p72
    %p74 = scmp.ne.s32.totalorder %s60, %s61
    %p75 = scmp.eq.s32.totalorder %s15, 3
    %p76 = por %p74, %p75
    %p78 = scmp.ne.s32.totalorder %s61, %s77
    %p79 = scmp.eq.s32.totalorder %s15, 0
    %p80 = por %p78, %p79
    %s81 = ssub.s32 %s17, %s24
    %p82 = scmp.eq.s32.totalorder %s81, 0
    %s84 = sadd.s32 %s83, 1
    %s85 = scalar_select %p82, %s83, %s84
    %p88 = pneg %p82
    %p89 = scmp.eq.s32.totalorder %s9, 3
    %p90 = por %p88, %p89
    %p91 = scmp.ne.s32.totalorder %s83, %s86
    %p92 = scmp.eq.s32.totalorder %s9, 0
    %p93 = por %p91, %p92
    %p94 = scmp.ne.s32.totalorder %s83, %s86
    %p95 = scmp.eq.s32.totalorder %s14, 3
    %p96 = por %p94, %p95
    %p97 = scmp.ne.s32.totalorder %s86, %s87
    %p98 = scmp.eq.s32.totalorder %s14, 0
    %p99 = por %p97, %p98
    %p100 = scmp.ne.s32.totalorder %s86, %s87
    %p101 = scmp.eq.s32.totalorder %s15, 3
    %p102 = por %p100, %p101
    %p104 = scmp.ne.s32.totalorder %s87, %s103
    %p105 = scmp.eq.s32.totalorder %s15, 0
    %p106 = por %p104, %p105
    %s107 = ssub.s32 %s16, %s28
    %s108 = ssub.s32 %s17, %s24
    %s109 = sor.u32 %s107, %s108
    %p110 = scmp.eq.s32.totalorder %s109, 0
    %s112 = sadd.s32 %s111, 1
    %s113 = scalar_select %p110, %s111, %s112
    %p116 = pneg %p110
    %p117 = scmp.eq.s32.totalorder %s9, 3
    %p118 = por %p116, %p117
    %p119 = scmp.ne.s32.totalorder %s111, %s114
    %p120 = scmp.eq.s32.totalorder %s9, 0
    %p121 = por %p119, %p120
    %p122 = scmp.ne.s32.totalorder %s111, %s114
    %p123 = scmp.eq.s32.totalorder %s14, 3
    %p124 = por %p122, %p123
    %p125 = scmp.ne.s32.totalorder %s114, %s115
    %p126 = scmp.eq.s32.totalorder %s14, 0
    %p127 = por %p125, %p126
    %p128 = scmp.ne.s32.totalorder %s114, %s115
    %p129 = scmp.eq.s32.totalorder %s15, 3
    %p130 = por %p128, %p129
    %p132 = scmp.ne.s32.totalorder %s115, %s131
    %p133 = scmp.eq.s32.totalorder %s15, 0
    %p134 = por %p132, %p133
    %p135 = scmp.le.s32.totalorder 1, %s9
    %p136 = scmp.lt.s32.totalorder %s9, 5
    %p137 = pnand %p135, %p136
    %p138 = pneg %p137
    // Predicated region
    $region9: #{alexlike_forward.16} parent=5 // pred_check
      _
    $region10: #{alexlike_forward.16} parent=5 // pred_check_branch
      %140 = sbr.rel (%p137) target = $region12
    $region11: #{alexlike_forward.16} parent=5 // pred_region
      %s141 = ssub.s32 %s9, 1
      // Predicated region
      $region13: #{alexlike_forward.16} parent=11 // pred_check
        %p142 = pneg %p73
      $region14: #{alexlike_forward.16} parent=11 // pred_check_branch
        %144 = sbr.rel (%p142) target = $region16
      $region15: #{alexlike_forward.16} parent=11 // pred_region
        %p145 = scmp.lt.s32.totalorder %s19, 0
        %s146 = scalar_select %p145, %s19, 0
        %s147 = smul.addr %s146, 4
        %s148 = scalar_lea.vmem %s1, %s147
      $region16: #{alexlike_forward.16} parent=11 // pred_fallthru
        _
      // Predicated region
      $region17: #{alexlike_forward.16} parent=11 // pred_check
        %p149 = pneg %p99
      $region18: #{alexlike_forward.16} parent=11 // pred_check_branch
        %151 = sbr.rel (%p149) target = $region20
      $region19: #{alexlike_forward.16} parent=11 // pred_region
        %p152 = scmp.lt.s32.totalorder %s19, 0
        %s153 = scalar_select %p152, %s19, 0
        %s154 = scalar_lea.vmem %s2, %s153
      $region20: #{alexlike_forward.16} parent=11 // pred_fallthru
        _
    $region12: #{alexlike_forward.16} parent=5 // pred_fallthru
      _
    %p155 = scmp.lt.s32.totalorder %s9, 4
    // Predicated region
    $region21: #{alexlike_forward.16} parent=5 // pred_check
      %p156 = pneg %p155
    $region22: #{alexlike_forward.16} parent=5 // pred_check_branch
      %158 = sbr.rel (%p156) target = $region24
    $region23: #{alexlike_forward.16} parent=5 // pred_region
      // Predicated region
      $region25: #{alexlike_forward.16} parent=23 // pred_check
        %p159 = pneg %p41
      $region26: #{alexlike_forward.16} parent=23 // pred_check_branch
        %161 = sbr.rel (%p159) target = $region28
      $region27: #{alexlike_forward.16} parent=23 // pred_region
        %s162 = smul.u32 16, %s16
        %p163 = scmp.lt.s32.totalorder %s162, 63
        %s164 = scalar_select %p163, %s162, 63
        %s165 = smul.addr %s164, 3
        %s166 = smul.addr %s165, 4
        %s167 = scalar_lea.vmem %s0, %s166
        %s168 = smul.u32 16, %s16
      $region28: #{alexlike_forward.16} parent=23 // pred_fallthru
        _
    $region24: #{alexlike_forward.16} parent=5 // pred_fallthru
      _
    %p169 = scmp.le.s32.totalorder 1, %s9
    %p170 = scmp.lt.s32.totalorder %s9, 5
    %p171 = pnand %p169, %p170
    %p172 = pneg %p171
    // Predicated region
    $region29: #{alexlike_forward.16} parent=5 // pred_check
      _
    $region30: #{alexlike_forward.16} parent=5 // pred_check_branch
      %174 = sbr.rel (%p171) target = $region32
    $region31: #{alexlike_forward.16} parent=5 // pred_region
      %s175 = ssub.s32 %s9, 1
      %s176 = smul.u32 16, %s18
      %p177 = scmp.lt.s32.totalorder %s176, 63
      %s178 = scalar_select %p177, %s176, 63
      %s179 = smul.addr %s178, 3
      %s180 = smul.addr %s179, 4
      %s181 = scalar_lea.vmem %s0, %s180
      %p182 = pneg %p47
      %p183 = pneg %p44
      %p184 = scmp.lt.s32.totalorder %s19, 0
      %s185 = scalar_select %p184, %s19, 0
      %s186 = smul.addr %s185, 4
      %s187 = scalar_lea.vmem %s1, %s186
      %p188 = pneg %p73
      %p189 = pneg %p70
      %p190 = scmp.lt.s32.totalorder %s19, 0
      %s191 = scalar_select %p190, %s19, 0
      %s192 = scalar_lea.vmem %s2, %s191
      %p193 = pneg %p99
      %p194 = pneg %p96
      %p195 = pneg %p127
      %p196 = pneg %p124
      %s197 = smul.u32 16, %s18
      %p198 = scmp.lt.s32.totalorder %s197, 63
      %s199 = scalar_select %p198, %s197, 63
      %p200 = scmp.lt.s32.totalorder %s19, 0
      %s201 = scalar_select %p200, %s19, 0
      %s202 = sadd.s32 %s201, %s199
      %s203 = smul.addr %s202, 8
      %s204 = scalar_lea.vmem %s3, %s203
      %s205 = smul.u32 16, %s18
      %p206 = scmp.lt.s32.totalorder %s205, 63
      %s207 = scalar_select %p206, %s205, 63
      %s208 = smul.addr %s207, 3
      %s209 = smul.addr %s208, 4
      %s210 = scalar_lea.vmem %s0, %s209
      %s211 = smul.u32 16, %s18
      %p212 = scmp.lt.s32.totalorder %s19, 0
      %s213 = scalar_select %p212, %s19, 0
      %s214 = smul.addr %s213, 4
      %s215 = scalar_lea.vmem %s1, %s214
      %p216 = scmp.lt.s32.totalorder %s19, 0
      %s217 = scalar_select %p216, %s19, 0
      %s218 = scalar_lea.vmem %s2, %s217
      %s219 = smul.u32 16, %s18
      %p220 = scmp.lt.s32.totalorder %s219, 63
      %s221 = scalar_select %p220, %s219, 63
      %p222 = scmp.lt.s32.totalorder %s19, 0
      %s223 = scalar_select %p222, %s19, 0
      %s224 = sadd.s32 %s223, %s221
      %s225 = smul.addr %s224, 8
      %s226 = scalar_lea.vmem %s3, %s225
      %s227 = smul.u32 16, %s18
      %v228 = vld [vmem:[%s210] sm:$0xff]
      %v229 = vld [vmem:[%s210 + $0x8] sm:$0xf]
      %v230 = vld [vmem:[%s210 + $0xc] sm:$0xff]
      %v231 = vld [vmem:[%s210 + $0x14] sm:$0xf]
      %v232 = vld [vmem:[%s210 + $0x18] sm:$0xff]
      %v233 = vld [vmem:[%s210 + $0x20] sm:$0xf]
      %v234 = vld [vmem:[%s210 + $0x24] sm:$0xff]
      %v235 = vld [vmem:[%s210 + $0x2c] sm:$0xf]
      %v236 = vld [vmem:[%s210 + $0x30] sm:$0xff]
      %v237 = vld [vmem:[%s210 + $0x38] sm:$0xf]
      %v238 = vld [vmem:[%s210 + $0x3c] sm:$0xff]
      %v239 = vld [vmem:[%s210 + $0x44] sm:$0xf]
      %v240 = vld [vmem:[%s210 + $0x48] sm:$0xff]
      %v241 = vld [vmem:[%s210 + $0x50] sm:$0xf]
      %v242 = vld [vmem:[%s210 + $0x54] sm:$0xff]
      %v243 = vld [vmem:[%s210 + $0x5c] sm:$0xf]
      %v244 = vld [vmem:[%s210 + $0x60] sm:$0xff]
      %v245 = vld [vmem:[%s210 + $0x68] sm:$0xf]
      %v246 = vld [vmem:[%s210 + $0x6c] sm:$0xff]
      %v247 = vld [vmem:[%s210 + $0x74] sm:$0xf]
      %v248 = vld [vmem:[%s210 + $0x78] sm:$0xff]
      %v249 = vld [vmem:[%s210 + $0x80] sm:$0xf]
      %v250 = vld [vmem:[%s210 + $0x84] sm:$0xff]
      %v251 = vld [vmem:[%s210 + $0x8c] sm:$0xf]
      %v252 = vld [vmem:[%s210 + $0x90] sm:$0xff]
      %v253 = vld [vmem:[%s210 + $0x98] sm:$0xf]
      %v254 = vld [vmem:[%s210 + $0x9c] sm:$0xff]
      %v255 = vld [vmem:[%s210 + $0xa4] sm:$0xf]
      %v256 = vld [vmem:[%s210 + $0xa8] sm:$0xff]
      %v257 = vld [vmem:[%s210 + $0xb0] sm:$0xf]
      %v258 = vld [vmem:[%s210 + $0xb4] sm:$0xff]
      %v259 = vld [vmem:[%s210 + $0xbc] sm:$0xf]
      %v260 = vld [vmem:[%s215] sm:$0xf]
      %v261 = vld [vmem:[%s215 + $0x4] sm:$0xf]
      %v262 = vld [vmem:[%s215 + $0x8] sm:$0xf]
      %v263 = vld [vmem:[%s215 + $0xc] sm:$0xf]
      %v264 = vld [vmem:[%s215 + $0x10] sm:$0xf]
      %v265 = vld [vmem:[%s215 + $0x14] sm:$0xf]
      %v266 = vld [vmem:[%s215 + $0x18] sm:$0xf]
      %v267 = vld [vmem:[%s215 + $0x1c] sm:$0xf]
      %v268 = vld [vmem:[%s215 + $0x20] sm:$0xf]
      %v269 = vld [vmem:[%s215 + $0x24] sm:$0xf]
      %v270 = vld [vmem:[%s215 + $0x28] sm:$0xf]
      %v271 = vld [vmem:[%s215 + $0x2c] sm:$0xf]
      %v272 = vld [vmem:[%s215 + $0x30] sm:$0xf]
      %v273 = vld [vmem:[%s215 + $0x34] sm:$0xf]
      %v274 = vld [vmem:[%s215 + $0x38] sm:$0xf]
      %v275 = vld [vmem:[%s215 + $0x3c] sm:$0xf]
      %v276 = vld [vmem:[%s215 + $0x40] sm:$0xf]
      %v277 = vld [vmem:[%s215 + $0x44] sm:$0xf]
      %v278 = vld [vmem:[%s215 + $0x48] sm:$0xf]
      %v279 = vld [vmem:[%s215 + $0x4c] sm:$0xf]
      %v280 = vld [vmem:[%s215 + $0x50] sm:$0xf]
      %v281 = vld [vmem:[%s215 + $0x54] sm:$0xf]
      %v282 = vld [vmem:[%s215 + $0x58] sm:$0xf]
      %v283 = vld [vmem:[%s215 + $0x5c] sm:$0xf]
      %v284 = vld [vmem:[%s215 + $0x60] sm:$0xf]
      %v285 = vld [vmem:[%s215 + $0x64] sm:$0xf]
      %v286 = vld [vmem:[%s215 + $0x68] sm:$0xf]
      %v287 = vld [vmem:[%s215 + $0x6c] sm:$0xf]
      %v288 = vld [vmem:[%s215 + $0x70] sm:$0xf]
      %v289 = vld [vmem:[%s215 + $0x74] sm:$0xf]
      %v290 = vld [vmem:[%s215 + $0x78] sm:$0xf]
      %v291 = vld [vmem:[%s215 + $0x7c] sm:$0xf]
      %v292 = vld [vmem:[%s215 + $0x80] sm:$0xf]
      %v293 = vld [vmem:[%s215 + $0x84] sm:$0xf]
      %v294 = vld [vmem:[%s215 + $0x88] sm:$0xf]
      %v295 = vld [vmem:[%s215 + $0x8c] sm:$0xf]
      %v296 = vld [vmem:[%s215 + $0x90] sm:$0xf]
      %v297 = vld [vmem:[%s215 + $0x94] sm:$0xf]
      %v298 = vld [vmem:[%s215 + $0x98] sm:$0xf]
      %v299 = vld [vmem:[%s215 + $0x9c] sm:$0xf]
      %v300 = vld [vmem:[%s215 + $0xa0] sm:$0xf]
      %v301 = vld [vmem:[%s215 + $0xa4] sm:$0xf]
      %v302 = vld [vmem:[%s215 + $0xa8] sm:$0xf]
      %v303 = vld [vmem:[%s215 + $0xac] sm:$0xf]
      %v304 = vld [vmem:[%s215 + $0xb0] sm:$0xf]
      %v305 = vld [vmem:[%s215 + $0xb4] sm:$0xf]
      %v306 = vld [vmem:[%s215 + $0xb8] sm:$0xf]
      %v307 = vld [vmem:[%s215 + $0xbc] sm:$0xf]
      %v308 = vld [vmem:[%s218] sm:$0x1]
      %v310 = vperm.slane %v308, 0
      %v344 = vunpack.c.l.b16 %v228
      %v345 = vunpack.c.h.b16 %v228
      %v346 = vunpack.c.l.b16 %v229
      %v347 = vunpack.c.l.b16 %v230
      %v348 = vunpack.c.h.b16 %v230
      %v349 = vunpack.c.l.b16 %v231
      %v350 = vunpack.c.l.b16 %v232
      %v351 = vunpack.c.h.b16 %v232
      %v352 = vunpack.c.l.b16 %v233
      %v353 = vunpack.c.l.b16 %v234
      %v354 = vunpack.c.h.b16 %v234
      %v355 = vunpack.c.l.b16 %v235
      %v356 = vunpack.c.l.b16 %v236
      %v357 = vunpack.c.h.b16 %v236
      %v358 = vunpack.c.l.b16 %v237
      %v359 = vunpack.c.l.b16 %v238
      %v360 = vunpack.c.h.b16 %v238
      %v361 = vunpack.c.l.b16 %v239
      %v362 = vunpack.c.l.b16 %v240
      %v363 = vunpack.c.h.b16 %v240
      %v364 = vunpack.c.l.b16 %v241
      %v365 = vunpack.c.l.b16 %v242
      %v366 = vunpack.c.h.b16 %v242
      %v367 = vunpack.c.l.b16 %v243
      %v368 = vunpack.c.l.b16 %v244
      %v369 = vunpack.c.h.b16 %v244
      %v370 = vunpack.c.l.b16 %v245
      %v371 = vunpack.c.l.b16 %v246
      %v372 = vunpack.c.h.b16 %v246
      %v373 = vunpack.c.l.b16 %v247
      %v374 = vunpack.c.l.b16 %v248
      %v375 = vunpack.c.h.b16 %v248
      %v376 = vunpack.c.l.b16 %v249
      %v377 = vunpack.c.l.b16 %v250
      %v378 = vunpack.c.h.b16 %v250
      %v379 = vunpack.c.l.b16 %v251
      %v380 = vunpack.c.l.b16 %v252
      %v381 = vunpack.c.h.b16 %v252
      %v382 = vunpack.c.l.b16 %v253
      %v383 = vunpack.c.l.b16 %v254
      %v384 = vunpack.c.h.b16 %v254
      %v385 = vunpack.c.l.b16 %v255
      %v386 = vunpack.c.l.b16 %v256
      %v387 = vunpack.c.h.b16 %v256
      %v388 = vunpack.c.l.b16 %v257
      %v389 = vunpack.c.l.b16 %v258
      %v390 = vunpack.c.h.b16 %v258
      %v391 = vunpack.c.l.b16 %v259
      %v392 = vpack.c.b16 %v347, %v344
      %v393 = vpack.c.b16 %v348, %v345
      %v394 = vpack.c.b16 %v349, %v346
      %v395 = vpack.c.b16 %v353, %v350
      %v396 = vpack.c.b16 %v354, %v351
      %v397 = vpack.c.b16 %v355, %v352
      %v398 = vpack.c.b16 %v359, %v356
      %v399 = vpack.c.b16 %v360, %v357
      %v400 = vpack.c.b16 %v361, %v358
      %v401 = vpack.c.b16 %v365, %v362
      %v402 = vpack.c.b16 %v366, %v363
      %v403 = vpack.c.b16 %v367, %v364
      %v404 = vpack.c.b16 %v371, %v368
      %v405 = vpack.c.b16 %v372, %v369
      %v406 = vpack.c.b16 %v373, %v370
      %v407 = vpack.c.b16 %v377, %v374
      %v408 = vpack.c.b16 %v378, %v375
      %v409 = vpack.c.b16 %v379, %v376
      %v410 = vpack.c.b16 %v383, %v380
      %v411 = vpack.c.b16 %v384, %v381
      %v412 = vpack.c.b16 %v385, %v382
      %v413 = vpack.c.b16 %v389, %v386
      %v414 = vpack.c.b16 %v390, %v387
      %v415 = vpack.c.b16 %v391, %v388
      %v488 = vunpack.c.l.b16 %v260
      %v489 = vunpack.c.l.b16 %v261
      %v490 = vunpack.c.l.b16 %v262
      %v491 = vunpack.c.l.b16 %v263
      %v492 = vunpack.c.l.b16 %v264
      %v493 = vunpack.c.l.b16 %v265
      %v494 = vunpack.c.l.b16 %v266
      %v495 = vunpack.c.l.b16 %v267
      %v496 = vunpack.c.l.b16 %v268
      %v497 = vunpack.c.l.b16 %v269
      %v498 = vunpack.c.l.b16 %v270
      %v499 = vunpack.c.l.b16 %v271
      %v500 = vunpack.c.l.b16 %v272
      %v501 = vunpack.c.l.b16 %v273
      %v502 = vunpack.c.l.b16 %v274
      %v503 = vunpack.c.l.b16 %v275
      %v504 = vunpack.c.l.b16 %v276
      %v505 = vunpack.c.l.b16 %v277
      %v506 = vunpack.c.l.b16 %v278
      %v507 = vunpack.c.l.b16 %v279
      %v508 = vunpack.c.l.b16 %v280
      %v509 = vunpack.c.l.b16 %v281
      %v510 = vunpack.c.l.b16 %v282
      %v511 = vunpack.c.l.b16 %v283
      %v512 = vunpack.c.l.b16 %v284
      %v513 = vunpack.c.l.b16 %v285
      %v514 = vunpack.c.l.b16 %v286
      %v515 = vunpack.c.l.b16 %v287
      %v516 = vunpack.c.l.b16 %v288
      %v517 = vunpack.c.l.b16 %v289
      %v518 = vunpack.c.l.b16 %v290
      %v519 = vunpack.c.l.b16 %v291
      %v520 = vunpack.c.l.b16 %v292
      %v521 = vunpack.c.l.b16 %v293
      %v522 = vunpack.c.l.b16 %v294
      %v523 = vunpack.c.l.b16 %v295
      %v524 = vunpack.c.l.b16 %v296
      %v525 = vunpack.c.l.b16 %v297
      %v526 = vunpack.c.l.b16 %v298
      %v527 = vunpack.c.l.b16 %v299
      %v528 = vunpack.c.l.b16 %v300
      %v529 = vunpack.c.l.b16 %v301
      %v530 = vunpack.c.l.b16 %v302
      %v531 = vunpack.c.l.b16 %v303
      %v532 = vunpack.c.l.b16 %v304
      %v533 = vunpack.c.l.b16 %v305
      %v534 = vunpack.c.l.b16 %v306
      %v535 = vunpack.c.l.b16 %v307
      %v536 = vpack.c.b16 %v489, %v488
      %v537 = vpack.c.b16 %v491, %v490
      %v538 = vpack.c.b16 %v493, %v492
      %v539 = vpack.c.b16 %v495, %v494
      %v540 = vpack.c.b16 %v497, %v496
      %v541 = vpack.c.b16 %v499, %v498
      %v542 = vpack.c.b16 %v501, %v500
      %v543 = vpack.c.b16 %v503, %v502
      %v544 = vpack.c.b16 %v505, %v504
      %v545 = vpack.c.b16 %v507, %v506
      %v546 = vpack.c.b16 %v509, %v508
      %v547 = vpack.c.b16 %v511, %v510
      %v548 = vpack.c.b16 %v513, %v512
      %v549 = vpack.c.b16 %v515, %v514
      %v550 = vpack.c.b16 %v517, %v516
      %v551 = vpack.c.b16 %v519, %v518
      %v552 = vpack.c.b16 %v521, %v520
      %v553 = vpack.c.b16 %v523, %v522
      %v554 = vpack.c.b16 %v525, %v524
      %v555 = vpack.c.b16 %v527, %v526
      %v556 = vpack.c.b16 %v529, %v528
      %v557 = vpack.c.b16 %v531, %v530
      %v558 = vpack.c.b16 %v533, %v532
      %v559 = vpack.c.b16 %v535, %v534
      %584 = vmatpush.bf16.msra.mxu0 %v543
      %585 = vmatpush.bf16.msra.mxu0 %v542
      %586 = vmatpush.bf16.msra.mxu0 %v541
      %587 = vmatpush.bf16.msra.mxu0 %v540
      %588 = vmatpush.bf16.msra.mxu0 %v539
      %589 = vmatpush.bf16.msra.mxu0 %v538
      %590 = vmatpush.bf16.msra.mxu0 %v537
      %591 = vmatpush.bf16.msra.mxu0 %v536
      %592 = vmatmul.bf16.gmra.mxu0 %v392
      %v593 = vpop.f32.mrf.mxu0
      %v594 = vadd.f32 %v310, %v593
      %v595 = vpop.f32.mrf.mxu0
      %v596 = vadd.f32 %v310, %v595
      %597 = vmatmul.bf16.gmra.mxu0 %v395
      %v598 = vpop.f32.mrf.mxu0
      %v599 = vadd.f32 %v310, %v598
      %v600 = vpop.f32.mrf.mxu0
      %v601 = vadd.f32 %v310, %v600
      %602 = vmatmul.bf16.gmra.mxu0 %v398
      %v603 = vpop.f32.mrf.mxu0
      %v604 = vadd.f32 %v310, %v603
      %v605 = vpop.f32.mrf.mxu0
      %v606 = vadd.f32 %v310, %v605
      %607 = vmatmul.bf16.gmra.mxu0 %v401
      %v608 = vpop.f32.mrf.mxu0
      %v609 = vadd.f32 %v310, %v608
      %v610 = vpop.f32.mrf.mxu0
      %v611 = vadd.f32 %v310, %v610
      %612 = vmatmul.bf16.gmra.mxu0 %v404
      %v613 = vpop.f32.mrf.mxu0
      %v614 = vadd.f32 %v310, %v613
      %v615 = vpop.f32.mrf.mxu0
      %v616 = vadd.f32 %v310, %v615
      %617 = vmatmul.bf16.gmra.mxu0 %v407
      %v618 = vpop.f32.mrf.mxu0
      %v619 = vadd.f32 %v310, %v618
      %v620 = vpop.f32.mrf.mxu0
      %v621 = vadd.f32 %v310, %v620
      %622 = vmatmul.bf16.gmra.mxu0 %v410
      %v623 = vpop.f32.mrf.mxu0
      %v624 = vadd.f32 %v310, %v623
      %v625 = vpop.f32.mrf.mxu0
      %v626 = vadd.f32 %v310, %v625
      %627 = vmatmul.bf16.gmra.mxu0 %v413
      %v628 = vpop.f32.mrf.mxu0
      %v629 = vadd.f32 %v310, %v628
      %v630 = vpop.f32.mrf.mxu0
      %v631 = vadd.f32 %v310, %v630
      %632 = vdwg.mxu0
      %633 = vmatpush.bf16.msra.mxu0 %v551
      %634 = vmatpush.bf16.msra.mxu0 %v550
      %635 = vmatpush.bf16.msra.mxu0 %v549
      %636 = vmatpush.bf16.msra.mxu0 %v548
      %637 = vmatpush.bf16.msra.mxu0 %v547
      %638 = vmatpush.bf16.msra.mxu0 %v546
      %639 = vmatpush.bf16.msra.mxu0 %v545
      %640 = vmatpush.bf16.msra.mxu0 %v544
      %641 = vmatmul.bf16.gmra.mxu0 %v393
      %v642 = vpop.f32.mrf.mxu0
      %v643 = vadd.f32 %v594, %v642
      %v644 = vpop.f32.mrf.mxu0
      %v645 = vadd.f32 %v596, %v644
      %646 = vmatmul.bf16.gmra.mxu0 %v396
      %v647 = vpop.f32.mrf.mxu0
      %v648 = vadd.f32 %v599, %v647
      %v649 = vpop.f32.mrf.mxu0
      %v650 = vadd.f32 %v601, %v649
      %651 = vmatmul.bf16.gmra.mxu0 %v399
      %v652 = vpop.f32.mrf.mxu0
      %v653 = vadd.f32 %v604, %v652
      %v654 = vpop.f32.mrf.mxu0
      %v655 = vadd.f32 %v606, %v654
      %656 = vmatmul.bf16.gmra.mxu0 %v402
      %v657 = vpop.f32.mrf.mxu0
      %v658 = vadd.f32 %v609, %v657
      %v659 = vpop.f32.mrf.mxu0
      %v660 = vadd.f32 %v611, %v659
      %661 = vmatmul.bf16.gmra.mxu0 %v405
      %v662 = vpop.f32.mrf.mxu0
      %v663 = vadd.f32 %v614, %v662
      %v664 = vpop.f32.mrf.mxu0
      %v665 = vadd.f32 %v616, %v664
      %666 = vmatmul.bf16.gmra.mxu0 %v408
      %v667 = vpop.f32.mrf.mxu0
      %v668 = vadd.f32 %v619, %v667
      %v669 = vpop.f32.mrf.mxu0
      %v670 = vadd.f32 %v621, %v669
      %671 = vmatmul.bf16.gmra.mxu0 %v411
      %v672 = vpop.f32.mrf.mxu0
      %v673 = vadd.f32 %v624, %v672
      %v674 = vpop.f32.mrf.mxu0
      %v675 = vadd.f32 %v626, %v674
      %676 = vmatmul.bf16.gmra.mxu0 %v414
      %v677 = vpop.f32.mrf.mxu0
      %v678 = vadd.f32 %v629, %v677
      %v679 = vpop.f32.mrf.mxu0
      %v680 = vadd.f32 %v631, %v679
      %681 = vdwg.mxu0
      %682 = vmatpush.bf16.msra.mxu0 %v559
      %683 = vmatpush.bf16.msra.mxu0 %v558
      %684 = vmatpush.bf16.msra.mxu0 %v557
      %685 = vmatpush.bf16.msra.mxu0 %v556
      %686 = vmatpush.bf16.msra.mxu0 %v555
      %687 = vmatpush.bf16.msra.mxu0 %v554
      %688 = vmatpush.bf16.msra.mxu0 %v553
      %689 = vmatpush.bf16.msra.mxu0 %v552
      %690 = vmatmul.bf16.gmra.mxu0 %v394
      %v691 = vpop.f32.mrf.mxu0
      %v692 = vadd.f32 %v643, %v691
      %v693 = vpop.f32.mrf.mxu0
      %v694 = vadd.f32 %v645, %v693
      %695 = vmatmul.bf16.gmra.mxu0 %v397
      %v696 = vpop.f32.mrf.mxu0
      %v697 = vadd.f32 %v648, %v696
      %v698 = vpop.f32.mrf.mxu0
      %v699 = vadd.f32 %v650, %v698
      %700 = vmatmul.bf16.gmra.mxu0 %v400
      %v701 = vpop.f32.mrf.mxu0
      %v702 = vadd.f32 %v653, %v701
      %v703 = vpop.f32.mrf.mxu0
      %v704 = vadd.f32 %v655, %v703
      %705 = vmatmul.bf16.gmra.mxu0 %v403
      %v706 = vpop.f32.mrf.mxu0
      %v707 = vadd.f32 %v658, %v706
      %v708 = vpop.f32.mrf.mxu0
      %v709 = vadd.f32 %v660, %v708
      %710 = vmatmul.bf16.gmra.mxu0 %v406
      %v711 = vpop.f32.mrf.mxu0
      %v712 = vadd.f32 %v663, %v711
      %v713 = vpop.f32.mrf.mxu0
      %v714 = vadd.f32 %v665, %v713
      %715 = vmatmul.bf16.gmra.mxu0 %v409
      %v716 = vpop.f32.mrf.mxu0
      %v717 = vadd.f32 %v668, %v716
      %v718 = vpop.f32.mrf.mxu0
      %v719 = vadd.f32 %v670, %v718
      %720 = vmatmul.bf16.gmra.mxu0 %v412
      %v721 = vpop.f32.mrf.mxu0
      %v722 = vadd.f32 %v673, %v721
      %v723 = vpop.f32.mrf.mxu0
      %v724 = vadd.f32 %v675, %v723
      %725 = vmatmul.bf16.gmra.mxu0 %v415
      %v726 = vpop.f32.mrf.mxu0
      %v727 = vadd.f32 %v678, %v726
      %v728 = vpop.f32.mrf.mxu0
      %v729 = vadd.f32 %v680, %v728
      %730 = vdwg.mxu0
      %731 = vst [vmem:[%s226] sm:$0xff] %v692
      %732 = vst [vmem:[%s226 + $0x8] sm:$0xff] %v694
      %733 = vst [vmem:[%s226 + $0x10] sm:$0xff] %v697
      %734 = vst [vmem:[%s226 + $0x18] sm:$0xff] %v699
      %735 = vst [vmem:[%s226 + $0x20] sm:$0xff] %v702
      %736 = vst [vmem:[%s226 + $0x28] sm:$0xff] %v704
      %737 = vst [vmem:[%s226 + $0x30] sm:$0xff] %v707
      %738 = vst [vmem:[%s226 + $0x38] sm:$0xff] %v709
      %739 = vst [vmem:[%s226 + $0x40] sm:$0xff] %v712
      %740 = vst [vmem:[%s226 + $0x48] sm:$0xff] %v714
      %741 = vst [vmem:[%s226 + $0x50] sm:$0xff] %v717
      %742 = vst [vmem:[%s226 + $0x58] sm:$0xff] %v719
      %743 = vst [vmem:[%s226 + $0x60] sm:$0xff] %v722
      %744 = vst [vmem:[%s226 + $0x68] sm:$0xff] %v724
      %745 = vst [vmem:[%s226 + $0x70] sm:$0xff] %v727
      %746 = vst [vmem:[%s226 + $0x78] sm:$0xff] %v729
      %s747 = smul.u32 16, %s18
      %p748 = scmp.lt.s32.totalorder %s747, 63
      %s749 = scalar_select %p748, %s747, 63
      %p750 = scmp.lt.s32.totalorder %s19, 0
      %s751 = scalar_select %p750, %s19, 0
      %s752 = sadd.s32 %s751, %s749
      %s753 = smul.addr %s752, 8
      %s754 = scalar_lea.vmem %s3, %s753
      // Predicated region
      $region33: #{alexlike_forward.16} parent=31 // pred_check
        %p755 = pneg %p124
      $region34: #{alexlike_forward.16} parent=31 // pred_check_branch
        %757 = sbr.rel (%p755) target = $region36
      $region35: #{alexlike_forward.16} parent=31 // pred_region
        %s758 = smul.u32 16, %s18
      $region36: #{alexlike_forward.16} parent=31 // pred_fallthru
        _
    $region32: #{alexlike_forward.16} parent=5 // pred_fallthru
      _
    %p759 = scmp.le.s32.totalorder 2, %s9
    // Predicated region
    $region37: #{alexlike_forward.16} parent=5 // pred_check
      %p760 = pneg %p759
    $region38: #{alexlike_forward.16} parent=5 // pred_check_branch
      %762 = sbr.rel (%p760) target = $region40
    $region39: #{alexlike_forward.16} parent=5 // pred_region
      %s763 = ssub.s32 %s9, 2
      // Predicated region
      $region41: #{alexlike_forward.16} parent=39 // pred_check
        %p764 = pneg %p130
      $region42: #{alexlike_forward.16} parent=39 // pred_check_branch
        %766 = sbr.rel (%p764) target = $region44
      $region43: #{alexlike_forward.16} parent=39 // pred_region
        %s767 = smul.u32 16, %s20
        %p768 = scmp.lt.s32.totalorder %s767, 63
        %s769 = scalar_select %p768, %s767, 63
        %p770 = scmp.lt.s32.totalorder %s21, 0
        %s771 = scalar_select %p770, %s21, 0
        %s772 = sadd.s32 %s771, %s769
        %s773 = smul.addr %s772, 8
        %s774 = scalar_lea.vmem %s3, %s773
      $region44: #{alexlike_forward.16} parent=39 // pred_fallthru
        _
    $region40: #{alexlike_forward.16} parent=5 // pred_fallthru
      _
  $region6: #{alexlike_forward.16} parent=0 // loop_footer
    %s13 = sadd.s32 1, %s9
  $region7: #{alexlike_forward.16} parent=0 // loop_footer_branch
    %8 = sbr.rel target = $region3
  $region8: #{alexlike_forward.16} parent=0 // loop_exit
    _

// kernel: alexlike_forward.17
$region0: #{alexlike_forward.17}
  #allocation0 [shape = 'u32[]', space=smem, size = 0x4, offset = 0x4, fixed_abs, tag = 'smem constant byte address 0x4 - core index']
  #allocation1 [shape = 'u32[72,128]{1,0:T(1,128)}', space=vmem, size = 0x9000, scoped, tag = 'internal scratch']
  %s0 = inlined_call_operand.vmem [shape: f32[3,104,128], index: 0, kind: input, shape index: {}]
  %s1 = inlined_call_operand.vmem [shape: f32[128,128], index: 1, kind: input, shape index: {}]
  %s2 = inlined_call_operand.vmem [shape: f32[1,128], index: 2, kind: input, shape index: {}]
  %s3 = inlined_call_operand.vmem [shape: f32[1,128], index: 3, kind: input, shape index: {}]
  %s4 = inlined_call_operand.vmem [shape: f32[104,128], index: 4, kind: output, shape index: {}]
  %s5 = sld [smem:[#allocation0]]
  $region26: #{alexlike_forward.17} parent=0
    _
  %s7 = ssub.s32 1, %s5
  %s8 = scalar_select 0, %s7, %s5
  // Predicated region
  $region2: #{alexlike_forward.17} parent=0 // pred_check
    _
  $region3: #{alexlike_forward.17} parent=0 // pred_check_branch
    %10 = sbr.rel (0) target = $region5
  $region4: #{alexlike_forward.17} parent=0 // pred_region
    _
  $region5: #{alexlike_forward.17} parent=0 // pred_fallthru
    _
  // Predicated region
  $region6: #{alexlike_forward.17} parent=0 // pred_check
    _
  $region7: #{alexlike_forward.17} parent=0 // pred_check_branch
    %12 = sbr.rel (0) target = $region9
  $region8: #{alexlike_forward.17} parent=0 // pred_region
    _
  $region9: #{alexlike_forward.17} parent=0 // pred_fallthru
    _
  // Predicated region
  $region10: #{alexlike_forward.17} parent=0 // pred_check
    _
  $region11: #{alexlike_forward.17} parent=0 // pred_check_branch
    %14 = sbr.rel (0) target = $region13
  $region12: #{alexlike_forward.17} parent=0 // pred_region
    _
  $region13: #{alexlike_forward.17} parent=0 // pred_fallthru
    _
  // Predicated region
  $region14: #{alexlike_forward.17} parent=0 // pred_check
    _
  $region15: #{alexlike_forward.17} parent=0 // pred_check_branch
    %16 = sbr.rel (0) target = $region17
  $region16: #{alexlike_forward.17} parent=0 // pred_region
    _
  $region17: #{alexlike_forward.17} parent=0 // pred_fallthru
    _
  %v17 = vld [vmem:[%s0] sm:$0xff]
  %v18 = vld [vmem:[%s0 + $0x8] sm:$0xff]
  %v19 = vld [vmem:[%s0 + $0x10] sm:$0xff]
  %v20 = vld [vmem:[%s0 + $0x18] sm:$0xff]
  %v21 = vld [vmem:[%s0 + $0x20] sm:$0xff]
  %v22 = vld [vmem:[%s0 + $0x28] sm:$0xff]
  %v23 = vld [vmem:[%s0 + $0x30] sm:$0xff]
  %v24 = vld [vmem:[%s0 + $0x38] sm:$0xff]
  %v25 = vld [vmem:[%s0 + $0x40] sm:$0xff]
  %v26 = vld [vmem:[%s0 + $0x48] sm:$0xff]
  %v27 = vld [vmem:[%s0 + $0x50] sm:$0xff]
  %v28 = vld [vmem:[%s0 + $0x58] sm:$0xff]
  %v29 = vld [vmem:[%s0 + $0x60] sm:$0xff]
  %s30 = scalar_lea.vmem %s0, 104
  %v31 = vld [vmem:[%s30] sm:$0xff]
  %v32 = vld [vmem:[%s30 + $0x8] sm:$0xff]
  %v33 = vld [vmem:[%s30 + $0x10] sm:$0xff]
  %v34 = vld [vmem:[%s30 + $0x18] sm:$0xff]
  %v35 = vld [vmem:[%s30 + $0x20] sm:$0xff]
  %v36 = vld [vmem:[%s30 + $0x28] sm:$0xff]
  %v37 = vld [vmem:[%s30 + $0x30] sm:$0xff]
  %v38 = vld [vmem:[%s30 + $0x38] sm:$0xff]
  %v39 = vld [vmem:[%s30 + $0x40] sm:$0xff]
  %v40 = vld [vmem:[%s30 + $0x48] sm:$0xff]
  %v41 = vld [vmem:[%s30 + $0x50] sm:$0xff]
  %v42 = vld [vmem:[%s30 + $0x58] sm:$0xff]
  %v43 = vld [vmem:[%s30 + $0x60] sm:$0xff]
  %v44 = vmax.f32 %v17, %v31
  %v45 = vmax.f32 %v18, %v32
  %v46 = vmax.f32 %v19, %v33
  %v47 = vmax.f32 %v20, %v34
  %v48 = vmax.f32 %v21, %v35
  %v49 = vmax.f32 %v22, %v36
  %v50 = vmax.f32 %v23, %v37
  %v51 = vmax.f32 %v24, %v38
  %v52 = vmax.f32 %v25, %v39
  %v53 = vmax.f32 %v26, %v40
  %v54 = vmax.f32 %v27, %v41
  %v55 = vmax.f32 %v28, %v42
  %v56 = vmax.f32 %v29, %v43
  %s57 = scalar_lea.vmem %s0, 208
  %v58 = vld [vmem:[%s57] sm:$0xff]
  %v59 = vld [vmem:[%s57 + $0x8] sm:$0xff]
  %v60 = vld [vmem:[%s57 + $0x10] sm:$0xff]
  %v61 = vld [vmem:[%s57 + $0x18] sm:$0xff]
  %v62 = vld [vmem:[%s57 + $0x20] sm:$0xff]
  %v63 = vld [vmem:[%s57 + $0x28] sm:$0xff]
  %v64 = vld [vmem:[%s57 + $0x30] sm:$0xff]
  %v65 = vld [vmem:[%s57 + $0x38] sm:$0xff]
  %v66 = vld [vmem:[%s57 + $0x40] sm:$0xff]
  %v67 = vld [vmem:[%s57 + $0x48] sm:$0xff]
  %v68 = vld [vmem:[%s57 + $0x50] sm:$0xff]
  %v69 = vld [vmem:[%s57 + $0x58] sm:$0xff]
  %v70 = vld [vmem:[%s57 + $0x60] sm:$0xff]
  %v71 = vmax.f32 %v44, %v58
  %v72 = vmax.f32 %v45, %v59
  %v73 = vmax.f32 %v46, %v60
  %v74 = vmax.f32 %v47, %v61
  %v75 = vmax.f32 %v48, %v62
  %v76 = vmax.f32 %v49, %v63
  %v77 = vmax.f32 %v50, %v64
  %v78 = vmax.f32 %v51, %v65
  %v79 = vmax.f32 %v52, %v66
  %v80 = vmax.f32 %v53, %v67
  %v81 = vmax.f32 %v54, %v68
  %v82 = vmax.f32 %v55, %v69
  %v83 = vmax.f32 %v56, %v70
  %v84 = vmax.f32 %v71, 0.0
  %v85 = vmax.f32 %v72, 0.0
  %v86 = vmax.f32 %v73, 0.0
  %v87 = vmax.f32 %v74, 0.0
  %v88 = vmax.f32 %v75, 0.0
  %v89 = vmax.f32 %v76, 0.0
  %v90 = vmax.f32 %v77, 0.0
  %v91 = vmax.f32 %v78, 0.0
  %v92 = vmax.f32 %v79, 0.0
  %v93 = vmax.f32 %v80, 0.0
  %v94 = vmax.f32 %v81, 0.0
  %v95 = vmax.f32 %v82, 0.0
  %v96 = vmax.f32 %v83, 0.0
  %v97 = vmul.f32 %v84, %v84
  %v98 = vmul.f32 %v85, %v85
  %v99 = vmul.f32 %v86, %v86
  %v100 = vmul.f32 %v87, %v87
  %v101 = vmul.f32 %v88, %v88
  %v102 = vmul.f32 %v89, %v89
  %v103 = vmul.f32 %v90, %v90
  %v104 = vmul.f32 %v91, %v91
  %v105 = vmul.f32 %v92, %v92
  %v106 = vmul.f32 %v93, %v93
  %v107 = vmul.f32 %v94, %v94
  %v108 = vmul.f32 %v95, %v95
  %v109 = vmul.f32 %v96, %v96
  %v110 = vld [vmem:[%s1] sm:$0xff]
  %v111 = vld [vmem:[%s1 + $0x8] sm:$0xff]
  %v112 = vld [vmem:[%s1 + $0x10] sm:$0xff]
  %v113 = vld [vmem:[%s1 + $0x18] sm:$0xff]
  %v114 = vld [vmem:[%s1 + $0x20] sm:$0xff]
  %v115 = vld [vmem:[%s1 + $0x28] sm:$0xff]
  %v116 = vld [vmem:[%s1 + $0x30] sm:$0xff]
  %v117 = vld [vmem:[%s1 + $0x38] sm:$0xff]
  %v118 = vld [vmem:[%s1 + $0x40] sm:$0xff]
  %v119 = vld [vmem:[%s1 + $0x48] sm:$0xff]
  %v120 = vld [vmem:[%s1 + $0x50] sm:$0xff]
  %v121 = vld [vmem:[%s1 + $0x58] sm:$0xff]
  %v122 = vld [vmem:[%s1 + $0x60] sm:$0xff]
  %v123 = vld [vmem:[%s1 + $0x68] sm:$0xff]
  %v124 = vld [vmem:[%s1 + $0x70] sm:$0xff]
  %v125 = vld [vmem:[%s1 + $0x78] sm:$0xff]
  %126 = vmatpush.msra.mxu0 %v125
  %127 = vmatpush.msra.mxu0 %v124
  %128 = vmatpush.msra.mxu0 %v123
  %129 = vmatpush.msra.mxu0 %v122
  %130 = vmatpush.msra.mxu0 %v121
  %131 = vmatpush.msra.mxu0 %v120
  %132 = vmatpush.msra.mxu0 %v119
  %133 = vmatpush.msra.mxu0 %v118
  %134 = vmatpush.msra.mxu0 %v117
  %135 = vmatpush.msra.mxu0 %v116
  %136 = vmatpush.msra.mxu0 %v115
  %137 = vmatpush.msra.mxu0 %v114
  %138 = vmatpush.msra.mxu0 %v113
  %139 = vmatpush.msra.mxu0 %v112
  %140 = vmatpush.msra.mxu0 %v111
  %141 = vmatpush.msra.mxu0 %v110
  %142 = vmatmul.f32.gmra.mxu0 %v97
  %v143 = vpop.f32.mrf.mxu0
  %v144 = vadd.f32 0.0, %v143
  %145 = vmatmul.f32.gmra.mxu0 %v98
  %v146 = vpop.f32.mrf.mxu0
  %v147 = vadd.f32 0.0, %v146
  %148 = vmatmul.f32.gmra.mxu0 %v99
  %v149 = vpop.f32.mrf.mxu0
  %v150 = vadd.f32 0.0, %v149
  %151 = vmatmul.f32.gmra.mxu0 %v100
  %v152 = vpop.f32.mrf.mxu0
  %v153 = vadd.f32 0.0, %v152
  %154 = vmatmul.f32.gmra.mxu0 %v101
  %v155 = vpop.f32.mrf.mxu0
  %v156 = vadd.f32 0.0, %v155
  %157 = vmatmul.f32.gmra.mxu0 %v102
  %v158 = vpop.f32.mrf.mxu0
  %v159 = vadd.f32 0.0, %v158
  %160 = vmatmul.f32.gmra.mxu0 %v103
  %v161 = vpop.f32.mrf.mxu0
  %v162 = vadd.f32 0.0, %v161
  %163 = vmatmul.f32.gmra.mxu0 %v104
  %v164 = vpop.f32.mrf.mxu0
  %v165 = vadd.f32 0.0, %v164
  %166 = vmatmul.f32.gmra.mxu0 %v105
  %v167 = vpop.f32.mrf.mxu0
  %v168 = vadd.f32 0.0, %v167
  %169 = vmatmul.f32.gmra.mxu0 %v106
  %v170 = vpop.f32.mrf.mxu0
  %v171 = vadd.f32 0.0, %v170
  %172 = vmatmul.f32.gmra.mxu0 %v107
  %v173 = vpop.f32.mrf.mxu0
  %v174 = vadd.f32 0.0, %v173
  %175 = vmatmul.f32.gmra.mxu0 %v108
  %v176 = vpop.f32.mrf.mxu0
  %v177 = vadd.f32 0.0, %v176
  %178 = vmatmul.f32.gmra.mxu0 %v109
  %v179 = vpop.f32.mrf.mxu0
  %v180 = vadd.f32 0.0, %v179
  %181 = vdwg.mxu0
  %v182 = vmul.f32 %v144, 0.0002
  %v183 = vmul.f32 %v147, 0.0002
  %v184 = vmul.f32 %v150, 0.0002
  %v185 = vmul.f32 %v153, 0.0002
  %v186 = vmul.f32 %v156, 0.0002
  %v187 = vmul.f32 %v159, 0.0002
  %v188 = vmul.f32 %v162, 0.0002
  %v189 = vmul.f32 %v165, 0.0002
  %v190 = vmul.f32 %v168, 0.0002
  %v191 = vmul.f32 %v171, 0.0002
  %v192 = vmul.f32 %v174, 0.0002
  %v193 = vmul.f32 %v177, 0.0002
  %v194 = vmul.f32 %v180, 0.0002
  %v195 = vadd.f32 %v182, 2.0
  %v196 = vadd.f32 %v183, 2.0
  %v197 = vadd.f32 %v184, 2.0
  %v198 = vadd.f32 %v185, 2.0
  %v199 = vadd.f32 %v186, 2.0
  %v200 = vadd.f32 %v187, 2.0
  %v201 = vadd.f32 %v188, 2.0
  %v202 = vadd.f32 %v189, 2.0
  %v203 = vadd.f32 %v190, 2.0
  %v204 = vadd.f32 %v191, 2.0
  %v205 = vadd.f32 %v192, 2.0
  %v206 = vadd.f32 %v193, 2.0
  %v207 = vadd.f32 %v194, 2.0
  %v208 = vlog2.pop %v195
  %v209 = vmul.f32 %v208, 0.6931472
  %v210 = vlog2.pop %v196
  %v211 = vmul.f32 %v210, 0.6931472
  %v212 = vlog2.pop %v197
  %v213 = vmul.f32 %v212, 0.6931472
  %v214 = vlog2.pop %v198
  %v215 = vmul.f32 %v214, 0.6931472
  %v216 = vlog2.pop %v199
  %v217 = vmul.f32 %v216, 0.6931472
  %v218 = vlog2.pop %v200
  %v219 = vmul.f32 %v218, 0.6931472
  %v220 = vlog2.pop %v201
  %v221 = vmul.f32 %v220, 0.6931472
  %v222 = vlog2.pop %v202
  %v223 = vmul.f32 %v222, 0.6931472
  %v224 = vlog2.pop %v203
  %v225 = vmul.f32 %v224, 0.6931472
  %v226 = vlog2.pop %v204
  %v227 = vmul.f32 %v226, 0.6931472
  %v228 = vlog2.pop %v205
  %v229 = vmul.f32 %v228, 0.6931472
  %v230 = vlog2.pop %v206
  %v231 = vmul.f32 %v230, 0.6931472
  %v232 = vlog2.pop %v207
  %v233 = vmul.f32 %v232, 0.6931472
  %v234 = vmul.f32 %v209, -0.75
  %v235 = vmul.f32 %v211, -0.75
  %v236 = vmul.f32 %v213, -0.75
  %v237 = vmul.f32 %v215, -0.75
  %v238 = vmul.f32 %v217, -0.75
  %v239 = vmul.f32 %v219, -0.75
  %v240 = vmul.f32 %v221, -0.75
  %v241 = vmul.f32 %v223, -0.75
  %v242 = vmul.f32 %v225, -0.75
  %v243 = vmul.f32 %v227, -0.75
  %v244 = vmul.f32 %v229, -0.75
  %v245 = vmul.f32 %v231, -0.75
  %v246 = vmul.f32 %v233, -0.75
  %v247 = vmul.f32 %v234, 1.442695
  %v248 = vpow.pop %v247
  %v249 = vmul.f32 %v235, 1.442695
  %v250 = vpow.pop %v249
  %v251 = vmul.f32 %v236, 1.442695
  %v252 = vpow.pop %v251
  %v253 = vmul.f32 %v237, 1.442695
  %v254 = vpow.pop %v253
  %v255 = vmul.f32 %v238, 1.442695
  %v256 = vpow.pop %v255
  %v257 = vmul.f32 %v239, 1.442695
  %v258 = vpow.pop %v257
  %v259 = vmul.f32 %v240, 1.442695
  %v260 = vpow.pop %v259
  %v261 = vmul.f32 %v241, 1.442695
  %v262 = vpow.pop %v261
  %v263 = vmul.f32 %v242, 1.442695
  %v264 = vpow.pop %v263
  %v265 = vmul.f32 %v243, 1.442695
  %v266 = vpow.pop %v265
  %v267 = vmul.f32 %v244, 1.442695
  %v268 = vpow.pop %v267
  %v269 = vmul.f32 %v245, 1.442695
  %v270 = vpow.pop %v269
  %v271 = vmul.f32 %v246, 1.442695
  %v272 = vpow.pop %v271
  %v273 = vmul.f32 %v84, %v248
  %v274 = vmul.f32 %v85, %v250
  %v275 = vmul.f32 %v86, %v252
  %v276 = vmul.f32 %v87, %v254
  %v277 = vmul.f32 %v88, %v256
  %v278 = vmul.f32 %v89, %v258
  %v279 = vmul.f32 %v90, %v260
  %v280 = vmul.f32 %v91, %v262
  %v281 = vmul.f32 %v92, %v264
  %v282 = vmul.f32 %v93, %v266
  %v283 = vmul.f32 %v94, %v268
  %v284 = vmul.f32 %v95, %v270
  %v285 = vmul.f32 %v96, %v272
  %v286 = vld [vmem:[%s2] sm:$0x1]
  %v288 = vperm.slane %v286, 0
  %v290 = vmul.f32 %v273, %v288
  %v291 = vmul.f32 %v274, %v288
  %v292 = vmul.f32 %v275, %v288
  %v293 = vmul.f32 %v276, %v288
  %v294 = vmul.f32 %v277, %v288
  %v295 = vmul.f32 %v278, %v288
  %v296 = vmul.f32 %v279, %v288
  %v297 = vmul.f32 %v280, %v288
  %v298 = vmul.f32 %v281, %v288
  %v299 = vmul.f32 %v282, %v288
  %v300 = vmul.f32 %v283, %v288
  %v301 = vmul.f32 %v284, %v288
  %v302 = vmul.f32 %v285, %v288
  %v303 = vld [vmem:[%s3] sm:$0x1]
  %v305 = vperm.slane %v303, 0
  %v307 = vadd.f32 %v290, %v305
  %v308 = vadd.f32 %v291, %v305
  %v309 = vadd.f32 %v292, %v305
  %v310 = vadd.f32 %v293, %v305
  %v311 = vadd.f32 %v294, %v305
  %v312 = vadd.f32 %v295, %v305
  %v313 = vadd.f32 %v296, %v305
  %v314 = vadd.f32 %v297, %v305
  %v315 = vadd.f32 %v298, %v305
  %v316 = vadd.f32 %v299, %v305
  %v317 = vadd.f32 %v300, %v305
  %v318 = vadd.f32 %v301, %v305
  %v319 = vadd.f32 %v302, %v305
  %320 = vst [vmem:[%s4] sm:$0xff] %v307
  %321 = vst [vmem:[%s4 + $0x8] sm:$0xff] %v308
  %322 = vst [vmem:[%s4 + $0x10] sm:$0xff] %v309
  %323 = vst [vmem:[%s4 + $0x18] sm:$0xff] %v310
  %324 = vst [vmem:[%s4 + $0x20] sm:$0xff] %v311
  %325 = vst [vmem:[%s4 + $0x28] sm:$0xff] %v312
  %326 = vst [vmem:[%s4 + $0x30] sm:$0xff] %v313
  %327 = vst [vmem:[%s4 + $0x38] sm:$0xff] %v314
  %328 = vst [vmem:[%s4 + $0x40] sm:$0xff] %v315
  %329 = vst [vmem:[%s4 + $0x48] sm:$0xff] %v316
  %330 = vst [vmem:[%s4 + $0x50] sm:$0xff] %v317
  %331 = vst [vmem:[%s4 + $0x58] sm:$0xff] %v318
  %332 = vst [vmem:[%s4 + $0x60] sm:$0xff] %v319
  // Predicated region
  $region18: #{alexlike_forward.17} parent=0 // pred_check
    _
  $region19: #{alexlike_forward.17} parent=0 // pred_check_branch
    %334 = sbr.rel (0) target = $region21
  $region20: #{alexlike_forward.17} parent=0 // pred_region
    _
  $region21: #{alexlike_forward.17} parent=0 // pred_fallthru
    _
  // Predicated region
  $region22: #{alexlike_forward.17} parent=0 // pred_check
    _
  $region23: #{alexlike_forward.17} parent=0 // pred_check_branch
    %336 = sbr.rel (0) target = $region25
  $region24: #{alexlike_forward.17} parent=0 // pred_region
    _
  $region25: #{alexlike_forward.17} parent=0 // pred_fallthru
    _

// kernel: alexlike_forward.20
$region0: #{alexlike_forward.20}
  #allocation0 [shape = 'u32[]', space=smem, size = 0x4, offset = 0x4, fixed_abs, tag = 'smem constant byte address 0x4 - core index']
  #allocation1 [shape = 'u32[72,128]{1,0:T(1,128)}', space=vmem, size = 0x9000, scoped, tag = 'internal scratch']
  %s0 = inlined_call_operand.vmem [shape: bf16[112,1280], index: 0, kind: input, shape index: {}]
  %s1 = inlined_call_operand.vmem [shape: bf16[1280,128], index: 1, kind: input, shape index: {}]
  %s2 = inlined_call_operand.vmem [shape: f32[1,128], index: 2, kind: input, shape index: {}]
  %s3 = inlined_call_operand.vmem [shape: f32[112,128], index: 3, kind: output, shape index: {}]
  %s4 = sld [smem:[#allocation0]]
  $region22: #{alexlike_forward.20} parent=0
    _
  %s6 = ssub.s32 1, %s4
  %s7 = scalar_select 0, %s6, %s4
  // Predicated region
  $region2: #{alexlike_forward.20} parent=0 // pred_check
    _
  $region3: #{alexlike_forward.20} parent=0 // pred_check_branch
    %9 = sbr.rel (0) target = $region5
  $region4: #{alexlike_forward.20} parent=0 // pred_region
    _
  $region5: #{alexlike_forward.20} parent=0 // pred_fallthru
    _
  // Predicated region
  $region6: #{alexlike_forward.20} parent=0 // pred_check
    _
  $region7: #{alexlike_forward.20} parent=0 // pred_check_branch
    %11 = sbr.rel (0) target = $region9
  $region8: #{alexlike_forward.20} parent=0 // pred_region
    _
  $region9: #{alexlike_forward.20} parent=0 // pred_fallthru
    _
  // Predicated region
  $region10: #{alexlike_forward.20} parent=0 // pred_check
    _
  $region11: #{alexlike_forward.20} parent=0 // pred_check_branch
    %13 = sbr.rel (0) target = $region13
  $region12: #{alexlike_forward.20} parent=0 // pred_region
    _
  $region13: #{alexlike_forward.20} parent=0 // pred_fallthru
    _
  %v14 = vld [vmem:[%s0] sm:$0xff]
  %v15 = vld [vmem:[%s0 + $0x8] sm:$0xff]
  %v16 = vld [vmem:[%s0 + $0x10] sm:$0xff]
  %v17 = vld [vmem:[%s0 + $0x18] sm:$0xff]
  %v18 = vld [vmem:[%s0 + $0x20] sm:$0xff]
  %v19 = vld [vmem:[%s0 + $0x28] sm:$0xff]
  %v20 = vld [vmem:[%s0 + $0x30] sm:$0xff]
  %v21 = vld [vmem:[%s0 + $0x38] sm:$0xff]
  %v22 = vld [vmem:[%s0 + $0x40] sm:$0xff]
  %v23 = vld [vmem:[%s0 + $0x48] sm:$0xff]
  %v24 = vld [vmem:[%s0 + $0x50] sm:$0xff]
  %v25 = vld [vmem:[%s0 + $0x58] sm:$0xff]
  %v26 = vld [vmem:[%s0 + $0x60] sm:$0xff]
  %v27 = vld [vmem:[%s0 + $0x68] sm:$0xff]
  %v28 = vld [vmem:[%s0 + $0x70] sm:$0xff]
  %v29 = vld [vmem:[%s0 + $0x78] sm:$0xff]
  %v30 = vld [vmem:[%s0 + $0x80] sm:$0xff]
  %v31 = vld [vmem:[%s0 + $0x88] sm:$0xff]
  %v32 = vld [vmem:[%s0 + $0x90] sm:$0xff]
  %v33 = vld [vmem:[%s0 + $0x98] sm:$0xff]
  %v34 = vld [vmem:[%s0 + $0xa0] sm:$0xff]
  %v35 = vld [vmem:[%s0 + $0xa8] sm:$0xff]
  %v36 = vld [vmem:[%s0 + $0xb0] sm:$0xff]
  %v37 = vld [vmem:[%s0 + $0xb8] sm:$0xff]
  %v38 = vld [vmem:[%s0 + $0xc0] sm:$0xff]
  %v39 = vld [vmem:[%s0 + $0xc8] sm:$0xff]
  %v40 = vld [vmem:[%s0 + $0xd0] sm:$0xff]
  %v41 = vld [vmem:[%s0 + $0xd8] sm:$0xff]
  %v42 = vld [vmem:[%s0 + $0xe0] sm:$0xff]
  %v43 = vld [vmem:[%s0 + $0xe8] sm:$0xff]
  %v44 = vld [vmem:[%s0 + $0xf0] sm:$0xff]
  %v45 = vld [vmem:[%s0 + $0xf8] sm:$0xff]
  %v46 = vld [vmem:[%s0 + $0x100] sm:$0xff]
  %v47 = vld [vmem:[%s0 + $0x108] sm:$0xff]
  %v48 = vld [vmem:[%s0 + $0x110] sm:$0xff]
  %v49 = vld [vmem:[%s0 + $0x118] sm:$0xff]
  %v50 = vld [vmem:[%s0 + $0x120] sm:$0xff]
  %v51 = vld [vmem:[%s0 + $0x128] sm:$0xff]
  %v52 = vld [vmem:[%s0 + $0x130] sm:$0xff]
  %v53 = vld [vmem:[%s0 + $0x138] sm:$0xff]
  %v54 = vld [vmem:[%s0 + $0x140] sm:$0xff]
  %v55 = vld [vmem:[%s0 + $0x148] sm:$0xff]
  %v56 = vld [vmem:[%s0 + $0x150] sm:$0xff]
  %v57 = vld [vmem:[%s0 + $0x158] sm:$0xff]
  %v58 = vld [vmem:[%s0 + $0x160] sm:$0xff]
  %v59 = vld [vmem:[%s0 + $0x168] sm:$0xff]
  %v60 = vld [vmem:[%s0 + $0x170] sm:$0xff]
  %v61 = vld [vmem:[%s0 + $0x178] sm:$0xff]
  %v62 = vld [vmem:[%s0 + $0x180] sm:$0xff]
  %v63 = vld [vmem:[%s0 + $0x188] sm:$0xff]
  %v64 = vld [vmem:[%s0 + $0x190] sm:$0xff]
  %v65 = vld [vmem:[%s0 + $0x198] sm:$0xff]
  %v66 = vld [vmem:[%s0 + $0x1a0] sm:$0xff]
  %v67 = vld [vmem:[%s0 + $0x1a8] sm:$0xff]
  %v68 = vld [vmem:[%s0 + $0x1b0] sm:$0xff]
  %v69 = vld [vmem:[%s0 + $0x1b8] sm:$0xff]
  %v70 = vld [vmem:[%s0 + $0x1c0] sm:$0xff]
  %v71 = vld [vmem:[%s0 + $0x1c8] sm:$0xff]
  %v72 = vld [vmem:[%s0 + $0x1d0] sm:$0xff]
  %v73 = vld [vmem:[%s0 + $0x1d8] sm:$0xff]
  %v74 = vld [vmem:[%s0 + $0x1e0] sm:$0xff]
  %v75 = vld [vmem:[%s0 + $0x1e8] sm:$0xff]
  %v76 = vld [vmem:[%s0 + $0x1f0] sm:$0xff]
  %v77 = vld [vmem:[%s0 + $0x1f8] sm:$0xff]
  %v78 = vld [vmem:[%s0 + $0x200] sm:$0xff]
  %v79 = vld [vmem:[%s0 + $0x208] sm:$0xff]
  %v80 = vld [vmem:[%s0 + $0x210] sm:$0xff]
  %v81 = vld [vmem:[%s0 + $0x218] sm:$0xff]
  %v82 = vld [vmem:[%s0 + $0x220] sm:$0xff]
  %v83 = vld [vmem:[%s0 + $0x228] sm:$0xff]
  %v84 = vld [vmem:[%s1] sm:$0xf]
  %v85 = vld [vmem:[%s1 + $0x4] sm:$0xf]
  %v86 = vld [vmem:[%s1 + $0x8] sm:$0xf]
  %v87 = vld [vmem:[%s1 + $0xc] sm:$0xf]
  %v88 = vld [vmem:[%s1 + $0x10] sm:$0xf]
  %v89 = vld [vmem:[%s1 + $0x14] sm:$0xf]
  %v90 = vld [vmem:[%s1 + $0x18] sm:$0xf]
  %v91 = vld [vmem:[%s1 + $0x1c] sm:$0xf]
  %v92 = vld [vmem:[%s1 + $0x20] sm:$0xf]
  %v93 = vld [vmem:[%s1 + $0x24] sm:$0xf]
  %v94 = vld [vmem:[%s1 + $0x28] sm:$0xf]
  %v95 = vld [vmem:[%s1 + $0x2c] sm:$0xf]
  %v96 = vld [vmem:[%s1 + $0x30] sm:$0xf]
  %v97 = vld [vmem:[%s1 + $0x34] sm:$0xf]
  %v98 = vld [vmem:[%s1 + $0x38] sm:$0xf]
  %v99 = vld [vmem:[%s1 + $0x3c] sm:$0xf]
  %v100 = vld [vmem:[%s1 + $0x40] sm:$0xf]
  %v101 = vld [vmem:[%s1 + $0x44] sm:$0xf]
  %v102 = vld [vmem:[%s1 + $0x48] sm:$0xf]
  %v103 = vld [vmem:[%s1 + $0x4c] sm:$0xf]
  %v104 = vld [vmem:[%s1 + $0x50] sm:$0xf]
  %v105 = vld [vmem:[%s1 + $0x54] sm:$0xf]
  %v106 = vld [vmem:[%s1 + $0x58] sm:$0xf]
  %v107 = vld [vmem:[%s1 + $0x5c] sm:$0xf]
  %v108 = vld [vmem:[%s1 + $0x60] sm:$0xf]
  %v109 = vld [vmem:[%s1 + $0x64] sm:$0xf]
  %v110 = vld [vmem:[%s1 + $0x68] sm:$0xf]
  %v111 = vld [vmem:[%s1 + $0x6c] sm:$0xf]
  %v112 = vld [vmem:[%s1 + $0x70] sm:$0xf]
  %v113 = vld [vmem:[%s1 + $0x74] sm:$0xf]
  %v114 = vld [vmem:[%s1 + $0x78] sm:$0xf]
  %v115 = vld [vmem:[%s1 + $0x7c] sm:$0xf]
  %v116 = vld [vmem:[%s1 + $0x80] sm:$0xf]
  %v117 = vld [vmem:[%s1 + $0x84] sm:$0xf]
  %v118 = vld [vmem:[%s1 + $0x88] sm:$0xf]
  %v119 = vld [vmem:[%s1 + $0x8c] sm:$0xf]
  %v120 = vld [vmem:[%s1 + $0x90] sm:$0xf]
  %v121 = vld [vmem:[%s1 + $0x94] sm:$0xf]
  %v122 = vld [vmem:[%s1 + $0x98] sm:$0xf]
  %v123 = vld [vmem:[%s1 + $0x9c] sm:$0xf]
  %v124 = vld [vmem:[%s1 + $0xa0] sm:$0xf]
  %v125 = vld [vmem:[%s1 + $0xa4] sm:$0xf]
  %v126 = vld [vmem:[%s1 + $0xa8] sm:$0xf]
  %v127 = vld [vmem:[%s1 + $0xac] sm:$0xf]
  %v128 = vld [vmem:[%s1 + $0xb0] sm:$0xf]
  %v129 = vld [vmem:[%s1 + $0xb4] sm:$0xf]
  %v130 = vld [vmem:[%s1 + $0xb8] sm:$0xf]
  %v131 = vld [vmem:[%s1 + $0xbc] sm:$0xf]
  %v132 = vld [vmem:[%s1 + $0xc0] sm:$0xf]
  %v133 = vld [vmem:[%s1 + $0xc4] sm:$0xf]
  %v134 = vld [vmem:[%s1 + $0xc8] sm:$0xf]
  %v135 = vld [vmem:[%s1 + $0xcc] sm:$0xf]
  %v136 = vld [vmem:[%s1 + $0xd0] sm:$0xf]
  %v137 = vld [vmem:[%s1 + $0xd4] sm:$0xf]
  %v138 = vld [vmem:[%s1 + $0xd8] sm:$0xf]
  %v139 = vld [vmem:[%s1 + $0xdc] sm:$0xf]
  %v140 = vld [vmem:[%s1 + $0xe0] sm:$0xf]
  %v141 = vld [vmem:[%s1 + $0xe4] sm:$0xf]
  %v142 = vld [vmem:[%s1 + $0xe8] sm:$0xf]
  %v143 = vld [vmem:[%s1 + $0xec] sm:$0xf]
  %v144 = vld [vmem:[%s1 + $0xf0] sm:$0xf]
  %v145 = vld [vmem:[%s1 + $0xf4] sm:$0xf]
  %v146 = vld [vmem:[%s1 + $0xf8] sm:$0xf]
  %v147 = vld [vmem:[%s1 + $0xfc] sm:$0xf]
  %v148 = vld [vmem:[%s1 + $0x100] sm:$0xf]
  %v149 = vld [vmem:[%s1 + $0x104] sm:$0xf]
  %v150 = vld [vmem:[%s1 + $0x108] sm:$0xf]
  %v151 = vld [vmem:[%s1 + $0x10c] sm:$0xf]
  %v152 = vld [vmem:[%s1 + $0x110] sm:$0xf]
  %v153 = vld [vmem:[%s1 + $0x114] sm:$0xf]
  %v154 = vld [vmem:[%s1 + $0x118] sm:$0xf]
  %v155 = vld [vmem:[%s1 + $0x11c] sm:$0xf]
  %v156 = vld [vmem:[%s1 + $0x120] sm:$0xf]
  %v157 = vld [vmem:[%s1 + $0x124] sm:$0xf]
  %v158 = vld [vmem:[%s1 + $0x128] sm:$0xf]
  %v159 = vld [vmem:[%s1 + $0x12c] sm:$0xf]
  %v160 = vld [vmem:[%s1 + $0x130] sm:$0xf]
  %v161 = vld [vmem:[%s1 + $0x134] sm:$0xf]
  %v162 = vld [vmem:[%s1 + $0x138] sm:$0xf]
  %v163 = vld [vmem:[%s1 + $0x13c] sm:$0xf]
  %v164 = vld [vmem:[%s1 + $0x140] sm:$0xf]
  %v165 = vld [vmem:[%s1 + $0x144] sm:$0xf]
  %v166 = vld [vmem:[%s1 + $0x148] sm:$0xf]
  %v167 = vld [vmem:[%s1 + $0x14c] sm:$0xf]
  %v168 = vld [vmem:[%s1 + $0x150] sm:$0xf]
  %v169 = vld [vmem:[%s1 + $0x154] sm:$0xf]
  %v170 = vld [vmem:[%s1 + $0x158] sm:$0xf]
  %v171 = vld [vmem:[%s1 + $0x15c] sm:$0xf]
  %v172 = vld [vmem:[%s1 + $0x160] sm:$0xf]
  %v173 = vld [vmem:[%s1 + $0x164] sm:$0xf]
  %v174 = vld [vmem:[%s1 + $0x168] sm:$0xf]
  %v175 = vld [vmem:[%s1 + $0x16c] sm:$0xf]
  %v176 = vld [vmem:[%s1 + $0x170] sm:$0xf]
  %v177 = vld [vmem:[%s1 + $0x174] sm:$0xf]
  %v178 = vld [vmem:[%s1 + $0x178] sm:$0xf]
  %v179 = vld [vmem:[%s1 + $0x17c] sm:$0xf]
  %v180 = vld [vmem:[%s1 + $0x180] sm:$0xf]
  %v181 = vld [vmem:[%s1 + $0x184] sm:$0xf]
  %v182 = vld [vmem:[%s1 + $0x188] sm:$0xf]
  %v183 = vld [vmem:[%s1 + $0x18c] sm:$0xf]
  %v184 = vld [vmem:[%s1 + $0x190] sm:$0xf]
  %v185 = vld [vmem:[%s1 + $0x194] sm:$0xf]
  %v186 = vld [vmem:[%s1 + $0x198] sm:$0xf]
  %v187 = vld [vmem:[%s1 + $0x19c] sm:$0xf]
  %v188 = vld [vmem:[%s1 + $0x1a0] sm:$0xf]
  %v189 = vld [vmem:[%s1 + $0x1a4] sm:$0xf]
  %v190 = vld [vmem:[%s1 + $0x1a8] sm:$0xf]
  %v191 = vld [vmem:[%s1 + $0x1ac] sm:$0xf]
  %v192 = vld [vmem:[%s1 + $0x1b0] sm:$0xf]
  %v193 = vld [vmem:[%s1 + $0x1b4] sm:$0xf]
  %v194 = vld [vmem:[%s1 + $0x1b8] sm:$0xf]
  %v195 = vld [vmem:[%s1 + $0x1bc] sm:$0xf]
  %v196 = vld [vmem:[%s1 + $0x1c0] sm:$0xf]
  %v197 = vld [vmem:[%s1 + $0x1c4] sm:$0xf]
  %v198 = vld [vmem:[%s1 + $0x1c8] sm:$0xf]
  %v199 = vld [vmem:[%s1 + $0x1cc] sm:$0xf]
  %v200 = vld [vmem:[%s1 + $0x1d0] sm:$0xf]
  %v201 = vld [vmem:[%s1 + $0x1d4] sm:$0xf]
  %v202 = vld [vmem:[%s1 + $0x1d8] sm:$0xf]
  %v203 = vld [vmem:[%s1 + $0x1dc] sm:$0xf]
  %v204 = vld [vmem:[%s1 + $0x1e0] sm:$0xf]
  %v205 = vld [vmem:[%s1 + $0x1e4] sm:$0xf]
  %v206 = vld [vmem:[%s1 + $0x1e8] sm:$0xf]
  %v207 = vld [vmem:[%s1 + $0x1ec] sm:$0xf]
  %v208 = vld [vmem:[%s1 + $0x1f0] sm:$0xf]
  %v209 = vld [vmem:[%s1 + $0x1f4] sm:$0xf]
  %v210 = vld [vmem:[%s1 + $0x1f8] sm:$0xf]
  %v211 = vld [vmem:[%s1 + $0x1fc] sm:$0xf]
  %v212 = vld [vmem:[%s1 + $0x200] sm:$0xf]
  %v213 = vld [vmem:[%s1 + $0x204] sm:$0xf]
  %v214 = vld [vmem:[%s1 + $0x208] sm:$0xf]
  %v215 = vld [vmem:[%s1 + $0x20c] sm:$0xf]
  %v216 = vld [vmem:[%s1 + $0x210] sm:$0xf]
  %v217 = vld [vmem:[%s1 + $0x214] sm:$0xf]
  %v218 = vld [vmem:[%s1 + $0x218] sm:$0xf]
  %v219 = vld [vmem:[%s1 + $0x21c] sm:$0xf]
  %v220 = vld [vmem:[%s1 + $0x220] sm:$0xf]
  %v221 = vld [vmem:[%s1 + $0x224] sm:$0xf]
  %v222 = vld [vmem:[%s1 + $0x228] sm:$0xf]
  %v223 = vld [vmem:[%s1 + $0x22c] sm:$0xf]
  %v224 = vld [vmem:[%s1 + $0x230] sm:$0xf]
  %v225 = vld [vmem:[%s1 + $0x234] sm:$0xf]
  %v226 = vld [vmem:[%s1 + $0x238] sm:$0xf]
  %v227 = vld [vmem:[%s1 + $0x23c] sm:$0xf]
  %v228 = vld [vmem:[%s1 + $0x240] sm:$0xf]
  %v229 = vld [vmem:[%s1 + $0x244] sm:$0xf]
  %v230 = vld [vmem:[%s1 + $0x248] sm:$0xf]
  %v231 = vld [vmem:[%s1 + $0x24c] sm:$0xf]
  %v232 = vld [vmem:[%s1 + $0x250] sm:$0xf]
  %v233 = vld [vmem:[%s1 + $0x254] sm:$0xf]
  %v234 = vld [vmem:[%s1 + $0x258] sm:$0xf]
  %v235 = vld [vmem:[%s1 + $0x25c] sm:$0xf]
  %v236 = vld [vmem:[%s1 + $0x260] sm:$0xf]
  %v237 = vld [vmem:[%s1 + $0x264] sm:$0xf]
  %v238 = vld [vmem:[%s1 + $0x268] sm:$0xf]
  %v239 = vld [vmem:[%s1 + $0x26c] sm:$0xf]
  %v240 = vld [vmem:[%s1 + $0x270] sm:$0xf]
  %v241 = vld [vmem:[%s1 + $0x274] sm:$0xf]
  %v242 = vld [vmem:[%s1 + $0x278] sm:$0xf]
  %v243 = vld [vmem:[%s1 + $0x27c] sm:$0xf]
  %v244 = vld [vmem:[%s2] sm:$0x1]
  %v246 = vperm.slane %v244, 0
  %v318 = vunpack.c.l.b16 %v14
  %v319 = vunpack.c.h.b16 %v14
  %v320 = vunpack.c.l.b16 %v15
  %v321 = vunpack.c.h.b16 %v15
  %v322 = vunpack.c.l.b16 %v16
  %v323 = vunpack.c.h.b16 %v16
  %v324 = vunpack.c.l.b16 %v17
  %v325 = vunpack.c.h.b16 %v17
  %v326 = vunpack.c.l.b16 %v18
  %v327 = vunpack.c.h.b16 %v18
  %v328 = vunpack.c.l.b16 %v19
  %v329 = vunpack.c.h.b16 %v19
  %v330 = vunpack.c.l.b16 %v20
  %v331 = vunpack.c.h.b16 %v20
  %v332 = vunpack.c.l.b16 %v21
  %v333 = vunpack.c.h.b16 %v21
  %v334 = vunpack.c.l.b16 %v22
  %v335 = vunpack.c.h.b16 %v22
  %v336 = vunpack.c.l.b16 %v23
  %v337 = vunpack.c.h.b16 %v23
  %v338 = vunpack.c.l.b16 %v24
  %v339 = vunpack.c.h.b16 %v24
  %v340 = vunpack.c.l.b16 %v25
  %v341 = vunpack.c.h.b16 %v25
  %v342 = vunpack.c.l.b16 %v26
  %v343 = vunpack.c.h.b16 %v26
  %v344 = vunpack.c.l.b16 %v27
  %v345 = vunpack.c.h.b16 %v27
  %v346 = vunpack.c.l.b16 %v28
  %v347 = vunpack.c.h.b16 %v28
  %v348 = vunpack.c.l.b16 %v29
  %v349 = vunpack.c.h.b16 %v29
  %v350 = vunpack.c.l.b16 %v30
  %v351 = vunpack.c.h.b16 %v30
  %v352 = vunpack.c.l.b16 %v31
  %v353 = vunpack.c.h.b16 %v31
  %v354 = vunpack.c.l.b16 %v32
  %v355 = vunpack.c.h.b16 %v32
  %v356 = vunpack.c.l.b16 %v33
  %v357 = vunpack.c.h.b16 %v33
  %v358 = vunpack.c.l.b16 %v34
  %v359 = vunpack.c.h.b16 %v34
  %v360 = vunpack.c.l.b16 %v35
  %v361 = vunpack.c.h.b16 %v35
  %v362 = vunpack.c.l.b16 %v36
  %v363 = vunpack.c.h.b16 %v36
  %v364 = vunpack.c.l.b16 %v37
  %v365 = vunpack.c.h.b16 %v37
  %v366 = vunpack.c.l.b16 %v38
  %v367 = vunpack.c.h.b16 %v38
  %v368 = vunpack.c.l.b16 %v39
  %v369 = vunpack.c.h.b16 %v39
  %v370 = vunpack.c.l.b16 %v40
  %v371 = vunpack.c.h.b16 %v40
  %v372 = vunpack.c.l.b16 %v41
  %v373 = vunpack.c.h.b16 %v41
  %v374 = vunpack.c.l.b16 %v42
  %v375 = vunpack.c.h.b16 %v42
  %v376 = vunpack.c.l.b16 %v43
  %v377 = vunpack.c.h.b16 %v43
  %v378 = vunpack.c.l.b16 %v44
  %v379 = vunpack.c.h.b16 %v44
  %v380 = vunpack.c.l.b16 %v45
  %v381 = vunpack.c.h.b16 %v45
  %v382 = vunpack.c.l.b16 %v46
  %v383 = vunpack.c.h.b16 %v46
  %v384 = vunpack.c.l.b16 %v47
  %v385 = vunpack.c.h.b16 %v47
  %v386 = vunpack.c.l.b16 %v48
  %v387 = vunpack.c.h.b16 %v48
  %v388 = vunpack.c.l.b16 %v49
  %v389 = vunpack.c.h.b16 %v49
  %v390 = vunpack.c.l.b16 %v50
  %v391 = vunpack.c.h.b16 %v50
  %v392 = vunpack.c.l.b16 %v51
  %v393 = vunpack.c.h.b16 %v51
  %v394 = vunpack.c.l.b16 %v52
  %v395 = vunpack.c.h.b16 %v52
  %v396 = vunpack.c.l.b16 %v53
  %v397 = vunpack.c.h.b16 %v53
  %v398 = vunpack.c.l.b16 %v54
  %v399 = vunpack.c.h.b16 %v54
  %v400 = vunpack.c.l.b16 %v55
  %v401 = vunpack.c.h.b16 %v55
  %v402 = vunpack.c.l.b16 %v56
  %v403 = vunpack.c.h.b16 %v56
  %v404 = vunpack.c.l.b16 %v57
  %v405 = vunpack.c.h.b16 %v57
  %v406 = vunpack.c.l.b16 %v58
  %v407 = vunpack.c.h.b16 %v58
  %v408 = vunpack.c.l.b16 %v59
  %v409 = vunpack.c.h.b16 %v59
  %v410 = vunpack.c.l.b16 %v60
  %v411 = vunpack.c.h.b16 %v60
  %v412 = vunpack.c.l.b16 %v61
  %v413 = vunpack.c.h.b16 %v61
  %v414 = vunpack.c.l.b16 %v62
  %v415 = vunpack.c.h.b16 %v62
  %v416 = vunpack.c.l.b16 %v63
  %v417 = vunpack.c.h.b16 %v63
  %v418 = vunpack.c.l.b16 %v64
  %v419 = vunpack.c.h.b16 %v64
  %v420 = vunpack.c.l.b16 %v65
  %v421 = vunpack.c.h.b16 %v65
  %v422 = vunpack.c.l.b16 %v66
  %v423 = vunpack.c.h.b16 %v66
  %v424 = vunpack.c.l.b16 %v67
  %v425 = vunpack.c.h.b16 %v67
  %v426 = vunpack.c.l.b16 %v68
  %v427 = vunpack.c.h.b16 %v68
  %v428 = vunpack.c.l.b16 %v69
  %v429 = vunpack.c.h.b16 %v69
  %v430 = vunpack.c.l.b16 %v70
  %v431 = vunpack.c.h.b16 %v70
  %v432 = vunpack.c.l.b16 %v71
  %v433 = vunpack.c.h.b16 %v71
  %v434 = vunpack.c.l.b16 %v72
  %v435 = vunpack.c.h.b16 %v72
  %v436 = vunpack.c.l.b16 %v73
  %v437 = vunpack.c.h.b16 %v73
  %v438 = vunpack.c.l.b16 %v74
  %v439 = vunpack.c.h.b16 %v74
  %v440 = vunpack.c.l.b16 %v75
  %v441 = vunpack.c.h.b16 %v75
  %v442 = vunpack.c.l.b16 %v76
  %v443 = vunpack.c.h.b16 %v76
  %v444 = vunpack.c.l.b16 %v77
  %v445 = vunpack.c.h.b16 %v77
  %v446 = vunpack.c.l.b16 %v78
  %v447 = vunpack.c.h.b16 %v78
  %v448 = vunpack.c.l.b16 %v79
  %v449 = vunpack.c.h.b16 %v79
  %v450 = vunpack.c.l.b16 %v80
  %v451 = vunpack.c.h.b16 %v80
  %v452 = vunpack.c.l.b16 %v81
  %v453 = vunpack.c.h.b16 %v81
  %v454 = vunpack.c.l.b16 %v82
  %v455 = vunpack.c.h.b16 %v82
  %v456 = vunpack.c.l.b16 %v83
  %v457 = vunpack.c.h.b16 %v83
  %v458 = vpack.c.b16 %v328, %v318
  %v459 = vpack.c.b16 %v329, %v319
  %v460 = vpack.c.b16 %v330, %v320
  %v461 = vpack.c.b16 %v331, %v321
  %v462 = vpack.c.b16 %v332, %v322
  %v463 = vpack.c.b16 %v333, %v323
  %v464 = vpack.c.b16 %v334, %v324
  %v465 = vpack.c.b16 %v335, %v325
  %v466 = vpack.c.b16 %v336, %v326
  %v467 = vpack.c.b16 %v337, %v327
  %v468 = vpack.c.b16 %v348, %v338
  %v469 = vpack.c.b16 %v349, %v339
  %v470 = vpack.c.b16 %v350, %v340
  %v471 = vpack.c.b16 %v351, %v341
  %v472 = vpack.c.b16 %v352, %v342
  %v473 = vpack.c.b16 %v353, %v343
  %v474 = vpack.c.b16 %v354, %v344
  %v475 = vpack.c.b16 %v355, %v345
  %v476 = vpack.c.b16 %v356, %v346
  %v477 = vpack.c.b16 %v357, %v347
  %v478 = vpack.c.b16 %v368, %v358
  %v479 = vpack.c.b16 %v369, %v359
  %v480 = vpack.c.b16 %v370, %v360
  %v481 = vpack.c.b16 %v371, %v361
  %v482 = vpack.c.b16 %v372, %v362
  %v483 = vpack.c.b16 %v373, %v363
  %v484 = vpack.c.b16 %v374, %v364
  %v485 = vpack.c.b16 %v375, %v365
  %v486 = vpack.c.b16 %v376, %v366
  %v487 = vpack.c.b16 %v377, %v367
  %v488 = vpack.c.b16 %v388, %v378
  %v489 = vpack.c.b16 %v389, %v379
  %v490 = vpack.c.b16 %v390, %v380
  %v491 = vpack.c.b16 %v391, %v381
  %v492 = vpack.c.b16 %v392, %v382
  %v493 = vpack.c.b16 %v393, %v383
  %v494 = vpack.c.b16 %v394, %v384
  %v495 = vpack.c.b16 %v395, %v385
  %v496 = vpack.c.b16 %v396, %v386
  %v497 = vpack.c.b16 %v397, %v387
  %v498 = vpack.c.b16 %v408, %v398
  %v499 = vpack.c.b16 %v409, %v399
  %v500 = vpack.c.b16 %v410, %v400
  %v501 = vpack.c.b16 %v411, %v401
  %v502 = vpack.c.b16 %v412, %v402
  %v503 = vpack.c.b16 %v413, %v403
  %v504 = vpack.c.b16 %v414, %v404
  %v505 = vpack.c.b16 %v415, %v405
  %v506 = vpack.c.b16 %v416, %v406
  %v507 = vpack.c.b16 %v417, %v407
  %v508 = vpack.c.b16 %v428, %v418
  %v509 = vpack.c.b16 %v429, %v419
  %v510 = vpack.c.b16 %v430, %v420
  %v511 = vpack.c.b16 %v431, %v421
  %v512 = vpack.c.b16 %v432, %v422
  %v513 = vpack.c.b16 %v433, %v423
  %v514 = vpack.c.b16 %v434, %v424
  %v515 = vpack.c.b16 %v435, %v425
  %v516 = vpack.c.b16 %v436, %v426
  %v517 = vpack.c.b16 %v437, %v427
  %v518 = vpack.c.b16 %v448, %v438
  %v519 = vpack.c.b16 %v449, %v439
  %v520 = vpack.c.b16 %v450, %v440
  %v521 = vpack.c.b16 %v451, %v441
  %v522 = vpack.c.b16 %v452, %v442
  %v523 = vpack.c.b16 %v453, %v443
  %v524 = vpack.c.b16 %v454, %v444
  %v525 = vpack.c.b16 %v455, %v445
  %v526 = vpack.c.b16 %v456, %v446
  %v527 = vpack.c.b16 %v457, %v447
  %v758 = vunpack.c.l.b16 %v84
  %v759 = vunpack.c.l.b16 %v85
  %v760 = vunpack.c.l.b16 %v86
  %v761 = vunpack.c.l.b16 %v87
  %v762 = vunpack.c.l.b16 %v88
  %v763 = vunpack.c.l.b16 %v89
  %v764 = vunpack.c.l.b16 %v90
  %v765 = vunpack.c.l.b16 %v91
  %v766 = vunpack.c.l.b16 %v92
  %v767 = vunpack.c.l.b16 %v93
  %v768 = vunpack.c.l.b16 %v94
  %v769 = vunpack.c.l.b16 %v95
  %v770 = vunpack.c.l.b16 %v96
  %v771 = vunpack.c.l.b16 %v97
  %v772 = vunpack.c.l.b16 %v98
  %v773 = vunpack.c.l.b16 %v99
  %v774 = vunpack.c.l.b16 %v100
  %v775 = vunpack.c.l.b16 %v101
  %v776 = vunpack.c.l.b16 %v102
  %v777 = vunpack.c.l.b16 %v103
  %v778 = vunpack.c.l.b16 %v104
  %v779 = vunpack.c.l.b16 %v105
  %v780 = vunpack.c.l.b16 %v106
  %v781 = vunpack.c.l.b16 %v107
  %v782 = vunpack.c.l.b16 %v108
  %v783 = vunpack.c.l.b16 %v109
  %v784 = vunpack.c.l.b16 %v110
  %v785 = vunpack.c.l.b16 %v111
  %v786 = vunpack.c.l.b16 %v112
  %v787 = vunpack.c.l.b16 %v113
  %v788 = vunpack.c.l.b16 %v114
  %v789 = vunpack.c.l.b16 %v115
  %v790 = vunpack.c.l.b16 %v116
  %v791 = vunpack.c.l.b16 %v117
  %v792 = vunpack.c.l.b16 %v118
  %v793 = vunpack.c.l.b16 %v119
  %v794 = vunpack.c.l.b16 %v120
  %v795 = vunpack.c.l.b16 %v121
  %v796 = vunpack.c.l.b16 %v122
  %v797 = vunpack.c.l.b16 %v123
  %v798 = vunpack.c.l.b16 %v124
  %v799 = vunpack.c.l.b16 %v125
  %v800 = vunpack.c.l.b16 %v126
  %v801 = vunpack.c.l.b16 %v127
  %v802 = vunpack.c.l.b16 %v128
  %v803 = vunpack.c.l.b16 %v129
  %v804 = vunpack.c.l.b16 %v130
  %v805 = vunpack.c.l.b16 %v131
  %v806 = vunpack.c.l.b16 %v132
  %v807 = vunpack.c.l.b16 %v133
  %v808 = vunpack.c.l.b16 %v134
  %v809 = vunpack.c.l.b16 %v135
  %v810 = vunpack.c.l.b16 %v136
  %v811 = vunpack.c.l.b16 %v137
  %v812 = vunpack.c.l.b16 %v138
  %v813 = vunpack.c.l.b16 %v139
  %v814 = vunpack.c.l.b16 %v140
  %v815 = vunpack.c.l.b16 %v141
  %v816 = vunpack.c.l.b16 %v142
  %v817 = vunpack.c.l.b16 %v143
  %v818 = vunpack.c.l.b16 %v144
  %v819 = vunpack.c.l.b16 %v145
  %v820 = vunpack.c.l.b16 %v146
  %v821 = vunpack.c.l.b16 %v147
  %v822 = vunpack.c.l.b16 %v148
  %v823 = vunpack.c.l.b16 %v149
  %v824 = vunpack.c.l.b16 %v150
  %v825 = vunpack.c.l.b16 %v151
  %v826 = vunpack.c.l.b16 %v152
  %v827 = vunpack.c.l.b16 %v153
  %v828 = vunpack.c.l.b16 %v154
  %v829 = vunpack.c.l.b16 %v155
  %v830 = vunpack.c.l.b16 %v156
  %v831 = vunpack.c.l.b16 %v157
  %v832 = vunpack.c.l.b16 %v158
  %v833 = vunpack.c.l.b16 %v159
  %v834 = vunpack.c.l.b16 %v160
  %v835 = vunpack.c.l.b16 %v161
  %v836 = vunpack.c.l.b16 %v162
  %v837 = vunpack.c.l.b16 %v163
  %v838 = vunpack.c.l.b16 %v164
  %v839 = vunpack.c.l.b16 %v165
  %v840 = vunpack.c.l.b16 %v166
  %v841 = vunpack.c.l.b16 %v167
  %v842 = vunpack.c.l.b16 %v168
  %v843 = vunpack.c.l.b16 %v169
  %v844 = vunpack.c.l.b16 %v170
  %v845 = vunpack.c.l.b16 %v171
  %v846 = vunpack.c.l.b16 %v172
  %v847 = vunpack.c.l.b16 %v173
  %v848 = vunpack.c.l.b16 %v174
  %v849 = vunpack.c.l.b16 %v175
  %v850 = vunpack.c.l.b16 %v176
  %v851 = vunpack.c.l.b16 %v177
  %v852 = vunpack.c.l.b16 %v178
  %v853 = vunpack.c.l.b16 %v179
  %v854 = vunpack.c.l.b16 %v180
  %v855 = vunpack.c.l.b16 %v181
  %v856 = vunpack.c.l.b16 %v182
  %v857 = vunpack.c.l.b16 %v183
  %v858 = vunpack.c.l.b16 %v184
  %v859 = vunpack.c.l.b16 %v185
  %v860 = vunpack.c.l.b16 %v186
  %v861 = vunpack.c.l.b16 %v187
  %v862 = vunpack.c.l.b16 %v188
  %v863 = vunpack.c.l.b16 %v189
  %v864 = vunpack.c.l.b16 %v190
  %v865 = vunpack.c.l.b16 %v191
  %v866 = vunpack.c.l.b16 %v192
  %v867 = vunpack.c.l.b16 %v193
  %v868 = vunpack.c.l.b16 %v194
  %v869 = vunpack.c.l.b16 %v195
  %v870 = vunpack.c.l.b16 %v196
  %v871 = vunpack.c.l.b16 %v197
  %v872 = vunpack.c.l.b16 %v198
  %v873 = vunpack.c.l.b16 %v199
  %v874 = vunpack.c.l.b16 %v200
  %v875 = vunpack.c.l.b16 %v201
  %v876 = vunpack.c.l.b16 %v202
  %v877 = vunpack.c.l.b16 %v203
  %v878 = vunpack.c.l.b16 %v204
  %v879 = vunpack.c.l.b16 %v205
  %v880 = vunpack.c.l.b16 %v206
  %v881 = vunpack.c.l.b16 %v207
  %v882 = vunpack.c.l.b16 %v208
  %v883 = vunpack.c.l.b16 %v209
  %v884 = vunpack.c.l.b16 %v210
  %v885 = vunpack.c.l.b16 %v211
  %v886 = vunpack.c.l.b16 %v212
  %v887 = vunpack.c.l.b16 %v213
  %v888 = vunpack.c.l.b16 %v214
  %v889 = vunpack.c.l.b16 %v215
  %v890 = vunpack.c.l.b16 %v216
  %v891 = vunpack.c.l.b16 %v217
  %v892 = vunpack.c.l.b16 %v218
  %v893 = vunpack.c.l.b16 %v219
  %v894 = vunpack.c.l.b16 %v220
  %v895 = vunpack.c.l.b16 %v221
  %v896 = vunpack.c.l.b16 %v222
  %v897 = vunpack.c.l.b16 %v223
  %v898 = vunpack.c.l.b16 %v224
  %v899 = vunpack.c.l.b16 %v225
  %v900 = vunpack.c.l.b16 %v226
  %v901 = vunpack.c.l.b16 %v227
  %v902 = vunpack.c.l.b16 %v228
  %v903 = vunpack.c.l.b16 %v229
  %v904 = vunpack.c.l.b16 %v230
  %v905 = vunpack.c.l.b16 %v231
  %v906 = vunpack.c.l.b16 %v232
  %v907 = vunpack.c.l.b16 %v233
  %v908 = vunpack.c.l.b16 %v234
  %v909 = vunpack.c.l.b16 %v235
  %v910 = vunpack.c.l.b16 %v236
  %v911 = vunpack.c.l.b16 %v237
  %v912 = vunpack.c.l.b16 %v238
  %v913 = vunpack.c.l.b16 %v239
  %v914 = vunpack.c.l.b16 %v240
  %v915 = vunpack.c.l.b16 %v241
  %v916 = vunpack.c.l.b16 %v242
  %v917 = vunpack.c.l.b16 %v243
  %v918 = vpack.c.b16 %v759, %v758
  %v919 = vpack.c.b16 %v761, %v760
  %v920 = vpack.c.b16 %v763, %v762
  %v921 = vpack.c.b16 %v765, %v764
  %v922 = vpack.c.b16 %v767, %v766
  %v923 = vpack.c.b16 %v769, %v768
  %v924 = vpack.c.b16 %v771, %v770
  %v925 = vpack.c.b16 %v773, %v772
  %v926 = vpack.c.b16 %v775, %v774
  %v927 = vpack.c.b16 %v777, %v776
  %v928 = vpack.c.b16 %v779, %v778
  %v929 = vpack.c.b16 %v781, %v780
  %v930 = vpack.c.b16 %v783, %v782
  %v931 = vpack.c.b16 %v785, %v784
  %v932 = vpack.c.b16 %v787, %v786
  %v933 = vpack.c.b16 %v789, %v788
  %v934 = vpack.c.b16 %v791, %v790
  %v935 = vpack.c.b16 %v793, %v792
  %v936 = vpack.c.b16 %v795, %v794
  %v937 = vpack.c.b16 %v797, %v796
  %v938 = vpack.c.b16 %v799, %v798
  %v939 = vpack.c.b16 %v801, %v800
  %v940 = vpack.c.b16 %v803, %v802
  %v941 = vpack.c.b16 %v805, %v804
  %v942 = vpack.c.b16 %v807, %v806
  %v943 = vpack.c.b16 %v809, %v808
  %v944 = vpack.c.b16 %v811, %v810
  %v945 = vpack.c.b16 %v813, %v812
  %v946 = vpack.c.b16 %v815, %v814
  %v947 = vpack.c.b16 %v817, %v816
  %v948 = vpack.c.b16 %v819, %v818
  %v949 = vpack.c.b16 %v821, %v820
  %v950 = vpack.c.b16 %v823, %v822
  %v951 = vpack.c.b16 %v825, %v824
  %v952 = vpack.c.b16 %v827, %v826
  %v953 = vpack.c.b16 %v829, %v828
  %v954 = vpack.c.b16 %v831, %v830
  %v955 = vpack.c.b16 %v833, %v832
  %v956 = vpack.c.b16 %v835, %v834
  %v957 = vpack.c.b16 %v837, %v836
  %v958 = vpack.c.b16 %v839, %v838
  %v959 = vpack.c.b16 %v841, %v840
  %v960 = vpack.c.b16 %v843, %v842
  %v961 = vpack.c.b16 %v845, %v844
  %v962 = vpack.c.b16 %v847, %v846
  %v963 = vpack.c.b16 %v849, %v848
  %v964 = vpack.c.b16 %v851, %v850
  %v965 = vpack.c.b16 %v853, %v852
  %v966 = vpack.c.b16 %v855, %v854
  %v967 = vpack.c.b16 %v857, %v856
  %v968 = vpack.c.b16 %v859, %v858
  %v969 = vpack.c.b16 %v861, %v860
  %v970 = vpack.c.b16 %v863, %v862
  %v971 = vpack.c.b16 %v865, %v864
  %v972 = vpack.c.b16 %v867, %v866
  %v973 = vpack.c.b16 %v869, %v868
  %v974 = vpack.c.b16 %v871, %v870
  %v975 = vpack.c.b16 %v873, %v872
  %v976 = vpack.c.b16 %v875, %v874
  %v977 = vpack.c.b16 %v877, %v876
  %v978 = vpack.c.b16 %v879, %v878
  %v979 = vpack.c.b16 %v881, %v880
  %v980 = vpack.c.b16 %v883, %v882
  %v981 = vpack.c.b16 %v885, %v884
  %v982 = vpack.c.b16 %v887, %v886
  %v983 = vpack.c.b16 %v889, %v888
  %v984 = vpack.c.b16 %v891, %v890
  %v985 = vpack.c.b16 %v893, %v892
  %v986 = vpack.c.b16 %v895, %v894
  %v987 = vpack.c.b16 %v897, %v896
  %v988 = vpack.c.b16 %v899, %v898
  %v989 = vpack.c.b16 %v901, %v900
  %v990 = vpack.c.b16 %v903, %v902
  %v991 = vpack.c.b16 %v905, %v904
  %v992 = vpack.c.b16 %v907, %v906
  %v993 = vpack.c.b16 %v909, %v908
  %v994 = vpack.c.b16 %v911, %v910
  %v995 = vpack.c.b16 %v913, %v912
  %v996 = vpack.c.b16 %v915, %v914
  %v997 = vpack.c.b16 %v917, %v916
  %1078 = vmatpush.bf16.msra.mxu0 %v925
  %1079 = vmatpush.bf16.msra.mxu0 %v924
  %1080 = vmatpush.bf16.msra.mxu0 %v923
  %1081 = vmatpush.bf16.msra.mxu0 %v922
  %1082 = vmatpush.bf16.msra.mxu0 %v921
  %1083 = vmatpush.bf16.msra.mxu0 %v920
  %1084 = vmatpush.bf16.msra.mxu0 %v919
  %1085 = vmatpush.bf16.msra.mxu0 %v918
  %1086 = vmatmul.bf16.gmra.mxu0 %v458
  %v1087 = vpop.f32.mrf.mxu0
  %v1088 = vadd.f32 %v246, %v1087
  %v1089 = vpop.f32.mrf.mxu0
  %v1090 = vadd.f32 %v246, %v1089
  %1091 = vmatmul.bf16.gmra.mxu0 %v468
  %v1092 = vpop.f32.mrf.mxu0
  %v1093 = vadd.f32 %v246, %v1092
  %v1094 = vpop.f32.mrf.mxu0
  %v1095 = vadd.f32 %v246, %v1094
  %1096 = vmatmul.bf16.gmra.mxu0 %v478
  %v1097 = vpop.f32.mrf.mxu0
  %v1098 = vadd.f32 %v246, %v1097
  %v1099 = vpop.f32.mrf.mxu0
  %v1100 = vadd.f32 %v246, %v1099
  %1101 = vmatmul.bf16.gmra.mxu0 %v488
  %v1102 = vpop.f32.mrf.mxu0
  %v1103 = vadd.f32 %v246, %v1102
  %v1104 = vpop.f32.mrf.mxu0
  %v1105 = vadd.f32 %v246, %v1104
  %1106 = vmatmul.bf16.gmra.mxu0 %v498
  %v1107 = vpop.f32.mrf.mxu0
  %v1108 = vadd.f32 %v246, %v1107
  %v1109 = vpop.f32.mrf.mxu0
  %v1110 = vadd.f32 %v246, %v1109
  %1111 = vmatmul.bf16.gmra.mxu0 %v508
  %v1112 = vpop.f32.mrf.mxu0
  %v1113 = vadd.f32 %v246, %v1112
  %v1114 = vpop.f32.mrf.mxu0
  %v1115 = vadd.f32 %v246, %v1114
  %1116 = vmatmul.bf16.gmra.mxu0 %v518
  %v1117 = vpop.f32.mrf.mxu0
  %v1118 = vadd.f32 %v246, %v1117
  %v1119 = vpop.f32.mrf.mxu0
  %v1120 = vadd.f32 %v246, %v1119
  %1121 = vdwg.mxu0
  %1122 = vmatpush.bf16.msra.mxu0 %v933
  %1123 = vmatpush.bf16.msra.mxu0 %v932
  %1124 = vmatpush.bf16.msra.mxu0 %v931
  %1125 = vmatpush.bf16.msra.mxu0 %v930
  %1126 = vmatpush.bf16.msra.mxu0 %v929
  %1127 = vmatpush.bf16.msra.mxu0 %v928
  %1128 = vmatpush.bf16.msra.mxu0 %v927
  %1129 = vmatpush.bf16.msra.mxu0 %v926
  %1130 = vmatmul.bf16.gmra.mxu0 %v459
  %v1131 = vpop.f32.mrf.mxu0
  %v1132 = vadd.f32 %v1088, %v1131
  %v1133 = vpop.f32.mrf.mxu0
  %v1134 = vadd.f32 %v1090, %v1133
  %1135 = vmatmul.bf16.gmra.mxu0 %v469
  %v1136 = vpop.f32.mrf.mxu0
  %v1137 = vadd.f32 %v1093, %v1136
  %v1138 = vpop.f32.mrf.mxu0
  %v1139 = vadd.f32 %v1095, %v1138
  %1140 = vmatmul.bf16.gmra.mxu0 %v479
  %v1141 = vpop.f32.mrf.mxu0
  %v1142 = vadd.f32 %v1098, %v1141
  %v1143 = vpop.f32.mrf.mxu0
  %v1144 = vadd.f32 %v1100, %v1143
  %1145 = vmatmul.bf16.gmra.mxu0 %v489
  %v1146 = vpop.f32.mrf.mxu0
  %v1147 = vadd.f32 %v1103, %v1146
  %v1148 = vpop.f32.mrf.mxu0
  %v1149 = vadd.f32 %v1105, %v1148
  %1150 = vmatmul.bf16.gmra.mxu0 %v499
  %v1151 = vpop.f32.mrf.mxu0
  %v1152 = vadd.f32 %v1108, %v1151
  %v1153 = vpop.f32.mrf.mxu0
  %v1154 = vadd.f32 %v1110, %v1153
  %1155 = vmatmul.bf16.gmra.mxu0 %v509
  %v1156 = vpop.f32.mrf.mxu0
  %v1157 = vadd.f32 %v1113, %v1156
  %v1158 = vpop.f32.mrf.mxu0
  %v1159 = vadd.f32 %v1115, %v1158
  %1160 = vmatmul.bf16.gmra.mxu0 %v519
  %v1161 = vpop.f32.mrf.mxu0
  %v1162 = vadd.f32 %v1118, %v1161
  %v1163 = vpop.f32.mrf.mxu0
  %v1164 = vadd.f32 %v1120, %v1163
  %1165 = vdwg.mxu0
  %1166 = vmatpush.bf16.msra.mxu0 %v941
  %1167 = vmatpush.bf16.msra.mxu0 %v940
  %1168 = vmatpush.bf16.msra.mxu0 %v939
  %1169 = vmatpush.bf16.msra.mxu0 %v938
  %1170 = vmatpush.bf16.msra.mxu0 %v937
  %1171 = vmatpush.bf16.msra.mxu0 %v936
  %1172 = vmatpush.bf16.msra.mxu0 %v935
  %1173 = vmatpush.bf16.msra.mxu0 %v934
  %1174 = vmatmul.bf16.gmra.mxu0 %v460
  %v1175 = vpop.f32.mrf.mxu0
  %v1176 = vadd.f32 %v1132, %v1175
  %v1177 = vpop.f32.mrf.mxu0
  %v1178 = vadd.f32 %v1134, %v1177
  %1179 = vmatmul.bf16.gmra.mxu0 %v470
  %v1180 = vpop.f32.mrf.mxu0
  %v1181 = vadd.f32 %v1137, %v1180
  %v1182 = vpop.f32.mrf.mxu0
  %v1183 = vadd.f32 %v1139, %v1182
  %1184 = vmatmul.bf16.gmra.mxu0 %v480
  %v1185 = vpop.f32.mrf.mxu0
  %v1186 = vadd.f32 %v1142, %v1185
  %v1187 = vpop.f32.mrf.mxu0
  %v1188 = vadd.f32 %v1144, %v1187
  %1189 = vmatmul.bf16.gmra.mxu0 %v490
  %v1190 = vpop.f32.mrf.mxu0
  %v1191 = vadd.f32 %v1147, %v1190
  %v1192 = vpop.f32.mrf.mxu0
  %v1193 = vadd.f32 %v1149, %v1192
  %1194 = vmatmul.bf16.gmra.mxu0 %v500
  %v1195 = vpop.f32.mrf.mxu0
  %v1196 = vadd.f32 %v1152, %v1195
  %v1197 = vpop.f32.mrf.mxu0
  %v1198 = vadd.f32 %v1154, %v1197
  %1199 = vmatmul.bf16.gmra.mxu0 %v510
  %v1200 = vpop.f32.mrf.mxu0
  %v1201 = vadd.f32 %v1157, %v1200
  %v1202 = vpop.f32.mrf.mxu0
  %v1203 = vadd.f32 %v1159, %v1202
  %1204 = vmatmul.bf16.gmra.mxu0 %v520
  %v1205 = vpop.f32.mrf.mxu0
  %v1206 = vadd.f32 %v1162, %v1205
  %v1207 = vpop.f32.mrf.mxu0
  %v1208 = vadd.f32 %v1164, %v1207
  %1209 = vdwg.mxu0
  %1210 = vmatpush.bf16.msra.mxu0 %v949
  %1211 = vmatpush.bf16.msra.mxu0 %v948
  %1212 = vmatpush.bf16.msra.mxu0 %v947
  %1213 = vmatpush.bf16.msra.mxu0 %v946
  %1214 = vmatpush.bf16.msra.mxu0 %v945
  %1215 = vmatpush.bf16.msra.mxu0 %v944
  %1216 = vmatpush.bf16.msra.mxu0 %v943
  %1217 = vmatpush.bf16.msra.mxu0 %v942
  %1218 = vmatmul.bf16.gmra.mxu0 %v461
  %v1219 = vpop.f32.mrf.mxu0
  %v1220 = vadd.f32 %v1176, %v1219
  %v1221 = vpop.f32.mrf.mxu0
  %v1222 = vadd.f32 %v1178, %v1221
  %1223 = vmatmul.bf16.gmra.mxu0 %v471
  %v1224 = vpop.f32.mrf.mxu0
  %v1225 = vadd.f32 %v1181, %v1224
  %v1226 = vpop.f32.mrf.mxu0
  %v1227 = vadd.f32 %v1183, %v1226
  %1228 = vmatmul.bf16.gmra.mxu0 %v481
  %v1229 = vpop.f32.mrf.mxu0
  %v1230 = vadd.f32 %v1186, %v1229
  %v1231 = vpop.f32.mrf.mxu0
  %v1232 = vadd.f32 %v1188, %v1231
  %1233 = vmatmul.bf16.gmra.mxu0 %v491
  %v1234 = vpop.f32.mrf.mxu0
  %v1235 = vadd.f32 %v1191, %v1234
  %v1236 = vpop.f32.mrf.mxu0
  %v1237 = vadd.f32 %v1193, %v1236
  %1238 = vmatmul.bf16.gmra.mxu0 %v501
  %v1239 = vpop.f32.mrf.mxu0
  %v1240 = vadd.f32 %v1196, %v1239
  %v1241 = vpop.f32.mrf.mxu0
  %v1242 = vadd.f32 %v1198, %v1241
  %1243 = vmatmul.bf16.gmra.mxu0 %v511
  %v1244 = vpop.f32.mrf.mxu0
  %v1245 = vadd.f32 %v1201, %v1244
  %v1246 = vpop.f32.mrf.mxu0
  %v1247 = vadd.f32 %v1203, %v1246
  %1248 = vmatmul.bf16.gmra.mxu0 %v521
  %v1249 = vpop.f32.mrf.mxu0
  %v1250 = vadd.f32 %v1206, %v1249
  %v1251 = vpop.f32.mrf.mxu0
  %v1252 = vadd.f32 %v1208, %v1251
  %1253 = vdwg.mxu0
  %1254 = vmatpush.bf16.msra.mxu0 %v957
  %1255 = vmatpush.bf16.msra.mxu0 %v956
  %1256 = vmatpush.bf16.msra.mxu0 %v955
  %1257 = vmatpush.bf16.msra.mxu0 %v954
  %1258 = vmatpush.bf16.msra.mxu0 %v953
  %1259 = vmatpush.bf16.msra.mxu0 %v952
  %1260 = vmatpush.bf16.msra.mxu0 %v951
  %1261 = vmatpush.bf16.msra.mxu0 %v950
  %1262 = vmatmul.bf16.gmra.mxu0 %v462
  %v1263 = vpop.f32.mrf.mxu0
  %v1264 = vadd.f32 %v1220, %v1263
  %v1265 = vpop.f32.mrf.mxu0
  %v1266 = vadd.f32 %v1222, %v1265
  %1267 = vmatmul.bf16.gmra.mxu0 %v472
  %v1268 = vpop.f32.mrf.mxu0
  %v1269 = vadd.f32 %v1225, %v1268
  %v1270 = vpop.f32.mrf.mxu0
  %v1271 = vadd.f32 %v1227, %v1270
  %1272 = vmatmul.bf16.gmra.mxu0 %v482
  %v1273 = vpop.f32.mrf.mxu0
  %v1274 = vadd.f32 %v1230, %v1273
  %v1275 = vpop.f32.mrf.mxu0
  %v1276 = vadd.f32 %v1232, %v1275
  %1277 = vmatmul.bf16.gmra.mxu0 %v492
  %v1278 = vpop.f32.mrf.mxu0
  %v1279 = vadd.f32 %v1235, %v1278
  %v1280 = vpop.f32.mrf.mxu0
  %v1281 = vadd.f32 %v1237, %v1280
  %1282 = vmatmul.bf16.gmra.mxu0 %v502
  %v1283 = vpop.f32.mrf.mxu0
  %v1284 = vadd.f32 %v1240, %v1283
  %v1285 = vpop.f32.mrf.mxu0
  %v1286 = vadd.f32 %v1242, %v1285
  %1287 = vmatmul.bf16.gmra.mxu0 %v512
  %v1288 = vpop.f32.mrf.mxu0
  %v1289 = vadd.f32 %v1245, %v1288
  %v1290 = vpop.f32.mrf.mxu0
  %v1291 = vadd.f32 %v1247, %v1290
  %1292 = vmatmul.bf16.gmra.mxu0 %v522
  %v1293 = vpop.f32.mrf.mxu0
  %v1294 = vadd.f32 %v1250, %v1293
  %v1295 = vpop.f32.mrf.mxu0
  %v1296 = vadd.f32 %v1252, %v1295
  %1297 = vdwg.mxu0
  %1298 = vmatpush.bf16.msra.mxu0 %v965
  %1299 = vmatpush.bf16.msra.mxu0 %v964
  %1300 = vmatpush.bf16.msra.mxu0 %v963
  %1301 = vmatpush.bf16.msra.mxu0 %v962
  %1302 = vmatpush.bf16.msra.mxu0 %v961
  %1303 = vmatpush.bf16.msra.mxu0 %v960
  %1304 = vmatpush.bf16.msra.mxu0 %v959
  %1305 = vmatpush.bf16.msra.mxu0 %v958
  %1306 = vmatmul.bf16.gmra.mxu0 %v463
  %v1307 = vpop.f32.mrf.mxu0
  %v1308 = vadd.f32 %v1264, %v1307
  %v1309 = vpop.f32.mrf.mxu0
  %v1310 = vadd.f32 %v1266, %v1309
  %1311 = vmatmul.bf16.gmra.mxu0 %v473
  %v1312 = vpop.f32.mrf.mxu0
  %v1313 = vadd.f32 %v1269, %v1312
  %v1314 = vpop.f32.mrf.mxu0
  %v1315 = vadd.f32 %v1271, %v1314
  %1316 = vmatmul.bf16.gmra.mxu0 %v483
  %v1317 = vpop.f32.mrf.mxu0
  %v1318 = vadd.f32 %v1274, %v1317
  %v1319 = vpop.f32.mrf.mxu0
  %v1320 = vadd.f32 %v1276, %v1319
  %1321 = vmatmul.bf16.gmra.mxu0 %v493
  %v1322 = vpop.f32.mrf.mxu0
  %v1323 = vadd.f32 %v1279, %v1322
  %v1324 = vpop.f32.mrf.mxu0
  %v1325 = vadd.f32 %v1281, %v1324
  %1326 = vmatmul.bf16.gmra.mxu0 %v503
  %v1327 = vpop.f32.mrf.mxu0
  %v1328 = vadd.f32 %v1284, %v1327
  %v1329 = vpop.f32.mrf.mxu0
  %v1330 = vadd.f32 %v1286, %v1329
  %1331 = vmatmul.bf16.gmra.mxu0 %v513
  %v1332 = vpop.f32.mrf.mxu0
  %v1333 = vadd.f32 %v1289, %v1332
  %v1334 = vpop.f32.mrf.mxu0
  %v1335 = vadd.f32 %v1291, %v1334
  %1336 = vmatmul.bf16.gmra.mxu0 %v523
  %v1337 = vpop.f32.mrf.mxu0
  %v1338 = vadd.f32 %v1294, %v1337
  %v1339 = vpop.f32.mrf.mxu0
  %v1340 = vadd.f32 %v1296, %v1339
  %1341 = vdwg.mxu0
  %1342 = vmatpush.bf16.msra.mxu0 %v973
  %1343 = vmatpush.bf16.msra.mxu0 %v972
  %1344 = vmatpush.bf16.msra.mxu0 %v971
  %1345 = vmatpush.bf16.msra.mxu0 %v970
  %1346 = vmatpush.bf16.msra.mxu0 %v969
  %1347 = vmatpush.bf16.msra.mxu0 %v968
  %1348 = vmatpush.bf16.msra.mxu0 %v967
  %1349 = vmatpush.bf16.msra.mxu0 %v966
  %1350 = vmatmul.bf16.gmra.mxu0 %v464
  %v1351 = vpop.f32.mrf.mxu0
  %v1352 = vadd.f32 %v1308, %v1351
  %v1353 = vpop.f32.mrf.mxu0
  %v1354 = vadd.f32 %v1310, %v1353
  %1355 = vmatmul.bf16.gmra.mxu0 %v474
  %v1356 = vpop.f32.mrf.mxu0
  %v1357 = vadd.f32 %v1313, %v1356
  %v1358 = vpop.f32.mrf.mxu0
  %v1359 = vadd.f32 %v1315, %v1358
  %1360 = vmatmul.bf16.gmra.mxu0 %v484
  %v1361 = vpop.f32.mrf.mxu0
  %v1362 = vadd.f32 %v1318, %v1361
  %v1363 = vpop.f32.mrf.mxu0
  %v1364 = vadd.f32 %v1320, %v1363
  %1365 = vmatmul.bf16.gmra.mxu0 %v494
  %v1366 = vpop.f32.mrf.mxu0
  %v1367 = vadd.f32 %v1323, %v1366
  %v1368 = vpop.f32.mrf.mxu0
  %v1369 = vadd.f32 %v1325, %v1368
  %1370 = vmatmul.bf16.gmra.mxu0 %v504
  %v1371 = vpop.f32.mrf.mxu0
  %v1372 = vadd.f32 %v1328, %v1371
  %v1373 = vpop.f32.mrf.mxu0
  %v1374 = vadd.f32 %v1330, %v1373
  %1375 = vmatmul.bf16.gmra.mxu0 %v514
  %v1376 = vpop.f32.mrf.mxu0
  %v1377 = vadd.f32 %v1333, %v1376
  %v1378 = vpop.f32.mrf.mxu0
  %v1379 = vadd.f32 %v1335, %v1378
  %1380 = vmatmul.bf16.gmra.mxu0 %v524
  %v1381 = vpop.f32.mrf.mxu0
  %v1382 = vadd.f32 %v1338, %v1381
  %v1383 = vpop.f32.mrf.mxu0
  %v1384 = vadd.f32 %v1340, %v1383
  %1385 = vdwg.mxu0
  %1386 = vmatpush.bf16.msra.mxu0 %v981
  %1387 = vmatpush.bf16.msra.mxu0 %v980
  %1388 = vmatpush.bf16.msra.mxu0 %v979
  %1389 = vmatpush.bf16.msra.mxu0 %v978
  %1390 = vmatpush.bf16.msra.mxu0 %v977
  %1391 = vmatpush.bf16.msra.mxu0 %v976
  %1392 = vmatpush.bf16.msra.mxu0 %v975
  %1393 = vmatpush.bf16.msra.mxu0 %v974
  %1394 = vmatmul.bf16.gmra.mxu0 %v465
  %v1395 = vpop.f32.mrf.mxu0
  %v1396 = vadd.f32 %v1352, %v1395
  %v1397 = vpop.f32.mrf.mxu0
  %v1398 = vadd.f32 %v1354, %v1397
  %1399 = vmatmul.bf16.gmra.mxu0 %v475
  %v1400 = vpop.f32.mrf.mxu0
  %v1401 = vadd.f32 %v1357, %v1400
  %v1402 = vpop.f32.mrf.mxu0
  %v1403 = vadd.f32 %v1359, %v1402
  %1404 = vmatmul.bf16.gmra.mxu0 %v485
  %v1405 = vpop.f32.mrf.mxu0
  %v1406 = vadd.f32 %v1362, %v1405
  %v1407 = vpop.f32.mrf.mxu0
  %v1408 = vadd.f32 %v1364, %v1407
  %1409 = vmatmul.bf16.gmra.mxu0 %v495
  %v1410 = vpop.f32.mrf.mxu0
  %v1411 = vadd.f32 %v1367, %v1410
  %v1412 = vpop.f32.mrf.mxu0
  %v1413 = vadd.f32 %v1369, %v1412
  %1414 = vmatmul.bf16.gmra.mxu0 %v505
  %v1415 = vpop.f32.mrf.mxu0
  %v1416 = vadd.f32 %v1372, %v1415
  %v1417 = vpop.f32.mrf.mxu0
  %v1418 = vadd.f32 %v1374, %v1417
  %1419 = vmatmul.bf16.gmra.mxu0 %v515
  %v1420 = vpop.f32.mrf.mxu0
  %v1421 = vadd.f32 %v1377, %v1420
  %v1422 = vpop.f32.mrf.mxu0
  %v1423 = vadd.f32 %v1379, %v1422
  %1424 = vmatmul.bf16.gmra.mxu0 %v525
  %v1425 = vpop.f32.mrf.mxu0
  %v1426 = vadd.f32 %v1382, %v1425
  %v1427 = vpop.f32.mrf.mxu0
  %v1428 = vadd.f32 %v1384, %v1427
  %1429 = vdwg.mxu0
  %1430 = vmatpush.bf16.msra.mxu0 %v989
  %1431 = vmatpush.bf16.msra.mxu0 %v988
  %1432 = vmatpush.bf16.msra.mxu0 %v987
  %1433 = vmatpush.bf16.msra.mxu0 %v986
  %1434 = vmatpush.bf16.msra.mxu0 %v985
  %1435 = vmatpush.bf16.msra.mxu0 %v984
  %1436 = vmatpush.bf16.msra.mxu0 %v983
  %1437 = vmatpush.bf16.msra.mxu0 %v982
  %1438 = vmatmul.bf16.gmra.mxu0 %v466
  %v1439 = vpop.f32.mrf.mxu0
  %v1440 = vadd.f32 %v1396, %v1439
  %v1441 = vpop.f32.mrf.mxu0
  %v1442 = vadd.f32 %v1398, %v1441
  %1443 = vmatmul.bf16.gmra.mxu0 %v476
  %v1444 = vpop.f32.mrf.mxu0
  %v1445 = vadd.f32 %v1401, %v1444
  %v1446 = vpop.f32.mrf.mxu0
  %v1447 = vadd.f32 %v1403, %v1446
  %1448 = vmatmul.bf16.gmra.mxu0 %v486
  %v1449 = vpop.f32.mrf.mxu0
  %v1450 = vadd.f32 %v1406, %v1449
  %v1451 = vpop.f32.mrf.mxu0
  %v1452 = vadd.f32 %v1408, %v1451
  %1453 = vmatmul.bf16.gmra.mxu0 %v496
  %v1454 = vpop.f32.mrf.mxu0
  %v1455 = vadd.f32 %v1411, %v1454
  %v1456 = vpop.f32.mrf.mxu0
  %v1457 = vadd.f32 %v1413, %v1456
  %1458 = vmatmul.bf16.gmra.mxu0 %v506
  %v1459 = vpop.f32.mrf.mxu0
  %v1460 = vadd.f32 %v1416, %v1459
  %v1461 = vpop.f32.mrf.mxu0
  %v1462 = vadd.f32 %v1418, %v1461
  %1463 = vmatmul.bf16.gmra.mxu0 %v516
  %v1464 = vpop.f32.mrf.mxu0
  %v1465 = vadd.f32 %v1421, %v1464
  %v1466 = vpop.f32.mrf.mxu0
  %v1467 = vadd.f32 %v1423, %v1466
  %1468 = vmatmul.bf16.gmra.mxu0 %v526
  %v1469 = vpop.f32.mrf.mxu0
  %v1470 = vadd.f32 %v1426, %v1469
  %v1471 = vpop.f32.mrf.mxu0
  %v1472 = vadd.f32 %v1428, %v1471
  %1473 = vdwg.mxu0
  %1474 = vmatpush.bf16.msra.mxu0 %v997
  %1475 = vmatpush.bf16.msra.mxu0 %v996
  %1476 = vmatpush.bf16.msra.mxu0 %v995
  %1477 = vmatpush.bf16.msra.mxu0 %v994
  %1478 = vmatpush.bf16.msra.mxu0 %v993
  %1479 = vmatpush.bf16.msra.mxu0 %v992
  %1480 = vmatpush.bf16.msra.mxu0 %v991
  %1481 = vmatpush.bf16.msra.mxu0 %v990
  %1482 = vmatmul.bf16.gmra.mxu0 %v467
  %v1483 = vpop.f32.mrf.mxu0
  %v1484 = vadd.f32 %v1440, %v1483
  %v1485 = vpop.f32.mrf.mxu0
  %v1486 = vadd.f32 %v1442, %v1485
  %1487 = vmatmul.bf16.gmra.mxu0 %v477
  %v1488 = vpop.f32.mrf.mxu0
  %v1489 = vadd.f32 %v1445, %v1488
  %v1490 = vpop.f32.mrf.mxu0
  %v1491 = vadd.f32 %v1447, %v1490
  %1492 = vmatmul.bf16.gmra.mxu0 %v487
  %v1493 = vpop.f32.mrf.mxu0
  %v1494 = vadd.f32 %v1450, %v1493
  %v1495 = vpop.f32.mrf.mxu0
  %v1496 = vadd.f32 %v1452, %v1495
  %1497 = vmatmul.bf16.gmra.mxu0 %v497
  %v1498 = vpop.f32.mrf.mxu0
  %v1499 = vadd.f32 %v1455, %v1498
  %v1500 = vpop.f32.mrf.mxu0
  %v1501 = vadd.f32 %v1457, %v1500
  %1502 = vmatmul.bf16.gmra.mxu0 %v507
  %v1503 = vpop.f32.mrf.mxu0
  %v1504 = vadd.f32 %v1460, %v1503
  %v1505 = vpop.f32.mrf.mxu0
  %v1506 = vadd.f32 %v1462, %v1505
  %1507 = vmatmul.bf16.gmra.mxu0 %v517
  %v1508 = vpop.f32.mrf.mxu0
  %v1509 = vadd.f32 %v1465, %v1508
  %v1510 = vpop.f32.mrf.mxu0
  %v1511 = vadd.f32 %v1467, %v1510
  %1512 = vmatmul.bf16.gmra.mxu0 %v527
  %v1513 = vpop.f32.mrf.mxu0
  %v1514 = vadd.f32 %v1470, %v1513
  %v1515 = vpop.f32.mrf.mxu0
  %v1516 = vadd.f32 %v1472, %v1515
  %1517 = vdwg.mxu0
  %1518 = vst [vmem:[%s3] sm:$0xff] %v1484
  %1519 = vst [vmem:[%s3 + $0x8] sm:$0xff] %v1486
  %1520 = vst [vmem:[%s3 + $0x10] sm:$0xff] %v1489
  %1521 = vst [vmem:[%s3 + $0x18] sm:$0xff] %v1491
  %1522 = vst [vmem:[%s3 + $0x20] sm:$0xff] %v1494
  %1523 = vst [vmem:[%s3 + $0x28] sm:$0xff] %v1496
  %1524 = vst [vmem:[%s3 + $0x30] sm:$0xff] %v1499
  %1525 = vst [vmem:[%s3 + $0x38] sm:$0xff] %v1501
  %1526 = vst [vmem:[%s3 + $0x40] sm:$0xff] %v1504
  %1527 = vst [vmem:[%s3 + $0x48] sm:$0xff] %v1506
  %1528 = vst [vmem:[%s3 + $0x50] sm:$0xff] %v1509
  %1529 = vst [vmem:[%s3 + $0x58] sm:$0xff] %v1511
  %1530 = vst [vmem:[%s3 + $0x60] sm:$0xff] %v1514
  %1531 = vst [vmem:[%s3 + $0x68] sm:$0xff] %v1516
  // Predicated region
  $region14: #{alexlike_forward.20} parent=0 // pred_check
    _
  $region15: #{alexlike_forward.20} parent=0 // pred_check_branch
    %1533 = sbr.rel (0) target = $region17
  $region16: #{alexlike_forward.20} parent=0 // pred_region
    _
  $region17: #{alexlike_forward.20} parent=0 // pred_fallthru
    _
  // Predicated region
  $region18: #{alexlike_forward.20} parent=0 // pred_check
    _
  $region19: #{alexlike_forward.20} parent=0 // pred_check_branch
    %1535 = sbr.rel (0) target = $region21
  $region20: #{alexlike_forward.20} parent=0 // pred_region
    _
  $region21: #{alexlike_forward.20} parent=0 // pred_fallthru
    _

// kernel: alexlike_forward.21
$region0: #{alexlike_forward.21}
  #allocation0 [shape = 'u32[]', space=smem, size = 0x4, offset = 0x4, fixed_abs, tag = 'smem constant byte address 0x4 - core index']
  #allocation1 [shape = 'u32[72,128]{1,0:T(1,128)}', space=vmem, size = 0x9000, scoped, tag = 'internal scratch']
  %s0 = inlined_call_operand.vmem [shape: f32[3,24,128], index: 0, kind: input, shape index: {}]
  %s1 = inlined_call_operand.vmem [shape: f32[128,128], index: 1, kind: input, shape index: {}]
  %s2 = inlined_call_operand.vmem [shape: f32[1,128], index: 2, kind: input, shape index: {}]
  %s3 = inlined_call_operand.vmem [shape: f32[1,128], index: 3, kind: input, shape index: {}]
  %s4 = inlined_call_operand.vmem [shape: f32[24,128], index: 4, kind: output, shape index: {}]
  %s5 = sld [smem:[#allocation0]]
  $region26: #{alexlike_forward.21} parent=0
    _
  %s7 = ssub.s32 1, %s5
  %s8 = scalar_select 0, %s7, %s5
  // Predicated region
  $region2: #{alexlike_forward.21} parent=0 // pred_check
    _
  $region3: #{alexlike_forward.21} parent=0 // pred_check_branch
    %10 = sbr.rel (0) target = $region5
  $region4: #{alexlike_forward.21} parent=0 // pred_region
    _
  $region5: #{alexlike_forward.21} parent=0 // pred_fallthru
    _
  // Predicated region
  $region6: #{alexlike_forward.21} parent=0 // pred_check
    _
  $region7: #{alexlike_forward.21} parent=0 // pred_check_branch
    %12 = sbr.rel (0) target = $region9
  $region8: #{alexlike_forward.21} parent=0 // pred_region
    _
  $region9: #{alexlike_forward.21} parent=0 // pred_fallthru
    _
  // Predicated region
  $region10: #{alexlike_forward.21} parent=0 // pred_check
    _
  $region11: #{alexlike_forward.21} parent=0 // pred_check_branch
    %14 = sbr.rel (0) target = $region13
  $region12: #{alexlike_forward.21} parent=0 // pred_region
    _
  $region13: #{alexlike_forward.21} parent=0 // pred_fallthru
    _
  // Predicated region
  $region14: #{alexlike_forward.21} parent=0 // pred_check
    _
  $region15: #{alexlike_forward.21} parent=0 // pred_check_branch
    %16 = sbr.rel (0) target = $region17
  $region16: #{alexlike_forward.21} parent=0 // pred_region
    _
  $region17: #{alexlike_forward.21} parent=0 // pred_fallthru
    _
  %v17 = vld [vmem:[%s0] sm:$0xff]
  %v18 = vld [vmem:[%s0 + $0x8] sm:$0xff]
  %v19 = vld [vmem:[%s0 + $0x10] sm:$0xff]
  %s20 = scalar_lea.vmem %s0, 24
  %v21 = vld [vmem:[%s20] sm:$0xff]
  %v22 = vld [vmem:[%s20 + $0x8] sm:$0xff]
  %v23 = vld [vmem:[%s20 + $0x10] sm:$0xff]
  %v24 = vmax.f32 %v17, %v21
  %v25 = vmax.f32 %v18, %v22
  %v26 = vmax.f32 %v19, %v23
  %s27 = scalar_lea.vmem %s0, 48
  %v28 = vld [vmem:[%s27] sm:$0xff]
  %v29 = vld [vmem:[%s27 + $0x8] sm:$0xff]
  %v30 = vld [vmem:[%s27 + $0x10] sm:$0xff]
  %v31 = vmax.f32 %v24, %v28
  %v32 = vmax.f32 %v25, %v29
  %v33 = vmax.f32 %v26, %v30
  %v34 = vmax.f32 %v31, 0.0
  %v35 = vmax.f32 %v32, 0.0
  %v36 = vmax.f32 %v33, 0.0
  %v37 = vmul.f32 %v34, %v34
  %v38 = vmul.f32 %v35, %v35
  %v39 = vmul.f32 %v36, %v36
  %v40 = vld [vmem:[%s1] sm:$0xff]
  %v41 = vld [vmem:[%s1 + $0x8] sm:$0xff]
  %v42 = vld [vmem:[%s1 + $0x10] sm:$0xff]
  %v43 = vld [vmem:[%s1 + $0x18] sm:$0xff]
  %v44 = vld [vmem:[%s1 + $0x20] sm:$0xff]
  %v45 = vld [vmem:[%s1 + $0x28] sm:$0xff]
  %v46 = vld [vmem:[%s1 + $0x30] sm:$0xff]
  %v47 = vld [vmem:[%s1 + $0x38] sm:$0xff]
  %v48 = vld [vmem:[%s1 + $0x40] sm:$0xff]
  %v49 = vld [vmem:[%s1 + $0x48] sm:$0xff]
  %v50 = vld [vmem:[%s1 + $0x50] sm:$0xff]
  %v51 = vld [vmem:[%s1 + $0x58] sm:$0xff]
  %v52 = vld [vmem:[%s1 + $0x60] sm:$0xff]
  %v53 = vld [vmem:[%s1 + $0x68] sm:$0xff]
  %v54 = vld [vmem:[%s1 + $0x70] sm:$0xff]
  %v55 = vld [vmem:[%s1 + $0x78] sm:$0xff]
  %56 = vmatpush.msra.mxu0 %v55
  %57 = vmatpush.msra.mxu0 %v54
  %58 = vmatpush.msra.mxu0 %v53
  %59 = vmatpush.msra.mxu0 %v52
  %60 = vmatpush.msra.mxu0 %v51
  %61 = vmatpush.msra.mxu0 %v50
  %62 = vmatpush.msra.mxu0 %v49
  %63 = vmatpush.msra.mxu0 %v48
  %64 = vmatpush.msra.mxu0 %v47
  %65 = vmatpush.msra.mxu0 %v46
  %66 = vmatpush.msra.mxu0 %v45
  %67 = vmatpush.msra.mxu0 %v44
  %68 = vmatpush.msra.mxu0 %v43
  %69 = vmatpush.msra.mxu0 %v42
  %70 = vmatpush.msra.mxu0 %v41
  %71 = vmatpush.msra.mxu0 %v40
  %72 = vmatmul.f32.gmra.mxu0 %v37
  %v73 = vpop.f32.mrf.mxu0
  %v74 = vadd.f32 0.0, %v73
  %75 = vmatmul.f32.gmra.mxu0 %v38
  %v76 = vpop.f32.mrf.mxu0
  %v77 = vadd.f32 0.0, %v76
  %78 = vmatmul.f32.gmra.mxu0 %v39
  %v79 = vpop.f32.mrf.mxu0
  %v80 = vadd.f32 0.0, %v79
  %81 = vdwg.mxu0
  %v82 = vmul.f32 %v74, 0.0002
  %v83 = vmul.f32 %v77, 0.0002
  %v84 = vmul.f32 %v80, 0.0002
  %v85 = vadd.f32 %v82, 2.0
  %v86 = vadd.f32 %v83, 2.0
  %v87 = vadd.f32 %v84, 2.0
  %v88 = vlog2.pop %v85
  %v89 = vmul.f32 %v88, 0.6931472
  %v90 = vlog2.pop %v86
  %v91 = vmul.f32 %v90, 0.6931472
  %v92 = vlog2.pop %v87
  %v93 = vmul.f32 %v92, 0.6931472
  %v94 = vmul.f32 %v89, -0.75
  %v95 = vmul.f32 %v91, -0.75
  %v96 = vmul.f32 %v93, -0.75
  %v97 = vmul.f32 %v94, 1.442695
  %v98 = vpow.pop %v97
  %v99 = vmul.f32 %v95, 1.442695
  %v100 = vpow.pop %v99
  %v101 = vmul.f32 %v96, 1.442695
  %v102 = vpow.pop %v101
  %v103 = vmul.f32 %v34, %v98
  %v104 = vmul.f32 %v35, %v100
  %v105 = vmul.f32 %v36, %v102
  %v106 = vld [vmem:[%s2] sm:$0x1]
  %v108 = vperm.slane %v106, 0
  %v110 = vmul.f32 %v103, %v108
  %v111 = vmul.f32 %v104, %v108
  %v112 = vmul.f32 %v105, %v108
  %v113 = vld [vmem:[%s3] sm:$0x1]
  %v115 = vperm.slane %v113, 0
  %v117 = vadd.f32 %v110, %v115
  %v118 = vadd.f32 %v111, %v115
  %v119 = vadd.f32 %v112, %v115
  %120 = vst [vmem:[%s4] sm:$0xff] %v117
  %121 = vst [vmem:[%s4 + $0x8] sm:$0xff] %v118
  %122 = vst [vmem:[%s4 + $0x10] sm:$0xff] %v119
  // Predicated region
  $region18: #{alexlike_forward.21} parent=0 // pred_check
    _
  $region19: #{alexlike_forward.21} parent=0 // pred_check_branch
    %124 = sbr.rel (0) target = $region21
  $region20: #{alexlike_forward.21} parent=0 // pred_region
    _
  $region21: #{alexlike_forward.21} parent=0 // pred_fallthru
    _
  // Predicated region
  $region22: #{alexlike_forward.21} parent=0 // pred_check
    _
  $region23: #{alexlike_forward.21} parent=0 // pred_check_branch
    %126 = sbr.rel (0) target = $region25
  $region24: #{alexlike_forward.21} parent=0 // pred_region
    _
  $region25: #{alexlike_forward.21} parent=0 // pred_fallthru
    _

// kernel: alexlike_forward.22
$region0: #{alexlike_forward.22}
  #allocation0 [shape = 'u32[]', space=smem, size = 0x4, offset = 0x4, fixed_abs, tag = 'smem constant byte address 0x4 - core index']
  #allocation1 [shape = 'u32[72,128]{1,0:T(1,128)}', space=vmem, size = 0x9000, scoped, tag = 'internal scratch']
  %s0 = inlined_call_operand.vmem [shape: bf16[32,2304], index: 0, kind: input, shape index: {}]
  %s1 = inlined_call_operand.vmem [shape: bf16[2304,384], index: 1, kind: input, shape index: {}]
  %s2 = inlined_call_operand.vmem [shape: f32[1,384], index: 2, kind: input, shape index: {}]
  %s3 = inlined_call_operand.vmem [shape: f32[1,384], index: 3, kind: input, shape index: {}]
  %s4 = inlined_call_operand.vmem [shape: f32[1,384], index: 4, kind: input, shape index: {}]
  %s5 = inlined_call_operand.vmem [shape: f32[32,384], index: 5, kind: output, shape index: {}]
  %s6 = sld [smem:[#allocation0]]
  $region30: #{alexlike_forward.22} parent=0
    _
  %s8 = ssub.s32 1, %s6
  %s9 = scalar_select 0, %s8, %s6
  // Predicated region
  $region2: #{alexlike_forward.22} parent=0 // pred_check
    _
  $region3: #{alexlike_forward.22} parent=0 // pred_check_branch
    %11 = sbr.rel (0) target = $region5
  $region4: #{alexlike_forward.22} parent=0 // pred_region
    _
  $region5: #{alexlike_forward.22} parent=0 // pred_fallthru
    _
  // Predicated region
  $region6: #{alexlike_forward.22} parent=0 // pred_check
    _
  $region7: #{alexlike_forward.22} parent=0 // pred_check_branch
    %13 = sbr.rel (0) target = $region9
  $region8: #{alexlike_forward.22} parent=0 // pred_region
    _
  $region9: #{alexlike_forward.22} parent=0 // pred_fallthru
    _
  // Predicated region
  $region10: #{alexlike_forward.22} parent=0 // pred_check
    _
  $region11: #{alexlike_forward.22} parent=0 // pred_check_branch
    %15 = sbr.rel (0) target = $region13
  $region12: #{alexlike_forward.22} parent=0 // pred_region
    _
  $region13: #{alexlike_forward.22} parent=0 // pred_fallthru
    _
  // Predicated region
  $region14: #{alexlike_forward.22} parent=0 // pred_check
    _
  $region15: #{alexlike_forward.22} parent=0 // pred_check_branch
    %17 = sbr.rel (0) target = $region17
  $region16: #{alexlike_forward.22} parent=0 // pred_region
    _
  $region17: #{alexlike_forward.22} parent=0 // pred_fallthru
    _
  // Predicated region
  $region18: #{alexlike_forward.22} parent=0 // pred_check
    _
  $region19: #{alexlike_forward.22} parent=0 // pred_check_branch
    %19 = sbr.rel (0) target = $region21
  $region20: #{alexlike_forward.22} parent=0 // pred_region
    _
  $region21: #{alexlike_forward.22} parent=0 // pred_fallthru
    _
  %v20 = vld [vmem:[%s0] sm:$0xff]
  %v21 = vld [vmem:[%s0 + $0x8] sm:$0xff]
  %v22 = vld [vmem:[%s0 + $0x10] sm:$0xff]
  %v23 = vld [vmem:[%s0 + $0x18] sm:$0xff]
  %v24 = vld [vmem:[%s0 + $0x20] sm:$0xff]
  %v25 = vld [vmem:[%s0 + $0x28] sm:$0xff]
  %v26 = vld [vmem:[%s0 + $0x30] sm:$0xff]
  %v27 = vld [vmem:[%s0 + $0x38] sm:$0xff]
  %v28 = vld [vmem:[%s0 + $0x40] sm:$0xff]
  %v29 = vld [vmem:[%s0 + $0x48] sm:$0xff]
  %v30 = vld [vmem:[%s0 + $0x50] sm:$0xff]
  %v31 = vld [vmem:[%s0 + $0x58] sm:$0xff]
  %v32 = vld [vmem:[%s0 + $0x60] sm:$0xff]
  %v33 = vld [vmem:[%s0 + $0x68] sm:$0xff]
  %v34 = vld [vmem:[%s0 + $0x70] sm:$0xff]
  %v35 = vld [vmem:[%s0 + $0x78] sm:$0xff]
  %v36 = vld [vmem:[%s0 + $0x80] sm:$0xff]
  %v37 = vld [vmem:[%s0 + $0x88] sm:$0xff]
  %v38 = vld [vmem:[%s0 + $0x90] sm:$0xff]
  %v39 = vld [vmem:[%s0 + $0x98] sm:$0xff]
  %v40 = vld [vmem:[%s0 + $0xa0] sm:$0xff]
  %v41 = vld [vmem:[%s0 + $0xa8] sm:$0xff]
  %v42 = vld [vmem:[%s0 + $0xb0] sm:$0xff]
  %v43 = vld [vmem:[%s0 + $0xb8] sm:$0xff]
  %v44 = vld [vmem:[%s0 + $0xc0] sm:$0xff]
  %v45 = vld [vmem:[%s0 + $0xc8] sm:$0xff]
  %v46 = vld [vmem:[%s0 + $0xd0] sm:$0xff]
  %v47 = vld [vmem:[%s0 + $0xd8] sm:$0xff]
  %v48 = vld [vmem:[%s0 + $0xe0] sm:$0xff]
  %v49 = vld [vmem:[%s0 + $0xe8] sm:$0xff]
  %v50 = vld [vmem:[%s0 + $0xf0] sm:$0xff]
  %v51 = vld [vmem:[%s0 + $0xf8] sm:$0xff]
  %v52 = vld [vmem:[%s0 + $0x100] sm:$0xff]
  %v53 = vld [vmem:[%s0 + $0x108] sm:$0xff]
  %v54 = vld [vmem:[%s0 + $0x110] sm:$0xff]
  %v55 = vld [vmem:[%s0 + $0x118] sm:$0xff]
  %v56 = vld [vmem:[%s1] sm:$0xff]
  %v57 = vld [vmem:[%s1 + $0x8] sm:$0xf]
  %v58 = vld [vmem:[%s1 + $0xc] sm:$0xff]
  %v59 = vld [vmem:[%s1 + $0x14] sm:$0xf]
  %v60 = vld [vmem:[%s1 + $0x18] sm:$0xff]
  %v61 = vld [vmem:[%s1 + $0x20] sm:$0xf]
  %v62 = vld [vmem:[%s1 + $0x24] sm:$0xff]
  %v63 = vld [vmem:[%s1 + $0x2c] sm:$0xf]
  %v64 = vld [vmem:[%s1 + $0x30] sm:$0xff]
  %v65 = vld [vmem:[%s1 + $0x38] sm:$0xf]
  %v66 = vld [vmem:[%s1 + $0x3c] sm:$0xff]
  %v67 = vld [vmem:[%s1 + $0x44] sm:$0xf]
  %v68 = vld [vmem:[%s1 + $0x48] sm:$0xff]
  %v69 = vld [vmem:[%s1 + $0x50] sm:$0xf]
  %v70 = vld [vmem:[%s1 + $0x54] sm:$0xff]
  %v71 = vld [vmem:[%s1 + $0x5c] sm:$0xf]
  %v72 = vld [vmem:[%s1 + $0x60] sm:$0xff]
  %v73 = vld [vmem:[%s1 + $0x68] sm:$0xf]
  %v74 = vld [vmem:[%s1 + $0x6c] sm:$0xff]
  %v75 = vld [vmem:[%s1 + $0x74] sm:$0xf]
  %v76 = vld [vmem:[%s1 + $0x78] sm:$0xff]
  %v77 = vld [vmem:[%s1 + $0x80] sm:$0xf]
  %v78 = vld [vmem:[%s1 + $0x84] sm:$0xff]
  %v79 = vld [vmem:[%s1 + $0x8c] sm:$0xf]
  %v80 = vld [vmem:[%s1 + $0x90] sm:$0xff]
  %v81 = vld [vmem:[%s1 + $0x98] sm:$0xf]
  %v82 = vld [vmem:[%s1 + $0x9c] sm:$0xff]
  %v83 = vld [vmem:[%s1 + $0xa4] sm:$0xf]
  %v84 = vld [vmem:[%s1 + $0xa8] sm:$0xff]
  %v85 = vld [vmem:[%s1 + $0xb0] sm:$0xf]
  %v86 = vld [vmem:[%s1 + $0xb4] sm:$0xff]
  %v87 = vld [vmem:[%s1 + $0xbc] sm:$0xf]
  %v88 = vld [vmem:[%s1 + $0xc0] sm:$0xff]
  %v89 = vld [vmem:[%s1 + $0xc8] sm:$0xf]
  %v90 = vld [vmem:[%s1 + $0xcc] sm:$0xff]
  %v91 = vld [vmem:[%s1 + $0xd4] sm:$0xf]
  %v92 = vld [vmem:[%s1 + $0xd8] sm:$0xff]
  %v93 = vld [vmem:[%s1 + $0xe0] sm:$0xf]
  %v94 = vld [vmem:[%s1 + $0xe4] sm:$0xff]
  %v95 = vld [vmem:[%s1 + $0xec] sm:$0xf]
  %v96 = vld [vmem:[%s1 + $0xf0] sm:$0xff]
  %v97 = vld [vmem:[%s1 + $0xf8] sm:$0xf]
  %v98 = vld [vmem:[%s1 + $0xfc] sm:$0xff]
  %v99 = vld [vmem:[%s1 + $0x104] sm:$0xf]
  %v100 = vld [vmem:[%s1 + $0x108] sm:$0xff]
  %v101 = vld [vmem:[%s1 + $0x110] sm:$0xf]
  %v102 = vld [vmem:[%s1 + $0x114] sm:$0xff]
  %v103 = vld [vmem:[%s1 + $0x11c] sm:$0xf]
  %v104 = vld [vmem:[%s1 + $0x120] sm:$0xff]
  %v105 = vld [vmem:[%s1 + $0x128] sm:$0xf]
  %v106 = vld [vmem:[%s1 + $0x12c] sm:$0xff]
  %v107 = vld [vmem:[%s1 + $0x134] sm:$0xf]
  %v108 = vld [vmem:[%s1 + $0x138] sm:$0xff]
  %v109 = vld [vmem:[%s1 + $0x140] sm:$0xf]
  %v110 = vld [vmem:[%s1 + $0x144] sm:$0xff]
  %v111 = vld [vmem:[%s1 + $0x14c] sm:$0xf]
  %v112 = vld [vmem:[%s1 + $0x150] sm:$0xff]
  %v113 = vld [vmem:[%s1 + $0x158] sm:$0xf]
  %v114 = vld [vmem:[%s1 + $0x15c] sm:$0xff]
  %v115 = vld [vmem:[%s1 + $0x164] sm:$0xf]
  %v116 = vld [vmem:[%s1 + $0x168] sm:$0xff]
  %v117 = vld [vmem:[%s1 + $0x170] sm:$0xf]
  %v118 = vld [vmem:[%s1 + $0x174] sm:$0xff]
  %v119 = vld [vmem:[%s1 + $0x17c] sm:$0xf]
  %v120 = vld [vmem:[%s1 + $0x180] sm:$0xff]
  %v121 = vld [vmem:[%s1 + $0x188] sm:$0xf]
  %v122 = vld [vmem:[%s1 + $0x18c] sm:$0xff]
  %v123 = vld [vmem:[%s1 + $0x194] sm:$0xf]
  %v124 = vld [vmem:[%s1 + $0x198] sm:$0xff]
  %v125 = vld [vmem:[%s1 + $0x1a0] sm:$0xf]
  %v126 = vld [vmem:[%s1 + $0x1a4] sm:$0xff]
  %v127 = vld [vmem:[%s1 + $0x1ac] sm:$0xf]
  %v128 = vld [vmem:[%s1 + $0x1b0] sm:$0xff]
  %v129 = vld [vmem:[%s1 + $0x1b8] sm:$0xf]
  %v130 = vld [vmem:[%s1 + $0x1bc] sm:$0xff]
  %v131 = vld [vmem:[%s1 + $0x1c4] sm:$0xf]
  %v132 = vld [vmem:[%s1 + $0x1c8] sm:$0xff]
  %v133 = vld [vmem:[%s1 + $0x1d0] sm:$0xf]
  %v134 = vld [vmem:[%s1 + $0x1d4] sm:$0xff]
  %v135 = vld [vmem:[%s1 + $0x1dc] sm:$0xf]
  %v136 = vld [vmem:[%s1 + $0x1e0] sm:$0xff]
  %v137 = vld [vmem:[%s1 + $0x1e8] sm:$0xf]
  %v138 = vld [vmem:[%s1 + $0x1ec] sm:$0xff]
  %v139 = vld [vmem:[%s1 + $0x1f4] sm:$0xf]
  %v140 = vld [vmem:[%s1 + $0x1f8] sm:$0xff]
  %v141 = vld [vmem:[%s1 + $0x200] sm:$0xf]
  %v142 = vld [vmem:[%s1 + $0x204] sm:$0xff]
  %v143 = vld [vmem:[%s1 + $0x20c] sm:$0xf]
  %v144 = vld [vmem:[%s1 + $0x210] sm:$0xff]
  %v145 = vld [vmem:[%s1 + $0x218] sm:$0xf]
  %v146 = vld [vmem:[%s1 + $0x21c] sm:$0xff]
  %v147 = vld [vmem:[%s1 + $0x224] sm:$0xf]
  %v148 = vld [vmem:[%s1 + $0x228] sm:$0xff]
  %v149 = vld [vmem:[%s1 + $0x230] sm:$0xf]
  %v150 = vld [vmem:[%s1 + $0x234] sm:$0xff]
  %v151 = vld [vmem:[%s1 + $0x23c] sm:$0xf]
  %v152 = vld [vmem:[%s1 + $0x240] sm:$0xff]
  %v153 = vld [vmem:[%s1 + $0x248] sm:$0xf]
  %v154 = vld [vmem:[%s1 + $0x24c] sm:$0xff]
  %v155 = vld [vmem:[%s1 + $0x254] sm:$0xf]
  %v156 = vld [vmem:[%s1 + $0x258] sm:$0xff]
  %v157 = vld [vmem:[%s1 + $0x260] sm:$0xf]
  %v158 = vld [vmem:[%s1 + $0x264] sm:$0xff]
  %v159 = vld [vmem:[%s1 + $0x26c] sm:$0xf]
  %v160 = vld [vmem:[%s1 + $0x270] sm:$0xff]
  %v161 = vld [vmem:[%s1 + $0x278] sm:$0xf]
  %v162 = vld [vmem:[%s1 + $0x27c] sm:$0xff]
  %v163 = vld [vmem:[%s1 + $0x284] sm:$0xf]
  %v164 = vld [vmem:[%s1 + $0x288] sm:$0xff]
  %v165 = vld [vmem:[%s1 + $0x290] sm:$0xf]
  %v166 = vld [vmem:[%s1 + $0x294] sm:$0xff]
  %v167 = vld [vmem:[%s1 + $0x29c] sm:$0xf]
  %v168 = vld [vmem:[%s1 + $0x2a0] sm:$0xff]
  %v169 = vld [vmem:[%s1 + $0x2a8] sm:$0xf]
  %v170 = vld [vmem:[%s1 + $0x2ac] sm:$0xff]
  %v171 = vld [vmem:[%s1 + $0x2b4] sm:$0xf]
  %v172 = vld [vmem:[%s1 + $0x2b8] sm:$0xff]
  %v173 = vld [vmem:[%s1 + $0x2c0] sm:$0xf]
  %v174 = vld [vmem:[%s1 + $0x2c4] sm:$0xff]
  %v175 = vld [vmem:[%s1 + $0x2cc] sm:$0xf]
  %v176 = vld [vmem:[%s1 + $0x2d0] sm:$0xff]
  %v177 = vld [vmem:[%s1 + $0x2d8] sm:$0xf]
  %v178 = vld [vmem:[%s1 + $0x2dc] sm:$0xff]
  %v179 = vld [vmem:[%s1 + $0x2e4] sm:$0xf]
  %v180 = vld [vmem:[%s1 + $0x2e8] sm:$0xff]
  %v181 = vld [vmem:[%s1 + $0x2f0] sm:$0xf]
  %v182 = vld [vmem:[%s1 + $0x2f4] sm:$0xff]
  %v183 = vld [vmem:[%s1 + $0x2fc] sm:$0xf]
  %v184 = vld [vmem:[%s1 + $0x300] sm:$0xff]
  %v185 = vld [vmem:[%s1 + $0x308] sm:$0xf]
  %v186 = vld [vmem:[%s1 + $0x30c] sm:$0xff]
  %v187 = vld [vmem:[%s1 + $0x314] sm:$0xf]
  %v188 = vld [vmem:[%s1 + $0x318] sm:$0xff]
  %v189 = vld [vmem:[%s1 + $0x320] sm:$0xf]
  %v190 = vld [vmem:[%s1 + $0x324] sm:$0xff]
  %v191 = vld [vmem:[%s1 + $0x32c] sm:$0xf]
  %v192 = vld [vmem:[%s1 + $0x330] sm:$0xff]
  %v193 = vld [vmem:[%s1 + $0x338] sm:$0xf]
  %v194 = vld [vmem:[%s1 + $0x33c] sm:$0xff]
  %v195 = vld [vmem:[%s1 + $0x344] sm:$0xf]
  %v196 = vld [vmem:[%s1 + $0x348] sm:$0xff]
  %v197 = vld [vmem:[%s1 + $0x350] sm:$0xf]
  %v198 = vld [vmem:[%s1 + $0x354] sm:$0xff]
  %v199 = vld [vmem:[%s1 + $0x35c] sm:$0xf]
  %v200 = vld [vmem:[%s1 + $0x360] sm:$0xff]
  %v201 = vld [vmem:[%s1 + $0x368] sm:$0xf]
  %v202 = vld [vmem:[%s1 + $0x36c] sm:$0xff]
  %v203 = vld [vmem:[%s1 + $0x374] sm:$0xf]
  %v204 = vld [vmem:[%s1 + $0x378] sm:$0xff]
  %v205 = vld [vmem:[%s1 + $0x380] sm:$0xf]
  %v206 = vld [vmem:[%s1 + $0x384] sm:$0xff]
  %v207 = vld [vmem:[%s1 + $0x38c] sm:$0xf]
  %v208 = vld [vmem:[%s1 + $0x390] sm:$0xff]
  %v209 = vld [vmem:[%s1 + $0x398] sm:$0xf]
  %v210 = vld [vmem:[%s1 + $0x39c] sm:$0xff]
  %v211 = vld [vmem:[%s1 + $0x3a4] sm:$0xf]
  %v212 = vld [vmem:[%s1 + $0x3a8] sm:$0xff]
  %v213 = vld [vmem:[%s1 + $0x3b0] sm:$0xf]
  %v214 = vld [vmem:[%s1 + $0x3b4] sm:$0xff]
  %v215 = vld [vmem:[%s1 + $0x3bc] sm:$0xf]
  %v216 = vld [vmem:[%s1 + $0x3c0] sm:$0xff]
  %v217 = vld [vmem:[%s1 + $0x3c8] sm:$0xf]
  %v218 = vld [vmem:[%s1 + $0x3cc] sm:$0xff]
  %v219 = vld [vmem:[%s1 + $0x3d4] sm:$0xf]
  %v220 = vld [vmem:[%s1 + $0x3d8] sm:$0xff]
  %v221 = vld [vmem:[%s1 + $0x3e0] sm:$0xf]
  %v222 = vld [vmem:[%s1 + $0x3e4] sm:$0xff]
  %v223 = vld [vmem:[%s1 + $0x3ec] sm:$0xf]
  %v224 = vld [vmem:[%s1 + $0x3f0] sm:$0xff]
  %v225 = vld [vmem:[%s1 + $0x3f8] sm:$0xf]
  %v226 = vld [vmem:[%s1 + $0x3fc] sm:$0xff]
  %v227 = vld [vmem:[%s1 + $0x404] sm:$0xf]
  %v228 = vld [vmem:[%s1 + $0x408] sm:$0xff]
  %v229 = vld [vmem:[%s1 + $0x410] sm:$0xf]
  %v230 = vld [vmem:[%s1 + $0x414] sm:$0xff]
  %v231 = vld [vmem:[%s1 + $0x41c] sm:$0xf]
  %v232 = vld [vmem:[%s1 + $0x420] sm:$0xff]
  %v233 = vld [vmem:[%s1 + $0x428] sm:$0xf]
  %v234 = vld [vmem:[%s1 + $0x42c] sm:$0xff]
  %v235 = vld [vmem:[%s1 + $0x434] sm:$0xf]
  %v236 = vld [vmem:[%s1 + $0x438] sm:$0xff]
  %v237 = vld [vmem:[%s1 + $0x440] sm:$0xf]
  %v238 = vld [vmem:[%s1 + $0x444] sm:$0xff]
  %v239 = vld [vmem:[%s1 + $0x44c] sm:$0xf]
  %v240 = vld [vmem:[%s1 + $0x450] sm:$0xff]
  %v241 = vld [vmem:[%s1 + $0x458] sm:$0xf]
  %v242 = vld [vmem:[%s1 + $0x45c] sm:$0xff]
  %v243 = vld [vmem:[%s1 + $0x464] sm:$0xf]
  %v244 = vld [vmem:[%s1 + $0x468] sm:$0xff]
  %v245 = vld [vmem:[%s1 + $0x470] sm:$0xf]
  %v246 = vld [vmem:[%s1 + $0x474] sm:$0xff]
  %v247 = vld [vmem:[%s1 + $0x47c] sm:$0xf]
  %v248 = vld [vmem:[%s1 + $0x480] sm:$0xff]
  %v249 = vld [vmem:[%s1 + $0x488] sm:$0xf]
  %v250 = vld [vmem:[%s1 + $0x48c] sm:$0xff]
  %v251 = vld [vmem:[%s1 + $0x494] sm:$0xf]
  %v252 = vld [vmem:[%s1 + $0x498] sm:$0xff]
  %v253 = vld [vmem:[%s1 + $0x4a0] sm:$0xf]
  %v254 = vld [vmem:[%s1 + $0x4a4] sm:$0xff]
  %v255 = vld [vmem:[%s1 + $0x4ac] sm:$0xf]
  %v256 = vld [vmem:[%s1 + $0x4b0] sm:$0xff]
  %v257 = vld [vmem:[%s1 + $0x4b8] sm:$0xf]
  %v258 = vld [vmem:[%s1 + $0x4bc] sm:$0xff]
  %v259 = vld [vmem:[%s1 + $0x4c4] sm:$0xf]
  %v260 = vld [vmem:[%s1 + $0x4c8] sm:$0xff]
  %v261 = vld [vmem:[%s1 + $0x4d0] sm:$0xf]
  %v262 = vld [vmem:[%s1 + $0x4d4] sm:$0xff]
  %v263 = vld [vmem:[%s1 + $0x4dc] sm:$0xf]
  %v264 = vld [vmem:[%s1 + $0x4e0] sm:$0xff]
  %v265 = vld [vmem:[%s1 + $0x4e8] sm:$0xf]
  %v266 = vld [vmem:[%s1 + $0x4ec] sm:$0xff]
  %v267 = vld [vmem:[%s1 + $0x4f4] sm:$0xf]
  %v268 = vld [vmem:[%s1 + $0x4f8] sm:$0xff]
  %v269 = vld [vmem:[%s1 + $0x500] sm:$0xf]
  %v270 = vld [vmem:[%s1 + $0x504] sm:$0xff]
  %v271 = vld [vmem:[%s1 + $0x50c] sm:$0xf]
  %v272 = vld [vmem:[%s1 + $0x510] sm:$0xff]
  %v273 = vld [vmem:[%s1 + $0x518] sm:$0xf]
  %v274 = vld [vmem:[%s1 + $0x51c] sm:$0xff]
  %v275 = vld [vmem:[%s1 + $0x524] sm:$0xf]
  %v276 = vld [vmem:[%s1 + $0x528] sm:$0xff]
  %v277 = vld [vmem:[%s1 + $0x530] sm:$0xf]
  %v278 = vld [vmem:[%s1 + $0x534] sm:$0xff]
  %v279 = vld [vmem:[%s1 + $0x53c] sm:$0xf]
  %v280 = vld [vmem:[%s1 + $0x540] sm:$0xff]
  %v281 = vld [vmem:[%s1 + $0x548] sm:$0xf]
  %v282 = vld [vmem:[%s1 + $0x54c] sm:$0xff]
  %v283 = vld [vmem:[%s1 + $0x554] sm:$0xf]
  %v284 = vld [vmem:[%s1 + $0x558] sm:$0xff]
  %v285 = vld [vmem:[%s1 + $0x560] sm:$0xf]
  %v286 = vld [vmem:[%s1 + $0x564] sm:$0xff]
  %v287 = vld [vmem:[%s1 + $0x56c] sm:$0xf]
  %v288 = vld [vmem:[%s1 + $0x570] sm:$0xff]
  %v289 = vld [vmem:[%s1 + $0x578] sm:$0xf]
  %v290 = vld [vmem:[%s1 + $0x57c] sm:$0xff]
  %v291 = vld [vmem:[%s1 + $0x584] sm:$0xf]
  %v292 = vld [vmem:[%s1 + $0x588] sm:$0xff]
  %v293 = vld [vmem:[%s1 + $0x590] sm:$0xf]
  %v294 = vld [vmem:[%s1 + $0x594] sm:$0xff]
  %v295 = vld [vmem:[%s1 + $0x59c] sm:$0xf]
  %v296 = vld [vmem:[%s1 + $0x5a0] sm:$0xff]
  %v297 = vld [vmem:[%s1 + $0x5a8] sm:$0xf]
  %v298 = vld [vmem:[%s1 + $0x5ac] sm:$0xff]
  %v299 = vld [vmem:[%s1 + $0x5b4] sm:$0xf]
  %v300 = vld [vmem:[%s1 + $0x5b8] sm:$0xff]
  %v301 = vld [vmem:[%s1 + $0x5c0] sm:$0xf]
  %v302 = vld [vmem:[%s1 + $0x5c4] sm:$0xff]
  %v303 = vld [vmem:[%s1 + $0x5cc] sm:$0xf]
  %v304 = vld [vmem:[%s1 + $0x5d0] sm:$0xff]
  %v305 = vld [vmem:[%s1 + $0x5d8] sm:$0xf]
  %v306 = vld [vmem:[%s1 + $0x5dc] sm:$0xff]
  %v307 = vld [vmem:[%s1 + $0x5e4] sm:$0xf]
  %v308 = vld [vmem:[%s1 + $0x5e8] sm:$0xff]
  %v309 = vld [vmem:[%s1 + $0x5f0] sm:$0xf]
  %v310 = vld [vmem:[%s1 + $0x5f4] sm:$0xff]
  %v311 = vld [vmem:[%s1 + $0x5fc] sm:$0xf]
  %v312 = vld [vmem:[%s1 + $0x600] sm:$0xff]
  %v313 = vld [vmem:[%s1 + $0x608] sm:$0xf]
  %v314 = vld [vmem:[%s1 + $0x60c] sm:$0xff]
  %v315 = vld [vmem:[%s1 + $0x614] sm:$0xf]
  %v316 = vld [vmem:[%s1 + $0x618] sm:$0xff]
  %v317 = vld [vmem:[%s1 + $0x620] sm:$0xf]
  %v318 = vld [vmem:[%s1 + $0x624] sm:$0xff]
  %v319 = vld [vmem:[%s1 + $0x62c] sm:$0xf]
  %v320 = vld [vmem:[%s1 + $0x630] sm:$0xff]
  %v321 = vld [vmem:[%s1 + $0x638] sm:$0xf]
  %v322 = vld [vmem:[%s1 + $0x63c] sm:$0xff]
  %v323 = vld [vmem:[%s1 + $0x644] sm:$0xf]
  %v324 = vld [vmem:[%s1 + $0x648] sm:$0xff]
  %v325 = vld [vmem:[%s1 + $0x650] sm:$0xf]
  %v326 = vld [vmem:[%s1 + $0x654] sm:$0xff]
  %v327 = vld [vmem:[%s1 + $0x65c] sm:$0xf]
  %v328 = vld [vmem:[%s1 + $0x660] sm:$0xff]
  %v329 = vld [vmem:[%s1 + $0x668] sm:$0xf]
  %v330 = vld [vmem:[%s1 + $0x66c] sm:$0xff]
  %v331 = vld [vmem:[%s1 + $0x674] sm:$0xf]
  %v332 = vld [vmem:[%s1 + $0x678] sm:$0xff]
  %v333 = vld [vmem:[%s1 + $0x680] sm:$0xf]
  %v334 = vld [vmem:[%s1 + $0x684] sm:$0xff]
  %v335 = vld [vmem:[%s1 + $0x68c] sm:$0xf]
  %v336 = vld [vmem:[%s1 + $0x690] sm:$0xff]
  %v337 = vld [vmem:[%s1 + $0x698] sm:$0xf]
  %v338 = vld [vmem:[%s1 + $0x69c] sm:$0xff]
  %v339 = vld [vmem:[%s1 + $0x6a4] sm:$0xf]
  %v340 = vld [vmem:[%s1 + $0x6a8] sm:$0xff]
  %v341 = vld [vmem:[%s1 + $0x6b0] sm:$0xf]
  %v342 = vld [vmem:[%s1 + $0x6b4] sm:$0xff]
  %v343 = vld [vmem:[%s1 + $0x6bc] sm:$0xf]
  %v344 = vld [vmem:[%s1 + $0x6c0] sm:$0xff]
  %v345 = vld [vmem:[%s1 + $0x6c8] sm:$0xf]
  %v346 = vld [vmem:[%s1 + $0x6cc] sm:$0xff]
  %v347 = vld [vmem:[%s1 + $0x6d4] sm:$0xf]
  %v348 = vld [vmem:[%s1 + $0x6d8] sm:$0xff]
  %v349 = vld [vmem:[%s1 + $0x6e0] sm:$0xf]
  %v350 = vld [vmem:[%s1 + $0x6e4] sm:$0xff]
  %v351 = vld [vmem:[%s1 + $0x6ec] sm:$0xf]
  %v352 = vld [vmem:[%s1 + $0x6f0] sm:$0xff]
  %v353 = vld [vmem:[%s1 + $0x6f8] sm:$0xf]
  %v354 = vld [vmem:[%s1 + $0x6fc] sm:$0xff]
  %v355 = vld [vmem:[%s1 + $0x704] sm:$0xf]
  %v356 = vld [vmem:[%s1 + $0x708] sm:$0xff]
  %v357 = vld [vmem:[%s1 + $0x710] sm:$0xf]
  %v358 = vld [vmem:[%s1 + $0x714] sm:$0xff]
  %v359 = vld [vmem:[%s1 + $0x71c] sm:$0xf]
  %v360 = vld [vmem:[%s1 + $0x720] sm:$0xff]
  %v361 = vld [vmem:[%s1 + $0x728] sm:$0xf]
  %v362 = vld [vmem:[%s1 + $0x72c] sm:$0xff]
  %v363 = vld [vmem:[%s1 + $0x734] sm:$0xf]
  %v364 = vld [vmem:[%s1 + $0x738] sm:$0xff]
  %v365 = vld [vmem:[%s1 + $0x740] sm:$0xf]
  %v366 = vld [vmem:[%s1 + $0x744] sm:$0xff]
  %v367 = vld [vmem:[%s1 + $0x74c] sm:$0xf]
  %v368 = vld [vmem:[%s1 + $0x750] sm:$0xff]
  %v369 = vld [vmem:[%s1 + $0x758] sm:$0xf]
  %v370 = vld [vmem:[%s1 + $0x75c] sm:$0xff]
  %v371 = vld [vmem:[%s1 + $0x764] sm:$0xf]
  %v372 = vld [vmem:[%s1 + $0x768] sm:$0xff]
  %v373 = vld [vmem:[%s1 + $0x770] sm:$0xf]
  %v374 = vld [vmem:[%s1 + $0x774] sm:$0xff]
  %v375 = vld [vmem:[%s1 + $0x77c] sm:$0xf]
  %v376 = vld [vmem:[%s1 + $0x780] sm:$0xff]
  %v377 = vld [vmem:[%s1 + $0x788] sm:$0xf]
  %v378 = vld [vmem:[%s1 + $0x78c] sm:$0xff]
  %v379 = vld [vmem:[%s1 + $0x794] sm:$0xf]
  %v380 = vld [vmem:[%s1 + $0x798] sm:$0xff]
  %v381 = vld [vmem:[%s1 + $0x7a0] sm:$0xf]
  %v382 = vld [vmem:[%s1 + $0x7a4] sm:$0xff]
  %v383 = vld [vmem:[%s1 + $0x7ac] sm:$0xf]
  %v384 = vld [vmem:[%s1 + $0x7b0] sm:$0xff]
  %v385 = vld [vmem:[%s1 + $0x7b8] sm:$0xf]
  %v386 = vld [vmem:[%s1 + $0x7bc] sm:$0xff]
  %v387 = vld [vmem:[%s1 + $0x7c4] sm:$0xf]
  %v388 = vld [vmem:[%s1 + $0x7c8] sm:$0xff]
  %v389 = vld [vmem:[%s1 + $0x7d0] sm:$0xf]
  %v390 = vld [vmem:[%s1 + $0x7d4] sm:$0xff]
  %v391 = vld [vmem:[%s1 + $0x7dc] sm:$0xf]
  %v392 = vld [vmem:[%s1 + $0x7e0] sm:$0xff]
  %v393 = vld [vmem:[%s1 + $0x7e8] sm:$0xf]
  %v394 = vld [vmem:[%s1 + $0x7ec] sm:$0xff]
  %v395 = vld [vmem:[%s1 + $0x7f4] sm:$0xf]
  %v396 = vld [vmem:[%s1 + $0x7f8] sm:$0xff]
  %v397 = vld [vmem:[%s1 + $0x800] sm:$0xf]
  %v398 = vld [vmem:[%s1 + $0x804] sm:$0xff]
  %v399 = vld [vmem:[%s1 + $0x80c] sm:$0xf]
  %v400 = vld [vmem:[%s1 + $0x810] sm:$0xff]
  %v401 = vld [vmem:[%s1 + $0x818] sm:$0xf]
  %v402 = vld [vmem:[%s1 + $0x81c] sm:$0xff]
  %v403 = vld [vmem:[%s1 + $0x824] sm:$0xf]
  %v404 = vld [vmem:[%s1 + $0x828] sm:$0xff]
  %v405 = vld [vmem:[%s1 + $0x830] sm:$0xf]
  %v406 = vld [vmem:[%s1 + $0x834] sm:$0xff]
  %v407 = vld [vmem:[%s1 + $0x83c] sm:$0xf]
  %v408 = vld [vmem:[%s1 + $0x840] sm:$0xff]
  %v409 = vld [vmem:[%s1 + $0x848] sm:$0xf]
  %v410 = vld [vmem:[%s1 + $0x84c] sm:$0xff]
  %v411 = vld [vmem:[%s1 + $0x854] sm:$0xf]
  %v412 = vld [vmem:[%s1 + $0x858] sm:$0xff]
  %v413 = vld [vmem:[%s1 + $0x860] sm:$0xf]
  %v414 = vld [vmem:[%s1 + $0x864] sm:$0xff]
  %v415 = vld [vmem:[%s1 + $0x86c] sm:$0xf]
  %v416 = vld [vmem:[%s1 + $0x870] sm:$0xff]
  %v417 = vld [vmem:[%s1 + $0x878] sm:$0xf]
  %v418 = vld [vmem:[%s1 + $0x87c] sm:$0xff]
  %v419 = vld [vmem:[%s1 + $0x884] sm:$0xf]
  %v420 = vld [vmem:[%s1 + $0x888] sm:$0xff]
  %v421 = vld [vmem:[%s1 + $0x890] sm:$0xf]
  %v422 = vld [vmem:[%s1 + $0x894] sm:$0xff]
  %v423 = vld [vmem:[%s1 + $0x89c] sm:$0xf]
  %v424 = vld [vmem:[%s1 + $0x8a0] sm:$0xff]
  %v425 = vld [vmem:[%s1 + $0x8a8] sm:$0xf]
  %v426 = vld [vmem:[%s1 + $0x8ac] sm:$0xff]
  %v427 = vld [vmem:[%s1 + $0x8b4] sm:$0xf]
  %v428 = vld [vmem:[%s1 + $0x8b8] sm:$0xff]
  %v429 = vld [vmem:[%s1 + $0x8c0] sm:$0xf]
  %v430 = vld [vmem:[%s1 + $0x8c4] sm:$0xff]
  %v431 = vld [vmem:[%s1 + $0x8cc] sm:$0xf]
  %v432 = vld [vmem:[%s1 + $0x8d0] sm:$0xff]
  %v433 = vld [vmem:[%s1 + $0x8d8] sm:$0xf]
  %v434 = vld [vmem:[%s1 + $0x8dc] sm:$0xff]
  %v435 = vld [vmem:[%s1 + $0x8e4] sm:$0xf]
  %v436 = vld [vmem:[%s1 + $0x8e8] sm:$0xff]
  %v437 = vld [vmem:[%s1 + $0x8f0] sm:$0xf]
  %v438 = vld [vmem:[%s1 + $0x8f4] sm:$0xff]
  %v439 = vld [vmem:[%s1 + $0x8fc] sm:$0xf]
  %v440 = vld [vmem:[%s1 + $0x900] sm:$0xff]
  %v441 = vld [vmem:[%s1 + $0x908] sm:$0xf]
  %v442 = vld [vmem:[%s1 + $0x90c] sm:$0xff]
  %v443 = vld [vmem:[%s1 + $0x914] sm:$0xf]
  %v444 = vld [vmem:[%s1 + $0x918] sm:$0xff]
  %v445 = vld [vmem:[%s1 + $0x920] sm:$0xf]
  %v446 = vld [vmem:[%s1 + $0x924] sm:$0xff]
  %v447 = vld [vmem:[%s1 + $0x92c] sm:$0xf]
  %v448 = vld [vmem:[%s1 + $0x930] sm:$0xff]
  %v449 = vld [vmem:[%s1 + $0x938] sm:$0xf]
  %v450 = vld [vmem:[%s1 + $0x93c] sm:$0xff]
  %v451 = vld [vmem:[%s1 + $0x944] sm:$0xf]
  %v452 = vld [vmem:[%s1 + $0x948] sm:$0xff]
  %v453 = vld [vmem:[%s1 + $0x950] sm:$0xf]
  %v454 = vld [vmem:[%s1 + $0x954] sm:$0xff]
  %v455 = vld [vmem:[%s1 + $0x95c] sm:$0xf]
  %v456 = vld [vmem:[%s1 + $0x960] sm:$0xff]
  %v457 = vld [vmem:[%s1 + $0x968] sm:$0xf]
  %v458 = vld [vmem:[%s1 + $0x96c] sm:$0xff]
  %v459 = vld [vmem:[%s1 + $0x974] sm:$0xf]
  %v460 = vld [vmem:[%s1 + $0x978] sm:$0xff]
  %v461 = vld [vmem:[%s1 + $0x980] sm:$0xf]
  %v462 = vld [vmem:[%s1 + $0x984] sm:$0xff]
  %v463 = vld [vmem:[%s1 + $0x98c] sm:$0xf]
  %v464 = vld [vmem:[%s1 + $0x990] sm:$0xff]
  %v465 = vld [vmem:[%s1 + $0x998] sm:$0xf]
  %v466 = vld [vmem:[%s1 + $0x99c] sm:$0xff]
  %v467 = vld [vmem:[%s1 + $0x9a4] sm:$0xf]
  %v468 = vld [vmem:[%s1 + $0x9a8] sm:$0xff]
  %v469 = vld [vmem:[%s1 + $0x9b0] sm:$0xf]
  %v470 = vld [vmem:[%s1 + $0x9b4] sm:$0xff]
  %v471 = vld [vmem:[%s1 + $0x9bc] sm:$0xf]
  %v472 = vld [vmem:[%s1 + $0x9c0] sm:$0xff]
  %v473 = vld [vmem:[%s1 + $0x9c8] sm:$0xf]
  %v474 = vld [vmem:[%s1 + $0x9cc] sm:$0xff]
  %v475 = vld [vmem:[%s1 + $0x9d4] sm:$0xf]
  %v476 = vld [vmem:[%s1 + $0x9d8] sm:$0xff]
  %v477 = vld [vmem:[%s1 + $0x9e0] sm:$0xf]
  %v478 = vld [vmem:[%s1 + $0x9e4] sm:$0xff]
  %v479 = vld [vmem:[%s1 + $0x9ec] sm:$0xf]
  %v480 = vld [vmem:[%s1 + $0x9f0] sm:$0xff]
  %v481 = vld [vmem:[%s1 + $0x9f8] sm:$0xf]
  %v482 = vld [vmem:[%s1 + $0x9fc] sm:$0xff]
  %v483 = vld [vmem:[%s1 + $0xa04] sm:$0xf]
  %v484 = vld [vmem:[%s1 + $0xa08] sm:$0xff]
  %v485 = vld [vmem:[%s1 + $0xa10] sm:$0xf]
  %v486 = vld [vmem:[%s1 + $0xa14] sm:$0xff]
  %v487 = vld [vmem:[%s1 + $0xa1c] sm:$0xf]
  %v488 = vld [vmem:[%s1 + $0xa20] sm:$0xff]
  %v489 = vld [vmem:[%s1 + $0xa28] sm:$0xf]
  %v490 = vld [vmem:[%s1 + $0xa2c] sm:$0xff]
  %v491 = vld [vmem:[%s1 + $0xa34] sm:$0xf]
  %v492 = vld [vmem:[%s1 + $0xa38] sm:$0xff]
  %v493 = vld [vmem:[%s1 + $0xa40] sm:$0xf]
  %v494 = vld [vmem:[%s1 + $0xa44] sm:$0xff]
  %v495 = vld [vmem:[%s1 + $0xa4c] sm:$0xf]
  %v496 = vld [vmem:[%s1 + $0xa50] sm:$0xff]
  %v497 = vld [vmem:[%s1 + $0xa58] sm:$0xf]
  %v498 = vld [vmem:[%s1 + $0xa5c] sm:$0xff]
  %v499 = vld [vmem:[%s1 + $0xa64] sm:$0xf]
  %v500 = vld [vmem:[%s1 + $0xa68] sm:$0xff]
  %v501 = vld [vmem:[%s1 + $0xa70] sm:$0xf]
  %v502 = vld [vmem:[%s1 + $0xa74] sm:$0xff]
  %v503 = vld [vmem:[%s1 + $0xa7c] sm:$0xf]
  %v504 = vld [vmem:[%s1 + $0xa80] sm:$0xff]
  %v505 = vld [vmem:[%s1 + $0xa88] sm:$0xf]
  %v506 = vld [vmem:[%s1 + $0xa8c] sm:$0xff]
  %v507 = vld [vmem:[%s1 + $0xa94] sm:$0xf]
  %v508 = vld [vmem:[%s1 + $0xa98] sm:$0xff]
  %v509 = vld [vmem:[%s1 + $0xaa0] sm:$0xf]
  %v510 = vld [vmem:[%s1 + $0xaa4] sm:$0xff]
  %v511 = vld [vmem:[%s1 + $0xaac] sm:$0xf]
  %v512 = vld [vmem:[%s1 + $0xab0] sm:$0xff]
  %v513 = vld [vmem:[%s1 + $0xab8] sm:$0xf]
  %v514 = vld [vmem:[%s1 + $0xabc] sm:$0xff]
  %v515 = vld [vmem:[%s1 + $0xac4] sm:$0xf]
  %v516 = vld [vmem:[%s1 + $0xac8] sm:$0xff]
  %v517 = vld [vmem:[%s1 + $0xad0] sm:$0xf]
  %v518 = vld [vmem:[%s1 + $0xad4] sm:$0xff]
  %v519 = vld [vmem:[%s1 + $0xadc] sm:$0xf]
  %v520 = vld [vmem:[%s1 + $0xae0] sm:$0xff]
  %v521 = vld [vmem:[%s1 + $0xae8] sm:$0xf]
  %v522 = vld [vmem:[%s1 + $0xaec] sm:$0xff]
  %v523 = vld [vmem:[%s1 + $0xaf4] sm:$0xf]
  %v524 = vld [vmem:[%s1 + $0xaf8] sm:$0xff]
  %v525 = vld [vmem:[%s1 + $0xb00] sm:$0xf]
  %v526 = vld [vmem:[%s1 + $0xb04] sm:$0xff]
  %v527 = vld [vmem:[%s1 + $0xb0c] sm:$0xf]
  %v528 = vld [vmem:[%s1 + $0xb10] sm:$0xff]
  %v529 = vld [vmem:[%s1 + $0xb18] sm:$0xf]
  %v530 = vld [vmem:[%s1 + $0xb1c] sm:$0xff]
  %v531 = vld [vmem:[%s1 + $0xb24] sm:$0xf]
  %v532 = vld [vmem:[%s1 + $0xb28] sm:$0xff]
  %v533 = vld [vmem:[%s1 + $0xb30] sm:$0xf]
  %v534 = vld [vmem:[%s1 + $0xb34] sm:$0xff]
  %v535 = vld [vmem:[%s1 + $0xb3c] sm:$0xf]
  %v536 = vld [vmem:[%s1 + $0xb40] sm:$0xff]
  %v537 = vld [vmem:[%s1 + $0xb48] sm:$0xf]
  %v538 = vld [vmem:[%s1 + $0xb4c] sm:$0xff]
  %v539 = vld [vmem:[%s1 + $0xb54] sm:$0xf]
  %v540 = vld [vmem:[%s1 + $0xb58] sm:$0xff]
  %v541 = vld [vmem:[%s1 + $0xb60] sm:$0xf]
  %v542 = vld [vmem:[%s1 + $0xb64] sm:$0xff]
  %v543 = vld [vmem:[%s1 + $0xb6c] sm:$0xf]
  %v544 = vld [vmem:[%s1 + $0xb70] sm:$0xff]
  %v545 = vld [vmem:[%s1 + $0xb78] sm:$0xf]
  %v546 = vld [vmem:[%s1 + $0xb7c] sm:$0xff]
  %v547 = vld [vmem:[%s1 + $0xb84] sm:$0xf]
  %v548 = vld [vmem:[%s1 + $0xb88] sm:$0xff]
  %v549 = vld [vmem:[%s1 + $0xb90] sm:$0xf]
  %v550 = vld [vmem:[%s1 + $0xb94] sm:$0xff]
  %v551 = vld [vmem:[%s1 + $0xb9c] sm:$0xf]
  %v552 = vld [vmem:[%s1 + $0xba0] sm:$0xff]
  %v553 = vld [vmem:[%s1 + $0xba8] sm:$0xf]
  %v554 = vld [vmem:[%s1 + $0xbac] sm:$0xff]
  %v555 = vld [vmem:[%s1 + $0xbb4] sm:$0xf]
  %v556 = vld [vmem:[%s1 + $0xbb8] sm:$0xff]
  %v557 = vld [vmem:[%s1 + $0xbc0] sm:$0xf]
  %v558 = vld [vmem:[%s1 + $0xbc4] sm:$0xff]
  %v559 = vld [vmem:[%s1 + $0xbcc] sm:$0xf]
  %v560 = vld [vmem:[%s1 + $0xbd0] sm:$0xff]
  %v561 = vld [vmem:[%s1 + $0xbd8] sm:$0xf]
  %v562 = vld [vmem:[%s1 + $0xbdc] sm:$0xff]
  %v563 = vld [vmem:[%s1 + $0xbe4] sm:$0xf]
  %v564 = vld [vmem:[%s1 + $0xbe8] sm:$0xff]
  %v565 = vld [vmem:[%s1 + $0xbf0] sm:$0xf]
  %v566 = vld [vmem:[%s1 + $0xbf4] sm:$0xff]
  %v567 = vld [vmem:[%s1 + $0xbfc] sm:$0xf]
  %v568 = vld [vmem:[%s1 + $0xc00] sm:$0xff]
  %v569 = vld [vmem:[%s1 + $0xc08] sm:$0xf]
  %v570 = vld [vmem:[%s1 + $0xc0c] sm:$0xff]
  %v571 = vld [vmem:[%s1 + $0xc14] sm:$0xf]
  %v572 = vld [vmem:[%s1 + $0xc18] sm:$0xff]
  %v573 = vld [vmem:[%s1 + $0xc20] sm:$0xf]
  %v574 = vld [vmem:[%s1 + $0xc24] sm:$0xff]
  %v575 = vld [vmem:[%s1 + $0xc2c] sm:$0xf]
  %v576 = vld [vmem:[%s1 + $0xc30] sm:$0xff]
  %v577 = vld [vmem:[%s1 + $0xc38] sm:$0xf]
  %v578 = vld [vmem:[%s1 + $0xc3c] sm:$0xff]
  %v579 = vld [vmem:[%s1 + $0xc44] sm:$0xf]
  %v580 = vld [vmem:[%s1 + $0xc48] sm:$0xff]
  %v581 = vld [vmem:[%s1 + $0xc50] sm:$0xf]
  %v582 = vld [vmem:[%s1 + $0xc54] sm:$0xff]
  %v583 = vld [vmem:[%s1 + $0xc5c] sm:$0xf]
  %v584 = vld [vmem:[%s1 + $0xc60] sm:$0xff]
  %v585 = vld [vmem:[%s1 + $0xc68] sm:$0xf]
  %v586 = vld [vmem:[%s1 + $0xc6c] sm:$0xff]
  %v587 = vld [vmem:[%s1 + $0xc74] sm:$0xf]
  %v588 = vld [vmem:[%s1 + $0xc78] sm:$0xff]
  %v589 = vld [vmem:[%s1 + $0xc80] sm:$0xf]
  %v590 = vld [vmem:[%s1 + $0xc84] sm:$0xff]
  %v591 = vld [vmem:[%s1 + $0xc8c] sm:$0xf]
  %v592 = vld [vmem:[%s1 + $0xc90] sm:$0xff]
  %v593 = vld [vmem:[%s1 + $0xc98] sm:$0xf]
  %v594 = vld [vmem:[%s1 + $0xc9c] sm:$0xff]
  %v595 = vld [vmem:[%s1 + $0xca4] sm:$0xf]
  %v596 = vld [vmem:[%s1 + $0xca8] sm:$0xff]
  %v597 = vld [vmem:[%s1 + $0xcb0] sm:$0xf]
  %v598 = vld [vmem:[%s1 + $0xcb4] sm:$0xff]
  %v599 = vld [vmem:[%s1 + $0xcbc] sm:$0xf]
  %v600 = vld [vmem:[%s1 + $0xcc0] sm:$0xff]
  %v601 = vld [vmem:[%s1 + $0xcc8] sm:$0xf]
  %v602 = vld [vmem:[%s1 + $0xccc] sm:$0xff]
  %v603 = vld [vmem:[%s1 + $0xcd4] sm:$0xf]
  %v604 = vld [vmem:[%s1 + $0xcd8] sm:$0xff]
  %v605 = vld [vmem:[%s1 + $0xce0] sm:$0xf]
  %v606 = vld [vmem:[%s1 + $0xce4] sm:$0xff]
  %v607 = vld [vmem:[%s1 + $0xcec] sm:$0xf]
  %v608 = vld [vmem:[%s1 + $0xcf0] sm:$0xff]
  %v609 = vld [vmem:[%s1 + $0xcf8] sm:$0xf]
  %v610 = vld [vmem:[%s1 + $0xcfc] sm:$0xff]
  %v611 = vld [vmem:[%s1 + $0xd04] sm:$0xf]
  %v612 = vld [vmem:[%s1 + $0xd08] sm:$0xff]
  %v613 = vld [vmem:[%s1 + $0xd10] sm:$0xf]
  %v614 = vld [vmem:[%s1 + $0xd14] sm:$0xff]
  %v615 = vld [vmem:[%s1 + $0xd1c] sm:$0xf]
  %v616 = vld [vmem:[%s1 + $0xd20] sm:$0xff]
  %v617 = vld [vmem:[%s1 + $0xd28] sm:$0xf]
  %v618 = vld [vmem:[%s1 + $0xd2c] sm:$0xff]
  %v619 = vld [vmem:[%s1 + $0xd34] sm:$0xf]
  %v620 = vld [vmem:[%s1 + $0xd38] sm:$0xff]
  %v621 = vld [vmem:[%s1 + $0xd40] sm:$0xf]
  %v622 = vld [vmem:[%s1 + $0xd44] sm:$0xff]
  %v623 = vld [vmem:[%s1 + $0xd4c] sm:$0xf]
  %v624 = vld [vmem:[%s1 + $0xd50] sm:$0xff]
  %v625 = vld [vmem:[%s1 + $0xd58] sm:$0xf]
  %v626 = vld [vmem:[%s1 + $0xd5c] sm:$0xff]
  %v627 = vld [vmem:[%s1 + $0xd64] sm:$0xf]
  %v628 = vld [vmem:[%s1 + $0xd68] sm:$0xff]
  %v629 = vld [vmem:[%s1 + $0xd70] sm:$0xf]
  %v630 = vld [vmem:[%s1 + $0xd74] sm:$0xff]
  %v631 = vld [vmem:[%s1 + $0xd7c] sm:$0xf]
  %v632 = vld [vmem:[%s2] sm:$0x7]
  %v634 = vperm.slane %v632, 0
  %v635 = vperm.slane %v632, 1
  %v636 = vperm.slane %v632, 2
  %v676 = vunpack.c.l.b16 %v20
  %v677 = vunpack.c.h.b16 %v20
  %v678 = vunpack.c.l.b16 %v21
  %v679 = vunpack.c.h.b16 %v21
  %v680 = vunpack.c.l.b16 %v22
  %v681 = vunpack.c.h.b16 %v22
  %v682 = vunpack.c.l.b16 %v23
  %v683 = vunpack.c.h.b16 %v23
  %v684 = vunpack.c.l.b16 %v24
  %v685 = vunpack.c.h.b16 %v24
  %v686 = vunpack.c.l.b16 %v25
  %v687 = vunpack.c.h.b16 %v25
  %v688 = vunpack.c.l.b16 %v26
  %v689 = vunpack.c.h.b16 %v26
  %v690 = vunpack.c.l.b16 %v27
  %v691 = vunpack.c.h.b16 %v27
  %v692 = vunpack.c.l.b16 %v28
  %v693 = vunpack.c.h.b16 %v28
  %v694 = vunpack.c.l.b16 %v29
  %v695 = vunpack.c.h.b16 %v29
  %v696 = vunpack.c.l.b16 %v30
  %v697 = vunpack.c.h.b16 %v30
  %v698 = vunpack.c.l.b16 %v31
  %v699 = vunpack.c.h.b16 %v31
  %v700 = vunpack.c.l.b16 %v32
  %v701 = vunpack.c.h.b16 %v32
  %v702 = vunpack.c.l.b16 %v33
  %v703 = vunpack.c.h.b16 %v33
  %v704 = vunpack.c.l.b16 %v34
  %v705 = vunpack.c.h.b16 %v34
  %v706 = vunpack.c.l.b16 %v35
  %v707 = vunpack.c.h.b16 %v35
  %v708 = vunpack.c.l.b16 %v36
  %v709 = vunpack.c.h.b16 %v36
  %v710 = vunpack.c.l.b16 %v37
  %v711 = vunpack.c.h.b16 %v37
  %v712 = vunpack.c.l.b16 %v38
  %v713 = vunpack.c.h.b16 %v38
  %v714 = vunpack.c.l.b16 %v39
  %v715 = vunpack.c.h.b16 %v39
  %v716 = vunpack.c.l.b16 %v40
  %v717 = vunpack.c.h.b16 %v40
  %v718 = vunpack.c.l.b16 %v41
  %v719 = vunpack.c.h.b16 %v41
  %v720 = vunpack.c.l.b16 %v42
  %v721 = vunpack.c.h.b16 %v42
  %v722 = vunpack.c.l.b16 %v43
  %v723 = vunpack.c.h.b16 %v43
  %v724 = vunpack.c.l.b16 %v44
  %v725 = vunpack.c.h.b16 %v44
  %v726 = vunpack.c.l.b16 %v45
  %v727 = vunpack.c.h.b16 %v45
  %v728 = vunpack.c.l.b16 %v46
  %v729 = vunpack.c.h.b16 %v46
  %v730 = vunpack.c.l.b16 %v47
  %v731 = vunpack.c.h.b16 %v47
  %v732 = vunpack.c.l.b16 %v48
  %v733 = vunpack.c.h.b16 %v48
  %v734 = vunpack.c.l.b16 %v49
  %v735 = vunpack.c.h.b16 %v49
  %v736 = vunpack.c.l.b16 %v50
  %v737 = vunpack.c.h.b16 %v50
  %v738 = vunpack.c.l.b16 %v51
  %v739 = vunpack.c.h.b16 %v51
  %v740 = vunpack.c.l.b16 %v52
  %v741 = vunpack.c.h.b16 %v52
  %v742 = vunpack.c.l.b16 %v53
  %v743 = vunpack.c.h.b16 %v53
  %v744 = vunpack.c.l.b16 %v54
  %v745 = vunpack.c.h.b16 %v54
  %v746 = vunpack.c.l.b16 %v55
  %v747 = vunpack.c.h.b16 %v55
  %v748 = vpack.c.b16 %v694, %v676
  %v749 = vpack.c.b16 %v695, %v677
  %v750 = vpack.c.b16 %v696, %v678
  %v751 = vpack.c.b16 %v697, %v679
  %v752 = vpack.c.b16 %v698, %v680
  %v753 = vpack.c.b16 %v699, %v681
  %v754 = vpack.c.b16 %v700, %v682
  %v755 = vpack.c.b16 %v701, %v683
  %v756 = vpack.c.b16 %v702, %v684
  %v757 = vpack.c.b16 %v703, %v685
  %v758 = vpack.c.b16 %v704, %v686
  %v759 = vpack.c.b16 %v705, %v687
  %v760 = vpack.c.b16 %v706, %v688
  %v761 = vpack.c.b16 %v707, %v689
  %v762 = vpack.c.b16 %v708, %v690
  %v763 = vpack.c.b16 %v709, %v691
  %v764 = vpack.c.b16 %v710, %v692
  %v765 = vpack.c.b16 %v711, %v693
  %v766 = vpack.c.b16 %v730, %v712
  %v767 = vpack.c.b16 %v731, %v713
  %v768 = vpack.c.b16 %v732, %v714
  %v769 = vpack.c.b16 %v733, %v715
  %v770 = vpack.c.b16 %v734, %v716
  %v771 = vpack.c.b16 %v735, %v717
  %v772 = vpack.c.b16 %v736, %v718
  %v773 = vpack.c.b16 %v737, %v719
  %v774 = vpack.c.b16 %v738, %v720
  %v775 = vpack.c.b16 %v739, %v721
  %v776 = vpack.c.b16 %v740, %v722
  %v777 = vpack.c.b16 %v741, %v723
  %v778 = vpack.c.b16 %v742, %v724
  %v779 = vpack.c.b16 %v743, %v725
  %v780 = vpack.c.b16 %v744, %v726
  %v781 = vpack.c.b16 %v745, %v727
  %v782 = vpack.c.b16 %v746, %v728
  %v783 = vpack.c.b16 %v747, %v729
  %v1396 = vunpack.c.l.b16 %v56
  %v1397 = vunpack.c.h.b16 %v56
  %v1398 = vunpack.c.l.b16 %v57
  %v1399 = vunpack.c.l.b16 %v58
  %v1400 = vunpack.c.h.b16 %v58
  %v1401 = vunpack.c.l.b16 %v59
  %v1402 = vunpack.c.l.b16 %v60
  %v1403 = vunpack.c.h.b16 %v60
  %v1404 = vunpack.c.l.b16 %v61
  %v1405 = vunpack.c.l.b16 %v62
  %v1406 = vunpack.c.h.b16 %v62
  %v1407 = vunpack.c.l.b16 %v63
  %v1408 = vunpack.c.l.b16 %v64
  %v1409 = vunpack.c.h.b16 %v64
  %v1410 = vunpack.c.l.b16 %v65
  %v1411 = vunpack.c.l.b16 %v66
  %v1412 = vunpack.c.h.b16 %v66
  %v1413 = vunpack.c.l.b16 %v67
  %v1414 = vunpack.c.l.b16 %v68
  %v1415 = vunpack.c.h.b16 %v68
  %v1416 = vunpack.c.l.b16 %v69
  %v1417 = vunpack.c.l.b16 %v70
  %v1418 = vunpack.c.h.b16 %v70
  %v1419 = vunpack.c.l.b16 %v71
  %v1420 = vunpack.c.l.b16 %v72
  %v1421 = vunpack.c.h.b16 %v72
  %v1422 = vunpack.c.l.b16 %v73
  %v1423 = vunpack.c.l.b16 %v74
  %v1424 = vunpack.c.h.b16 %v74
  %v1425 = vunpack.c.l.b16 %v75
  %v1426 = vunpack.c.l.b16 %v76
  %v1427 = vunpack.c.h.b16 %v76
  %v1428 = vunpack.c.l.b16 %v77
  %v1429 = vunpack.c.l.b16 %v78
  %v1430 = vunpack.c.h.b16 %v78
  %v1431 = vunpack.c.l.b16 %v79
  %v1432 = vunpack.c.l.b16 %v80
  %v1433 = vunpack.c.h.b16 %v80
  %v1434 = vunpack.c.l.b16 %v81
  %v1435 = vunpack.c.l.b16 %v82
  %v1436 = vunpack.c.h.b16 %v82
  %v1437 = vunpack.c.l.b16 %v83
  %v1438 = vunpack.c.l.b16 %v84
  %v1439 = vunpack.c.h.b16 %v84
  %v1440 = vunpack.c.l.b16 %v85
  %v1441 = vunpack.c.l.b16 %v86
  %v1442 = vunpack.c.h.b16 %v86
  %v1443 = vunpack.c.l.b16 %v87
  %v1444 = vunpack.c.l.b16 %v88
  %v1445 = vunpack.c.h.b16 %v88
  %v1446 = vunpack.c.l.b16 %v89
  %v1447 = vunpack.c.l.b16 %v90
  %v1448 = vunpack.c.h.b16 %v90
  %v1449 = vunpack.c.l.b16 %v91
  %v1450 = vunpack.c.l.b16 %v92
  %v1451 = vunpack.c.h.b16 %v92
  %v1452 = vunpack.c.l.b16 %v93
  %v1453 = vunpack.c.l.b16 %v94
  %v1454 = vunpack.c.h.b16 %v94
  %v1455 = vunpack.c.l.b16 %v95
  %v1456 = vunpack.c.l.b16 %v96
  %v1457 = vunpack.c.h.b16 %v96
  %v1458 = vunpack.c.l.b16 %v97
  %v1459 = vunpack.c.l.b16 %v98
  %v1460 = vunpack.c.h.b16 %v98
  %v1461 = vunpack.c.l.b16 %v99
  %v1462 = vunpack.c.l.b16 %v100
  %v1463 = vunpack.c.h.b16 %v100
  %v1464 = vunpack.c.l.b16 %v101
  %v1465 = vunpack.c.l.b16 %v102
  %v1466 = vunpack.c.h.b16 %v102
  %v1467 = vunpack.c.l.b16 %v103
  %v1468 = vunpack.c.l.b16 %v104
  %v1469 = vunpack.c.h.b16 %v104
  %v1470 = vunpack.c.l.b16 %v105
  %v1471 = vunpack.c.l.b16 %v106
  %v1472 = vunpack.c.h.b16 %v106
  %v1473 = vunpack.c.l.b16 %v107
  %v1474 = vunpack.c.l.b16 %v108
  %v1475 = vunpack.c.h.b16 %v108
  %v1476 = vunpack.c.l.b16 %v109
  %v1477 = vunpack.c.l.b16 %v110
  %v1478 = vunpack.c.h.b16 %v110
  %v1479 = vunpack.c.l.b16 %v111
  %v1480 = vunpack.c.l.b16 %v112
  %v1481 = vunpack.c.h.b16 %v112
  %v1482 = vunpack.c.l.b16 %v113
  %v1483 = vunpack.c.l.b16 %v114
  %v1484 = vunpack.c.h.b16 %v114
  %v1485 = vunpack.c.l.b16 %v115
  %v1486 = vunpack.c.l.b16 %v116
  %v1487 = vunpack.c.h.b16 %v116
  %v1488 = vunpack.c.l.b16 %v117
  %v1489 = vunpack.c.l.b16 %v118
  %v1490 = vunpack.c.h.b16 %v118
  %v1491 = vunpack.c.l.b16 %v119
  %v1492 = vunpack.c.l.b16 %v120
  %v1493 = vunpack.c.h.b16 %v120
  %v1494 = vunpack.c.l.b16 %v121
  %v1495 = vunpack.c.l.b16 %v122
  %v1496 = vunpack.c.h.b16 %v122
  %v1497 = vunpack.c.l.b16 %v123
  %v1498 = vunpack.c.l.b16 %v124
  %v1499 = vunpack.c.h.b16 %v124
  %v1500 = vunpack.c.l.b16 %v125
  %v1501 = vunpack.c.l.b16 %v126
  %v1502 = vunpack.c.h.b16 %v126
  %v1503 = vunpack.c.l.b16 %v127
  %v1504 = vunpack.c.l.b16 %v128
  %v1505 = vunpack.c.h.b16 %v128
  %v1506 = vunpack.c.l.b16 %v129
  %v1507 = vunpack.c.l.b16 %v130
  %v1508 = vunpack.c.h.b16 %v130
  %v1509 = vunpack.c.l.b16 %v131
  %v1510 = vunpack.c.l.b16 %v132
  %v1511 = vunpack.c.h.b16 %v132
  %v1512 = vunpack.c.l.b16 %v133
  %v1513 = vunpack.c.l.b16 %v134
  %v1514 = vunpack.c.h.b16 %v134
  %v1515 = vunpack.c.l.b16 %v135
  %v1516 = vunpack.c.l.b16 %v136
  %v1517 = vunpack.c.h.b16 %v136
  %v1518 = vunpack.c.l.b16 %v137
  %v1519 = vunpack.c.l.b16 %v138
  %v1520 = vunpack.c.h.b16 %v138
  %v1521 = vunpack.c.l.b16 %v139
  %v1522 = vunpack.c.l.b16 %v140
  %v1523 = vunpack.c.h.b16 %v140
  %v1524 = vunpack.c.l.b16 %v141
  %v1525 = vunpack.c.l.b16 %v142
  %v1526 = vunpack.c.h.b16 %v142
  %v1527 = vunpack.c.l.b16 %v143
  %v1528 = vunpack.c.l.b16 %v144
  %v1529 = vunpack.c.h.b16 %v144
  %v1530 = vunpack.c.l.b16 %v145
  %v1531 = vunpack.c.l.b16 %v146
  %v1532 = vunpack.c.h.b16 %v146
  %v1533 = vunpack.c.l.b16 %v147
  %v1534 = vunpack.c.l.b16 %v148
  %v1535 = vunpack.c.h.b16 %v148
  %v1536 = vunpack.c.l.b16 %v149
  %v1537 = vunpack.c.l.b16 %v150
  %v1538 = vunpack.c.h.b16 %v150
  %v1539 = vunpack.c.l.b16 %v151
  %v1540 = vunpack.c.l.b16 %v152
  %v1541 = vunpack.c.h.b16 %v152
  %v1542 = vunpack.c.l.b16 %v153
  %v1543 = vunpack.c.l.b16 %v154
  %v1544 = vunpack.c.h.b16 %v154
  %v1545 = vunpack.c.l.b16 %v155
  %v1546 = vunpack.c.l.b16 %v156
  %v1547 = vunpack.c.h.b16 %v156
  %v1548 = vunpack.c.l.b16 %v157
  %v1549 = vunpack.c.l.b16 %v158
  %v1550 = vunpack.c.h.b16 %v158
  %v1551 = vunpack.c.l.b16 %v159
  %v1552 = vunpack.c.l.b16 %v160
  %v1553 = vunpack.c.h.b16 %v160
  %v1554 = vunpack.c.l.b16 %v161
  %v1555 = vunpack.c.l.b16 %v162
  %v1556 = vunpack.c.h.b16 %v162
  %v1557 = vunpack.c.l.b16 %v163
  %v1558 = vunpack.c.l.b16 %v164
  %v1559 = vunpack.c.h.b16 %v164
  %v1560 = vunpack.c.l.b16 %v165
  %v1561 = vunpack.c.l.b16 %v166
  %v1562 = vunpack.c.h.b16 %v166
  %v1563 = vunpack.c.l.b16 %v167
  %v1564 = vunpack.c.l.b16 %v168
  %v1565 = vunpack.c.h.b16 %v168
  %v1566 = vunpack.c.l.b16 %v169
  %v1567 = vunpack.c.l.b16 %v170
  %v1568 = vunpack.c.h.b16 %v170
  %v1569 = vunpack.c.l.b16 %v171
  %v1570 = vunpack.c.l.b16 %v172
  %v1571 = vunpack.c.h.b16 %v172
  %v1572 = vunpack.c.l.b16 %v173
  %v1573 = vunpack.c.l.b16 %v174
  %v1574 = vunpack.c.h.b16 %v174
  %v1575 = vunpack.c.l.b16 %v175
  %v1576 = vunpack.c.l.b16 %v176
  %v1577 = vunpack.c.h.b16 %v176
  %v1578 = vunpack.c.l.b16 %v177
  %v1579 = vunpack.c.l.b16 %v178
  %v1580 = vunpack.c.h.b16 %v178
  %v1581 = vunpack.c.l.b16 %v179
  %v1582 = vunpack.c.l.b16 %v180
  %v1583 = vunpack.c.h.b16 %v180
  %v1584 = vunpack.c.l.b16 %v181
  %v1585 = vunpack.c.l.b16 %v182
  %v1586 = vunpack.c.h.b16 %v182
  %v1587 = vunpack.c.l.b16 %v183
  %v1588 = vunpack.c.l.b16 %v184
  %v1589 = vunpack.c.h.b16 %v184
  %v1590 = vunpack.c.l.b16 %v185
  %v1591 = vunpack.c.l.b16 %v186
  %v1592 = vunpack.c.h.b16 %v186
  %v1593 = vunpack.c.l.b16 %v187
  %v1594 = vunpack.c.l.b16 %v188
  %v1595 = vunpack.c.h.b16 %v188
  %v1596 = vunpack.c.l.b16 %v189
  %v1597 = vunpack.c.l.b16 %v190
  %v1598 = vunpack.c.h.b16 %v190
  %v1599 = vunpack.c.l.b16 %v191
  %v1600 = vunpack.c.l.b16 %v192
  %v1601 = vunpack.c.h.b16 %v192
  %v1602 = vunpack.c.l.b16 %v193
  %v1603 = vunpack.c.l.b16 %v194
  %v1604 = vunpack.c.h.b16 %v194
  %v1605 = vunpack.c.l.b16 %v195
  %v1606 = vunpack.c.l.b16 %v196
  %v1607 = vunpack.c.h.b16 %v196
  %v1608 = vunpack.c.l.b16 %v197
  %v1609 = vunpack.c.l.b16 %v198
  %v1610 = vunpack.c.h.b16 %v198
  %v1611 = vunpack.c.l.b16 %v199
  %v1612 = vunpack.c.l.b16 %v200
  %v1613 = vunpack.c.h.b16 %v200
  %v1614 = vunpack.c.l.b16 %v201
  %v1615 = vunpack.c.l.b16 %v202
  %v1616 = vunpack.c.h.b16 %v202
  %v1617 = vunpack.c.l.b16 %v203
  %v1618 = vunpack.c.l.b16 %v204
  %v1619 = vunpack.c.h.b16 %v204
  %v1620 = vunpack.c.l.b16 %v205
  %v1621 = vunpack.c.l.b16 %v206
  %v1622 = vunpack.c.h.b16 %v206
  %v1623 = vunpack.c.l.b16 %v207
  %v1624 = vunpack.c.l.b16 %v208
  %v1625 = vunpack.c.h.b16 %v208
  %v1626 = vunpack.c.l.b16 %v209
  %v1627 = vunpack.c.l.b16 %v210
  %v1628 = vunpack.c.h.b16 %v210
  %v1629 = vunpack.c.l.b16 %v211
  %v1630 = vunpack.c.l.b16 %v212
  %v1631 = vunpack.c.h.b16 %v212
  %v1632 = vunpack.c.l.b16 %v213
  %v1633 = vunpack.c.l.b16 %v214
  %v1634 = vunpack.c.h.b16 %v214
  %v1635 = vunpack.c.l.b16 %v215
  %v1636 = vunpack.c.l.b16 %v216
  %v1637 = vunpack.c.h.b16 %v216
  %v1638 = vunpack.c.l.b16 %v217
  %v1639 = vunpack.c.l.b16 %v218
  %v1640 = vunpack.c.h.b16 %v218
  %v1641 = vunpack.c.l.b16 %v219
  %v1642 = vunpack.c.l.b16 %v220
  %v1643 = vunpack.c.h.b16 %v220
  %v1644 = vunpack.c.l.b16 %v221
  %v1645 = vunpack.c.l.b16 %v222
  %v1646 = vunpack.c.h.b16 %v222
  %v1647 = vunpack.c.l.b16 %v223
  %v1648 = vunpack.c.l.b16 %v224
  %v1649 = vunpack.c.h.b16 %v224
  %v1650 = vunpack.c.l.b16 %v225
  %v1651 = vunpack.c.l.b16 %v226
  %v1652 = vunpack.c.h.b16 %v226
  %v1653 = vunpack.c.l.b16 %v227
  %v1654 = vunpack.c.l.b16 %v228
  %v1655 = vunpack.c.h.b16 %v228
  %v1656 = vunpack.c.l.b16 %v229
  %v1657 = vunpack.c.l.b16 %v230
  %v1658 = vunpack.c.h.b16 %v230
  %v1659 = vunpack.c.l.b16 %v231
  %v1660 = vunpack.c.l.b16 %v232
  %v1661 = vunpack.c.h.b16 %v232
  %v1662 = vunpack.c.l.b16 %v233
  %v1663 = vunpack.c.l.b16 %v234
  %v1664 = vunpack.c.h.b16 %v234
  %v1665 = vunpack.c.l.b16 %v235
  %v1666 = vunpack.c.l.b16 %v236
  %v1667 = vunpack.c.h.b16 %v236
  %v1668 = vunpack.c.l.b16 %v237
  %v1669 = vunpack.c.l.b16 %v238
  %v1670 = vunpack.c.h.b16 %v238
  %v1671 = vunpack.c.l.b16 %v239
  %v1672 = vunpack.c.l.b16 %v240
  %v1673 = vunpack.c.h.b16 %v240
  %v1674 = vunpack.c.l.b16 %v241
  %v1675 = vunpack.c.l.b16 %v242
  %v1676 = vunpack.c.h.b16 %v242
  %v1677 = vunpack.c.l.b16 %v243
  %v1678 = vunpack.c.l.b16 %v244
  %v1679 = vunpack.c.h.b16 %v244
  %v1680 = vunpack.c.l.b16 %v245
  %v1681 = vunpack.c.l.b16 %v246
  %v1682 = vunpack.c.h.b16 %v246
  %v1683 = vunpack.c.l.b16 %v247
  %v1684 = vunpack.c.l.b16 %v248
  %v1685 = vunpack.c.h.b16 %v248
  %v1686 = vunpack.c.l.b16 %v249
  %v1687 = vunpack.c.l.b16 %v250
  %v1688 = vunpack.c.h.b16 %v250
  %v1689 = vunpack.c.l.b16 %v251
  %v1690 = vunpack.c.l.b16 %v252
  %v1691 = vunpack.c.h.b16 %v252
  %v1692 = vunpack.c.l.b16 %v253
  %v1693 = vunpack.c.l.b16 %v254
  %v1694 = vunpack.c.h.b16 %v254
  %v1695 = vunpack.c.l.b16 %v255
  %v1696 = vunpack.c.l.b16 %v256
  %v1697 = vunpack.c.h.b16 %v256
  %v1698 = vunpack.c.l.b16 %v257
  %v1699 = vunpack.c.l.b16 %v258
  %v1700 = vunpack.c.h.b16 %v258
  %v1701 = vunpack.c.l.b16 %v259
  %v1702 = vunpack.c.l.b16 %v260
  %v1703 = vunpack.c.h.b16 %v260
  %v1704 = vunpack.c.l.b16 %v261
  %v1705 = vunpack.c.l.b16 %v262
  %v1706 = vunpack.c.h.b16 %v262
  %v1707 = vunpack.c.l.b16 %v263
  %v1708 = vunpack.c.l.b16 %v264
  %v1709 = vunpack.c.h.b16 %v264
  %v1710 = vunpack.c.l.b16 %v265
  %v1711 = vunpack.c.l.b16 %v266
  %v1712 = vunpack.c.h.b16 %v266
  %v1713 = vunpack.c.l.b16 %v267
  %v1714 = vunpack.c.l.b16 %v268
  %v1715 = vunpack.c.h.b16 %v268
  %v1716 = vunpack.c.l.b16 %v269
  %v1717 = vunpack.c.l.b16 %v270
  %v1718 = vunpack.c.h.b16 %v270
  %v1719 = vunpack.c.l.b16 %v271
  %v1720 = vunpack.c.l.b16 %v272
  %v1721 = vunpack.c.h.b16 %v272
  %v1722 = vunpack.c.l.b16 %v273
  %v1723 = vunpack.c.l.b16 %v274
  %v1724 = vunpack.c.h.b16 %v274
  %v1725 = vunpack.c.l.b16 %v275
  %v1726 = vunpack.c.l.b16 %v276
  %v1727 = vunpack.c.h.b16 %v276
  %v1728 = vunpack.c.l.b16 %v277
  %v1729 = vunpack.c.l.b16 %v278
  %v1730 = vunpack.c.h.b16 %v278
  %v1731 = vunpack.c.l.b16 %v279
  %v1732 = vunpack.c.l.b16 %v280
  %v1733 = vunpack.c.h.b16 %v280
  %v1734 = vunpack.c.l.b16 %v281
  %v1735 = vunpack.c.l.b16 %v282
  %v1736 = vunpack.c.h.b16 %v282
  %v1737 = vunpack.c.l.b16 %v283
  %v1738 = vunpack.c.l.b16 %v284
  %v1739 = vunpack.c.h.b16 %v284
  %v1740 = vunpack.c.l.b16 %v285
  %v1741 = vunpack.c.l.b16 %v286
  %v1742 = vunpack.c.h.b16 %v286
  %v1743 = vunpack.c.l.b16 %v287
  %v1744 = vunpack.c.l.b16 %v288
  %v1745 = vunpack.c.h.b16 %v288
  %v1746 = vunpack.c.l.b16 %v289
  %v1747 = vunpack.c.l.b16 %v290
  %v1748 = vunpack.c.h.b16 %v290
  %v1749 = vunpack.c.l.b16 %v291
  %v1750 = vunpack.c.l.b16 %v292
  %v1751 = vunpack.c.h.b16 %v292
  %v1752 = vunpack.c.l.b16 %v293
  %v1753 = vunpack.c.l.b16 %v294
  %v1754 = vunpack.c.h.b16 %v294
  %v1755 = vunpack.c.l.b16 %v295
  %v1756 = vunpack.c.l.b16 %v296
  %v1757 = vunpack.c.h.b16 %v296
  %v1758 = vunpack.c.l.b16 %v297
  %v1759 = vunpack.c.l.b16 %v298
  %v1760 = vunpack.c.h.b16 %v298
  %v1761 = vunpack.c.l.b16 %v299
  %v1762 = vunpack.c.l.b16 %v300
  %v1763 = vunpack.c.h.b16 %v300
  %v1764 = vunpack.c.l.b16 %v301
  %v1765 = vunpack.c.l.b16 %v302
  %v1766 = vunpack.c.h.b16 %v302
  %v1767 = vunpack.c.l.b16 %v303
  %v1768 = vunpack.c.l.b16 %v304
  %v1769 = vunpack.c.h.b16 %v304
  %v1770 = vunpack.c.l.b16 %v305
  %v1771 = vunpack.c.l.b16 %v306
  %v1772 = vunpack.c.h.b16 %v306
  %v1773 = vunpack.c.l.b16 %v307
  %v1774 = vunpack.c.l.b16 %v308
  %v1775 = vunpack.c.h.b16 %v308
  %v1776 = vunpack.c.l.b16 %v309
  %v1777 = vunpack.c.l.b16 %v310
  %v1778 = vunpack.c.h.b16 %v310
  %v1779 = vunpack.c.l.b16 %v311
  %v1780 = vunpack.c.l.b16 %v312
  %v1781 = vunpack.c.h.b16 %v312
  %v1782 = vunpack.c.l.b16 %v313
  %v1783 = vunpack.c.l.b16 %v314
  %v1784 = vunpack.c.h.b16 %v314
  %v1785 = vunpack.c.l.b16 %v315
  %v1786 = vunpack.c.l.b16 %v316
  %v1787 = vunpack.c.h.b16 %v316
  %v1788 = vunpack.c.l.b16 %v317
  %v1789 = vunpack.c.l.b16 %v318
  %v1790 = vunpack.c.h.b16 %v318
  %v1791 = vunpack.c.l.b16 %v319
  %v1792 = vunpack.c.l.b16 %v320
  %v1793 = vunpack.c.h.b16 %v320
  %v1794 = vunpack.c.l.b16 %v321
  %v1795 = vunpack.c.l.b16 %v322
  %v1796 = vunpack.c.h.b16 %v322
  %v1797 = vunpack.c.l.b16 %v323
  %v1798 = vunpack.c.l.b16 %v324
  %v1799 = vunpack.c.h.b16 %v324
  %v1800 = vunpack.c.l.b16 %v325
  %v1801 = vunpack.c.l.b16 %v326
  %v1802 = vunpack.c.h.b16 %v326
  %v1803 = vunpack.c.l.b16 %v327
  %v1804 = vunpack.c.l.b16 %v328
  %v1805 = vunpack.c.h.b16 %v328
  %v1806 = vunpack.c.l.b16 %v329
  %v1807 = vunpack.c.l.b16 %v330
  %v1808 = vunpack.c.h.b16 %v330
  %v1809 = vunpack.c.l.b16 %v331
  %v1810 = vunpack.c.l.b16 %v332
  %v1811 = vunpack.c.h.b16 %v332
  %v1812 = vunpack.c.l.b16 %v333
  %v1813 = vunpack.c.l.b16 %v334
  %v1814 = vunpack.c.h.b16 %v334
  %v1815 = vunpack.c.l.b16 %v335
  %v1816 = vunpack.c.l.b16 %v336
  %v1817 = vunpack.c.h.b16 %v336
  %v1818 = vunpack.c.l.b16 %v337
  %v1819 = vunpack.c.l.b16 %v338
  %v1820 = vunpack.c.h.b16 %v338
  %v1821 = vunpack.c.l.b16 %v339
  %v1822 = vunpack.c.l.b16 %v340
  %v1823 = vunpack.c.h.b16 %v340
  %v1824 = vunpack.c.l.b16 %v341
  %v1825 = vunpack.c.l.b16 %v342
  %v1826 = vunpack.c.h.b16 %v342
  %v1827 = vunpack.c.l.b16 %v343
  %v1828 = vunpack.c.l.b16 %v344
  %v1829 = vunpack.c.h.b16 %v344
  %v1830 = vunpack.c.l.b16 %v345
  %v1831 = vunpack.c.l.b16 %v346
  %v1832 = vunpack.c.h.b16 %v346
  %v1833 = vunpack.c.l.b16 %v347
  %v1834 = vunpack.c.l.b16 %v348
  %v1835 = vunpack.c.h.b16 %v348
  %v1836 = vunpack.c.l.b16 %v349
  %v1837 = vunpack.c.l.b16 %v350
  %v1838 = vunpack.c.h.b16 %v350
  %v1839 = vunpack.c.l.b16 %v351
  %v1840 = vunpack.c.l.b16 %v352
  %v1841 = vunpack.c.h.b16 %v352
  %v1842 = vunpack.c.l.b16 %v353
  %v1843 = vunpack.c.l.b16 %v354
  %v1844 = vunpack.c.h.b16 %v354
  %v1845 = vunpack.c.l.b16 %v355
  %v1846 = vunpack.c.l.b16 %v356
  %v1847 = vunpack.c.h.b16 %v356
  %v1848 = vunpack.c.l.b16 %v357
  %v1849 = vunpack.c.l.b16 %v358
  %v1850 = vunpack.c.h.b16 %v358
  %v1851 = vunpack.c.l.b16 %v359
  %v1852 = vunpack.c.l.b16 %v360
  %v1853 = vunpack.c.h.b16 %v360
  %v1854 = vunpack.c.l.b16 %v361
  %v1855 = vunpack.c.l.b16 %v362
  %v1856 = vunpack.c.h.b16 %v362
  %v1857 = vunpack.c.l.b16 %v363
  %v1858 = vunpack.c.l.b16 %v364
  %v1859 = vunpack.c.h.b16 %v364
  %v1860 = vunpack.c.l.b16 %v365
  %v1861 = vunpack.c.l.b16 %v366
  %v1862 = vunpack.c.h.b16 %v366
  %v1863 = vunpack.c.l.b16 %v367
  %v1864 = vunpack.c.l.b16 %v368
  %v1865 = vunpack.c.h.b16 %v368
  %v1866 = vunpack.c.l.b16 %v369
  %v1867 = vunpack.c.l.b16 %v370
  %v1868 = vunpack.c.h.b16 %v370
  %v1869 = vunpack.c.l.b16 %v371
  %v1870 = vunpack.c.l.b16 %v372
  %v1871 = vunpack.c.h.b16 %v372
  %v1872 = vunpack.c.l.b16 %v373
  %v1873 = vunpack.c.l.b16 %v374
  %v1874 = vunpack.c.h.b16 %v374
  %v1875 = vunpack.c.l.b16 %v375
  %v1876 = vunpack.c.l.b16 %v376
  %v1877 = vunpack.c.h.b16 %v376
  %v1878 = vunpack.c.l.b16 %v377
  %v1879 = vunpack.c.l.b16 %v378
  %v1880 = vunpack.c.h.b16 %v378
  %v1881 = vunpack.c.l.b16 %v379
  %v1882 = vunpack.c.l.b16 %v380
  %v1883 = vunpack.c.h.b16 %v380
  %v1884 = vunpack.c.l.b16 %v381
  %v1885 = vunpack.c.l.b16 %v382
  %v1886 = vunpack.c.h.b16 %v382
  %v1887 = vunpack.c.l.b16 %v383
  %v1888 = vunpack.c.l.b16 %v384
  %v1889 = vunpack.c.h.b16 %v384
  %v1890 = vunpack.c.l.b16 %v385
  %v1891 = vunpack.c.l.b16 %v386
  %v1892 = vunpack.c.h.b16 %v386
  %v1893 = vunpack.c.l.b16 %v387
  %v1894 = vunpack.c.l.b16 %v388
  %v1895 = vunpack.c.h.b16 %v388
  %v1896 = vunpack.c.l.b16 %v389
  %v1897 = vunpack.c.l.b16 %v390
  %v1898 = vunpack.c.h.b16 %v390
  %v1899 = vunpack.c.l.b16 %v391
  %v1900 = vunpack.c.l.b16 %v392
  %v1901 = vunpack.c.h.b16 %v392
  %v1902 = vunpack.c.l.b16 %v393
  %v1903 = vunpack.c.l.b16 %v394
  %v1904 = vunpack.c.h.b16 %v394
  %v1905 = vunpack.c.l.b16 %v395
  %v1906 = vunpack.c.l.b16 %v396
  %v1907 = vunpack.c.h.b16 %v396
  %v1908 = vunpack.c.l.b16 %v397
  %v1909 = vunpack.c.l.b16 %v398
  %v1910 = vunpack.c.h.b16 %v398
  %v1911 = vunpack.c.l.b16 %v399
  %v1912 = vunpack.c.l.b16 %v400
  %v1913 = vunpack.c.h.b16 %v400
  %v1914 = vunpack.c.l.b16 %v401
  %v1915 = vunpack.c.l.b16 %v402
  %v1916 = vunpack.c.h.b16 %v402
  %v1917 = vunpack.c.l.b16 %v403
  %v1918 = vunpack.c.l.b16 %v404
  %v1919 = vunpack.c.h.b16 %v404
  %v1920 = vunpack.c.l.b16 %v405
  %v1921 = vunpack.c.l.b16 %v406
  %v1922 = vunpack.c.h.b16 %v406
  %v1923 = vunpack.c.l.b16 %v407
  %v1924 = vunpack.c.l.b16 %v408
  %v1925 = vunpack.c.h.b16 %v408
  %v1926 = vunpack.c.l.b16 %v409
  %v1927 = vunpack.c.l.b16 %v410
  %v1928 = vunpack.c.h.b16 %v410
  %v1929 = vunpack.c.l.b16 %v411
  %v1930 = vunpack.c.l.b16 %v412
  %v1931 = vunpack.c.h.b16 %v412
  %v1932 = vunpack.c.l.b16 %v413
  %v1933 = vunpack.c.l.b16 %v414
  %v1934 = vunpack.c.h.b16 %v414
  %v1935 = vunpack.c.l.b16 %v415
  %v1936 = vunpack.c.l.b16 %v416
  %v1937 = vunpack.c.h.b16 %v416
  %v1938 = vunpack.c.l.b16 %v417
  %v1939 = vunpack.c.l.b16 %v418
  %v1940 = vunpack.c.h.b16 %v418
  %v1941 = vunpack.c.l.b16 %v419
  %v1942 = vunpack.c.l.b16 %v420
  %v1943 = vunpack.c.h.b16 %v420
  %v1944 = vunpack.c.l.b16 %v421
  %v1945 = vunpack.c.l.b16 %v422
  %v1946 = vunpack.c.h.b16 %v422
  %v1947 = vunpack.c.l.b16 %v423
  %v1948 = vunpack.c.l.b16 %v424
  %v1949 = vunpack.c.h.b16 %v424
  %v1950 = vunpack.c.l.b16 %v425
  %v1951 = vunpack.c.l.b16 %v426
  %v1952 = vunpack.c.h.b16 %v426
  %v1953 = vunpack.c.l.b16 %v427
  %v1954 = vunpack.c.l.b16 %v428
  %v1955 = vunpack.c.h.b16 %v428
  %v1956 = vunpack.c.l.b16 %v429
  %v1957 = vunpack.c.l.b16 %v430
  %v1958 = vunpack.c.h.b16 %v430
  %v1959 = vunpack.c.l.b16 %v431
  %v1960 = vunpack.c.l.b16 %v432
  %v1961 = vunpack.c.h.b16 %v432
  %v1962 = vunpack.c.l.b16 %v433
  %v1963 = vunpack.c.l.b16 %v434
  %v1964 = vunpack.c.h.b16 %v434
  %v1965 = vunpack.c.l.b16 %v435
  %v1966 = vunpack.c.l.b16 %v436
  %v1967 = vunpack.c.h.b16 %v436
  %v1968 = vunpack.c.l.b16 %v437
  %v1969 = vunpack.c.l.b16 %v438
  %v1970 = vunpack.c.h.b16 %v438
  %v1971 = vunpack.c.l.b16 %v439
  %v1972 = vunpack.c.l.b16 %v440
  %v1973 = vunpack.c.h.b16 %v440
  %v1974 = vunpack.c.l.b16 %v441
  %v1975 = vunpack.c.l.b16 %v442
  %v1976 = vunpack.c.h.b16 %v442
  %v1977 = vunpack.c.l.b16 %v443
  %v1978 = vunpack.c.l.b16 %v444
  %v1979 = vunpack.c.h.b16 %v444
  %v1980 = vunpack.c.l.b16 %v445
  %v1981 = vunpack.c.l.b16 %v446
  %v1982 = vunpack.c.h.b16 %v446
  %v1983 = vunpack.c.l.b16 %v447
  %v1984 = vunpack.c.l.b16 %v448
  %v1985 = vunpack.c.h.b16 %v448
  %v1986 = vunpack.c.l.b16 %v449
  %v1987 = vunpack.c.l.b16 %v450
  %v1988 = vunpack.c.h.b16 %v450
  %v1989 = vunpack.c.l.b16 %v451
  %v1990 = vunpack.c.l.b16 %v452
  %v1991 = vunpack.c.h.b16 %v452
  %v1992 = vunpack.c.l.b16 %v453
  %v1993 = vunpack.c.l.b16 %v454
  %v1994 = vunpack.c.h.b16 %v454
  %v1995 = vunpack.c.l.b16 %v455
  %v1996 = vunpack.c.l.b16 %v456
  %v1997 = vunpack.c.h.b16 %v456
  %v1998 = vunpack.c.l.b16 %v457
  %v1999 = vunpack.c.l.b16 %v458
  %v2000 = vunpack.c.h.b16 %v458
  %v2001 = vunpack.c.l.b16 %v459
  %v2002 = vunpack.c.l.b16 %v460
  %v2003 = vunpack.c.h.b16 %v460
  %v2004 = vunpack.c.l.b16 %v461
  %v2005 = vunpack.c.l.b16 %v462
  %v2006 = vunpack.c.h.b16 %v462
  %v2007 = vunpack.c.l.b16 %v463
  %v2008 = vunpack.c.l.b16 %v464
  %v2009 = vunpack.c.h.b16 %v464
  %v2010 = vunpack.c.l.b16 %v465
  %v2011 = vunpack.c.l.b16 %v466
  %v2012 = vunpack.c.h.b16 %v466
  %v2013 = vunpack.c.l.b16 %v467
  %v2014 = vunpack.c.l.b16 %v468
  %v2015 = vunpack.c.h.b16 %v468
  %v2016 = vunpack.c.l.b16 %v469
  %v2017 = vunpack.c.l.b16 %v470
  %v2018 = vunpack.c.h.b16 %v470
  %v2019 = vunpack.c.l.b16 %v471
  %v2020 = vunpack.c.l.b16 %v472
  %v2021 = vunpack.c.h.b16 %v472
  %v2022 = vunpack.c.l.b16 %v473
  %v2023 = vunpack.c.l.b16 %v474
  %v2024 = vunpack.c.h.b16 %v474
  %v2025 = vunpack.c.l.b16 %v475
  %v2026 = vunpack.c.l.b16 %v476
  %v2027 = vunpack.c.h.b16 %v476
  %v2028 = vunpack.c.l.b16 %v477
  %v2029 = vunpack.c.l.b16 %v478
  %v2030 = vunpack.c.h.b16 %v478
  %v2031 = vunpack.c.l.b16 %v479
  %v2032 = vunpack.c.l.b16 %v480
  %v2033 = vunpack.c.h.b16 %v480
  %v2034 = vunpack.c.l.b16 %v481
  %v2035 = vunpack.c.l.b16 %v482
  %v2036 = vunpack.c.h.b16 %v482
  %v2037 = vunpack.c.l.b16 %v483
  %v2038 = vunpack.c.l.b16 %v484
  %v2039 = vunpack.c.h.b16 %v484
  %v2040 = vunpack.c.l.b16 %v485
  %v2041 = vunpack.c.l.b16 %v486
  %v2042 = vunpack.c.h.b16 %v486
  %v2043 = vunpack.c.l.b16 %v487
  %v2044 = vunpack.c.l.b16 %v488
  %v2045 = vunpack.c.h.b16 %v488
  %v2046 = vunpack.c.l.b16 %v489
  %v2047 = vunpack.c.l.b16 %v490
  %v2048 = vunpack.c.h.b16 %v490
  %v2049 = vunpack.c.l.b16 %v491
  %v2050 = vunpack.c.l.b16 %v492
  %v2051 = vunpack.c.h.b16 %v492
  %v2052 = vunpack.c.l.b16 %v493
  %v2053 = vunpack.c.l.b16 %v494
  %v2054 = vunpack.c.h.b16 %v494
  %v2055 = vunpack.c.l.b16 %v495
  %v2056 = vunpack.c.l.b16 %v496
  %v2057 = vunpack.c.h.b16 %v496
  %v2058 = vunpack.c.l.b16 %v497
  %v2059 = vunpack.c.l.b16 %v498
  %v2060 = vunpack.c.h.b16 %v498
  %v2061 = vunpack.c.l.b16 %v499
  %v2062 = vunpack.c.l.b16 %v500
  %v2063 = vunpack.c.h.b16 %v500
  %v2064 = vunpack.c.l.b16 %v501
  %v2065 = vunpack.c.l.b16 %v502
  %v2066 = vunpack.c.h.b16 %v502
  %v2067 = vunpack.c.l.b16 %v503
  %v2068 = vunpack.c.l.b16 %v504
  %v2069 = vunpack.c.h.b16 %v504
  %v2070 = vunpack.c.l.b16 %v505
  %v2071 = vunpack.c.l.b16 %v506
  %v2072 = vunpack.c.h.b16 %v506
  %v2073 = vunpack.c.l.b16 %v507
  %v2074 = vunpack.c.l.b16 %v508
  %v2075 = vunpack.c.h.b16 %v508
  %v2076 = vunpack.c.l.b16 %v509
  %v2077 = vunpack.c.l.b16 %v510
  %v2078 = vunpack.c.h.b16 %v510
  %v2079 = vunpack.c.l.b16 %v511
  %v2080 = vunpack.c.l.b16 %v512
  %v2081 = vunpack.c.h.b16 %v512
  %v2082 = vunpack.c.l.b16 %v513
  %v2083 = vunpack.c.l.b16 %v514
  %v2084 = vunpack.c.h.b16 %v514
  %v2085 = vunpack.c.l.b16 %v515
  %v2086 = vunpack.c.l.b16 %v516
  %v2087 = vunpack.c.h.b16 %v516
  %v2088 = vunpack.c.l.b16 %v517
  %v2089 = vunpack.c.l.b16 %v518
  %v2090 = vunpack.c.h.b16 %v518
  %v2091 = vunpack.c.l.b16 %v519
  %v2092 = vunpack.c.l.b16 %v520
  %v2093 = vunpack.c.h.b16 %v520
  %v2094 = vunpack.c.l.b16 %v521
  %v2095 = vunpack.c.l.b16 %v522
  %v2096 = vunpack.c.h.b16 %v522
  %v2097 = vunpack.c.l.b16 %v523
  %v2098 = vunpack.c.l.b16 %v524
  %v2099 = vunpack.c.h.b16 %v524
  %v2100 = vunpack.c.l.b16 %v525
  %v2101 = vunpack.c.l.b16 %v526
  %v2102 = vunpack.c.h.b16 %v526
  %v2103 = vunpack.c.l.b16 %v527
  %v2104 = vunpack.c.l.b16 %v528
  %v2105 = vunpack.c.h.b16 %v528
  %v2106 = vunpack.c.l.b16 %v529
  %v2107 = vunpack.c.l.b16 %v530
  %v2108 = vunpack.c.h.b16 %v530
  %v2109 = vunpack.c.l.b16 %v531
  %v2110 = vunpack.c.l.b16 %v532
  %v2111 = vunpack.c.h.b16 %v532
  %v2112 = vunpack.c.l.b16 %v533
  %v2113 = vunpack.c.l.b16 %v534
  %v2114 = vunpack.c.h.b16 %v534
  %v2115 = vunpack.c.l.b16 %v535
  %v2116 = vunpack.c.l.b16 %v536
  %v2117 = vunpack.c.h.b16 %v536
  %v2118 = vunpack.c.l.b16 %v537
  %v2119 = vunpack.c.l.b16 %v538
  %v2120 = vunpack.c.h.b16 %v538
  %v2121 = vunpack.c.l.b16 %v539
  %v2122 = vunpack.c.l.b16 %v540
  %v2123 = vunpack.c.h.b16 %v540
  %v2124 = vunpack.c.l.b16 %v541
  %v2125 = vunpack.c.l.b16 %v542
  %v2126 = vunpack.c.h.b16 %v542
  %v2127 = vunpack.c.l.b16 %v543
  %v2128 = vunpack.c.l.b16 %v544
  %v2129 = vunpack.c.h.b16 %v544
  %v2130 = vunpack.c.l.b16 %v545
  %v2131 = vunpack.c.l.b16 %v546
  %v2132 = vunpack.c.h.b16 %v546
  %v2133 = vunpack.c.l.b16 %v547
  %v2134 = vunpack.c.l.b16 %v548
  %v2135 = vunpack.c.h.b16 %v548
  %v2136 = vunpack.c.l.b16 %v549
  %v2137 = vunpack.c.l.b16 %v550
  %v2138 = vunpack.c.h.b16 %v550
  %v2139 = vunpack.c.l.b16 %v551
  %v2140 = vunpack.c.l.b16 %v552
  %v2141 = vunpack.c.h.b16 %v552
  %v2142 = vunpack.c.l.b16 %v553
  %v2143 = vunpack.c.l.b16 %v554
  %v2144 = vunpack.c.h.b16 %v554
  %v2145 = vunpack.c.l.b16 %v555
  %v2146 = vunpack.c.l.b16 %v556
  %v2147 = vunpack.c.h.b16 %v556
  %v2148 = vunpack.c.l.b16 %v557
  %v2149 = vunpack.c.l.b16 %v558
  %v2150 = vunpack.c.h.b16 %v558
  %v2151 = vunpack.c.l.b16 %v559
  %v2152 = vunpack.c.l.b16 %v560
  %v2153 = vunpack.c.h.b16 %v560
  %v2154 = vunpack.c.l.b16 %v561
  %v2155 = vunpack.c.l.b16 %v562
  %v2156 = vunpack.c.h.b16 %v562
  %v2157 = vunpack.c.l.b16 %v563
  %v2158 = vunpack.c.l.b16 %v564
  %v2159 = vunpack.c.h.b16 %v564
  %v2160 = vunpack.c.l.b16 %v565
  %v2161 = vunpack.c.l.b16 %v566
  %v2162 = vunpack.c.h.b16 %v566
  %v2163 = vunpack.c.l.b16 %v567
  %v2164 = vunpack.c.l.b16 %v568
  %v2165 = vunpack.c.h.b16 %v568
  %v2166 = vunpack.c.l.b16 %v569
  %v2167 = vunpack.c.l.b16 %v570
  %v2168 = vunpack.c.h.b16 %v570
  %v2169 = vunpack.c.l.b16 %v571
  %v2170 = vunpack.c.l.b16 %v572
  %v2171 = vunpack.c.h.b16 %v572
  %v2172 = vunpack.c.l.b16 %v573
  %v2173 = vunpack.c.l.b16 %v574
  %v2174 = vunpack.c.h.b16 %v574
  %v2175 = vunpack.c.l.b16 %v575
  %v2176 = vunpack.c.l.b16 %v576
  %v2177 = vunpack.c.h.b16 %v576
  %v2178 = vunpack.c.l.b16 %v577
  %v2179 = vunpack.c.l.b16 %v578
  %v2180 = vunpack.c.h.b16 %v578
  %v2181 = vunpack.c.l.b16 %v579
  %v2182 = vunpack.c.l.b16 %v580
  %v2183 = vunpack.c.h.b16 %v580
  %v2184 = vunpack.c.l.b16 %v581
  %v2185 = vunpack.c.l.b16 %v582
  %v2186 = vunpack.c.h.b16 %v582
  %v2187 = vunpack.c.l.b16 %v583
  %v2188 = vunpack.c.l.b16 %v584
  %v2189 = vunpack.c.h.b16 %v584
  %v2190 = vunpack.c.l.b16 %v585
  %v2191 = vunpack.c.l.b16 %v586
  %v2192 = vunpack.c.h.b16 %v586
  %v2193 = vunpack.c.l.b16 %v587
  %v2194 = vunpack.c.l.b16 %v588
  %v2195 = vunpack.c.h.b16 %v588
  %v2196 = vunpack.c.l.b16 %v589
  %v2197 = vunpack.c.l.b16 %v590
  %v2198 = vunpack.c.h.b16 %v590
  %v2199 = vunpack.c.l.b16 %v591
  %v2200 = vunpack.c.l.b16 %v592
  %v2201 = vunpack.c.h.b16 %v592
  %v2202 = vunpack.c.l.b16 %v593
  %v2203 = vunpack.c.l.b16 %v594
  %v2204 = vunpack.c.h.b16 %v594
  %v2205 = vunpack.c.l.b16 %v595
  %v2206 = vunpack.c.l.b16 %v596
  %v2207 = vunpack.c.h.b16 %v596
  %v2208 = vunpack.c.l.b16 %v597
  %v2209 = vunpack.c.l.b16 %v598
  %v2210 = vunpack.c.h.b16 %v598
  %v2211 = vunpack.c.l.b16 %v599
  %v2212 = vunpack.c.l.b16 %v600
  %v2213 = vunpack.c.h.b16 %v600
  %v2214 = vunpack.c.l.b16 %v601
  %v2215 = vunpack.c.l.b16 %v602
  %v2216 = vunpack.c.h.b16 %v602
  %v2217 = vunpack.c.l.b16 %v603
  %v2218 = vunpack.c.l.b16 %v604
  %v2219 = vunpack.c.h.b16 %v604
  %v2220 = vunpack.c.l.b16 %v605
  %v2221 = vunpack.c.l.b16 %v606
  %v2222 = vunpack.c.h.b16 %v606
  %v2223 = vunpack.c.l.b16 %v607
  %v2224 = vunpack.c.l.b16 %v608
  %v2225 = vunpack.c.h.b16 %v608
  %v2226 = vunpack.c.l.b16 %v609
  %v2227 = vunpack.c.l.b16 %v610
  %v2228 = vunpack.c.h.b16 %v610
  %v2229 = vunpack.c.l.b16 %v611
  %v2230 = vunpack.c.l.b16 %v612
  %v2231 = vunpack.c.h.b16 %v612
  %v2232 = vunpack.c.l.b16 %v613
  %v2233 = vunpack.c.l.b16 %v614
  %v2234 = vunpack.c.h.b16 %v614
  %v2235 = vunpack.c.l.b16 %v615
  %v2236 = vunpack.c.l.b16 %v616
  %v2237 = vunpack.c.h.b16 %v616
  %v2238 = vunpack.c.l.b16 %v617
  %v2239 = vunpack.c.l.b16 %v618
  %v2240 = vunpack.c.h.b16 %v618
  %v2241 = vunpack.c.l.b16 %v619
  %v2242 = vunpack.c.l.b16 %v620
  %v2243 = vunpack.c.h.b16 %v620
  %v2244 = vunpack.c.l.b16 %v621
  %v2245 = vunpack.c.l.b16 %v622
  %v2246 = vunpack.c.h.b16 %v622
  %v2247 = vunpack.c.l.b16 %v623
  %v2248 = vunpack.c.l.b16 %v624
  %v2249 = vunpack.c.h.b16 %v624
  %v2250 = vunpack.c.l.b16 %v625
  %v2251 = vunpack.c.l.b16 %v626
  %v2252 = vunpack.c.h.b16 %v626
  %v2253 = vunpack.c.l.b16 %v627
  %v2254 = vunpack.c.l.b16 %v628
  %v2255 = vunpack.c.h.b16 %v628
  %v2256 = vunpack.c.l.b16 %v629
  %v2257 = vunpack.c.l.b16 %v630
  %v2258 = vunpack.c.h.b16 %v630
  %v2259 = vunpack.c.l.b16 %v631
  %v2260 = vpack.c.b16 %v1399, %v1396
  %v2261 = vpack.c.b16 %v1400, %v1397
  %v2262 = vpack.c.b16 %v1401, %v1398
  %v2263 = vpack.c.b16 %v1405, %v1402
  %v2264 = vpack.c.b16 %v1406, %v1403
  %v2265 = vpack.c.b16 %v1407, %v1404
  %v2266 = vpack.c.b16 %v1411, %v1408
  %v2267 = vpack.c.b16 %v1412, %v1409
  %v2268 = vpack.c.b16 %v1413, %v1410
  %v2269 = vpack.c.b16 %v1417, %v1414
  %v2270 = vpack.c.b16 %v1418, %v1415
  %v2271 = vpack.c.b16 %v1419, %v1416
  %v2272 = vpack.c.b16 %v1423, %v1420
  %v2273 = vpack.c.b16 %v1424, %v1421
  %v2274 = vpack.c.b16 %v1425, %v1422
  %v2275 = vpack.c.b16 %v1429, %v1426
  %v2276 = vpack.c.b16 %v1430, %v1427
  %v2277 = vpack.c.b16 %v1431, %v1428
  %v2278 = vpack.c.b16 %v1435, %v1432
  %v2279 = vpack.c.b16 %v1436, %v1433
  %v2280 = vpack.c.b16 %v1437, %v1434
  %v2281 = vpack.c.b16 %v1441, %v1438
  %v2282 = vpack.c.b16 %v1442, %v1439
  %v2283 = vpack.c.b16 %v1443, %v1440
  %v2284 = vpack.c.b16 %v1447, %v1444
  %v2285 = vpack.c.b16 %v1448, %v1445
  %v2286 = vpack.c.b16 %v1449, %v1446
  %v2287 = vpack.c.b16 %v1453, %v1450
  %v2288 = vpack.c.b16 %v1454, %v1451
  %v2289 = vpack.c.b16 %v1455, %v1452
  %v2290 = vpack.c.b16 %v1459, %v1456
  %v2291 = vpack.c.b16 %v1460, %v1457
  %v2292 = vpack.c.b16 %v1461, %v1458
  %v2293 = vpack.c.b16 %v1465, %v1462
  %v2294 = vpack.c.b16 %v1466, %v1463
  %v2295 = vpack.c.b16 %v1467, %v1464
  %v2296 = vpack.c.b16 %v1471, %v1468
  %v2297 = vpack.c.b16 %v1472, %v1469
  %v2298 = vpack.c.b16 %v1473, %v1470
  %v2299 = vpack.c.b16 %v1477, %v1474
  %v2300 = vpack.c.b16 %v1478, %v1475
  %v2301 = vpack.c.b16 %v1479, %v1476
  %v2302 = vpack.c.b16 %v1483, %v1480
  %v2303 = vpack.c.b16 %v1484, %v1481
  %v2304 = vpack.c.b16 %v1485, %v1482
  %v2305 = vpack.c.b16 %v1489, %v1486
  %v2306 = vpack.c.b16 %v1490, %v1487
  %v2307 = vpack.c.b16 %v1491, %v1488
  %v2308 = vpack.c.b16 %v1495, %v1492
  %v2309 = vpack.c.b16 %v1496, %v1493
  %v2310 = vpack.c.b16 %v1497, %v1494
  %v2311 = vpack.c.b16 %v1501, %v1498
  %v2312 = vpack.c.b16 %v1502, %v1499
  %v2313 = vpack.c.b16 %v1503, %v1500
  %v2314 = vpack.c.b16 %v1507, %v1504
  %v2315 = vpack.c.b16 %v1508, %v1505
  %v2316 = vpack.c.b16 %v1509, %v1506
  %v2317 = vpack.c.b16 %v1513, %v1510
  %v2318 = vpack.c.b16 %v1514, %v1511
  %v2319 = vpack.c.b16 %v1515, %v1512
  %v2320 = vpack.c.b16 %v1519, %v1516
  %v2321 = vpack.c.b16 %v1520, %v1517
  %v2322 = vpack.c.b16 %v1521, %v1518
  %v2323 = vpack.c.b16 %v1525, %v1522
  %v2324 = vpack.c.b16 %v1526, %v1523
  %v2325 = vpack.c.b16 %v1527, %v1524
  %v2326 = vpack.c.b16 %v1531, %v1528
  %v2327 = vpack.c.b16 %v1532, %v1529
  %v2328 = vpack.c.b16 %v1533, %v1530
  %v2329 = vpack.c.b16 %v1537, %v1534
  %v2330 = vpack.c.b16 %v1538, %v1535
  %v2331 = vpack.c.b16 %v1539, %v1536
  %v2332 = vpack.c.b16 %v1543, %v1540
  %v2333 = vpack.c.b16 %v1544, %v1541
  %v2334 = vpack.c.b16 %v1545, %v1542
  %v2335 = vpack.c.b16 %v1549, %v1546
  %v2336 = vpack.c.b16 %v1550, %v1547
  %v2337 = vpack.c.b16 %v1551, %v1548
  %v2338 = vpack.c.b16 %v1555, %v1552
  %v2339 = vpack.c.b16 %v1556, %v1553
  %v2340 = vpack.c.b16 %v1557, %v1554
  %v2341 = vpack.c.b16 %v1561, %v1558
  %v2342 = vpack.c.b16 %v1562, %v1559
  %v2343 = vpack.c.b16 %v1563, %v1560
  %v2344 = vpack.c.b16 %v1567, %v1564
  %v2345 = vpack.c.b16 %v1568, %v1565
  %v2346 = vpack.c.b16 %v1569, %v1566
  %v2347 = vpack.c.b16 %v1573, %v1570
  %v2348 = vpack.c.b16 %v1574, %v1571
  %v2349 = vpack.c.b16 %v1575, %v1572
  %v2350 = vpack.c.b16 %v1579, %v1576
  %v2351 = vpack.c.b16 %v1580, %v1577
  %v2352 = vpack.c.b16 %v1581, %v1578
  %v2353 = vpack.c.b16 %v1585, %v1582
  %v2354 = vpack.c.b16 %v1586, %v1583
  %v2355 = vpack.c.b16 %v1587, %v1584
  %v2356 = vpack.c.b16 %v1591, %v1588
  %v2357 = vpack.c.b16 %v1592, %v1589
  %v2358 = vpack.c.b16 %v1593, %v1590
  %v2359 = vpack.c.b16 %v1597, %v1594
  %v2360 = vpack.c.b16 %v1598, %v1595
  %v2361 = vpack.c.b16 %v1599, %v1596
  %v2362 = vpack.c.b16 %v1603, %v1600
  %v2363 = vpack.c.b16 %v1604, %v1601
  %v2364 = vpack.c.b16 %v1605, %v1602
  %v2365 = vpack.c.b16 %v1609, %v1606
  %v2366 = vpack.c.b16 %v1610, %v1607
  %v2367 = vpack.c.b16 %v1611, %v1608
  %v2368 = vpack.c.b16 %v1615, %v1612
  %v2369 = vpack.c.b16 %v1616, %v1613
  %v2370 = vpack.c.b16 %v1617, %v1614
  %v2371 = vpack.c.b16 %v1621, %v1618
  %v2372 = vpack.c.b16 %v1622, %v1619
  %v2373 = vpack.c.b16 %v1623, %v1620
  %v2374 = vpack.c.b16 %v1627, %v1624
  %v2375 = vpack.c.b16 %v1628, %v1625
  %v2376 = vpack.c.b16 %v1629, %v1626
  %v2377 = vpack.c.b16 %v1633, %v1630
  %v2378 = vpack.c.b16 %v1634, %v1631
  %v2379 = vpack.c.b16 %v1635, %v1632
  %v2380 = vpack.c.b16 %v1639, %v1636
  %v2381 = vpack.c.b16 %v1640, %v1637
  %v2382 = vpack.c.b16 %v1641, %v1638
  %v2383 = vpack.c.b16 %v1645, %v1642
  %v2384 = vpack.c.b16 %v1646, %v1643
  %v2385 = vpack.c.b16 %v1647, %v1644
  %v2386 = vpack.c.b16 %v1651, %v1648
  %v2387 = vpack.c.b16 %v1652, %v1649
  %v2388 = vpack.c.b16 %v1653, %v1650
  %v2389 = vpack.c.b16 %v1657, %v1654
  %v2390 = vpack.c.b16 %v1658, %v1655
  %v2391 = vpack.c.b16 %v1659, %v1656
  %v2392 = vpack.c.b16 %v1663, %v1660
  %v2393 = vpack.c.b16 %v1664, %v1661
  %v2394 = vpack.c.b16 %v1665, %v1662
  %v2395 = vpack.c.b16 %v1669, %v1666
  %v2396 = vpack.c.b16 %v1670, %v1667
  %v2397 = vpack.c.b16 %v1671, %v1668
  %v2398 = vpack.c.b16 %v1675, %v1672
  %v2399 = vpack.c.b16 %v1676, %v1673
  %v2400 = vpack.c.b16 %v1677, %v1674
  %v2401 = vpack.c.b16 %v1681, %v1678
  %v2402 = vpack.c.b16 %v1682, %v1679
  %v2403 = vpack.c.b16 %v1683, %v1680
  %v2404 = vpack.c.b16 %v1687, %v1684
  %v2405 = vpack.c.b16 %v1688, %v1685
  %v2406 = vpack.c.b16 %v1689, %v1686
  %v2407 = vpack.c.b16 %v1693, %v1690
  %v2408 = vpack.c.b16 %v1694, %v1691
  %v2409 = vpack.c.b16 %v1695, %v1692
  %v2410 = vpack.c.b16 %v1699, %v1696
  %v2411 = vpack.c.b16 %v1700, %v1697
  %v2412 = vpack.c.b16 %v1701, %v1698
  %v2413 = vpack.c.b16 %v1705, %v1702
  %v2414 = vpack.c.b16 %v1706, %v1703
  %v2415 = vpack.c.b16 %v1707, %v1704
  %v2416 = vpack.c.b16 %v1711, %v1708
  %v2417 = vpack.c.b16 %v1712, %v1709
  %v2418 = vpack.c.b16 %v1713, %v1710
  %v2419 = vpack.c.b16 %v1717, %v1714
  %v2420 = vpack.c.b16 %v1718, %v1715
  %v2421 = vpack.c.b16 %v1719, %v1716
  %v2422 = vpack.c.b16 %v1723, %v1720
  %v2423 = vpack.c.b16 %v1724, %v1721
  %v2424 = vpack.c.b16 %v1725, %v1722
  %v2425 = vpack.c.b16 %v1729, %v1726
  %v2426 = vpack.c.b16 %v1730, %v1727
  %v2427 = vpack.c.b16 %v1731, %v1728
  %v2428 = vpack.c.b16 %v1735, %v1732
  %v2429 = vpack.c.b16 %v1736, %v1733
  %v2430 = vpack.c.b16 %v1737, %v1734
  %v2431 = vpack.c.b16 %v1741, %v1738
  %v2432 = vpack.c.b16 %v1742, %v1739
  %v2433 = vpack.c.b16 %v1743, %v1740
  %v2434 = vpack.c.b16 %v1747, %v1744
  %v2435 = vpack.c.b16 %v1748, %v1745
  %v2436 = vpack.c.b16 %v1749, %v1746
  %v2437 = vpack.c.b16 %v1753, %v1750
  %v2438 = vpack.c.b16 %v1754, %v1751
  %v2439 = vpack.c.b16 %v1755, %v1752
  %v2440 = vpack.c.b16 %v1759, %v1756
  %v2441 = vpack.c.b16 %v1760, %v1757
  %v2442 = vpack.c.b16 %v1761, %v1758
  %v2443 = vpack.c.b16 %v1765, %v1762
  %v2444 = vpack.c.b16 %v1766, %v1763
  %v2445 = vpack.c.b16 %v1767, %v1764
  %v2446 = vpack.c.b16 %v1771, %v1768
  %v2447 = vpack.c.b16 %v1772, %v1769
  %v2448 = vpack.c.b16 %v1773, %v1770
  %v2449 = vpack.c.b16 %v1777, %v1774
  %v2450 = vpack.c.b16 %v1778, %v1775
  %v2451 = vpack.c.b16 %v1779, %v1776
  %v2452 = vpack.c.b16 %v1783, %v1780
  %v2453 = vpack.c.b16 %v1784, %v1781
  %v2454 = vpack.c.b16 %v1785, %v1782
  %v2455 = vpack.c.b16 %v1789, %v1786
  %v2456 = vpack.c.b16 %v1790, %v1787
  %v2457 = vpack.c.b16 %v1791, %v1788
  %v2458 = vpack.c.b16 %v1795, %v1792
  %v2459 = vpack.c.b16 %v1796, %v1793
  %v2460 = vpack.c.b16 %v1797, %v1794
  %v2461 = vpack.c.b16 %v1801, %v1798
  %v2462 = vpack.c.b16 %v1802, %v1799
  %v2463 = vpack.c.b16 %v1803, %v1800
  %v2464 = vpack.c.b16 %v1807, %v1804
  %v2465 = vpack.c.b16 %v1808, %v1805
  %v2466 = vpack.c.b16 %v1809, %v1806
  %v2467 = vpack.c.b16 %v1813, %v1810
  %v2468 = vpack.c.b16 %v1814, %v1811
  %v2469 = vpack.c.b16 %v1815, %v1812
  %v2470 = vpack.c.b16 %v1819, %v1816
  %v2471 = vpack.c.b16 %v1820, %v1817
  %v2472 = vpack.c.b16 %v1821, %v1818
  %v2473 = vpack.c.b16 %v1825, %v1822
  %v2474 = vpack.c.b16 %v1826, %v1823
  %v2475 = vpack.c.b16 %v1827, %v1824
  %v2476 = vpack.c.b16 %v1831, %v1828
  %v2477 = vpack.c.b16 %v1832, %v1829
  %v2478 = vpack.c.b16 %v1833, %v1830
  %v2479 = vpack.c.b16 %v1837, %v1834
  %v2480 = vpack.c.b16 %v1838, %v1835
  %v2481 = vpack.c.b16 %v1839, %v1836
  %v2482 = vpack.c.b16 %v1843, %v1840
  %v2483 = vpack.c.b16 %v1844, %v1841
  %v2484 = vpack.c.b16 %v1845, %v1842
  %v2485 = vpack.c.b16 %v1849, %v1846
  %v2486 = vpack.c.b16 %v1850, %v1847
  %v2487 = vpack.c.b16 %v1851, %v1848
  %v2488 = vpack.c.b16 %v1855, %v1852
  %v2489 = vpack.c.b16 %v1856, %v1853
  %v2490 = vpack.c.b16 %v1857, %v1854
  %v2491 = vpack.c.b16 %v1861, %v1858
  %v2492 = vpack.c.b16 %v1862, %v1859
  %v2493 = vpack.c.b16 %v1863, %v1860
  %v2494 = vpack.c.b16 %v1867, %v1864
  %v2495 = vpack.c.b16 %v1868, %v1865
  %v2496 = vpack.c.b16 %v1869, %v1866
  %v2497 = vpack.c.b16 %v1873, %v1870
  %v2498 = vpack.c.b16 %v1874, %v1871
  %v2499 = vpack.c.b16 %v1875, %v1872
  %v2500 = vpack.c.b16 %v1879, %v1876
  %v2501 = vpack.c.b16 %v1880, %v1877
  %v2502 = vpack.c.b16 %v1881, %v1878
  %v2503 = vpack.c.b16 %v1885, %v1882
  %v2504 = vpack.c.b16 %v1886, %v1883
  %v2505 = vpack.c.b16 %v1887, %v1884
  %v2506 = vpack.c.b16 %v1891, %v1888
  %v2507 = vpack.c.b16 %v1892, %v1889
  %v2508 = vpack.c.b16 %v1893, %v1890
  %v2509 = vpack.c.b16 %v1897, %v1894
  %v2510 = vpack.c.b16 %v1898, %v1895
  %v2511 = vpack.c.b16 %v1899, %v1896
  %v2512 = vpack.c.b16 %v1903, %v1900
  %v2513 = vpack.c.b16 %v1904, %v1901
  %v2514 = vpack.c.b16 %v1905, %v1902
  %v2515 = vpack.c.b16 %v1909, %v1906
  %v2516 = vpack.c.b16 %v1910, %v1907
  %v2517 = vpack.c.b16 %v1911, %v1908
  %v2518 = vpack.c.b16 %v1915, %v1912
  %v2519 = vpack.c.b16 %v1916, %v1913
  %v2520 = vpack.c.b16 %v1917, %v1914
  %v2521 = vpack.c.b16 %v1921, %v1918
  %v2522 = vpack.c.b16 %v1922, %v1919
  %v2523 = vpack.c.b16 %v1923, %v1920
  %v2524 = vpack.c.b16 %v1927, %v1924
  %v2525 = vpack.c.b16 %v1928, %v1925
  %v2526 = vpack.c.b16 %v1929, %v1926
  %v2527 = vpack.c.b16 %v1933, %v1930
  %v2528 = vpack.c.b16 %v1934, %v1931
  %v2529 = vpack.c.b16 %v1935, %v1932
  %v2530 = vpack.c.b16 %v1939, %v1936
  %v2531 = vpack.c.b16 %v1940, %v1937
  %v2532 = vpack.c.b16 %v1941, %v1938
  %v2533 = vpack.c.b16 %v1945, %v1942
  %v2534 = vpack.c.b16 %v1946, %v1943
  %v2535 = vpack.c.b16 %v1947, %v1944
  %v2536 = vpack.c.b16 %v1951, %v1948
  %v2537 = vpack.c.b16 %v1952, %v1949
  %v2538 = vpack.c.b16 %v1953, %v1950
  %v2539 = vpack.c.b16 %v1957, %v1954
  %v2540 = vpack.c.b16 %v1958, %v1955
  %v2541 = vpack.c.b16 %v1959, %v1956
  %v2542 = vpack.c.b16 %v1963, %v1960
  %v2543 = vpack.c.b16 %v1964, %v1961
  %v2544 = vpack.c.b16 %v1965, %v1962
  %v2545 = vpack.c.b16 %v1969, %v1966
  %v2546 = vpack.c.b16 %v1970, %v1967
  %v2547 = vpack.c.b16 %v1971, %v1968
  %v2548 = vpack.c.b16 %v1975, %v1972
  %v2549 = vpack.c.b16 %v1976, %v1973
  %v2550 = vpack.c.b16 %v1977, %v1974
  %v2551 = vpack.c.b16 %v1981, %v1978
  %v2552 = vpack.c.b16 %v1982, %v1979
  %v2553 = vpack.c.b16 %v1983, %v1980
  %v2554 = vpack.c.b16 %v1987, %v1984
  %v2555 = vpack.c.b16 %v1988, %v1985
  %v2556 = vpack.c.b16 %v1989, %v1986
  %v2557 = vpack.c.b16 %v1993, %v1990
  %v2558 = vpack.c.b16 %v1994, %v1991
  %v2559 = vpack.c.b16 %v1995, %v1992
  %v2560 = vpack.c.b16 %v1999, %v1996
  %v2561 = vpack.c.b16 %v2000, %v1997
  %v2562 = vpack.c.b16 %v2001, %v1998
  %v2563 = vpack.c.b16 %v2005, %v2002
  %v2564 = vpack.c.b16 %v2006, %v2003
  %v2565 = vpack.c.b16 %v2007, %v2004
  %v2566 = vpack.c.b16 %v2011, %v2008
  %v2567 = vpack.c.b16 %v2012, %v2009
  %v2568 = vpack.c.b16 %v2013, %v2010
  %v2569 = vpack.c.b16 %v2017, %v2014
  %v2570 = vpack.c.b16 %v2018, %v2015
  %v2571 = vpack.c.b16 %v2019, %v2016
  %v2572 = vpack.c.b16 %v2023, %v2020
  %v2573 = vpack.c.b16 %v2024, %v2021
  %v2574 = vpack.c.b16 %v2025, %v2022
  %v2575 = vpack.c.b16 %v2029, %v2026
  %v2576 = vpack.c.b16 %v2030, %v2027
  %v2577 = vpack.c.b16 %v2031, %v2028
  %v2578 = vpack.c.b16 %v2035, %v2032
  %v2579 = vpack.c.b16 %v2036, %v2033
  %v2580 = vpack.c.b16 %v2037, %v2034
  %v2581 = vpack.c.b16 %v2041, %v2038
  %v2582 = vpack.c.b16 %v2042, %v2039
  %v2583 = vpack.c.b16 %v2043, %v2040
  %v2584 = vpack.c.b16 %v2047, %v2044
  %v2585 = vpack.c.b16 %v2048, %v2045
  %v2586 = vpack.c.b16 %v2049, %v2046
  %v2587 = vpack.c.b16 %v2053, %v2050
  %v2588 = vpack.c.b16 %v2054, %v2051
  %v2589 = vpack.c.b16 %v2055, %v2052
  %v2590 = vpack.c.b16 %v2059, %v2056
  %v2591 = vpack.c.b16 %v2060, %v2057
  %v2592 = vpack.c.b16 %v2061, %v2058
  %v2593 = vpack.c.b16 %v2065, %v2062
  %v2594 = vpack.c.b16 %v2066, %v2063
  %v2595 = vpack.c.b16 %v2067, %v2064
  %v2596 = vpack.c.b16 %v2071, %v2068
  %v2597 = vpack.c.b16 %v2072, %v2069
  %v2598 = vpack.c.b16 %v2073, %v2070
  %v2599 = vpack.c.b16 %v2077, %v2074
  %v2600 = vpack.c.b16 %v2078, %v2075
  %v2601 = vpack.c.b16 %v2079, %v2076
  %v2602 = vpack.c.b16 %v2083, %v2080
  %v2603 = vpack.c.b16 %v2084, %v2081
  %v2604 = vpack.c.b16 %v2085, %v2082
  %v2605 = vpack.c.b16 %v2089, %v2086
  %v2606 = vpack.c.b16 %v2090, %v2087
  %v2607 = vpack.c.b16 %v2091, %v2088
  %v2608 = vpack.c.b16 %v2095, %v2092
  %v2609 = vpack.c.b16 %v2096, %v2093
  %v2610 = vpack.c.b16 %v2097, %v2094
  %v2611 = vpack.c.b16 %v2101, %v2098
  %v2612 = vpack.c.b16 %v2102, %v2099
  %v2613 = vpack.c.b16 %v2103, %v2100
  %v2614 = vpack.c.b16 %v2107, %v2104
  %v2615 = vpack.c.b16 %v2108, %v2105
  %v2616 = vpack.c.b16 %v2109, %v2106
  %v2617 = vpack.c.b16 %v2113, %v2110
  %v2618 = vpack.c.b16 %v2114, %v2111
  %v2619 = vpack.c.b16 %v2115, %v2112
  %v2620 = vpack.c.b16 %v2119, %v2116
  %v2621 = vpack.c.b16 %v2120, %v2117
  %v2622 = vpack.c.b16 %v2121, %v2118
  %v2623 = vpack.c.b16 %v2125, %v2122
  %v2624 = vpack.c.b16 %v2126, %v2123
  %v2625 = vpack.c.b16 %v2127, %v2124
  %v2626 = vpack.c.b16 %v2131, %v2128
  %v2627 = vpack.c.b16 %v2132, %v2129
  %v2628 = vpack.c.b16 %v2133, %v2130
  %v2629 = vpack.c.b16 %v2137, %v2134
  %v2630 = vpack.c.b16 %v2138, %v2135
  %v2631 = vpack.c.b16 %v2139, %v2136
  %v2632 = vpack.c.b16 %v2143, %v2140
  %v2633 = vpack.c.b16 %v2144, %v2141
  %v2634 = vpack.c.b16 %v2145, %v2142
  %v2635 = vpack.c.b16 %v2149, %v2146
  %v2636 = vpack.c.b16 %v2150, %v2147
  %v2637 = vpack.c.b16 %v2151, %v2148
  %v2638 = vpack.c.b16 %v2155, %v2152
  %v2639 = vpack.c.b16 %v2156, %v2153
  %v2640 = vpack.c.b16 %v2157, %v2154
  %v2641 = vpack.c.b16 %v2161, %v2158
  %v2642 = vpack.c.b16 %v2162, %v2159
  %v2643 = vpack.c.b16 %v2163, %v2160
  %v2644 = vpack.c.b16 %v2167, %v2164
  %v2645 = vpack.c.b16 %v2168, %v2165
  %v2646 = vpack.c.b16 %v2169, %v2166
  %v2647 = vpack.c.b16 %v2173, %v2170
  %v2648 = vpack.c.b16 %v2174, %v2171
  %v2649 = vpack.c.b16 %v2175, %v2172
  %v2650 = vpack.c.b16 %v2179, %v2176
  %v2651 = vpack.c.b16 %v2180, %v2177
  %v2652 = vpack.c.b16 %v2181, %v2178
  %v2653 = vpack.c.b16 %v2185, %v2182
  %v2654 = vpack.c.b16 %v2186, %v2183
  %v2655 = vpack.c.b16 %v2187, %v2184
  %v2656 = vpack.c.b16 %v2191, %v2188
  %v2657 = vpack.c.b16 %v2192, %v2189
  %v2658 = vpack.c.b16 %v2193, %v2190
  %v2659 = vpack.c.b16 %v2197, %v2194
  %v2660 = vpack.c.b16 %v2198, %v2195
  %v2661 = vpack.c.b16 %v2199, %v2196
  %v2662 = vpack.c.b16 %v2203, %v2200
  %v2663 = vpack.c.b16 %v2204, %v2201
  %v2664 = vpack.c.b16 %v2205, %v2202
  %v2665 = vpack.c.b16 %v2209, %v2206
  %v2666 = vpack.c.b16 %v2210, %v2207
  %v2667 = vpack.c.b16 %v2211, %v2208
  %v2668 = vpack.c.b16 %v2215, %v2212
  %v2669 = vpack.c.b16 %v2216, %v2213
  %v2670 = vpack.c.b16 %v2217, %v2214
  %v2671 = vpack.c.b16 %v2221, %v2218
  %v2672 = vpack.c.b16 %v2222, %v2219
  %v2673 = vpack.c.b16 %v2223, %v2220
  %v2674 = vpack.c.b16 %v2227, %v2224
  %v2675 = vpack.c.b16 %v2228, %v2225
  %v2676 = vpack.c.b16 %v2229, %v2226
  %v2677 = vpack.c.b16 %v2233, %v2230
  %v2678 = vpack.c.b16 %v2234, %v2231
  %v2679 = vpack.c.b16 %v2235, %v2232
  %v2680 = vpack.c.b16 %v2239, %v2236
  %v2681 = vpack.c.b16 %v2240, %v2237
  %v2682 = vpack.c.b16 %v2241, %v2238
  %v2683 = vpack.c.b16 %v2245, %v2242
  %v2684 = vpack.c.b16 %v2246, %v2243
  %v2685 = vpack.c.b16 %v2247, %v2244
  %v2686 = vpack.c.b16 %v2251, %v2248
  %v2687 = vpack.c.b16 %v2252, %v2249
  %v2688 = vpack.c.b16 %v2253, %v2250
  %v2689 = vpack.c.b16 %v2257, %v2254
  %v2690 = vpack.c.b16 %v2258, %v2255
  %v2691 = vpack.c.b16 %v2259, %v2256
  %3124 = vmatpush.bf16.msra.mxu0 %v2281
  %3125 = vmatpush.bf16.msra.mxu0 %v2278
  %3126 = vmatpush.bf16.msra.mxu0 %v2275
  %3127 = vmatpush.bf16.msra.mxu0 %v2272
  %3128 = vmatpush.bf16.msra.mxu0 %v2269
  %3129 = vmatpush.bf16.msra.mxu0 %v2266
  %3130 = vmatpush.bf16.msra.mxu0 %v2263
  %3131 = vmatpush.bf16.msra.mxu0 %v2260
  %3132 = vmatmul.bf16.gmra.mxu0 %v748
  %v3133 = vpop.f32.mrf.mxu0
  %v3134 = vadd.f32 %v634, %v3133
  %v3135 = vpop.f32.mrf.mxu0
  %v3136 = vadd.f32 %v634, %v3135
  %3137 = vmatmul.bf16.gmra.mxu0 %v766
  %v3138 = vpop.f32.mrf.mxu0
  %v3139 = vadd.f32 %v634, %v3138
  %v3140 = vpop.f32.mrf.mxu0
  %v3141 = vadd.f32 %v634, %v3140
  %3142 = vdwg.mxu0
  %3143 = vmatpush.bf16.msra.mxu0 %v2305
  %3144 = vmatpush.bf16.msra.mxu0 %v2302
  %3145 = vmatpush.bf16.msra.mxu0 %v2299
  %3146 = vmatpush.bf16.msra.mxu0 %v2296
  %3147 = vmatpush.bf16.msra.mxu0 %v2293
  %3148 = vmatpush.bf16.msra.mxu0 %v2290
  %3149 = vmatpush.bf16.msra.mxu0 %v2287
  %3150 = vmatpush.bf16.msra.mxu0 %v2284
  %3151 = vmatmul.bf16.gmra.mxu0 %v749
  %v3152 = vpop.f32.mrf.mxu0
  %v3153 = vadd.f32 %v3134, %v3152
  %v3154 = vpop.f32.mrf.mxu0
  %v3155 = vadd.f32 %v3136, %v3154
  %3156 = vmatmul.bf16.gmra.mxu0 %v767
  %v3157 = vpop.f32.mrf.mxu0
  %v3158 = vadd.f32 %v3139, %v3157
  %v3159 = vpop.f32.mrf.mxu0
  %v3160 = vadd.f32 %v3141, %v3159
  %3161 = vdwg.mxu0
  %3162 = vmatpush.bf16.msra.mxu0 %v2329
  %3163 = vmatpush.bf16.msra.mxu0 %v2326
  %3164 = vmatpush.bf16.msra.mxu0 %v2323
  %3165 = vmatpush.bf16.msra.mxu0 %v2320
  %3166 = vmatpush.bf16.msra.mxu0 %v2317
  %3167 = vmatpush.bf16.msra.mxu0 %v2314
  %3168 = vmatpush.bf16.msra.mxu0 %v2311
  %3169 = vmatpush.bf16.msra.mxu0 %v2308
  %3170 = vmatmul.bf16.gmra.mxu0 %v750
  %v3171 = vpop.f32.mrf.mxu0
  %v3172 = vadd.f32 %v3153, %v3171
  %v3173 = vpop.f32.mrf.mxu0
  %v3174 = vadd.f32 %v3155, %v3173
  %3175 = vmatmul.bf16.gmra.mxu0 %v768
  %v3176 = vpop.f32.mrf.mxu0
  %v3177 = vadd.f32 %v3158, %v3176
  %v3178 = vpop.f32.mrf.mxu0
  %v3179 = vadd.f32 %v3160, %v3178
  %3180 = vdwg.mxu0
  %3181 = vmatpush.bf16.msra.mxu0 %v2353
  %3182 = vmatpush.bf16.msra.mxu0 %v2350
  %3183 = vmatpush.bf16.msra.mxu0 %v2347
  %3184 = vmatpush.bf16.msra.mxu0 %v2344
  %3185 = vmatpush.bf16.msra.mxu0 %v2341
  %3186 = vmatpush.bf16.msra.mxu0 %v2338
  %3187 = vmatpush.bf16.msra.mxu0 %v2335
  %3188 = vmatpush.bf16.msra.mxu0 %v2332
  %3189 = vmatmul.bf16.gmra.mxu0 %v751
  %v3190 = vpop.f32.mrf.mxu0
  %v3191 = vadd.f32 %v3172, %v3190
  %v3192 = vpop.f32.mrf.mxu0
  %v3193 = vadd.f32 %v3174, %v3192
  %3194 = vmatmul.bf16.gmra.mxu0 %v769
  %v3195 = vpop.f32.mrf.mxu0
  %v3196 = vadd.f32 %v3177, %v3195
  %v3197 = vpop.f32.mrf.mxu0
  %v3198 = vadd.f32 %v3179, %v3197
  %3199 = vdwg.mxu0
  %3200 = vmatpush.bf16.msra.mxu0 %v2377
  %3201 = vmatpush.bf16.msra.mxu0 %v2374
  %3202 = vmatpush.bf16.msra.mxu0 %v2371
  %3203 = vmatpush.bf16.msra.mxu0 %v2368
  %3204 = vmatpush.bf16.msra.mxu0 %v2365
  %3205 = vmatpush.bf16.msra.mxu0 %v2362
  %3206 = vmatpush.bf16.msra.mxu0 %v2359
  %3207 = vmatpush.bf16.msra.mxu0 %v2356
  %3208 = vmatmul.bf16.gmra.mxu0 %v752
  %v3209 = vpop.f32.mrf.mxu0
  %v3210 = vadd.f32 %v3191, %v3209
  %v3211 = vpop.f32.mrf.mxu0
  %v3212 = vadd.f32 %v3193, %v3211
  %3213 = vmatmul.bf16.gmra.mxu0 %v770
  %v3214 = vpop.f32.mrf.mxu0
  %v3215 = vadd.f32 %v3196, %v3214
  %v3216 = vpop.f32.mrf.mxu0
  %v3217 = vadd.f32 %v3198, %v3216
  %3218 = vdwg.mxu0
  %3219 = vmatpush.bf16.msra.mxu0 %v2401
  %3220 = vmatpush.bf16.msra.mxu0 %v2398
  %3221 = vmatpush.bf16.msra.mxu0 %v2395
  %3222 = vmatpush.bf16.msra.mxu0 %v2392
  %3223 = vmatpush.bf16.msra.mxu0 %v2389
  %3224 = vmatpush.bf16.msra.mxu0 %v2386
  %3225 = vmatpush.bf16.msra.mxu0 %v2383
  %3226 = vmatpush.bf16.msra.mxu0 %v2380
  %3227 = vmatmul.bf16.gmra.mxu0 %v753
  %v3228 = vpop.f32.mrf.mxu0
  %v3229 = vadd.f32 %v3210, %v3228
  %v3230 = vpop.f32.mrf.mxu0
  %v3231 = vadd.f32 %v3212, %v3230
  %3232 = vmatmul.bf16.gmra.mxu0 %v771
  %v3233 = vpop.f32.mrf.mxu0
  %v3234 = vadd.f32 %v3215, %v3233
  %v3235 = vpop.f32.mrf.mxu0
  %v3236 = vadd.f32 %v3217, %v3235
  %3237 = vdwg.mxu0
  %3238 = vmatpush.bf16.msra.mxu0 %v2425
  %3239 = vmatpush.bf16.msra.mxu0 %v2422
  %3240 = vmatpush.bf16.msra.mxu0 %v2419
  %3241 = vmatpush.bf16.msra.mxu0 %v2416
  %3242 = vmatpush.bf16.msra.mxu0 %v2413
  %3243 = vmatpush.bf16.msra.mxu0 %v2410
  %3244 = vmatpush.bf16.msra.mxu0 %v2407
  %3245 = vmatpush.bf16.msra.mxu0 %v2404
  %3246 = vmatmul.bf16.gmra.mxu0 %v754
  %v3247 = vpop.f32.mrf.mxu0
  %v3248 = vadd.f32 %v3229, %v3247
  %v3249 = vpop.f32.mrf.mxu0
  %v3250 = vadd.f32 %v3231, %v3249
  %3251 = vmatmul.bf16.gmra.mxu0 %v772
  %v3252 = vpop.f32.mrf.mxu0
  %v3253 = vadd.f32 %v3234, %v3252
  %v3254 = vpop.f32.mrf.mxu0
  %v3255 = vadd.f32 %v3236, %v3254
  %3256 = vdwg.mxu0
  %3257 = vmatpush.bf16.msra.mxu0 %v2449
  %3258 = vmatpush.bf16.msra.mxu0 %v2446
  %3259 = vmatpush.bf16.msra.mxu0 %v2443
  %3260 = vmatpush.bf16.msra.mxu0 %v2440
  %3261 = vmatpush.bf16.msra.mxu0 %v2437
  %3262 = vmatpush.bf16.msra.mxu0 %v2434
  %3263 = vmatpush.bf16.msra.mxu0 %v2431
  %3264 = vmatpush.bf16.msra.mxu0 %v2428
  %3265 = vmatmul.bf16.gmra.mxu0 %v755
  %v3266 = vpop.f32.mrf.mxu0
  %v3267 = vadd.f32 %v3248, %v3266
  %v3268 = vpop.f32.mrf.mxu0
  %v3269 = vadd.f32 %v3250, %v3268
  %3270 = vmatmul.bf16.gmra.mxu0 %v773
  %v3271 = vpop.f32.mrf.mxu0
  %v3272 = vadd.f32 %v3253, %v3271
  %v3273 = vpop.f32.mrf.mxu0
  %v3274 = vadd.f32 %v3255, %v3273
  %3275 = vdwg.mxu0
  %3276 = vmatpush.bf16.msra.mxu0 %v2473
  %3277 = vmatpush.bf16.msra.mxu0 %v2470
  %3278 = vmatpush.bf16.msra.mxu0 %v2467
  %3279 = vmatpush.bf16.msra.mxu0 %v2464
  %3280 = vmatpush.bf16.msra.mxu0 %v2461
  %3281 = vmatpush.bf16.msra.mxu0 %v2458
  %3282 = vmatpush.bf16.msra.mxu0 %v2455
  %3283 = vmatpush.bf16.msra.mxu0 %v2452
  %3284 = vmatmul.bf16.gmra.mxu0 %v756
  %v3285 = vpop.f32.mrf.mxu0
  %v3286 = vadd.f32 %v3267, %v3285
  %v3287 = vpop.f32.mrf.mxu0
  %v3288 = vadd.f32 %v3269, %v3287
  %3289 = vmatmul.bf16.gmra.mxu0 %v774
  %v3290 = vpop.f32.mrf.mxu0
  %v3291 = vadd.f32 %v3272, %v3290
  %v3292 = vpop.f32.mrf.mxu0
  %v3293 = vadd.f32 %v3274, %v3292
  %3294 = vdwg.mxu0
  %3295 = vmatpush.bf16.msra.mxu0 %v2497
  %3296 = vmatpush.bf16.msra.mxu0 %v2494
  %3297 = vmatpush.bf16.msra.mxu0 %v2491
  %3298 = vmatpush.bf16.msra.mxu0 %v2488
  %3299 = vmatpush.bf16.msra.mxu0 %v2485
  %3300 = vmatpush.bf16.msra.mxu0 %v2482
  %3301 = vmatpush.bf16.msra.mxu0 %v2479
  %3302 = vmatpush.bf16.msra.mxu0 %v2476
  %3303 = vmatmul.bf16.gmra.mxu0 %v757
  %v3304 = vpop.f32.mrf.mxu0
  %v3305 = vadd.f32 %v3286, %v3304
  %v3306 = vpop.f32.mrf.mxu0
  %v3307 = vadd.f32 %v3288, %v3306
  %3308 = vmatmul.bf16.gmra.mxu0 %v775
  %v3309 = vpop.f32.mrf.mxu0
  %v3310 = vadd.f32 %v3291, %v3309
  %v3311 = vpop.f32.mrf.mxu0
  %v3312 = vadd.f32 %v3293, %v3311
  %3313 = vdwg.mxu0
  %3314 = vmatpush.bf16.msra.mxu0 %v2521
  %3315 = vmatpush.bf16.msra.mxu0 %v2518
  %3316 = vmatpush.bf16.msra.mxu0 %v2515
  %3317 = vmatpush.bf16.msra.mxu0 %v2512
  %3318 = vmatpush.bf16.msra.mxu0 %v2509
  %3319 = vmatpush.bf16.msra.mxu0 %v2506
  %3320 = vmatpush.bf16.msra.mxu0 %v2503
  %3321 = vmatpush.bf16.msra.mxu0 %v2500
  %3322 = vmatmul.bf16.gmra.mxu0 %v758
  %v3323 = vpop.f32.mrf.mxu0
  %v3324 = vadd.f32 %v3305, %v3323
  %v3325 = vpop.f32.mrf.mxu0
  %v3326 = vadd.f32 %v3307, %v3325
  %3327 = vmatmul.bf16.gmra.mxu0 %v776
  %v3328 = vpop.f32.mrf.mxu0
  %v3329 = vadd.f32 %v3310, %v3328
  %v3330 = vpop.f32.mrf.mxu0
  %v3331 = vadd.f32 %v3312, %v3330
  %3332 = vdwg.mxu0
  %3333 = vmatpush.bf16.msra.mxu0 %v2545
  %3334 = vmatpush.bf16.msra.mxu0 %v2542
  %3335 = vmatpush.bf16.msra.mxu0 %v2539
  %3336 = vmatpush.bf16.msra.mxu0 %v2536
  %3337 = vmatpush.bf16.msra.mxu0 %v2533
  %3338 = vmatpush.bf16.msra.mxu0 %v2530
  %3339 = vmatpush.bf16.msra.mxu0 %v2527
  %3340 = vmatpush.bf16.msra.mxu0 %v2524
  %3341 = vmatmul.bf16.gmra.mxu0 %v759
  %v3342 = vpop.f32.mrf.mxu0
  %v3343 = vadd.f32 %v3324, %v3342
  %v3344 = vpop.f32.mrf.mxu0
  %v3345 = vadd.f32 %v3326, %v3344
  %3346 = vmatmul.bf16.gmra.mxu0 %v777
  %v3347 = vpop.f32.mrf.mxu0
  %v3348 = vadd.f32 %v3329, %v3347
  %v3349 = vpop.f32.mrf.mxu0
  %v3350 = vadd.f32 %v3331, %v3349
  %3351 = vdwg.mxu0
  %3352 = vmatpush.bf16.msra.mxu0 %v2569
  %3353 = vmatpush.bf16.msra.mxu0 %v2566
  %3354 = vmatpush.bf16.msra.mxu0 %v2563
  %3355 = vmatpush.bf16.msra.mxu0 %v2560
  %3356 = vmatpush.bf16.msra.mxu0 %v2557
  %3357 = vmatpush.bf16.msra.mxu0 %v2554
  %3358 = vmatpush.bf16.msra.mxu0 %v2551
  %3359 = vmatpush.bf16.msra.mxu0 %v2548
  %3360 = vmatmul.bf16.gmra.mxu0 %v760
  %v3361 = vpop.f32.mrf.mxu0
  %v3362 = vadd.f32 %v3343, %v3361
  %v3363 = vpop.f32.mrf.mxu0
  %v3364 = vadd.f32 %v3345, %v3363
  %3365 = vmatmul.bf16.gmra.mxu0 %v778
  %v3366 = vpop.f32.mrf.mxu0
  %v3367 = vadd.f32 %v3348, %v3366
  %v3368 = vpop.f32.mrf.mxu0
  %v3369 = vadd.f32 %v3350, %v3368
  %3370 = vdwg.mxu0
  %3371 = vmatpush.bf16.msra.mxu0 %v2593
  %3372 = vmatpush.bf16.msra.mxu0 %v2590
  %3373 = vmatpush.bf16.msra.mxu0 %v2587
  %3374 = vmatpush.bf16.msra.mxu0 %v2584
  %3375 = vmatpush.bf16.msra.mxu0 %v2581
  %3376 = vmatpush.bf16.msra.mxu0 %v2578
  %3377 = vmatpush.bf16.msra.mxu0 %v2575
  %3378 = vmatpush.bf16.msra.mxu0 %v2572
  %3379 = vmatmul.bf16.gmra.mxu0 %v761
  %v3380 = vpop.f32.mrf.mxu0
  %v3381 = vadd.f32 %v3362, %v3380
  %v3382 = vpop.f32.mrf.mxu0
  %v3383 = vadd.f32 %v3364, %v3382
  %3384 = vmatmul.bf16.gmra.mxu0 %v779
  %v3385 = vpop.f32.mrf.mxu0
  %v3386 = vadd.f32 %v3367, %v3385
  %v3387 = vpop.f32.mrf.mxu0
  %v3388 = vadd.f32 %v3369, %v3387
  %3389 = vdwg.mxu0
  %3390 = vmatpush.bf16.msra.mxu0 %v2617
  %3391 = vmatpush.bf16.msra.mxu0 %v2614
  %3392 = vmatpush.bf16.msra.mxu0 %v2611
  %3393 = vmatpush.bf16.msra.mxu0 %v2608
  %3394 = vmatpush.bf16.msra.mxu0 %v2605
  %3395 = vmatpush.bf16.msra.mxu0 %v2602
  %3396 = vmatpush.bf16.msra.mxu0 %v2599
  %3397 = vmatpush.bf16.msra.mxu0 %v2596
  %3398 = vmatmul.bf16.gmra.mxu0 %v762
  %v3399 = vpop.f32.mrf.mxu0
  %v3400 = vadd.f32 %v3381, %v3399
  %v3401 = vpop.f32.mrf.mxu0
  %v3402 = vadd.f32 %v3383, %v3401
  %3403 = vmatmul.bf16.gmra.mxu0 %v780
  %v3404 = vpop.f32.mrf.mxu0
  %v3405 = vadd.f32 %v3386, %v3404
  %v3406 = vpop.f32.mrf.mxu0
  %v3407 = vadd.f32 %v3388, %v3406
  %3408 = vdwg.mxu0
  %3409 = vmatpush.bf16.msra.mxu0 %v2641
  %3410 = vmatpush.bf16.msra.mxu0 %v2638
  %3411 = vmatpush.bf16.msra.mxu0 %v2635
  %3412 = vmatpush.bf16.msra.mxu0 %v2632
  %3413 = vmatpush.bf16.msra.mxu0 %v2629
  %3414 = vmatpush.bf16.msra.mxu0 %v2626
  %3415 = vmatpush.bf16.msra.mxu0 %v2623
  %3416 = vmatpush.bf16.msra.mxu0 %v2620
  %3417 = vmatmul.bf16.gmra.mxu0 %v763
  %v3418 = vpop.f32.mrf.mxu0
  %v3419 = vadd.f32 %v3400, %v3418
  %v3420 = vpop.f32.mrf.mxu0
  %v3421 = vadd.f32 %v3402, %v3420
  %3422 = vmatmul.bf16.gmra.mxu0 %v781
  %v3423 = vpop.f32.mrf.mxu0
  %v3424 = vadd.f32 %v3405, %v3423
  %v3425 = vpop.f32.mrf.mxu0
  %v3426 = vadd.f32 %v3407, %v3425
  %3427 = vdwg.mxu0
  %3428 = vmatpush.bf16.msra.mxu0 %v2665
  %3429 = vmatpush.bf16.msra.mxu0 %v2662
  %3430 = vmatpush.bf16.msra.mxu0 %v2659
  %3431 = vmatpush.bf16.msra.mxu0 %v2656
  %3432 = vmatpush.bf16.msra.mxu0 %v2653
  %3433 = vmatpush.bf16.msra.mxu0 %v2650
  %3434 = vmatpush.bf16.msra.mxu0 %v2647
  %3435 = vmatpush.bf16.msra.mxu0 %v2644
  %3436 = vmatmul.bf16.gmra.mxu0 %v764
  %v3437 = vpop.f32.mrf.mxu0
  %v3438 = vadd.f32 %v3419, %v3437
  %v3439 = vpop.f32.mrf.mxu0
  %v3440 = vadd.f32 %v3421, %v3439
  %3441 = vmatmul.bf16.gmra.mxu0 %v782
  %v3442 = vpop.f32.mrf.mxu0
  %v3443 = vadd.f32 %v3424, %v3442
  %v3444 = vpop.f32.mrf.mxu0
  %v3445 = vadd.f32 %v3426, %v3444
  %3446 = vdwg.mxu0
  %3447 = vmatpush.bf16.msra.mxu0 %v2689
  %3448 = vmatpush.bf16.msra.mxu0 %v2686
  %3449 = vmatpush.bf16.msra.mxu0 %v2683
  %3450 = vmatpush.bf16.msra.mxu0 %v2680
  %3451 = vmatpush.bf16.msra.mxu0 %v2677
  %3452 = vmatpush.bf16.msra.mxu0 %v2674
  %3453 = vmatpush.bf16.msra.mxu0 %v2671
  %3454 = vmatpush.bf16.msra.mxu0 %v2668
  %3455 = vmatmul.bf16.gmra.mxu0 %v765
  %v3456 = vpop.f32.mrf.mxu0
  %v3457 = vadd.f32 %v3438, %v3456
  %v3458 = vpop.f32.mrf.mxu0
  %v3459 = vadd.f32 %v3440, %v3458
  %3460 = vmatmul.bf16.gmra.mxu0 %v783
  %v3461 = vpop.f32.mrf.mxu0
  %v3462 = vadd.f32 %v3443, %v3461
  %v3463 = vpop.f32.mrf.mxu0
  %v3464 = vadd.f32 %v3445, %v3463
  %3465 = vdwg.mxu0
  %3466 = vmatpush.bf16.msra.mxu0 %v2282
  %3467 = vmatpush.bf16.msra.mxu0 %v2279
  %3468 = vmatpush.bf16.msra.mxu0 %v2276
  %3469 = vmatpush.bf16.msra.mxu0 %v2273
  %3470 = vmatpush.bf16.msra.mxu0 %v2270
  %3471 = vmatpush.bf16.msra.mxu0 %v2267
  %3472 = vmatpush.bf16.msra.mxu0 %v2264
  %3473 = vmatpush.bf16.msra.mxu0 %v2261
  %3474 = vmatmul.bf16.gmra.mxu0 %v748
  %v3475 = vpop.f32.mrf.mxu0
  %v3476 = vadd.f32 %v635, %v3475
  %v3477 = vpop.f32.mrf.mxu0
  %v3478 = vadd.f32 %v635, %v3477
  %3479 = vmatmul.bf16.gmra.mxu0 %v766
  %v3480 = vpop.f32.mrf.mxu0
  %v3481 = vadd.f32 %v635, %v3480
  %v3482 = vpop.f32.mrf.mxu0
  %v3483 = vadd.f32 %v635, %v3482
  %3484 = vdwg.mxu0
  %3485 = vmatpush.bf16.msra.mxu0 %v2306
  %3486 = vmatpush.bf16.msra.mxu0 %v2303
  %3487 = vmatpush.bf16.msra.mxu0 %v2300
  %3488 = vmatpush.bf16.msra.mxu0 %v2297
  %3489 = vmatpush.bf16.msra.mxu0 %v2294
  %3490 = vmatpush.bf16.msra.mxu0 %v2291
  %3491 = vmatpush.bf16.msra.mxu0 %v2288
  %3492 = vmatpush.bf16.msra.mxu0 %v2285
  %3493 = vmatmul.bf16.gmra.mxu0 %v749
  %v3494 = vpop.f32.mrf.mxu0
  %v3495 = vadd.f32 %v3476, %v3494
  %v3496 = vpop.f32.mrf.mxu0
  %v3497 = vadd.f32 %v3478, %v3496
  %3498 = vmatmul.bf16.gmra.mxu0 %v767
  %v3499 = vpop.f32.mrf.mxu0
  %v3500 = vadd.f32 %v3481, %v3499
  %v3501 = vpop.f32.mrf.mxu0
  %v3502 = vadd.f32 %v3483, %v3501
  %3503 = vdwg.mxu0
  %3504 = vmatpush.bf16.msra.mxu0 %v2330
  %3505 = vmatpush.bf16.msra.mxu0 %v2327
  %3506 = vmatpush.bf16.msra.mxu0 %v2324
  %3507 = vmatpush.bf16.msra.mxu0 %v2321
  %3508 = vmatpush.bf16.msra.mxu0 %v2318
  %3509 = vmatpush.bf16.msra.mxu0 %v2315
  %3510 = vmatpush.bf16.msra.mxu0 %v2312
  %3511 = vmatpush.bf16.msra.mxu0 %v2309
  %3512 = vmatmul.bf16.gmra.mxu0 %v750
  %v3513 = vpop.f32.mrf.mxu0
  %v3514 = vadd.f32 %v3495, %v3513
  %v3515 = vpop.f32.mrf.mxu0
  %v3516 = vadd.f32 %v3497, %v3515
  %3517 = vmatmul.bf16.gmra.mxu0 %v768
  %v3518 = vpop.f32.mrf.mxu0
  %v3519 = vadd.f32 %v3500, %v3518
  %v3520 = vpop.f32.mrf.mxu0
  %v3521 = vadd.f32 %v3502, %v3520
  %3522 = vdwg.mxu0
  %3523 = vmatpush.bf16.msra.mxu0 %v2354
  %3524 = vmatpush.bf16.msra.mxu0 %v2351
  %3525 = vmatpush.bf16.msra.mxu0 %v2348
  %3526 = vmatpush.bf16.msra.mxu0 %v2345
  %3527 = vmatpush.bf16.msra.mxu0 %v2342
  %3528 = vmatpush.bf16.msra.mxu0 %v2339
  %3529 = vmatpush.bf16.msra.mxu0 %v2336
  %3530 = vmatpush.bf16.msra.mxu0 %v2333
  %3531 = vmatmul.bf16.gmra.mxu0 %v751
  %v3532 = vpop.f32.mrf.mxu0
  %v3533 = vadd.f32 %v3514, %v3532
  %v3534 = vpop.f32.mrf.mxu0
  %v3535 = vadd.f32 %v3516, %v3534
  %3536 = vmatmul.bf16.gmra.mxu0 %v769
  %v3537 = vpop.f32.mrf.mxu0
  %v3538 = vadd.f32 %v3519, %v3537
  %v3539 = vpop.f32.mrf.mxu0
  %v3540 = vadd.f32 %v3521, %v3539
  %3541 = vdwg.mxu0
  %3542 = vmatpush.bf16.msra.mxu0 %v2378
  %3543 = vmatpush.bf16.msra.mxu0 %v2375
  %3544 = vmatpush.bf16.msra.mxu0 %v2372
  %3545 = vmatpush.bf16.msra.mxu0 %v2369
  %3546 = vmatpush.bf16.msra.mxu0 %v2366
  %3547 = vmatpush.bf16.msra.mxu0 %v2363
  %3548 = vmatpush.bf16.msra.mxu0 %v2360
  %3549 = vmatpush.bf16.msra.mxu0 %v2357
  %3550 = vmatmul.bf16.gmra.mxu0 %v752
  %v3551 = vpop.f32.mrf.mxu0
  %v3552 = vadd.f32 %v3533, %v3551
  %v3553 = vpop.f32.mrf.mxu0
  %v3554 = vadd.f32 %v3535, %v3553
  %3555 = vmatmul.bf16.gmra.mxu0 %v770
  %v3556 = vpop.f32.mrf.mxu0
  %v3557 = vadd.f32 %v3538, %v3556
  %v3558 = vpop.f32.mrf.mxu0
  %v3559 = vadd.f32 %v3540, %v3558
  %3560 = vdwg.mxu0
  %3561 = vmatpush.bf16.msra.mxu0 %v2402
  %3562 = vmatpush.bf16.msra.mxu0 %v2399
  %3563 = vmatpush.bf16.msra.mxu0 %v2396
  %3564 = vmatpush.bf16.msra.mxu0 %v2393
  %3565 = vmatpush.bf16.msra.mxu0 %v2390
  %3566 = vmatpush.bf16.msra.mxu0 %v2387
  %3567 = vmatpush.bf16.msra.mxu0 %v2384
  %3568 = vmatpush.bf16.msra.mxu0 %v2381
  %3569 = vmatmul.bf16.gmra.mxu0 %v753
  %v3570 = vpop.f32.mrf.mxu0
  %v3571 = vadd.f32 %v3552, %v3570
  %v3572 = vpop.f32.mrf.mxu0
  %v3573 = vadd.f32 %v3554, %v3572
  %3574 = vmatmul.bf16.gmra.mxu0 %v771
  %v3575 = vpop.f32.mrf.mxu0
  %v3576 = vadd.f32 %v3557, %v3575
  %v3577 = vpop.f32.mrf.mxu0
  %v3578 = vadd.f32 %v3559, %v3577
  %3579 = vdwg.mxu0
  %3580 = vmatpush.bf16.msra.mxu0 %v2426
  %3581 = vmatpush.bf16.msra.mxu0 %v2423
  %3582 = vmatpush.bf16.msra.mxu0 %v2420
  %3583 = vmatpush.bf16.msra.mxu0 %v2417
  %3584 = vmatpush.bf16.msra.mxu0 %v2414
  %3585 = vmatpush.bf16.msra.mxu0 %v2411
  %3586 = vmatpush.bf16.msra.mxu0 %v2408
  %3587 = vmatpush.bf16.msra.mxu0 %v2405
  %3588 = vmatmul.bf16.gmra.mxu0 %v754
  %v3589 = vpop.f32.mrf.mxu0
  %v3590 = vadd.f32 %v3571, %v3589
  %v3591 = vpop.f32.mrf.mxu0
  %v3592 = vadd.f32 %v3573, %v3591
  %3593 = vmatmul.bf16.gmra.mxu0 %v772
  %v3594 = vpop.f32.mrf.mxu0
  %v3595 = vadd.f32 %v3576, %v3594
  %v3596 = vpop.f32.mrf.mxu0
  %v3597 = vadd.f32 %v3578, %v3596
  %3598 = vdwg.mxu0
  %3599 = vmatpush.bf16.msra.mxu0 %v2450
  %3600 = vmatpush.bf16.msra.mxu0 %v2447
  %3601 = vmatpush.bf16.msra.mxu0 %v2444
  %3602 = vmatpush.bf16.msra.mxu0 %v2441
  %3603 = vmatpush.bf16.msra.mxu0 %v2438
  %3604 = vmatpush.bf16.msra.mxu0 %v2435
  %3605 = vmatpush.bf16.msra.mxu0 %v2432
  %3606 = vmatpush.bf16.msra.mxu0 %v2429
  %3607 = vmatmul.bf16.gmra.mxu0 %v755
  %v3608 = vpop.f32.mrf.mxu0
  %v3609 = vadd.f32 %v3590, %v3608
  %v3610 = vpop.f32.mrf.mxu0
  %v3611 = vadd.f32 %v3592, %v3610
  %3612 = vmatmul.bf16.gmra.mxu0 %v773
  %v3613 = vpop.f32.mrf.mxu0
  %v3614 = vadd.f32 %v3595, %v3613
  %v3615 = vpop.f32.mrf.mxu0
  %v3616 = vadd.f32 %v3597, %v3615
  %3617 = vdwg.mxu0
  %3618 = vmatpush.bf16.msra.mxu0 %v2474
  %3619 = vmatpush.bf16.msra.mxu0 %v2471
  %3620 = vmatpush.bf16.msra.mxu0 %v2468
  %3621 = vmatpush.bf16.msra.mxu0 %v2465
  %3622 = vmatpush.bf16.msra.mxu0 %v2462
  %3623 = vmatpush.bf16.msra.mxu0 %v2459
  %3624 = vmatpush.bf16.msra.mxu0 %v2456
  %3625 = vmatpush.bf16.msra.mxu0 %v2453
  %3626 = vmatmul.bf16.gmra.mxu0 %v756
  %v3627 = vpop.f32.mrf.mxu0
  %v3628 = vadd.f32 %v3609, %v3627
  %v3629 = vpop.f32.mrf.mxu0
  %v3630 = vadd.f32 %v3611, %v3629
  %3631 = vmatmul.bf16.gmra.mxu0 %v774
  %v3632 = vpop.f32.mrf.mxu0
  %v3633 = vadd.f32 %v3614, %v3632
  %v3634 = vpop.f32.mrf.mxu0
  %v3635 = vadd.f32 %v3616, %v3634
  %3636 = vdwg.mxu0
  %3637 = vmatpush.bf16.msra.mxu0 %v2498
  %3638 = vmatpush.bf16.msra.mxu0 %v2495
  %3639 = vmatpush.bf16.msra.mxu0 %v2492
  %3640 = vmatpush.bf16.msra.mxu0 %v2489
  %3641 = vmatpush.bf16.msra.mxu0 %v2486
  %3642 = vmatpush.bf16.msra.mxu0 %v2483
  %3643 = vmatpush.bf16.msra.mxu0 %v2480
  %3644 = vmatpush.bf16.msra.mxu0 %v2477
  %3645 = vmatmul.bf16.gmra.mxu0 %v757
  %v3646 = vpop.f32.mrf.mxu0
  %v3647 = vadd.f32 %v3628, %v3646
  %v3648 = vpop.f32.mrf.mxu0
  %v3649 = vadd.f32 %v3630, %v3648
  %3650 = vmatmul.bf16.gmra.mxu0 %v775
  %v3651 = vpop.f32.mrf.mxu0
  %v3652 = vadd.f32 %v3633, %v3651
  %v3653 = vpop.f32.mrf.mxu0
  %v3654 = vadd.f32 %v3635, %v3653
  %3655 = vdwg.mxu0
  %3656 = vmatpush.bf16.msra.mxu0 %v2522
  %3657 = vmatpush.bf16.msra.mxu0 %v2519
  %3658 = vmatpush.bf16.msra.mxu0 %v2516
  %3659 = vmatpush.bf16.msra.mxu0 %v2513
  %3660 = vmatpush.bf16.msra.mxu0 %v2510
  %3661 = vmatpush.bf16.msra.mxu0 %v2507
  %3662 = vmatpush.bf16.msra.mxu0 %v2504
  %3663 = vmatpush.bf16.msra.mxu0 %v2501
  %3664 = vmatmul.bf16.gmra.mxu0 %v758
  %v3665 = vpop.f32.mrf.mxu0
  %v3666 = vadd.f32 %v3647, %v3665
  %v3667 = vpop.f32.mrf.mxu0
  %v3668 = vadd.f32 %v3649, %v3667
  %3669 = vmatmul.bf16.gmra.mxu0 %v776
  %v3670 = vpop.f32.mrf.mxu0
  %v3671 = vadd.f32 %v3652, %v3670
  %v3672 = vpop.f32.mrf.mxu0
  %v3673 = vadd.f32 %v3654, %v3672
  %3674 = vdwg.mxu0
  %3675 = vmatpush.bf16.msra.mxu0 %v2546
  %3676 = vmatpush.bf16.msra.mxu0 %v2543
  %3677 = vmatpush.bf16.msra.mxu0 %v2540
  %3678 = vmatpush.bf16.msra.mxu0 %v2537
  %3679 = vmatpush.bf16.msra.mxu0 %v2534
  %3680 = vmatpush.bf16.msra.mxu0 %v2531
  %3681 = vmatpush.bf16.msra.mxu0 %v2528
  %3682 = vmatpush.bf16.msra.mxu0 %v2525
  %3683 = vmatmul.bf16.gmra.mxu0 %v759
  %v3684 = vpop.f32.mrf.mxu0
  %v3685 = vadd.f32 %v3666, %v3684
  %v3686 = vpop.f32.mrf.mxu0
  %v3687 = vadd.f32 %v3668, %v3686
  %3688 = vmatmul.bf16.gmra.mxu0 %v777
  %v3689 = vpop.f32.mrf.mxu0
  %v3690 = vadd.f32 %v3671, %v3689
  %v3691 = vpop.f32.mrf.mxu0
  %v3692 = vadd.f32 %v3673, %v3691
  %3693 = vdwg.mxu0
  %3694 = vmatpush.bf16.msra.mxu0 %v2570
  %3695 = vmatpush.bf16.msra.mxu0 %v2567
  %3696 = vmatpush.bf16.msra.mxu0 %v2564
  %3697 = vmatpush.bf16.msra.mxu0 %v2561
  %3698 = vmatpush.bf16.msra.mxu0 %v2558
  %3699 = vmatpush.bf16.msra.mxu0 %v2555
  %3700 = vmatpush.bf16.msra.mxu0 %v2552
  %3701 = vmatpush.bf16.msra.mxu0 %v2549
  %3702 = vmatmul.bf16.gmra.mxu0 %v760
  %v3703 = vpop.f32.mrf.mxu0
  %v3704 = vadd.f32 %v3685, %v3703
  %v3705 = vpop.f32.mrf.mxu0
  %v3706 = vadd.f32 %v3687, %v3705
  %3707 = vmatmul.bf16.gmra.mxu0 %v778
  %v3708 = vpop.f32.mrf.mxu0
  %v3709 = vadd.f32 %v3690, %v3708
  %v3710 = vpop.f32.mrf.mxu0
  %v3711 = vadd.f32 %v3692, %v3710
  %3712 = vdwg.mxu0
  %3713 = vmatpush.bf16.msra.mxu0 %v2594
  %3714 = vmatpush.bf16.msra.mxu0 %v2591
  %3715 = vmatpush.bf16.msra.mxu0 %v2588
  %3716 = vmatpush.bf16.msra.mxu0 %v2585
  %3717 = vmatpush.bf16.msra.mxu0 %v2582
  %3718 = vmatpush.bf16.msra.mxu0 %v2579
  %3719 = vmatpush.bf16.msra.mxu0 %v2576
  %3720 = vmatpush.bf16.msra.mxu0 %v2573
  %3721 = vmatmul.bf16.gmra.mxu0 %v761
  %v3722 = vpop.f32.mrf.mxu0
  %v3723 = vadd.f32 %v3704, %v3722
  %v3724 = vpop.f32.mrf.mxu0
  %v3725 = vadd.f32 %v3706, %v3724
  %3726 = vmatmul.bf16.gmra.mxu0 %v779
  %v3727 = vpop.f32.mrf.mxu0
  %v3728 = vadd.f32 %v3709, %v3727
  %v3729 = vpop.f32.mrf.mxu0
  %v3730 = vadd.f32 %v3711, %v3729
  %3731 = vdwg.mxu0
  %3732 = vmatpush.bf16.msra.mxu0 %v2618
  %3733 = vmatpush.bf16.msra.mxu0 %v2615
  %3734 = vmatpush.bf16.msra.mxu0 %v2612
  %3735 = vmatpush.bf16.msra.mxu0 %v2609
  %3736 = vmatpush.bf16.msra.mxu0 %v2606
  %3737 = vmatpush.bf16.msra.mxu0 %v2603
  %3738 = vmatpush.bf16.msra.mxu0 %v2600
  %3739 = vmatpush.bf16.msra.mxu0 %v2597
  %3740 = vmatmul.bf16.gmra.mxu0 %v762
  %v3741 = vpop.f32.mrf.mxu0
  %v3742 = vadd.f32 %v3723, %v3741
  %v3743 = vpop.f32.mrf.mxu0
  %v3744 = vadd.f32 %v3725, %v3743
  %3745 = vmatmul.bf16.gmra.mxu0 %v780
  %v3746 = vpop.f32.mrf.mxu0
  %v3747 = vadd.f32 %v3728, %v3746
  %v3748 = vpop.f32.mrf.mxu0
  %v3749 = vadd.f32 %v3730, %v3748
  %3750 = vdwg.mxu0
  %3751 = vmatpush.bf16.msra.mxu0 %v2642
  %3752 = vmatpush.bf16.msra.mxu0 %v2639
  %3753 = vmatpush.bf16.msra.mxu0 %v2636
  %3754 = vmatpush.bf16.msra.mxu0 %v2633
  %3755 = vmatpush.bf16.msra.mxu0 %v2630
  %3756 = vmatpush.bf16.msra.mxu0 %v2627
  %3757 = vmatpush.bf16.msra.mxu0 %v2624
  %3758 = vmatpush.bf16.msra.mxu0 %v2621
  %3759 = vmatmul.bf16.gmra.mxu0 %v763
  %v3760 = vpop.f32.mrf.mxu0
  %v3761 = vadd.f32 %v3742, %v3760
  %v3762 = vpop.f32.mrf.mxu0
  %v3763 = vadd.f32 %v3744, %v3762
  %3764 = vmatmul.bf16.gmra.mxu0 %v781
  %v3765 = vpop.f32.mrf.mxu0
  %v3766 = vadd.f32 %v3747, %v3765
  %v3767 = vpop.f32.mrf.mxu0
  %v3768 = vadd.f32 %v3749, %v3767
  %3769 = vdwg.mxu0
  %3770 = vmatpush.bf16.msra.mxu0 %v2666
  %3771 = vmatpush.bf16.msra.mxu0 %v2663
  %3772 = vmatpush.bf16.msra.mxu0 %v2660
  %3773 = vmatpush.bf16.msra.mxu0 %v2657
  %3774 = vmatpush.bf16.msra.mxu0 %v2654
  %3775 = vmatpush.bf16.msra.mxu0 %v2651
  %3776 = vmatpush.bf16.msra.mxu0 %v2648
  %3777 = vmatpush.bf16.msra.mxu0 %v2645
  %3778 = vmatmul.bf16.gmra.mxu0 %v764
  %v3779 = vpop.f32.mrf.mxu0
  %v3780 = vadd.f32 %v3761, %v3779
  %v3781 = vpop.f32.mrf.mxu0
  %v3782 = vadd.f32 %v3763, %v3781
  %3783 = vmatmul.bf16.gmra.mxu0 %v782
  %v3784 = vpop.f32.mrf.mxu0
  %v3785 = vadd.f32 %v3766, %v3784
  %v3786 = vpop.f32.mrf.mxu0
  %v3787 = vadd.f32 %v3768, %v3786
  %3788 = vdwg.mxu0
  %3789 = vmatpush.bf16.msra.mxu0 %v2690
  %3790 = vmatpush.bf16.msra.mxu0 %v2687
  %3791 = vmatpush.bf16.msra.mxu0 %v2684
  %3792 = vmatpush.bf16.msra.mxu0 %v2681
  %3793 = vmatpush.bf16.msra.mxu0 %v2678
  %3794 = vmatpush.bf16.msra.mxu0 %v2675
  %3795 = vmatpush.bf16.msra.mxu0 %v2672
  %3796 = vmatpush.bf16.msra.mxu0 %v2669
  %3797 = vmatmul.bf16.gmra.mxu0 %v765
  %v3798 = vpop.f32.mrf.mxu0
  %v3799 = vadd.f32 %v3780, %v3798
  %v3800 = vpop.f32.mrf.mxu0
  %v3801 = vadd.f32 %v3782, %v3800
  %3802 = vmatmul.bf16.gmra.mxu0 %v783
  %v3803 = vpop.f32.mrf.mxu0
  %v3804 = vadd.f32 %v3785, %v3803
  %v3805 = vpop.f32.mrf.mxu0
  %v3806 = vadd.f32 %v3787, %v3805
  %3807 = vdwg.mxu0
  %3808 = vmatpush.bf16.msra.mxu0 %v2283
  %3809 = vmatpush.bf16.msra.mxu0 %v2280
  %3810 = vmatpush.bf16.msra.mxu0 %v2277
  %3811 = vmatpush.bf16.msra.mxu0 %v2274
  %3812 = vmatpush.bf16.msra.mxu0 %v2271
  %3813 = vmatpush.bf16.msra.mxu0 %v2268
  %3814 = vmatpush.bf16.msra.mxu0 %v2265
  %3815 = vmatpush.bf16.msra.mxu0 %v2262
  %3816 = vmatmul.bf16.gmra.mxu0 %v748
  %v3817 = vpop.f32.mrf.mxu0
  %v3818 = vadd.f32 %v636, %v3817
  %v3819 = vpop.f32.mrf.mxu0
  %v3820 = vadd.f32 %v636, %v3819
  %3821 = vmatmul.bf16.gmra.mxu0 %v766
  %v3822 = vpop.f32.mrf.mxu0
  %v3823 = vadd.f32 %v636, %v3822
  %v3824 = vpop.f32.mrf.mxu0
  %v3825 = vadd.f32 %v636, %v3824
  %3826 = vdwg.mxu0
  %3827 = vmatpush.bf16.msra.mxu0 %v2307
  %3828 = vmatpush.bf16.msra.mxu0 %v2304
  %3829 = vmatpush.bf16.msra.mxu0 %v2301
  %3830 = vmatpush.bf16.msra.mxu0 %v2298
  %3831 = vmatpush.bf16.msra.mxu0 %v2295
  %3832 = vmatpush.bf16.msra.mxu0 %v2292
  %3833 = vmatpush.bf16.msra.mxu0 %v2289
  %3834 = vmatpush.bf16.msra.mxu0 %v2286
  %3835 = vmatmul.bf16.gmra.mxu0 %v749
  %v3836 = vpop.f32.mrf.mxu0
  %v3837 = vadd.f32 %v3818, %v3836
  %v3838 = vpop.f32.mrf.mxu0
  %v3839 = vadd.f32 %v3820, %v3838
  %3840 = vmatmul.bf16.gmra.mxu0 %v767
  %v3841 = vpop.f32.mrf.mxu0
  %v3842 = vadd.f32 %v3823, %v3841
  %v3843 = vpop.f32.mrf.mxu0
  %v3844 = vadd.f32 %v3825, %v3843
  %3845 = vdwg.mxu0
  %3846 = vmatpush.bf16.msra.mxu0 %v2331
  %3847 = vmatpush.bf16.msra.mxu0 %v2328
  %3848 = vmatpush.bf16.msra.mxu0 %v2325
  %3849 = vmatpush.bf16.msra.mxu0 %v2322
  %3850 = vmatpush.bf16.msra.mxu0 %v2319
  %3851 = vmatpush.bf16.msra.mxu0 %v2316
  %3852 = vmatpush.bf16.msra.mxu0 %v2313
  %3853 = vmatpush.bf16.msra.mxu0 %v2310
  %3854 = vmatmul.bf16.gmra.mxu0 %v750
  %v3855 = vpop.f32.mrf.mxu0
  %v3856 = vadd.f32 %v3837, %v3855
  %v3857 = vpop.f32.mrf.mxu0
  %v3858 = vadd.f32 %v3839, %v3857
  %3859 = vmatmul.bf16.gmra.mxu0 %v768
  %v3860 = vpop.f32.mrf.mxu0
  %v3861 = vadd.f32 %v3842, %v3860
  %v3862 = vpop.f32.mrf.mxu0
  %v3863 = vadd.f32 %v3844, %v3862
  %3864 = vdwg.mxu0
  %3865 = vmatpush.bf16.msra.mxu0 %v2355
  %3866 = vmatpush.bf16.msra.mxu0 %v2352
  %3867 = vmatpush.bf16.msra.mxu0 %v2349
  %3868 = vmatpush.bf16.msra.mxu0 %v2346
  %3869 = vmatpush.bf16.msra.mxu0 %v2343
  %3870 = vmatpush.bf16.msra.mxu0 %v2340
  %3871 = vmatpush.bf16.msra.mxu0 %v2337
  %3872 = vmatpush.bf16.msra.mxu0 %v2334
  %3873 = vmatmul.bf16.gmra.mxu0 %v751
  %v3874 = vpop.f32.mrf.mxu0
  %v3875 = vadd.f32 %v3856, %v3874
  %v3876 = vpop.f32.mrf.mxu0
  %v3877 = vadd.f32 %v3858, %v3876
  %3878 = vmatmul.bf16.gmra.mxu0 %v769
  %v3879 = vpop.f32.mrf.mxu0
  %v3880 = vadd.f32 %v3861, %v3879
  %v3881 = vpop.f32.mrf.mxu0
  %v3882 = vadd.f32 %v3863, %v3881
  %3883 = vdwg.mxu0
  %3884 = vmatpush.bf16.msra.mxu0 %v2379
  %3885 = vmatpush.bf16.msra.mxu0 %v2376
  %3886 = vmatpush.bf16.msra.mxu0 %v2373
  %3887 = vmatpush.bf16.msra.mxu0 %v2370
  %3888 = vmatpush.bf16.msra.mxu0 %v2367
  %3889 = vmatpush.bf16.msra.mxu0 %v2364
  %3890 = vmatpush.bf16.msra.mxu0 %v2361
  %3891 = vmatpush.bf16.msra.mxu0 %v2358
  %3892 = vmatmul.bf16.gmra.mxu0 %v752
  %v3893 = vpop.f32.mrf.mxu0
  %v3894 = vadd.f32 %v3875, %v3893
  %v3895 = vpop.f32.mrf.mxu0
  %v3896 = vadd.f32 %v3877, %v3895
  %3897 = vmatmul.bf16.gmra.mxu0 %v770
  %v3898 = vpop.f32.mrf.mxu0
  %v3899 = vadd.f32 %v3880, %v3898
  %v3900 = vpop.f32.mrf.mxu0
  %v3901 = vadd.f32 %v3882, %v3900
  %3902 = vdwg.mxu0
  %3903 = vmatpush.bf16.msra.mxu0 %v2403
  %3904 = vmatpush.bf16.msra.mxu0 %v2400
  %3905 = vmatpush.bf16.msra.mxu0 %v2397
  %3906 = vmatpush.bf16.msra.mxu0 %v2394
  %3907 = vmatpush.bf16.msra.mxu0 %v2391
  %3908 = vmatpush.bf16.msra.mxu0 %v2388
  %3909 = vmatpush.bf16.msra.mxu0 %v2385
  %3910 = vmatpush.bf16.msra.mxu0 %v2382
  %3911 = vmatmul.bf16.gmra.mxu0 %v753
  %v3912 = vpop.f32.mrf.mxu0
  %v3913 = vadd.f32 %v3894, %v3912
  %v3914 = vpop.f32.mrf.mxu0
  %v3915 = vadd.f32 %v3896, %v3914
  %3916 = vmatmul.bf16.gmra.mxu0 %v771
  %v3917 = vpop.f32.mrf.mxu0
  %v3918 = vadd.f32 %v3899, %v3917
  %v3919 = vpop.f32.mrf.mxu0
  %v3920 = vadd.f32 %v3901, %v3919
  %3921 = vdwg.mxu0
  %3922 = vmatpush.bf16.msra.mxu0 %v2427
  %3923 = vmatpush.bf16.msra.mxu0 %v2424
  %3924 = vmatpush.bf16.msra.mxu0 %v2421
  %3925 = vmatpush.bf16.msra.mxu0 %v2418
  %3926 = vmatpush.bf16.msra.mxu0 %v2415
  %3927 = vmatpush.bf16.msra.mxu0 %v2412
  %3928 = vmatpush.bf16.msra.mxu0 %v2409
  %3929 = vmatpush.bf16.msra.mxu0 %v2406
  %3930 = vmatmul.bf16.gmra.mxu0 %v754
  %v3931 = vpop.f32.mrf.mxu0
  %v3932 = vadd.f32 %v3913, %v3931
  %v3933 = vpop.f32.mrf.mxu0
  %v3934 = vadd.f32 %v3915, %v3933
  %3935 = vmatmul.bf16.gmra.mxu0 %v772
  %v3936 = vpop.f32.mrf.mxu0
  %v3937 = vadd.f32 %v3918, %v3936
  %v3938 = vpop.f32.mrf.mxu0
  %v3939 = vadd.f32 %v3920, %v3938
  %3940 = vdwg.mxu0
  %3941 = vmatpush.bf16.msra.mxu0 %v2451
  %3942 = vmatpush.bf16.msra.mxu0 %v2448
  %3943 = vmatpush.bf16.msra.mxu0 %v2445
  %3944 = vmatpush.bf16.msra.mxu0 %v2442
  %3945 = vmatpush.bf16.msra.mxu0 %v2439
  %3946 = vmatpush.bf16.msra.mxu0 %v2436
  %3947 = vmatpush.bf16.msra.mxu0 %v2433
  %3948 = vmatpush.bf16.msra.mxu0 %v2430
  %3949 = vmatmul.bf16.gmra.mxu0 %v755
  %v3950 = vpop.f32.mrf.mxu0
  %v3951 = vadd.f32 %v3932, %v3950
  %v3952 = vpop.f32.mrf.mxu0
  %v3953 = vadd.f32 %v3934, %v3952
  %3954 = vmatmul.bf16.gmra.mxu0 %v773
  %v3955 = vpop.f32.mrf.mxu0
  %v3956 = vadd.f32 %v3937, %v3955
  %v3957 = vpop.f32.mrf.mxu0
  %v3958 = vadd.f32 %v3939, %v3957
  %3959 = vdwg.mxu0
  %3960 = vmatpush.bf16.msra.mxu0 %v2475
  %3961 = vmatpush.bf16.msra.mxu0 %v2472
  %3962 = vmatpush.bf16.msra.mxu0 %v2469
  %3963 = vmatpush.bf16.msra.mxu0 %v2466
  %3964 = vmatpush.bf16.msra.mxu0 %v2463
  %3965 = vmatpush.bf16.msra.mxu0 %v2460
  %3966 = vmatpush.bf16.msra.mxu0 %v2457
  %3967 = vmatpush.bf16.msra.mxu0 %v2454
  %3968 = vmatmul.bf16.gmra.mxu0 %v756
  %v3969 = vpop.f32.mrf.mxu0
  %v3970 = vadd.f32 %v3951, %v3969
  %v3971 = vpop.f32.mrf.mxu0
  %v3972 = vadd.f32 %v3953, %v3971
  %3973 = vmatmul.bf16.gmra.mxu0 %v774
  %v3974 = vpop.f32.mrf.mxu0
  %v3975 = vadd.f32 %v3956, %v3974
  %v3976 = vpop.f32.mrf.mxu0
  %v3977 = vadd.f32 %v3958, %v3976
  %3978 = vdwg.mxu0
  %3979 = vmatpush.bf16.msra.mxu0 %v2499
  %3980 = vmatpush.bf16.msra.mxu0 %v2496
  %3981 = vmatpush.bf16.msra.mxu0 %v2493
  %3982 = vmatpush.bf16.msra.mxu0 %v2490
  %3983 = vmatpush.bf16.msra.mxu0 %v2487
  %3984 = vmatpush.bf16.msra.mxu0 %v2484
  %3985 = vmatpush.bf16.msra.mxu0 %v2481
  %3986 = vmatpush.bf16.msra.mxu0 %v2478
  %3987 = vmatmul.bf16.gmra.mxu0 %v757
  %v3988 = vpop.f32.mrf.mxu0
  %v3989 = vadd.f32 %v3970, %v3988
  %v3990 = vpop.f32.mrf.mxu0
  %v3991 = vadd.f32 %v3972, %v3990
  %3992 = vmatmul.bf16.gmra.mxu0 %v775
  %v3993 = vpop.f32.mrf.mxu0
  %v3994 = vadd.f32 %v3975, %v3993
  %v3995 = vpop.f32.mrf.mxu0
  %v3996 = vadd.f32 %v3977, %v3995
  %3997 = vdwg.mxu0
  %3998 = vmatpush.bf16.msra.mxu0 %v2523
  %3999 = vmatpush.bf16.msra.mxu0 %v2520
  %4000 = vmatpush.bf16.msra.mxu0 %v2517
  %4001 = vmatpush.bf16.msra.mxu0 %v2514
  %4002 = vmatpush.bf16.msra.mxu0 %v2511
  %4003 = vmatpush.bf16.msra.mxu0 %v2508
  %4004 = vmatpush.bf16.msra.mxu0 %v2505
  %4005 = vmatpush.bf16.msra.mxu0 %v2502
  %4006 = vmatmul.bf16.gmra.mxu0 %v758
  %v4007 = vpop.f32.mrf.mxu0
  %v4008 = vadd.f32 %v3989, %v4007
  %v4009 = vpop.f32.mrf.mxu0
  %v4010 = vadd.f32 %v3991, %v4009
  %4011 = vmatmul.bf16.gmra.mxu0 %v776
  %v4012 = vpop.f32.mrf.mxu0
  %v4013 = vadd.f32 %v3994, %v4012
  %v4014 = vpop.f32.mrf.mxu0
  %v4015 = vadd.f32 %v3996, %v4014
  %4016 = vdwg.mxu0
  %4017 = vmatpush.bf16.msra.mxu0 %v2547
  %4018 = vmatpush.bf16.msra.mxu0 %v2544
  %4019 = vmatpush.bf16.msra.mxu0 %v2541
  %4020 = vmatpush.bf16.msra.mxu0 %v2538
  %4021 = vmatpush.bf16.msra.mxu0 %v2535
  %4022 = vmatpush.bf16.msra.mxu0 %v2532
  %4023 = vmatpush.bf16.msra.mxu0 %v2529
  %4024 = vmatpush.bf16.msra.mxu0 %v2526
  %4025 = vmatmul.bf16.gmra.mxu0 %v759
  %v4026 = vpop.f32.mrf.mxu0
  %v4027 = vadd.f32 %v4008, %v4026
  %v4028 = vpop.f32.mrf.mxu0
  %v4029 = vadd.f32 %v4010, %v4028
  %4030 = vmatmul.bf16.gmra.mxu0 %v777
  %v4031 = vpop.f32.mrf.mxu0
  %v4032 = vadd.f32 %v4013, %v4031
  %v4033 = vpop.f32.mrf.mxu0
  %v4034 = vadd.f32 %v4015, %v4033
  %4035 = vdwg.mxu0
  %4036 = vmatpush.bf16.msra.mxu0 %v2571
  %4037 = vmatpush.bf16.msra.mxu0 %v2568
  %4038 = vmatpush.bf16.msra.mxu0 %v2565
  %4039 = vmatpush.bf16.msra.mxu0 %v2562
  %4040 = vmatpush.bf16.msra.mxu0 %v2559
  %4041 = vmatpush.bf16.msra.mxu0 %v2556
  %4042 = vmatpush.bf16.msra.mxu0 %v2553
  %4043 = vmatpush.bf16.msra.mxu0 %v2550
  %4044 = vmatmul.bf16.gmra.mxu0 %v760
  %v4045 = vpop.f32.mrf.mxu0
  %v4046 = vadd.f32 %v4027, %v4045
  %v4047 = vpop.f32.mrf.mxu0
  %v4048 = vadd.f32 %v4029, %v4047
  %4049 = vmatmul.bf16.gmra.mxu0 %v778
  %v4050 = vpop.f32.mrf.mxu0
  %v4051 = vadd.f32 %v4032, %v4050
  %v4052 = vpop.f32.mrf.mxu0
  %v4053 = vadd.f32 %v4034, %v4052
  %4054 = vdwg.mxu0
  %4055 = vmatpush.bf16.msra.mxu0 %v2595
  %4056 = vmatpush.bf16.msra.mxu0 %v2592
  %4057 = vmatpush.bf16.msra.mxu0 %v2589
  %4058 = vmatpush.bf16.msra.mxu0 %v2586
  %4059 = vmatpush.bf16.msra.mxu0 %v2583
  %4060 = vmatpush.bf16.msra.mxu0 %v2580
  %4061 = vmatpush.bf16.msra.mxu0 %v2577
  %4062 = vmatpush.bf16.msra.mxu0 %v2574
  %4063 = vmatmul.bf16.gmra.mxu0 %v761
  %v4064 = vpop.f32.mrf.mxu0
  %v4065 = vadd.f32 %v4046, %v4064
  %v4066 = vpop.f32.mrf.mxu0
  %v4067 = vadd.f32 %v4048, %v4066
  %4068 = vmatmul.bf16.gmra.mxu0 %v779
  %v4069 = vpop.f32.mrf.mxu0
  %v4070 = vadd.f32 %v4051, %v4069
  %v4071 = vpop.f32.mrf.mxu0
  %v4072 = vadd.f32 %v4053, %v4071
  %4073 = vdwg.mxu0
  %4074 = vmatpush.bf16.msra.mxu0 %v2619
  %4075 = vmatpush.bf16.msra.mxu0 %v2616
  %4076 = vmatpush.bf16.msra.mxu0 %v2613
  %4077 = vmatpush.bf16.msra.mxu0 %v2610
  %4078 = vmatpush.bf16.msra.mxu0 %v2607
  %4079 = vmatpush.bf16.msra.mxu0 %v2604
  %4080 = vmatpush.bf16.msra.mxu0 %v2601
  %4081 = vmatpush.bf16.msra.mxu0 %v2598
  %4082 = vmatmul.bf16.gmra.mxu0 %v762
  %v4083 = vpop.f32.mrf.mxu0
  %v4084 = vadd.f32 %v4065, %v4083
  %v4085 = vpop.f32.mrf.mxu0
  %v4086 = vadd.f32 %v4067, %v4085
  %4087 = vmatmul.bf16.gmra.mxu0 %v780
  %v4088 = vpop.f32.mrf.mxu0
  %v4089 = vadd.f32 %v4070, %v4088
  %v4090 = vpop.f32.mrf.mxu0
  %v4091 = vadd.f32 %v4072, %v4090
  %4092 = vdwg.mxu0
  %4093 = vmatpush.bf16.msra.mxu0 %v2643
  %4094 = vmatpush.bf16.msra.mxu0 %v2640
  %4095 = vmatpush.bf16.msra.mxu0 %v2637
  %4096 = vmatpush.bf16.msra.mxu0 %v2634
  %4097 = vmatpush.bf16.msra.mxu0 %v2631
  %4098 = vmatpush.bf16.msra.mxu0 %v2628
  %4099 = vmatpush.bf16.msra.mxu0 %v2625
  %4100 = vmatpush.bf16.msra.mxu0 %v2622
  %4101 = vmatmul.bf16.gmra.mxu0 %v763
  %v4102 = vpop.f32.mrf.mxu0
  %v4103 = vadd.f32 %v4084, %v4102
  %v4104 = vpop.f32.mrf.mxu0
  %v4105 = vadd.f32 %v4086, %v4104
  %4106 = vmatmul.bf16.gmra.mxu0 %v781
  %v4107 = vpop.f32.mrf.mxu0
  %v4108 = vadd.f32 %v4089, %v4107
  %v4109 = vpop.f32.mrf.mxu0
  %v4110 = vadd.f32 %v4091, %v4109
  %4111 = vdwg.mxu0
  %4112 = vmatpush.bf16.msra.mxu0 %v2667
  %4113 = vmatpush.bf16.msra.mxu0 %v2664
  %4114 = vmatpush.bf16.msra.mxu0 %v2661
  %4115 = vmatpush.bf16.msra.mxu0 %v2658
  %4116 = vmatpush.bf16.msra.mxu0 %v2655
  %4117 = vmatpush.bf16.msra.mxu0 %v2652
  %4118 = vmatpush.bf16.msra.mxu0 %v2649
  %4119 = vmatpush.bf16.msra.mxu0 %v2646
  %4120 = vmatmul.bf16.gmra.mxu0 %v764
  %v4121 = vpop.f32.mrf.mxu0
  %v4122 = vadd.f32 %v4103, %v4121
  %v4123 = vpop.f32.mrf.mxu0
  %v4124 = vadd.f32 %v4105, %v4123
  %4125 = vmatmul.bf16.gmra.mxu0 %v782
  %v4126 = vpop.f32.mrf.mxu0
  %v4127 = vadd.f32 %v4108, %v4126
  %v4128 = vpop.f32.mrf.mxu0
  %v4129 = vadd.f32 %v4110, %v4128
  %4130 = vdwg.mxu0
  %4131 = vmatpush.bf16.msra.mxu0 %v2691
  %4132 = vmatpush.bf16.msra.mxu0 %v2688
  %4133 = vmatpush.bf16.msra.mxu0 %v2685
  %4134 = vmatpush.bf16.msra.mxu0 %v2682
  %4135 = vmatpush.bf16.msra.mxu0 %v2679
  %4136 = vmatpush.bf16.msra.mxu0 %v2676
  %4137 = vmatpush.bf16.msra.mxu0 %v2673
  %4138 = vmatpush.bf16.msra.mxu0 %v2670
  %4139 = vmatmul.bf16.gmra.mxu0 %v765
  %v4140 = vpop.f32.mrf.mxu0
  %v4141 = vadd.f32 %v4122, %v4140
  %v4142 = vpop.f32.mrf.mxu0
  %v4143 = vadd.f32 %v4124, %v4142
  %4144 = vmatmul.bf16.gmra.mxu0 %v783
  %v4145 = vpop.f32.mrf.mxu0
  %v4146 = vadd.f32 %v4127, %v4145
  %v4147 = vpop.f32.mrf.mxu0
  %v4148 = vadd.f32 %v4129, %v4147
  %4149 = vdwg.mxu0
  %v4150 = vmax.f32 %v3457, 0.0
  %v4151 = vmax.f32 %v3799, 0.0
  %v4152 = vmax.f32 %v4141, 0.0
  %v4153 = vmax.f32 %v3459, 0.0
  %v4154 = vmax.f32 %v3801, 0.0
  %v4155 = vmax.f32 %v4143, 0.0
  %v4156 = vmax.f32 %v3462, 0.0
  %v4157 = vmax.f32 %v3804, 0.0
  %v4158 = vmax.f32 %v4146, 0.0
  %v4159 = vmax.f32 %v3464, 0.0
  %v4160 = vmax.f32 %v3806, 0.0
  %v4161 = vmax.f32 %v4148, 0.0
  %v4162 = vld [vmem:[%s3] sm:$0x7]
  %v4164 = vperm.slane %v4162, 0
  %v4165 = vperm.slane %v4162, 1
  %v4166 = vperm.slane %v4162, 2
  %v4170 = vmul.f32 %v4150, %v4164
  %v4171 = vmul.f32 %v4151, %v4165
  %v4172 = vmul.f32 %v4152, %v4166
  %v4173 = vmul.f32 %v4153, %v4164
  %v4174 = vmul.f32 %v4154, %v4165
  %v4175 = vmul.f32 %v4155, %v4166
  %v4176 = vmul.f32 %v4156, %v4164
  %v4177 = vmul.f32 %v4157, %v4165
  %v4178 = vmul.f32 %v4158, %v4166
  %v4179 = vmul.f32 %v4159, %v4164
  %v4180 = vmul.f32 %v4160, %v4165
  %v4181 = vmul.f32 %v4161, %v4166
  %v4182 = vld [vmem:[%s4] sm:$0x7]
  %v4184 = vperm.slane %v4182, 0
  %v4185 = vperm.slane %v4182, 1
  %v4186 = vperm.slane %v4182, 2
  %v4190 = vadd.f32 %v4170, %v4184
  %v4191 = vadd.f32 %v4171, %v4185
  %v4192 = vadd.f32 %v4172, %v4186
  %v4193 = vadd.f32 %v4173, %v4184
  %v4194 = vadd.f32 %v4174, %v4185
  %v4195 = vadd.f32 %v4175, %v4186
  %v4196 = vadd.f32 %v4176, %v4184
  %v4197 = vadd.f32 %v4177, %v4185
  %v4198 = vadd.f32 %v4178, %v4186
  %v4199 = vadd.f32 %v4179, %v4184
  %v4200 = vadd.f32 %v4180, %v4185
  %v4201 = vadd.f32 %v4181, %v4186
  %4202 = vst [vmem:[%s5] sm:$0xff] %v4190
  %4203 = vst [vmem:[%s5 + $0x8] sm:$0xff] %v4191
  %4204 = vst [vmem:[%s5 + $0x10] sm:$0xff] %v4192
  %4205 = vst [vmem:[%s5 + $0x18] sm:$0xff] %v4193
  %4206 = vst [vmem:[%s5 + $0x20] sm:$0xff] %v4194
  %4207 = vst [vmem:[%s5 + $0x28] sm:$0xff] %v4195
  %4208 = vst [vmem:[%s5 + $0x30] sm:$0xff] %v4196
  %4209 = vst [vmem:[%s5 + $0x38] sm:$0xff] %v4197
  %4210 = vst [vmem:[%s5 + $0x40] sm:$0xff] %v4198
  %4211 = vst [vmem:[%s5 + $0x48] sm:$0xff] %v4199
  %4212 = vst [vmem:[%s5 + $0x50] sm:$0xff] %v4200
  %4213 = vst [vmem:[%s5 + $0x58] sm:$0xff] %v4201
  // Predicated region
  $region22: #{alexlike_forward.22} parent=0 // pred_check
    _
  $region23: #{alexlike_forward.22} parent=0 // pred_check_branch
    %4215 = sbr.rel (0) target = $region25
  $region24: #{alexlike_forward.22} parent=0 // pred_region
    _
  $region25: #{alexlike_forward.22} parent=0 // pred_fallthru
    _
  // Predicated region
  $region26: #{alexlike_forward.22} parent=0 // pred_check
    _
  $region27: #{alexlike_forward.22} parent=0 // pred_check_branch
    %4217 = sbr.rel (0) target = $region29
  $region28: #{alexlike_forward.22} parent=0 // pred_region
    _
  $region29: #{alexlike_forward.22} parent=0 // pred_fallthru
    _

// kernel: alexlike_forward.23
$region0: #{alexlike_forward.23}
  #allocation0 [shape = 'u32[]', space=smem, size = 0x4, offset = 0x4, fixed_abs, tag = 'smem constant byte address 0x4 - core index']
  #allocation1 [shape = 'u32[72,128]{1,0:T(1,128)}', space=vmem, size = 0x9000, scoped, tag = 'internal scratch']
  %s0 = inlined_call_operand.vmem [shape: bf16[32,1792], index: 0, kind: input, shape index: {}]
  %s1 = inlined_call_operand.vmem [shape: bf16[1792,256], index: 1, kind: input, shape index: {}]
  %s2 = inlined_call_operand.vmem [shape: f32[1,256], index: 2, kind: input, shape index: {}]
  %s3 = inlined_call_operand.vmem [shape: f32[1,256], index: 3, kind: input, shape index: {}]
  %s4 = inlined_call_operand.vmem [shape: f32[1,256], index: 4, kind: input, shape index: {}]
  %s5 = inlined_call_operand.vmem [shape: f32[32,256], index: 5, kind: output, shape index: {}]
  %s6 = sld [smem:[#allocation0]]
  $region30: #{alexlike_forward.23} parent=0
    _
  %s8 = ssub.s32 1, %s6
  %s9 = scalar_select 0, %s8, %s6
  // Predicated region
  $region2: #{alexlike_forward.23} parent=0 // pred_check
    _
  $region3: #{alexlike_forward.23} parent=0 // pred_check_branch
    %11 = sbr.rel (0) target = $region5
  $region4: #{alexlike_forward.23} parent=0 // pred_region
    _
  $region5: #{alexlike_forward.23} parent=0 // pred_fallthru
    _
  // Predicated region
  $region6: #{alexlike_forward.23} parent=0 // pred_check
    _
  $region7: #{alexlike_forward.23} parent=0 // pred_check_branch
    %13 = sbr.rel (0) target = $region9
  $region8: #{alexlike_forward.23} parent=0 // pred_region
    _
  $region9: #{alexlike_forward.23} parent=0 // pred_fallthru
    _
  // Predicated region
  $region10: #{alexlike_forward.23} parent=0 // pred_check
    _
  $region11: #{alexlike_forward.23} parent=0 // pred_check_branch
    %15 = sbr.rel (0) target = $region13
  $region12: #{alexlike_forward.23} parent=0 // pred_region
    _
  $region13: #{alexlike_forward.23} parent=0 // pred_fallthru
    _
  // Predicated region
  $region14: #{alexlike_forward.23} parent=0 // pred_check
    _
  $region15: #{alexlike_forward.23} parent=0 // pred_check_branch
    %17 = sbr.rel (0) target = $region17
  $region16: #{alexlike_forward.23} parent=0 // pred_region
    _
  $region17: #{alexlike_forward.23} parent=0 // pred_fallthru
    _
  // Predicated region
  $region18: #{alexlike_forward.23} parent=0 // pred_check
    _
  $region19: #{alexlike_forward.23} parent=0 // pred_check_branch
    %19 = sbr.rel (0) target = $region21
  $region20: #{alexlike_forward.23} parent=0 // pred_region
    _
  $region21: #{alexlike_forward.23} parent=0 // pred_fallthru
    _
  %v20 = vld [vmem:[%s0] sm:$0xff]
  %v21 = vld [vmem:[%s0 + $0x8] sm:$0xff]
  %v22 = vld [vmem:[%s0 + $0x10] sm:$0xff]
  %v23 = vld [vmem:[%s0 + $0x18] sm:$0xff]
  %v24 = vld [vmem:[%s0 + $0x20] sm:$0xff]
  %v25 = vld [vmem:[%s0 + $0x28] sm:$0xff]
  %v26 = vld [vmem:[%s0 + $0x30] sm:$0xff]
  %v27 = vld [vmem:[%s0 + $0x38] sm:$0xff]
  %v28 = vld [vmem:[%s0 + $0x40] sm:$0xff]
  %v29 = vld [vmem:[%s0 + $0x48] sm:$0xff]
  %v30 = vld [vmem:[%s0 + $0x50] sm:$0xff]
  %v31 = vld [vmem:[%s0 + $0x58] sm:$0xff]
  %v32 = vld [vmem:[%s0 + $0x60] sm:$0xff]
  %v33 = vld [vmem:[%s0 + $0x68] sm:$0xff]
  %v34 = vld [vmem:[%s0 + $0x70] sm:$0xff]
  %v35 = vld [vmem:[%s0 + $0x78] sm:$0xff]
  %v36 = vld [vmem:[%s0 + $0x80] sm:$0xff]
  %v37 = vld [vmem:[%s0 + $0x88] sm:$0xff]
  %v38 = vld [vmem:[%s0 + $0x90] sm:$0xff]
  %v39 = vld [vmem:[%s0 + $0x98] sm:$0xff]
  %v40 = vld [vmem:[%s0 + $0xa0] sm:$0xff]
  %v41 = vld [vmem:[%s0 + $0xa8] sm:$0xff]
  %v42 = vld [vmem:[%s0 + $0xb0] sm:$0xff]
  %v43 = vld [vmem:[%s0 + $0xb8] sm:$0xff]
  %v44 = vld [vmem:[%s0 + $0xc0] sm:$0xff]
  %v45 = vld [vmem:[%s0 + $0xc8] sm:$0xff]
  %v46 = vld [vmem:[%s0 + $0xd0] sm:$0xff]
  %v47 = vld [vmem:[%s0 + $0xd8] sm:$0xff]
  %v48 = vld [vmem:[%s1] sm:$0xff]
  %v49 = vld [vmem:[%s1 + $0x8] sm:$0xff]
  %v50 = vld [vmem:[%s1 + $0x10] sm:$0xff]
  %v51 = vld [vmem:[%s1 + $0x18] sm:$0xff]
  %v52 = vld [vmem:[%s1 + $0x20] sm:$0xff]
  %v53 = vld [vmem:[%s1 + $0x28] sm:$0xff]
  %v54 = vld [vmem:[%s1 + $0x30] sm:$0xff]
  %v55 = vld [vmem:[%s1 + $0x38] sm:$0xff]
  %v56 = vld [vmem:[%s1 + $0x40] sm:$0xff]
  %v57 = vld [vmem:[%s1 + $0x48] sm:$0xff]
  %v58 = vld [vmem:[%s1 + $0x50] sm:$0xff]
  %v59 = vld [vmem:[%s1 + $0x58] sm:$0xff]
  %v60 = vld [vmem:[%s1 + $0x60] sm:$0xff]
  %v61 = vld [vmem:[%s1 + $0x68] sm:$0xff]
  %v62 = vld [vmem:[%s1 + $0x70] sm:$0xff]
  %v63 = vld [vmem:[%s1 + $0x78] sm:$0xff]
  %v64 = vld [vmem:[%s1 + $0x80] sm:$0xff]
  %v65 = vld [vmem:[%s1 + $0x88] sm:$0xff]
  %v66 = vld [vmem:[%s1 + $0x90] sm:$0xff]
  %v67 = vld [vmem:[%s1 + $0x98] sm:$0xff]
  %v68 = vld [vmem:[%s1 + $0xa0] sm:$0xff]
  %v69 = vld [vmem:[%s1 + $0xa8] sm:$0xff]
  %v70 = vld [vmem:[%s1 + $0xb0] sm:$0xff]
  %v71 = vld [vmem:[%s1 + $0xb8] sm:$0xff]
  %v72 = vld [vmem:[%s1 + $0xc0] sm:$0xff]
  %v73 = vld [vmem:[%s1 + $0xc8] sm:$0xff]
  %v74 = vld [vmem:[%s1 + $0xd0] sm:$0xff]
  %v75 = vld [vmem:[%s1 + $0xd8] sm:$0xff]
  %v76 = vld [vmem:[%s1 + $0xe0] sm:$0xff]
  %v77 = vld [vmem:[%s1 + $0xe8] sm:$0xff]
  %v78 = vld [vmem:[%s1 + $0xf0] sm:$0xff]
  %v79 = vld [vmem:[%s1 + $0xf8] sm:$0xff]
  %v80 = vld [vmem:[%s1 + $0x100] sm:$0xff]
  %v81 = vld [vmem:[%s1 + $0x108] sm:$0xff]
  %v82 = vld [vmem:[%s1 + $0x110] sm:$0xff]
  %v83 = vld [vmem:[%s1 + $0x118] sm:$0xff]
  %v84 = vld [vmem:[%s1 + $0x120] sm:$0xff]
  %v85 = vld [vmem:[%s1 + $0x128] sm:$0xff]
  %v86 = vld [vmem:[%s1 + $0x130] sm:$0xff]
  %v87 = vld [vmem:[%s1 + $0x138] sm:$0xff]
  %v88 = vld [vmem:[%s1 + $0x140] sm:$0xff]
  %v89 = vld [vmem:[%s1 + $0x148] sm:$0xff]
  %v90 = vld [vmem:[%s1 + $0x150] sm:$0xff]
  %v91 = vld [vmem:[%s1 + $0x158] sm:$0xff]
  %v92 = vld [vmem:[%s1 + $0x160] sm:$0xff]
  %v93 = vld [vmem:[%s1 + $0x168] sm:$0xff]
  %v94 = vld [vmem:[%s1 + $0x170] sm:$0xff]
  %v95 = vld [vmem:[%s1 + $0x178] sm:$0xff]
  %v96 = vld [vmem:[%s1 + $0x180] sm:$0xff]
  %v97 = vld [vmem:[%s1 + $0x188] sm:$0xff]
  %v98 = vld [vmem:[%s1 + $0x190] sm:$0xff]
  %v99 = vld [vmem:[%s1 + $0x198] sm:$0xff]
  %v100 = vld [vmem:[%s1 + $0x1a0] sm:$0xff]
  %v101 = vld [vmem:[%s1 + $0x1a8] sm:$0xff]
  %v102 = vld [vmem:[%s1 + $0x1b0] sm:$0xff]
  %v103 = vld [vmem:[%s1 + $0x1b8] sm:$0xff]
  %v104 = vld [vmem:[%s1 + $0x1c0] sm:$0xff]
  %v105 = vld [vmem:[%s1 + $0x1c8] sm:$0xff]
  %v106 = vld [vmem:[%s1 + $0x1d0] sm:$0xff]
  %v107 = vld [vmem:[%s1 + $0x1d8] sm:$0xff]
  %v108 = vld [vmem:[%s1 + $0x1e0] sm:$0xff]
  %v109 = vld [vmem:[%s1 + $0x1e8] sm:$0xff]
  %v110 = vld [vmem:[%s1 + $0x1f0] sm:$0xff]
  %v111 = vld [vmem:[%s1 + $0x1f8] sm:$0xff]
  %v112 = vld [vmem:[%s1 + $0x200] sm:$0xff]
  %v113 = vld [vmem:[%s1 + $0x208] sm:$0xff]
  %v114 = vld [vmem:[%s1 + $0x210] sm:$0xff]
  %v115 = vld [vmem:[%s1 + $0x218] sm:$0xff]
  %v116 = vld [vmem:[%s1 + $0x220] sm:$0xff]
  %v117 = vld [vmem:[%s1 + $0x228] sm:$0xff]
  %v118 = vld [vmem:[%s1 + $0x230] sm:$0xff]
  %v119 = vld [vmem:[%s1 + $0x238] sm:$0xff]
  %v120 = vld [vmem:[%s1 + $0x240] sm:$0xff]
  %v121 = vld [vmem:[%s1 + $0x248] sm:$0xff]
  %v122 = vld [vmem:[%s1 + $0x250] sm:$0xff]
  %v123 = vld [vmem:[%s1 + $0x258] sm:$0xff]
  %v124 = vld [vmem:[%s1 + $0x260] sm:$0xff]
  %v125 = vld [vmem:[%s1 + $0x268] sm:$0xff]
  %v126 = vld [vmem:[%s1 + $0x270] sm:$0xff]
  %v127 = vld [vmem:[%s1 + $0x278] sm:$0xff]
  %v128 = vld [vmem:[%s1 + $0x280] sm:$0xff]
  %v129 = vld [vmem:[%s1 + $0x288] sm:$0xff]
  %v130 = vld [vmem:[%s1 + $0x290] sm:$0xff]
  %v131 = vld [vmem:[%s1 + $0x298] sm:$0xff]
  %v132 = vld [vmem:[%s1 + $0x2a0] sm:$0xff]
  %v133 = vld [vmem:[%s1 + $0x2a8] sm:$0xff]
  %v134 = vld [vmem:[%s1 + $0x2b0] sm:$0xff]
  %v135 = vld [vmem:[%s1 + $0x2b8] sm:$0xff]
  %v136 = vld [vmem:[%s1 + $0x2c0] sm:$0xff]
  %v137 = vld [vmem:[%s1 + $0x2c8] sm:$0xff]
  %v138 = vld [vmem:[%s1 + $0x2d0] sm:$0xff]
  %v139 = vld [vmem:[%s1 + $0x2d8] sm:$0xff]
  %v140 = vld [vmem:[%s1 + $0x2e0] sm:$0xff]
  %v141 = vld [vmem:[%s1 + $0x2e8] sm:$0xff]
  %v142 = vld [vmem:[%s1 + $0x2f0] sm:$0xff]
  %v143 = vld [vmem:[%s1 + $0x2f8] sm:$0xff]
  %v144 = vld [vmem:[%s1 + $0x300] sm:$0xff]
  %v145 = vld [vmem:[%s1 + $0x308] sm:$0xff]
  %v146 = vld [vmem:[%s1 + $0x310] sm:$0xff]
  %v147 = vld [vmem:[%s1 + $0x318] sm:$0xff]
  %v148 = vld [vmem:[%s1 + $0x320] sm:$0xff]
  %v149 = vld [vmem:[%s1 + $0x328] sm:$0xff]
  %v150 = vld [vmem:[%s1 + $0x330] sm:$0xff]
  %v151 = vld [vmem:[%s1 + $0x338] sm:$0xff]
  %v152 = vld [vmem:[%s1 + $0x340] sm:$0xff]
  %v153 = vld [vmem:[%s1 + $0x348] sm:$0xff]
  %v154 = vld [vmem:[%s1 + $0x350] sm:$0xff]
  %v155 = vld [vmem:[%s1 + $0x358] sm:$0xff]
  %v156 = vld [vmem:[%s1 + $0x360] sm:$0xff]
  %v157 = vld [vmem:[%s1 + $0x368] sm:$0xff]
  %v158 = vld [vmem:[%s1 + $0x370] sm:$0xff]
  %v159 = vld [vmem:[%s1 + $0x378] sm:$0xff]
  %v160 = vld [vmem:[%s1 + $0x380] sm:$0xff]
  %v161 = vld [vmem:[%s1 + $0x388] sm:$0xff]
  %v162 = vld [vmem:[%s1 + $0x390] sm:$0xff]
  %v163 = vld [vmem:[%s1 + $0x398] sm:$0xff]
  %v164 = vld [vmem:[%s1 + $0x3a0] sm:$0xff]
  %v165 = vld [vmem:[%s1 + $0x3a8] sm:$0xff]
  %v166 = vld [vmem:[%s1 + $0x3b0] sm:$0xff]
  %v167 = vld [vmem:[%s1 + $0x3b8] sm:$0xff]
  %v168 = vld [vmem:[%s1 + $0x3c0] sm:$0xff]
  %v169 = vld [vmem:[%s1 + $0x3c8] sm:$0xff]
  %v170 = vld [vmem:[%s1 + $0x3d0] sm:$0xff]
  %v171 = vld [vmem:[%s1 + $0x3d8] sm:$0xff]
  %v172 = vld [vmem:[%s1 + $0x3e0] sm:$0xff]
  %v173 = vld [vmem:[%s1 + $0x3e8] sm:$0xff]
  %v174 = vld [vmem:[%s1 + $0x3f0] sm:$0xff]
  %v175 = vld [vmem:[%s1 + $0x3f8] sm:$0xff]
  %v176 = vld [vmem:[%s1 + $0x400] sm:$0xff]
  %v177 = vld [vmem:[%s1 + $0x408] sm:$0xff]
  %v178 = vld [vmem:[%s1 + $0x410] sm:$0xff]
  %v179 = vld [vmem:[%s1 + $0x418] sm:$0xff]
  %v180 = vld [vmem:[%s1 + $0x420] sm:$0xff]
  %v181 = vld [vmem:[%s1 + $0x428] sm:$0xff]
  %v182 = vld [vmem:[%s1 + $0x430] sm:$0xff]
  %v183 = vld [vmem:[%s1 + $0x438] sm:$0xff]
  %v184 = vld [vmem:[%s1 + $0x440] sm:$0xff]
  %v185 = vld [vmem:[%s1 + $0x448] sm:$0xff]
  %v186 = vld [vmem:[%s1 + $0x450] sm:$0xff]
  %v187 = vld [vmem:[%s1 + $0x458] sm:$0xff]
  %v188 = vld [vmem:[%s1 + $0x460] sm:$0xff]
  %v189 = vld [vmem:[%s1 + $0x468] sm:$0xff]
  %v190 = vld [vmem:[%s1 + $0x470] sm:$0xff]
  %v191 = vld [vmem:[%s1 + $0x478] sm:$0xff]
  %v192 = vld [vmem:[%s1 + $0x480] sm:$0xff]
  %v193 = vld [vmem:[%s1 + $0x488] sm:$0xff]
  %v194 = vld [vmem:[%s1 + $0x490] sm:$0xff]
  %v195 = vld [vmem:[%s1 + $0x498] sm:$0xff]
  %v196 = vld [vmem:[%s1 + $0x4a0] sm:$0xff]
  %v197 = vld [vmem:[%s1 + $0x4a8] sm:$0xff]
  %v198 = vld [vmem:[%s1 + $0x4b0] sm:$0xff]
  %v199 = vld [vmem:[%s1 + $0x4b8] sm:$0xff]
  %v200 = vld [vmem:[%s1 + $0x4c0] sm:$0xff]
  %v201 = vld [vmem:[%s1 + $0x4c8] sm:$0xff]
  %v202 = vld [vmem:[%s1 + $0x4d0] sm:$0xff]
  %v203 = vld [vmem:[%s1 + $0x4d8] sm:$0xff]
  %v204 = vld [vmem:[%s1 + $0x4e0] sm:$0xff]
  %v205 = vld [vmem:[%s1 + $0x4e8] sm:$0xff]
  %v206 = vld [vmem:[%s1 + $0x4f0] sm:$0xff]
  %v207 = vld [vmem:[%s1 + $0x4f8] sm:$0xff]
  %v208 = vld [vmem:[%s1 + $0x500] sm:$0xff]
  %v209 = vld [vmem:[%s1 + $0x508] sm:$0xff]
  %v210 = vld [vmem:[%s1 + $0x510] sm:$0xff]
  %v211 = vld [vmem:[%s1 + $0x518] sm:$0xff]
  %v212 = vld [vmem:[%s1 + $0x520] sm:$0xff]
  %v213 = vld [vmem:[%s1 + $0x528] sm:$0xff]
  %v214 = vld [vmem:[%s1 + $0x530] sm:$0xff]
  %v215 = vld [vmem:[%s1 + $0x538] sm:$0xff]
  %v216 = vld [vmem:[%s1 + $0x540] sm:$0xff]
  %v217 = vld [vmem:[%s1 + $0x548] sm:$0xff]
  %v218 = vld [vmem:[%s1 + $0x550] sm:$0xff]
  %v219 = vld [vmem:[%s1 + $0x558] sm:$0xff]
  %v220 = vld [vmem:[%s1 + $0x560] sm:$0xff]
  %v221 = vld [vmem:[%s1 + $0x568] sm:$0xff]
  %v222 = vld [vmem:[%s1 + $0x570] sm:$0xff]
  %v223 = vld [vmem:[%s1 + $0x578] sm:$0xff]
  %v224 = vld [vmem:[%s1 + $0x580] sm:$0xff]
  %v225 = vld [vmem:[%s1 + $0x588] sm:$0xff]
  %v226 = vld [vmem:[%s1 + $0x590] sm:$0xff]
  %v227 = vld [vmem:[%s1 + $0x598] sm:$0xff]
  %v228 = vld [vmem:[%s1 + $0x5a0] sm:$0xff]
  %v229 = vld [vmem:[%s1 + $0x5a8] sm:$0xff]
  %v230 = vld [vmem:[%s1 + $0x5b0] sm:$0xff]
  %v231 = vld [vmem:[%s1 + $0x5b8] sm:$0xff]
  %v232 = vld [vmem:[%s1 + $0x5c0] sm:$0xff]
  %v233 = vld [vmem:[%s1 + $0x5c8] sm:$0xff]
  %v234 = vld [vmem:[%s1 + $0x5d0] sm:$0xff]
  %v235 = vld [vmem:[%s1 + $0x5d8] sm:$0xff]
  %v236 = vld [vmem:[%s1 + $0x5e0] sm:$0xff]
  %v237 = vld [vmem:[%s1 + $0x5e8] sm:$0xff]
  %v238 = vld [vmem:[%s1 + $0x5f0] sm:$0xff]
  %v239 = vld [vmem:[%s1 + $0x5f8] sm:$0xff]
  %v240 = vld [vmem:[%s1 + $0x600] sm:$0xff]
  %v241 = vld [vmem:[%s1 + $0x608] sm:$0xff]
  %v242 = vld [vmem:[%s1 + $0x610] sm:$0xff]
  %v243 = vld [vmem:[%s1 + $0x618] sm:$0xff]
  %v244 = vld [vmem:[%s1 + $0x620] sm:$0xff]
  %v245 = vld [vmem:[%s1 + $0x628] sm:$0xff]
  %v246 = vld [vmem:[%s1 + $0x630] sm:$0xff]
  %v247 = vld [vmem:[%s1 + $0x638] sm:$0xff]
  %v248 = vld [vmem:[%s1 + $0x640] sm:$0xff]
  %v249 = vld [vmem:[%s1 + $0x648] sm:$0xff]
  %v250 = vld [vmem:[%s1 + $0x650] sm:$0xff]
  %v251 = vld [vmem:[%s1 + $0x658] sm:$0xff]
  %v252 = vld [vmem:[%s1 + $0x660] sm:$0xff]
  %v253 = vld [vmem:[%s1 + $0x668] sm:$0xff]
  %v254 = vld [vmem:[%s1 + $0x670] sm:$0xff]
  %v255 = vld [vmem:[%s1 + $0x678] sm:$0xff]
  %v256 = vld [vmem:[%s1 + $0x680] sm:$0xff]
  %v257 = vld [vmem:[%s1 + $0x688] sm:$0xff]
  %v258 = vld [vmem:[%s1 + $0x690] sm:$0xff]
  %v259 = vld [vmem:[%s1 + $0x698] sm:$0xff]
  %v260 = vld [vmem:[%s1 + $0x6a0] sm:$0xff]
  %v261 = vld [vmem:[%s1 + $0x6a8] sm:$0xff]
  %v262 = vld [vmem:[%s1 + $0x6b0] sm:$0xff]
  %v263 = vld [vmem:[%s1 + $0x6b8] sm:$0xff]
  %v264 = vld [vmem:[%s1 + $0x6c0] sm:$0xff]
  %v265 = vld [vmem:[%s1 + $0x6c8] sm:$0xff]
  %v266 = vld [vmem:[%s1 + $0x6d0] sm:$0xff]
  %v267 = vld [vmem:[%s1 + $0x6d8] sm:$0xff]
  %v268 = vld [vmem:[%s1 + $0x6e0] sm:$0xff]
  %v269 = vld [vmem:[%s1 + $0x6e8] sm:$0xff]
  %v270 = vld [vmem:[%s1 + $0x6f0] sm:$0xff]
  %v271 = vld [vmem:[%s1 + $0x6f8] sm:$0xff]
  %v272 = vld [vmem:[%s2] sm:$0x3]
  %v274 = vperm.slane %v272, 0
  %v275 = vperm.slane %v272, 1
  %v306 = vunpack.c.l.b16 %v20
  %v307 = vunpack.c.h.b16 %v20
  %v308 = vunpack.c.l.b16 %v21
  %v309 = vunpack.c.h.b16 %v21
  %v310 = vunpack.c.l.b16 %v22
  %v311 = vunpack.c.h.b16 %v22
  %v312 = vunpack.c.l.b16 %v23
  %v313 = vunpack.c.h.b16 %v23
  %v314 = vunpack.c.l.b16 %v24
  %v315 = vunpack.c.h.b16 %v24
  %v316 = vunpack.c.l.b16 %v25
  %v317 = vunpack.c.h.b16 %v25
  %v318 = vunpack.c.l.b16 %v26
  %v319 = vunpack.c.h.b16 %v26
  %v320 = vunpack.c.l.b16 %v27
  %v321 = vunpack.c.h.b16 %v27
  %v322 = vunpack.c.l.b16 %v28
  %v323 = vunpack.c.h.b16 %v28
  %v324 = vunpack.c.l.b16 %v29
  %v325 = vunpack.c.h.b16 %v29
  %v326 = vunpack.c.l.b16 %v30
  %v327 = vunpack.c.h.b16 %v30
  %v328 = vunpack.c.l.b16 %v31
  %v329 = vunpack.c.h.b16 %v31
  %v330 = vunpack.c.l.b16 %v32
  %v331 = vunpack.c.h.b16 %v32
  %v332 = vunpack.c.l.b16 %v33
  %v333 = vunpack.c.h.b16 %v33
  %v334 = vunpack.c.l.b16 %v34
  %v335 = vunpack.c.h.b16 %v34
  %v336 = vunpack.c.l.b16 %v35
  %v337 = vunpack.c.h.b16 %v35
  %v338 = vunpack.c.l.b16 %v36
  %v339 = vunpack.c.h.b16 %v36
  %v340 = vunpack.c.l.b16 %v37
  %v341 = vunpack.c.h.b16 %v37
  %v342 = vunpack.c.l.b16 %v38
  %v343 = vunpack.c.h.b16 %v38
  %v344 = vunpack.c.l.b16 %v39
  %v345 = vunpack.c.h.b16 %v39
  %v346 = vunpack.c.l.b16 %v40
  %v347 = vunpack.c.h.b16 %v40
  %v348 = vunpack.c.l.b16 %v41
  %v349 = vunpack.c.h.b16 %v41
  %v350 = vunpack.c.l.b16 %v42
  %v351 = vunpack.c.h.b16 %v42
  %v352 = vunpack.c.l.b16 %v43
  %v353 = vunpack.c.h.b16 %v43
  %v354 = vunpack.c.l.b16 %v44
  %v355 = vunpack.c.h.b16 %v44
  %v356 = vunpack.c.l.b16 %v45
  %v357 = vunpack.c.h.b16 %v45
  %v358 = vunpack.c.l.b16 %v46
  %v359 = vunpack.c.h.b16 %v46
  %v360 = vunpack.c.l.b16 %v47
  %v361 = vunpack.c.h.b16 %v47
  %v362 = vpack.c.b16 %v320, %v306
  %v363 = vpack.c.b16 %v321, %v307
  %v364 = vpack.c.b16 %v322, %v308
  %v365 = vpack.c.b16 %v323, %v309
  %v366 = vpack.c.b16 %v324, %v310
  %v367 = vpack.c.b16 %v325, %v311
  %v368 = vpack.c.b16 %v326, %v312
  %v369 = vpack.c.b16 %v327, %v313
  %v370 = vpack.c.b16 %v328, %v314
  %v371 = vpack.c.b16 %v329, %v315
  %v372 = vpack.c.b16 %v330, %v316
  %v373 = vpack.c.b16 %v331, %v317
  %v374 = vpack.c.b16 %v332, %v318
  %v375 = vpack.c.b16 %v333, %v319
  %v376 = vpack.c.b16 %v348, %v334
  %v377 = vpack.c.b16 %v349, %v335
  %v378 = vpack.c.b16 %v350, %v336
  %v379 = vpack.c.b16 %v351, %v337
  %v380 = vpack.c.b16 %v352, %v338
  %v381 = vpack.c.b16 %v353, %v339
  %v382 = vpack.c.b16 %v354, %v340
  %v383 = vpack.c.b16 %v355, %v341
  %v384 = vpack.c.b16 %v356, %v342
  %v385 = vpack.c.b16 %v357, %v343
  %v386 = vpack.c.b16 %v358, %v344
  %v387 = vpack.c.b16 %v359, %v345
  %v388 = vpack.c.b16 %v360, %v346
  %v389 = vpack.c.b16 %v361, %v347
  %v642 = vunpack.c.l.b16 %v48
  %v643 = vunpack.c.h.b16 %v48
  %v644 = vunpack.c.l.b16 %v49
  %v645 = vunpack.c.h.b16 %v49
  %v646 = vunpack.c.l.b16 %v50
  %v647 = vunpack.c.h.b16 %v50
  %v648 = vunpack.c.l.b16 %v51
  %v649 = vunpack.c.h.b16 %v51
  %v650 = vunpack.c.l.b16 %v52
  %v651 = vunpack.c.h.b16 %v52
  %v652 = vunpack.c.l.b16 %v53
  %v653 = vunpack.c.h.b16 %v53
  %v654 = vunpack.c.l.b16 %v54
  %v655 = vunpack.c.h.b16 %v54
  %v656 = vunpack.c.l.b16 %v55
  %v657 = vunpack.c.h.b16 %v55
  %v658 = vunpack.c.l.b16 %v56
  %v659 = vunpack.c.h.b16 %v56
  %v660 = vunpack.c.l.b16 %v57
  %v661 = vunpack.c.h.b16 %v57
  %v662 = vunpack.c.l.b16 %v58
  %v663 = vunpack.c.h.b16 %v58
  %v664 = vunpack.c.l.b16 %v59
  %v665 = vunpack.c.h.b16 %v59
  %v666 = vunpack.c.l.b16 %v60
  %v667 = vunpack.c.h.b16 %v60
  %v668 = vunpack.c.l.b16 %v61
  %v669 = vunpack.c.h.b16 %v61
  %v670 = vunpack.c.l.b16 %v62
  %v671 = vunpack.c.h.b16 %v62
  %v672 = vunpack.c.l.b16 %v63
  %v673 = vunpack.c.h.b16 %v63
  %v674 = vunpack.c.l.b16 %v64
  %v675 = vunpack.c.h.b16 %v64
  %v676 = vunpack.c.l.b16 %v65
  %v677 = vunpack.c.h.b16 %v65
  %v678 = vunpack.c.l.b16 %v66
  %v679 = vunpack.c.h.b16 %v66
  %v680 = vunpack.c.l.b16 %v67
  %v681 = vunpack.c.h.b16 %v67
  %v682 = vunpack.c.l.b16 %v68
  %v683 = vunpack.c.h.b16 %v68
  %v684 = vunpack.c.l.b16 %v69
  %v685 = vunpack.c.h.b16 %v69
  %v686 = vunpack.c.l.b16 %v70
  %v687 = vunpack.c.h.b16 %v70
  %v688 = vunpack.c.l.b16 %v71
  %v689 = vunpack.c.h.b16 %v71
  %v690 = vunpack.c.l.b16 %v72
  %v691 = vunpack.c.h.b16 %v72
  %v692 = vunpack.c.l.b16 %v73
  %v693 = vunpack.c.h.b16 %v73
  %v694 = vunpack.c.l.b16 %v74
  %v695 = vunpack.c.h.b16 %v74
  %v696 = vunpack.c.l.b16 %v75
  %v697 = vunpack.c.h.b16 %v75
  %v698 = vunpack.c.l.b16 %v76
  %v699 = vunpack.c.h.b16 %v76
  %v700 = vunpack.c.l.b16 %v77
  %v701 = vunpack.c.h.b16 %v77
  %v702 = vunpack.c.l.b16 %v78
  %v703 = vunpack.c.h.b16 %v78
  %v704 = vunpack.c.l.b16 %v79
  %v705 = vunpack.c.h.b16 %v79
  %v706 = vunpack.c.l.b16 %v80
  %v707 = vunpack.c.h.b16 %v80
  %v708 = vunpack.c.l.b16 %v81
  %v709 = vunpack.c.h.b16 %v81
  %v710 = vunpack.c.l.b16 %v82
  %v711 = vunpack.c.h.b16 %v82
  %v712 = vunpack.c.l.b16 %v83
  %v713 = vunpack.c.h.b16 %v83
  %v714 = vunpack.c.l.b16 %v84
  %v715 = vunpack.c.h.b16 %v84
  %v716 = vunpack.c.l.b16 %v85
  %v717 = vunpack.c.h.b16 %v85
  %v718 = vunpack.c.l.b16 %v86
  %v719 = vunpack.c.h.b16 %v86
  %v720 = vunpack.c.l.b16 %v87
  %v721 = vunpack.c.h.b16 %v87
  %v722 = vunpack.c.l.b16 %v88
  %v723 = vunpack.c.h.b16 %v88
  %v724 = vunpack.c.l.b16 %v89
  %v725 = vunpack.c.h.b16 %v89
  %v726 = vunpack.c.l.b16 %v90
  %v727 = vunpack.c.h.b16 %v90
  %v728 = vunpack.c.l.b16 %v91
  %v729 = vunpack.c.h.b16 %v91
  %v730 = vunpack.c.l.b16 %v92
  %v731 = vunpack.c.h.b16 %v92
  %v732 = vunpack.c.l.b16 %v93
  %v733 = vunpack.c.h.b16 %v93
  %v734 = vunpack.c.l.b16 %v94
  %v735 = vunpack.c.h.b16 %v94
  %v736 = vunpack.c.l.b16 %v95
  %v737 = vunpack.c.h.b16 %v95
  %v738 = vunpack.c.l.b16 %v96
  %v739 = vunpack.c.h.b16 %v96
  %v740 = vunpack.c.l.b16 %v97
  %v741 = vunpack.c.h.b16 %v97
  %v742 = vunpack.c.l.b16 %v98
  %v743 = vunpack.c.h.b16 %v98
  %v744 = vunpack.c.l.b16 %v99
  %v745 = vunpack.c.h.b16 %v99
  %v746 = vunpack.c.l.b16 %v100
  %v747 = vunpack.c.h.b16 %v100
  %v748 = vunpack.c.l.b16 %v101
  %v749 = vunpack.c.h.b16 %v101
  %v750 = vunpack.c.l.b16 %v102
  %v751 = vunpack.c.h.b16 %v102
  %v752 = vunpack.c.l.b16 %v103
  %v753 = vunpack.c.h.b16 %v103
  %v754 = vunpack.c.l.b16 %v104
  %v755 = vunpack.c.h.b16 %v104
  %v756 = vunpack.c.l.b16 %v105
  %v757 = vunpack.c.h.b16 %v105
  %v758 = vunpack.c.l.b16 %v106
  %v759 = vunpack.c.h.b16 %v106
  %v760 = vunpack.c.l.b16 %v107
  %v761 = vunpack.c.h.b16 %v107
  %v762 = vunpack.c.l.b16 %v108
  %v763 = vunpack.c.h.b16 %v108
  %v764 = vunpack.c.l.b16 %v109
  %v765 = vunpack.c.h.b16 %v109
  %v766 = vunpack.c.l.b16 %v110
  %v767 = vunpack.c.h.b16 %v110
  %v768 = vunpack.c.l.b16 %v111
  %v769 = vunpack.c.h.b16 %v111
  %v770 = vunpack.c.l.b16 %v112
  %v771 = vunpack.c.h.b16 %v112
  %v772 = vunpack.c.l.b16 %v113
  %v773 = vunpack.c.h.b16 %v113
  %v774 = vunpack.c.l.b16 %v114
  %v775 = vunpack.c.h.b16 %v114
  %v776 = vunpack.c.l.b16 %v115
  %v777 = vunpack.c.h.b16 %v115
  %v778 = vunpack.c.l.b16 %v116
  %v779 = vunpack.c.h.b16 %v116
  %v780 = vunpack.c.l.b16 %v117
  %v781 = vunpack.c.h.b16 %v117
  %v782 = vunpack.c.l.b16 %v118
  %v783 = vunpack.c.h.b16 %v118
  %v784 = vunpack.c.l.b16 %v119
  %v785 = vunpack.c.h.b16 %v119
  %v786 = vunpack.c.l.b16 %v120
  %v787 = vunpack.c.h.b16 %v120
  %v788 = vunpack.c.l.b16 %v121
  %v789 = vunpack.c.h.b16 %v121
  %v790 = vunpack.c.l.b16 %v122
  %v791 = vunpack.c.h.b16 %v122
  %v792 = vunpack.c.l.b16 %v123
  %v793 = vunpack.c.h.b16 %v123
  %v794 = vunpack.c.l.b16 %v124
  %v795 = vunpack.c.h.b16 %v124
  %v796 = vunpack.c.l.b16 %v125
  %v797 = vunpack.c.h.b16 %v125
  %v798 = vunpack.c.l.b16 %v126
  %v799 = vunpack.c.h.b16 %v126
  %v800 = vunpack.c.l.b16 %v127
  %v801 = vunpack.c.h.b16 %v127
  %v802 = vunpack.c.l.b16 %v128
  %v803 = vunpack.c.h.b16 %v128
  %v804 = vunpack.c.l.b16 %v129
  %v805 = vunpack.c.h.b16 %v129
  %v806 = vunpack.c.l.b16 %v130
  %v807 = vunpack.c.h.b16 %v130
  %v808 = vunpack.c.l.b16 %v131
  %v809 = vunpack.c.h.b16 %v131
  %v810 = vunpack.c.l.b16 %v132
  %v811 = vunpack.c.h.b16 %v132
  %v812 = vunpack.c.l.b16 %v133
  %v813 = vunpack.c.h.b16 %v133
  %v814 = vunpack.c.l.b16 %v134
  %v815 = vunpack.c.h.b16 %v134
  %v816 = vunpack.c.l.b16 %v135
  %v817 = vunpack.c.h.b16 %v135
  %v818 = vunpack.c.l.b16 %v136
  %v819 = vunpack.c.h.b16 %v136
  %v820 = vunpack.c.l.b16 %v137
  %v821 = vunpack.c.h.b16 %v137
  %v822 = vunpack.c.l.b16 %v138
  %v823 = vunpack.c.h.b16 %v138
  %v824 = vunpack.c.l.b16 %v139
  %v825 = vunpack.c.h.b16 %v139
  %v826 = vunpack.c.l.b16 %v140
  %v827 = vunpack.c.h.b16 %v140
  %v828 = vunpack.c.l.b16 %v141
  %v829 = vunpack.c.h.b16 %v141
  %v830 = vunpack.c.l.b16 %v142
  %v831 = vunpack.c.h.b16 %v142
  %v832 = vunpack.c.l.b16 %v143
  %v833 = vunpack.c.h.b16 %v143
  %v834 = vunpack.c.l.b16 %v144
  %v835 = vunpack.c.h.b16 %v144
  %v836 = vunpack.c.l.b16 %v145
  %v837 = vunpack.c.h.b16 %v145
  %v838 = vunpack.c.l.b16 %v146
  %v839 = vunpack.c.h.b16 %v146
  %v840 = vunpack.c.l.b16 %v147
  %v841 = vunpack.c.h.b16 %v147
  %v842 = vunpack.c.l.b16 %v148
  %v843 = vunpack.c.h.b16 %v148
  %v844 = vunpack.c.l.b16 %v149
  %v845 = vunpack.c.h.b16 %v149
  %v846 = vunpack.c.l.b16 %v150
  %v847 = vunpack.c.h.b16 %v150
  %v848 = vunpack.c.l.b16 %v151
  %v849 = vunpack.c.h.b16 %v151
  %v850 = vunpack.c.l.b16 %v152
  %v851 = vunpack.c.h.b16 %v152
  %v852 = vunpack.c.l.b16 %v153
  %v853 = vunpack.c.h.b16 %v153
  %v854 = vunpack.c.l.b16 %v154
  %v855 = vunpack.c.h.b16 %v154
  %v856 = vunpack.c.l.b16 %v155
  %v857 = vunpack.c.h.b16 %v155
  %v858 = vunpack.c.l.b16 %v156
  %v859 = vunpack.c.h.b16 %v156
  %v860 = vunpack.c.l.b16 %v157
  %v861 = vunpack.c.h.b16 %v157
  %v862 = vunpack.c.l.b16 %v158
  %v863 = vunpack.c.h.b16 %v158
  %v864 = vunpack.c.l.b16 %v159
  %v865 = vunpack.c.h.b16 %v159
  %v866 = vunpack.c.l.b16 %v160
  %v867 = vunpack.c.h.b16 %v160
  %v868 = vunpack.c.l.b16 %v161
  %v869 = vunpack.c.h.b16 %v161
  %v870 = vunpack.c.l.b16 %v162
  %v871 = vunpack.c.h.b16 %v162
  %v872 = vunpack.c.l.b16 %v163
  %v873 = vunpack.c.h.b16 %v163
  %v874 = vunpack.c.l.b16 %v164
  %v875 = vunpack.c.h.b16 %v164
  %v876 = vunpack.c.l.b16 %v165
  %v877 = vunpack.c.h.b16 %v165
  %v878 = vunpack.c.l.b16 %v166
  %v879 = vunpack.c.h.b16 %v166
  %v880 = vunpack.c.l.b16 %v167
  %v881 = vunpack.c.h.b16 %v167
  %v882 = vunpack.c.l.b16 %v168
  %v883 = vunpack.c.h.b16 %v168
  %v884 = vunpack.c.l.b16 %v169
  %v885 = vunpack.c.h.b16 %v169
  %v886 = vunpack.c.l.b16 %v170
  %v887 = vunpack.c.h.b16 %v170
  %v888 = vunpack.c.l.b16 %v171
  %v889 = vunpack.c.h.b16 %v171
  %v890 = vunpack.c.l.b16 %v172
  %v891 = vunpack.c.h.b16 %v172
  %v892 = vunpack.c.l.b16 %v173
  %v893 = vunpack.c.h.b16 %v173
  %v894 = vunpack.c.l.b16 %v174
  %v895 = vunpack.c.h.b16 %v174
  %v896 = vunpack.c.l.b16 %v175
  %v897 = vunpack.c.h.b16 %v175
  %v898 = vunpack.c.l.b16 %v176
  %v899 = vunpack.c.h.b16 %v176
  %v900 = vunpack.c.l.b16 %v177
  %v901 = vunpack.c.h.b16 %v177
  %v902 = vunpack.c.l.b16 %v178
  %v903 = vunpack.c.h.b16 %v178
  %v904 = vunpack.c.l.b16 %v179
  %v905 = vunpack.c.h.b16 %v179
  %v906 = vunpack.c.l.b16 %v180
  %v907 = vunpack.c.h.b16 %v180
  %v908 = vunpack.c.l.b16 %v181
  %v909 = vunpack.c.h.b16 %v181
  %v910 = vunpack.c.l.b16 %v182
  %v911 = vunpack.c.h.b16 %v182
  %v912 = vunpack.c.l.b16 %v183
  %v913 = vunpack.c.h.b16 %v183
  %v914 = vunpack.c.l.b16 %v184
  %v915 = vunpack.c.h.b16 %v184
  %v916 = vunpack.c.l.b16 %v185
  %v917 = vunpack.c.h.b16 %v185
  %v918 = vunpack.c.l.b16 %v186
  %v919 = vunpack.c.h.b16 %v186
  %v920 = vunpack.c.l.b16 %v187
  %v921 = vunpack.c.h.b16 %v187
  %v922 = vunpack.c.l.b16 %v188
  %v923 = vunpack.c.h.b16 %v188
  %v924 = vunpack.c.l.b16 %v189
  %v925 = vunpack.c.h.b16 %v189
  %v926 = vunpack.c.l.b16 %v190
  %v927 = vunpack.c.h.b16 %v190
  %v928 = vunpack.c.l.b16 %v191
  %v929 = vunpack.c.h.b16 %v191
  %v930 = vunpack.c.l.b16 %v192
  %v931 = vunpack.c.h.b16 %v192
  %v932 = vunpack.c.l.b16 %v193
  %v933 = vunpack.c.h.b16 %v193
  %v934 = vunpack.c.l.b16 %v194
  %v935 = vunpack.c.h.b16 %v194
  %v936 = vunpack.c.l.b16 %v195
  %v937 = vunpack.c.h.b16 %v195
  %v938 = vunpack.c.l.b16 %v196
  %v939 = vunpack.c.h.b16 %v196
  %v940 = vunpack.c.l.b16 %v197
  %v941 = vunpack.c.h.b16 %v197
  %v942 = vunpack.c.l.b16 %v198
  %v943 = vunpack.c.h.b16 %v198
  %v944 = vunpack.c.l.b16 %v199
  %v945 = vunpack.c.h.b16 %v199
  %v946 = vunpack.c.l.b16 %v200
  %v947 = vunpack.c.h.b16 %v200
  %v948 = vunpack.c.l.b16 %v201
  %v949 = vunpack.c.h.b16 %v201
  %v950 = vunpack.c.l.b16 %v202
  %v951 = vunpack.c.h.b16 %v202
  %v952 = vunpack.c.l.b16 %v203
  %v953 = vunpack.c.h.b16 %v203
  %v954 = vunpack.c.l.b16 %v204
  %v955 = vunpack.c.h.b16 %v204
  %v956 = vunpack.c.l.b16 %v205
  %v957 = vunpack.c.h.b16 %v205
  %v958 = vunpack.c.l.b16 %v206
  %v959 = vunpack.c.h.b16 %v206
  %v960 = vunpack.c.l.b16 %v207
  %v961 = vunpack.c.h.b16 %v207
  %v962 = vunpack.c.l.b16 %v208
  %v963 = vunpack.c.h.b16 %v208
  %v964 = vunpack.c.l.b16 %v209
  %v965 = vunpack.c.h.b16 %v209
  %v966 = vunpack.c.l.b16 %v210
  %v967 = vunpack.c.h.b16 %v210
  %v968 = vunpack.c.l.b16 %v211
  %v969 = vunpack.c.h.b16 %v211
  %v970 = vunpack.c.l.b16 %v212
  %v971 = vunpack.c.h.b16 %v212
  %v972 = vunpack.c.l.b16 %v213
  %v973 = vunpack.c.h.b16 %v213
  %v974 = vunpack.c.l.b16 %v214
  %v975 = vunpack.c.h.b16 %v214
  %v976 = vunpack.c.l.b16 %v215
  %v977 = vunpack.c.h.b16 %v215
  %v978 = vunpack.c.l.b16 %v216
  %v979 = vunpack.c.h.b16 %v216
  %v980 = vunpack.c.l.b16 %v217
  %v981 = vunpack.c.h.b16 %v217
  %v982 = vunpack.c.l.b16 %v218
  %v983 = vunpack.c.h.b16 %v218
  %v984 = vunpack.c.l.b16 %v219
  %v985 = vunpack.c.h.b16 %v219
  %v986 = vunpack.c.l.b16 %v220
  %v987 = vunpack.c.h.b16 %v220
  %v988 = vunpack.c.l.b16 %v221
  %v989 = vunpack.c.h.b16 %v221
  %v990 = vunpack.c.l.b16 %v222
  %v991 = vunpack.c.h.b16 %v222
  %v992 = vunpack.c.l.b16 %v223
  %v993 = vunpack.c.h.b16 %v223
  %v994 = vunpack.c.l.b16 %v224
  %v995 = vunpack.c.h.b16 %v224
  %v996 = vunpack.c.l.b16 %v225
  %v997 = vunpack.c.h.b16 %v225
  %v998 = vunpack.c.l.b16 %v226
  %v999 = vunpack.c.h.b16 %v226
  %v1000 = vunpack.c.l.b16 %v227
  %v1001 = vunpack.c.h.b16 %v227
  %v1002 = vunpack.c.l.b16 %v228
  %v1003 = vunpack.c.h.b16 %v228
  %v1004 = vunpack.c.l.b16 %v229
  %v1005 = vunpack.c.h.b16 %v229
  %v1006 = vunpack.c.l.b16 %v230
  %v1007 = vunpack.c.h.b16 %v230
  %v1008 = vunpack.c.l.b16 %v231
  %v1009 = vunpack.c.h.b16 %v231
  %v1010 = vunpack.c.l.b16 %v232
  %v1011 = vunpack.c.h.b16 %v232
  %v1012 = vunpack.c.l.b16 %v233
  %v1013 = vunpack.c.h.b16 %v233
  %v1014 = vunpack.c.l.b16 %v234
  %v1015 = vunpack.c.h.b16 %v234
  %v1016 = vunpack.c.l.b16 %v235
  %v1017 = vunpack.c.h.b16 %v235
  %v1018 = vunpack.c.l.b16 %v236
  %v1019 = vunpack.c.h.b16 %v236
  %v1020 = vunpack.c.l.b16 %v237
  %v1021 = vunpack.c.h.b16 %v237
  %v1022 = vunpack.c.l.b16 %v238
  %v1023 = vunpack.c.h.b16 %v238
  %v1024 = vunpack.c.l.b16 %v239
  %v1025 = vunpack.c.h.b16 %v239
  %v1026 = vunpack.c.l.b16 %v240
  %v1027 = vunpack.c.h.b16 %v240
  %v1028 = vunpack.c.l.b16 %v241
  %v1029 = vunpack.c.h.b16 %v241
  %v1030 = vunpack.c.l.b16 %v242
  %v1031 = vunpack.c.h.b16 %v242
  %v1032 = vunpack.c.l.b16 %v243
  %v1033 = vunpack.c.h.b16 %v243
  %v1034 = vunpack.c.l.b16 %v244
  %v1035 = vunpack.c.h.b16 %v244
  %v1036 = vunpack.c.l.b16 %v245
  %v1037 = vunpack.c.h.b16 %v245
  %v1038 = vunpack.c.l.b16 %v246
  %v1039 = vunpack.c.h.b16 %v246
  %v1040 = vunpack.c.l.b16 %v247
  %v1041 = vunpack.c.h.b16 %v247
  %v1042 = vunpack.c.l.b16 %v248
  %v1043 = vunpack.c.h.b16 %v248
  %v1044 = vunpack.c.l.b16 %v249
  %v1045 = vunpack.c.h.b16 %v249
  %v1046 = vunpack.c.l.b16 %v250
  %v1047 = vunpack.c.h.b16 %v250
  %v1048 = vunpack.c.l.b16 %v251
  %v1049 = vunpack.c.h.b16 %v251
  %v1050 = vunpack.c.l.b16 %v252
  %v1051 = vunpack.c.h.b16 %v252
  %v1052 = vunpack.c.l.b16 %v253
  %v1053 = vunpack.c.h.b16 %v253
  %v1054 = vunpack.c.l.b16 %v254
  %v1055 = vunpack.c.h.b16 %v254
  %v1056 = vunpack.c.l.b16 %v255
  %v1057 = vunpack.c.h.b16 %v255
  %v1058 = vunpack.c.l.b16 %v256
  %v1059 = vunpack.c.h.b16 %v256
  %v1060 = vunpack.c.l.b16 %v257
  %v1061 = vunpack.c.h.b16 %v257
  %v1062 = vunpack.c.l.b16 %v258
  %v1063 = vunpack.c.h.b16 %v258
  %v1064 = vunpack.c.l.b16 %v259
  %v1065 = vunpack.c.h.b16 %v259
  %v1066 = vunpack.c.l.b16 %v260
  %v1067 = vunpack.c.h.b16 %v260
  %v1068 = vunpack.c.l.b16 %v261
  %v1069 = vunpack.c.h.b16 %v261
  %v1070 = vunpack.c.l.b16 %v262
  %v1071 = vunpack.c.h.b16 %v262
  %v1072 = vunpack.c.l.b16 %v263
  %v1073 = vunpack.c.h.b16 %v263
  %v1074 = vunpack.c.l.b16 %v264
  %v1075 = vunpack.c.h.b16 %v264
  %v1076 = vunpack.c.l.b16 %v265
  %v1077 = vunpack.c.h.b16 %v265
  %v1078 = vunpack.c.l.b16 %v266
  %v1079 = vunpack.c.h.b16 %v266
  %v1080 = vunpack.c.l.b16 %v267
  %v1081 = vunpack.c.h.b16 %v267
  %v1082 = vunpack.c.l.b16 %v268
  %v1083 = vunpack.c.h.b16 %v268
  %v1084 = vunpack.c.l.b16 %v269
  %v1085 = vunpack.c.h.b16 %v269
  %v1086 = vunpack.c.l.b16 %v270
  %v1087 = vunpack.c.h.b16 %v270
  %v1088 = vunpack.c.l.b16 %v271
  %v1089 = vunpack.c.h.b16 %v271
  %v1090 = vpack.c.b16 %v644, %v642
  %v1091 = vpack.c.b16 %v645, %v643
  %v1092 = vpack.c.b16 %v648, %v646
  %v1093 = vpack.c.b16 %v649, %v647
  %v1094 = vpack.c.b16 %v652, %v650
  %v1095 = vpack.c.b16 %v653, %v651
  %v1096 = vpack.c.b16 %v656, %v654
  %v1097 = vpack.c.b16 %v657, %v655
  %v1098 = vpack.c.b16 %v660, %v658
  %v1099 = vpack.c.b16 %v661, %v659
  %v1100 = vpack.c.b16 %v664, %v662
  %v1101 = vpack.c.b16 %v665, %v663
  %v1102 = vpack.c.b16 %v668, %v666
  %v1103 = vpack.c.b16 %v669, %v667
  %v1104 = vpack.c.b16 %v672, %v670
  %v1105 = vpack.c.b16 %v673, %v671
  %v1106 = vpack.c.b16 %v676, %v674
  %v1107 = vpack.c.b16 %v677, %v675
  %v1108 = vpack.c.b16 %v680, %v678
  %v1109 = vpack.c.b16 %v681, %v679
  %v1110 = vpack.c.b16 %v684, %v682
  %v1111 = vpack.c.b16 %v685, %v683
  %v1112 = vpack.c.b16 %v688, %v686
  %v1113 = vpack.c.b16 %v689, %v687
  %v1114 = vpack.c.b16 %v692, %v690
  %v1115 = vpack.c.b16 %v693, %v691
  %v1116 = vpack.c.b16 %v696, %v694
  %v1117 = vpack.c.b16 %v697, %v695
  %v1118 = vpack.c.b16 %v700, %v698
  %v1119 = vpack.c.b16 %v701, %v699
  %v1120 = vpack.c.b16 %v704, %v702
  %v1121 = vpack.c.b16 %v705, %v703
  %v1122 = vpack.c.b16 %v708, %v706
  %v1123 = vpack.c.b16 %v709, %v707
  %v1124 = vpack.c.b16 %v712, %v710
  %v1125 = vpack.c.b16 %v713, %v711
  %v1126 = vpack.c.b16 %v716, %v714
  %v1127 = vpack.c.b16 %v717, %v715
  %v1128 = vpack.c.b16 %v720, %v718
  %v1129 = vpack.c.b16 %v721, %v719
  %v1130 = vpack.c.b16 %v724, %v722
  %v1131 = vpack.c.b16 %v725, %v723
  %v1132 = vpack.c.b16 %v728, %v726
  %v1133 = vpack.c.b16 %v729, %v727
  %v1134 = vpack.c.b16 %v732, %v730
  %v1135 = vpack.c.b16 %v733, %v731
  %v1136 = vpack.c.b16 %v736, %v734
  %v1137 = vpack.c.b16 %v737, %v735
  %v1138 = vpack.c.b16 %v740, %v738
  %v1139 = vpack.c.b16 %v741, %v739
  %v1140 = vpack.c.b16 %v744, %v742
  %v1141 = vpack.c.b16 %v745, %v743
  %v1142 = vpack.c.b16 %v748, %v746
  %v1143 = vpack.c.b16 %v749, %v747
  %v1144 = vpack.c.b16 %v752, %v750
  %v1145 = vpack.c.b16 %v753, %v751
  %v1146 = vpack.c.b16 %v756, %v754
  %v1147 = vpack.c.b16 %v757, %v755
  %v1148 = vpack.c.b16 %v760, %v758
  %v1149 = vpack.c.b16 %v761, %v759
  %v1150 = vpack.c.b16 %v764, %v762
  %v1151 = vpack.c.b16 %v765, %v763
  %v1152 = vpack.c.b16 %v768, %v766
  %v1153 = vpack.c.b16 %v769, %v767
  %v1154 = vpack.c.b16 %v772, %v770
  %v1155 = vpack.c.b16 %v773, %v771
  %v1156 = vpack.c.b16 %v776, %v774
  %v1157 = vpack.c.b16 %v777, %v775
  %v1158 = vpack.c.b16 %v780, %v778
  %v1159 = vpack.c.b16 %v781, %v779
  %v1160 = vpack.c.b16 %v784, %v782
  %v1161 = vpack.c.b16 %v785, %v783
  %v1162 = vpack.c.b16 %v788, %v786
  %v1163 = vpack.c.b16 %v789, %v787
  %v1164 = vpack.c.b16 %v792, %v790
  %v1165 = vpack.c.b16 %v793, %v791
  %v1166 = vpack.c.b16 %v796, %v794
  %v1167 = vpack.c.b16 %v797, %v795
  %v1168 = vpack.c.b16 %v800, %v798
  %v1169 = vpack.c.b16 %v801, %v799
  %v1170 = vpack.c.b16 %v804, %v802
  %v1171 = vpack.c.b16 %v805, %v803
  %v1172 = vpack.c.b16 %v808, %v806
  %v1173 = vpack.c.b16 %v809, %v807
  %v1174 = vpack.c.b16 %v812, %v810
  %v1175 = vpack.c.b16 %v813, %v811
  %v1176 = vpack.c.b16 %v816, %v814
  %v1177 = vpack.c.b16 %v817, %v815
  %v1178 = vpack.c.b16 %v820, %v818
  %v1179 = vpack.c.b16 %v821, %v819
  %v1180 = vpack.c.b16 %v824, %v822
  %v1181 = vpack.c.b16 %v825, %v823
  %v1182 = vpack.c.b16 %v828, %v826
  %v1183 = vpack.c.b16 %v829, %v827
  %v1184 = vpack.c.b16 %v832, %v830
  %v1185 = vpack.c.b16 %v833, %v831
  %v1186 = vpack.c.b16 %v836, %v834
  %v1187 = vpack.c.b16 %v837, %v835
  %v1188 = vpack.c.b16 %v840, %v838
  %v1189 = vpack.c.b16 %v841, %v839
  %v1190 = vpack.c.b16 %v844, %v842
  %v1191 = vpack.c.b16 %v845, %v843
  %v1192 = vpack.c.b16 %v848, %v846
  %v1193 = vpack.c.b16 %v849, %v847
  %v1194 = vpack.c.b16 %v852, %v850
  %v1195 = vpack.c.b16 %v853, %v851
  %v1196 = vpack.c.b16 %v856, %v854
  %v1197 = vpack.c.b16 %v857, %v855
  %v1198 = vpack.c.b16 %v860, %v858
  %v1199 = vpack.c.b16 %v861, %v859
  %v1200 = vpack.c.b16 %v864, %v862
  %v1201 = vpack.c.b16 %v865, %v863
  %v1202 = vpack.c.b16 %v868, %v866
  %v1203 = vpack.c.b16 %v869, %v867
  %v1204 = vpack.c.b16 %v872, %v870
  %v1205 = vpack.c.b16 %v873, %v871
  %v1206 = vpack.c.b16 %v876, %v874
  %v1207 = vpack.c.b16 %v877, %v875
  %v1208 = vpack.c.b16 %v880, %v878
  %v1209 = vpack.c.b16 %v881, %v879
  %v1210 = vpack.c.b16 %v884, %v882
  %v1211 = vpack.c.b16 %v885, %v883
  %v1212 = vpack.c.b16 %v888, %v886
  %v1213 = vpack.c.b16 %v889, %v887
  %v1214 = vpack.c.b16 %v892, %v890
  %v1215 = vpack.c.b16 %v893, %v891
  %v1216 = vpack.c.b16 %v896, %v894
  %v1217 = vpack.c.b16 %v897, %v895
  %v1218 = vpack.c.b16 %v900, %v898
  %v1219 = vpack.c.b16 %v901, %v899
  %v1220 = vpack.c.b16 %v904, %v902
  %v1221 = vpack.c.b16 %v905, %v903
  %v1222 = vpack.c.b16 %v908, %v906
  %v1223 = vpack.c.b16 %v909, %v907
  %v1224 = vpack.c.b16 %v912, %v910
  %v1225 = vpack.c.b16 %v913, %v911
  %v1226 = vpack.c.b16 %v916, %v914
  %v1227 = vpack.c.b16 %v917, %v915
  %v1228 = vpack.c.b16 %v920, %v918
  %v1229 = vpack.c.b16 %v921, %v919
  %v1230 = vpack.c.b16 %v924, %v922
  %v1231 = vpack.c.b16 %v925, %v923
  %v1232 = vpack.c.b16 %v928, %v926
  %v1233 = vpack.c.b16 %v929, %v927
  %v1234 = vpack.c.b16 %v932, %v930
  %v1235 = vpack.c.b16 %v933, %v931
  %v1236 = vpack.c.b16 %v936, %v934
  %v1237 = vpack.c.b16 %v937, %v935
  %v1238 = vpack.c.b16 %v940, %v938
  %v1239 = vpack.c.b16 %v941, %v939
  %v1240 = vpack.c.b16 %v944, %v942
  %v1241 = vpack.c.b16 %v945, %v943
  %v1242 = vpack.c.b16 %v948, %v946
  %v1243 = vpack.c.b16 %v949, %v947
  %v1244 = vpack.c.b16 %v952, %v950
  %v1245 = vpack.c.b16 %v953, %v951
  %v1246 = vpack.c.b16 %v956, %v954
  %v1247 = vpack.c.b16 %v957, %v955
  %v1248 = vpack.c.b16 %v960, %v958
  %v1249 = vpack.c.b16 %v961, %v959
  %v1250 = vpack.c.b16 %v964, %v962
  %v1251 = vpack.c.b16 %v965, %v963
  %v1252 = vpack.c.b16 %v968, %v966
  %v1253 = vpack.c.b16 %v969, %v967
  %v1254 = vpack.c.b16 %v972, %v970
  %v1255 = vpack.c.b16 %v973, %v971
  %v1256 = vpack.c.b16 %v976, %v974
  %v1257 = vpack.c.b16 %v977, %v975
  %v1258 = vpack.c.b16 %v980, %v978
  %v1259 = vpack.c.b16 %v981, %v979
  %v1260 = vpack.c.b16 %v984, %v982
  %v1261 = vpack.c.b16 %v985, %v983
  %v1262 = vpack.c.b16 %v988, %v986
  %v1263 = vpack.c.b16 %v989, %v987
  %v1264 = vpack.c.b16 %v992, %v990
  %v1265 = vpack.c.b16 %v993, %v991
  %v1266 = vpack.c.b16 %v996, %v994
  %v1267 = vpack.c.b16 %v997, %v995
  %v1268 = vpack.c.b16 %v1000, %v998
  %v1269 = vpack.c.b16 %v1001, %v999
  %v1270 = vpack.c.b16 %v1004, %v1002
  %v1271 = vpack.c.b16 %v1005, %v1003
  %v1272 = vpack.c.b16 %v1008, %v1006
  %v1273 = vpack.c.b16 %v1009, %v1007
  %v1274 = vpack.c.b16 %v1012, %v1010
  %v1275 = vpack.c.b16 %v1013, %v1011
  %v1276 = vpack.c.b16 %v1016, %v1014
  %v1277 = vpack.c.b16 %v1017, %v1015
  %v1278 = vpack.c.b16 %v1020, %v1018
  %v1279 = vpack.c.b16 %v1021, %v1019
  %v1280 = vpack.c.b16 %v1024, %v1022
  %v1281 = vpack.c.b16 %v1025, %v1023
  %v1282 = vpack.c.b16 %v1028, %v1026
  %v1283 = vpack.c.b16 %v1029, %v1027
  %v1284 = vpack.c.b16 %v1032, %v1030
  %v1285 = vpack.c.b16 %v1033, %v1031
  %v1286 = vpack.c.b16 %v1036, %v1034
  %v1287 = vpack.c.b16 %v1037, %v1035
  %v1288 = vpack.c.b16 %v1040, %v1038
  %v1289 = vpack.c.b16 %v1041, %v1039
  %v1290 = vpack.c.b16 %v1044, %v1042
  %v1291 = vpack.c.b16 %v1045, %v1043
  %v1292 = vpack.c.b16 %v1048, %v1046
  %v1293 = vpack.c.b16 %v1049, %v1047
  %v1294 = vpack.c.b16 %v1052, %v1050
  %v1295 = vpack.c.b16 %v1053, %v1051
  %v1296 = vpack.c.b16 %v1056, %v1054
  %v1297 = vpack.c.b16 %v1057, %v1055
  %v1298 = vpack.c.b16 %v1060, %v1058
  %v1299 = vpack.c.b16 %v1061, %v1059
  %v1300 = vpack.c.b16 %v1064, %v1062
  %v1301 = vpack.c.b16 %v1065, %v1063
  %v1302 = vpack.c.b16 %v1068, %v1066
  %v1303 = vpack.c.b16 %v1069, %v1067
  %v1304 = vpack.c.b16 %v1072, %v1070
  %v1305 = vpack.c.b16 %v1073, %v1071
  %v1306 = vpack.c.b16 %v1076, %v1074
  %v1307 = vpack.c.b16 %v1077, %v1075
  %v1308 = vpack.c.b16 %v1080, %v1078
  %v1309 = vpack.c.b16 %v1081, %v1079
  %v1310 = vpack.c.b16 %v1084, %v1082
  %v1311 = vpack.c.b16 %v1085, %v1083
  %v1312 = vpack.c.b16 %v1088, %v1086
  %v1313 = vpack.c.b16 %v1089, %v1087
  %1538 = vmatpush.bf16.msra.mxu0 %v1104
  %1539 = vmatpush.bf16.msra.mxu0 %v1102
  %1540 = vmatpush.bf16.msra.mxu0 %v1100
  %1541 = vmatpush.bf16.msra.mxu0 %v1098
  %1542 = vmatpush.bf16.msra.mxu0 %v1096
  %1543 = vmatpush.bf16.msra.mxu0 %v1094
  %1544 = vmatpush.bf16.msra.mxu0 %v1092
  %1545 = vmatpush.bf16.msra.mxu0 %v1090
  %1546 = vmatmul.bf16.gmra.mxu0 %v362
  %v1547 = vpop.f32.mrf.mxu0
  %v1548 = vadd.f32 %v274, %v1547
  %v1549 = vpop.f32.mrf.mxu0
  %v1550 = vadd.f32 %v274, %v1549
  %1551 = vmatmul.bf16.gmra.mxu0 %v376
  %v1552 = vpop.f32.mrf.mxu0
  %v1553 = vadd.f32 %v274, %v1552
  %v1554 = vpop.f32.mrf.mxu0
  %v1555 = vadd.f32 %v274, %v1554
  %1556 = vdwg.mxu0
  %1557 = vmatpush.bf16.msra.mxu0 %v1120
  %1558 = vmatpush.bf16.msra.mxu0 %v1118
  %1559 = vmatpush.bf16.msra.mxu0 %v1116
  %1560 = vmatpush.bf16.msra.mxu0 %v1114
  %1561 = vmatpush.bf16.msra.mxu0 %v1112
  %1562 = vmatpush.bf16.msra.mxu0 %v1110
  %1563 = vmatpush.bf16.msra.mxu0 %v1108
  %1564 = vmatpush.bf16.msra.mxu0 %v1106
  %1565 = vmatmul.bf16.gmra.mxu0 %v363
  %v1566 = vpop.f32.mrf.mxu0
  %v1567 = vadd.f32 %v1548, %v1566
  %v1568 = vpop.f32.mrf.mxu0
  %v1569 = vadd.f32 %v1550, %v1568
  %1570 = vmatmul.bf16.gmra.mxu0 %v377
  %v1571 = vpop.f32.mrf.mxu0
  %v1572 = vadd.f32 %v1553, %v1571
  %v1573 = vpop.f32.mrf.mxu0
  %v1574 = vadd.f32 %v1555, %v1573
  %1575 = vdwg.mxu0
  %1576 = vmatpush.bf16.msra.mxu0 %v1136
  %1577 = vmatpush.bf16.msra.mxu0 %v1134
  %1578 = vmatpush.bf16.msra.mxu0 %v1132
  %1579 = vmatpush.bf16.msra.mxu0 %v1130
  %1580 = vmatpush.bf16.msra.mxu0 %v1128
  %1581 = vmatpush.bf16.msra.mxu0 %v1126
  %1582 = vmatpush.bf16.msra.mxu0 %v1124
  %1583 = vmatpush.bf16.msra.mxu0 %v1122
  %1584 = vmatmul.bf16.gmra.mxu0 %v364
  %v1585 = vpop.f32.mrf.mxu0
  %v1586 = vadd.f32 %v1567, %v1585
  %v1587 = vpop.f32.mrf.mxu0
  %v1588 = vadd.f32 %v1569, %v1587
  %1589 = vmatmul.bf16.gmra.mxu0 %v378
  %v1590 = vpop.f32.mrf.mxu0
  %v1591 = vadd.f32 %v1572, %v1590
  %v1592 = vpop.f32.mrf.mxu0
  %v1593 = vadd.f32 %v1574, %v1592
  %1594 = vdwg.mxu0
  %1595 = vmatpush.bf16.msra.mxu0 %v1152
  %1596 = vmatpush.bf16.msra.mxu0 %v1150
  %1597 = vmatpush.bf16.msra.mxu0 %v1148
  %1598 = vmatpush.bf16.msra.mxu0 %v1146
  %1599 = vmatpush.bf16.msra.mxu0 %v1144
  %1600 = vmatpush.bf16.msra.mxu0 %v1142
  %1601 = vmatpush.bf16.msra.mxu0 %v1140
  %1602 = vmatpush.bf16.msra.mxu0 %v1138
  %1603 = vmatmul.bf16.gmra.mxu0 %v365
  %v1604 = vpop.f32.mrf.mxu0
  %v1605 = vadd.f32 %v1586, %v1604
  %v1606 = vpop.f32.mrf.mxu0
  %v1607 = vadd.f32 %v1588, %v1606
  %1608 = vmatmul.bf16.gmra.mxu0 %v379
  %v1609 = vpop.f32.mrf.mxu0
  %v1610 = vadd.f32 %v1591, %v1609
  %v1611 = vpop.f32.mrf.mxu0
  %v1612 = vadd.f32 %v1593, %v1611
  %1613 = vdwg.mxu0
  %1614 = vmatpush.bf16.msra.mxu0 %v1168
  %1615 = vmatpush.bf16.msra.mxu0 %v1166
  %1616 = vmatpush.bf16.msra.mxu0 %v1164
  %1617 = vmatpush.bf16.msra.mxu0 %v1162
  %1618 = vmatpush.bf16.msra.mxu0 %v1160
  %1619 = vmatpush.bf16.msra.mxu0 %v1158
  %1620 = vmatpush.bf16.msra.mxu0 %v1156
  %1621 = vmatpush.bf16.msra.mxu0 %v1154
  %1622 = vmatmul.bf16.gmra.mxu0 %v366
  %v1623 = vpop.f32.mrf.mxu0
  %v1624 = vadd.f32 %v1605, %v1623
  %v1625 = vpop.f32.mrf.mxu0
  %v1626 = vadd.f32 %v1607, %v1625
  %1627 = vmatmul.bf16.gmra.mxu0 %v380
  %v1628 = vpop.f32.mrf.mxu0
  %v1629 = vadd.f32 %v1610, %v1628
  %v1630 = vpop.f32.mrf.mxu0
  %v1631 = vadd.f32 %v1612, %v1630
  %1632 = vdwg.mxu0
  %1633 = vmatpush.bf16.msra.mxu0 %v1184
  %1634 = vmatpush.bf16.msra.mxu0 %v1182
  %1635 = vmatpush.bf16.msra.mxu0 %v1180
  %1636 = vmatpush.bf16.msra.mxu0 %v1178
  %1637 = vmatpush.bf16.msra.mxu0 %v1176
  %1638 = vmatpush.bf16.msra.mxu0 %v1174
  %1639 = vmatpush.bf16.msra.mxu0 %v1172
  %1640 = vmatpush.bf16.msra.mxu0 %v1170
  %1641 = vmatmul.bf16.gmra.mxu0 %v367
  %v1642 = vpop.f32.mrf.mxu0
  %v1643 = vadd.f32 %v1624, %v1642
  %v1644 = vpop.f32.mrf.mxu0
  %v1645 = vadd.f32 %v1626, %v1644
  %1646 = vmatmul.bf16.gmra.mxu0 %v381
  %v1647 = vpop.f32.mrf.mxu0
  %v1648 = vadd.f32 %v1629, %v1647
  %v1649 = vpop.f32.mrf.mxu0
  %v1650 = vadd.f32 %v1631, %v1649
  %1651 = vdwg.mxu0
  %1652 = vmatpush.bf16.msra.mxu0 %v1200
  %1653 = vmatpush.bf16.msra.mxu0 %v1198
  %1654 = vmatpush.bf16.msra.mxu0 %v1196
  %1655 = vmatpush.bf16.msra.mxu0 %v1194
  %1656 = vmatpush.bf16.msra.mxu0 %v1192
  %1657 = vmatpush.bf16.msra.mxu0 %v1190
  %1658 = vmatpush.bf16.msra.mxu0 %v1188
  %1659 = vmatpush.bf16.msra.mxu0 %v1186
  %1660 = vmatmul.bf16.gmra.mxu0 %v368
  %v1661 = vpop.f32.mrf.mxu0
  %v1662 = vadd.f32 %v1643, %v1661
  %v1663 = vpop.f32.mrf.mxu0
  %v1664 = vadd.f32 %v1645, %v1663
  %1665 = vmatmul.bf16.gmra.mxu0 %v382
  %v1666 = vpop.f32.mrf.mxu0
  %v1667 = vadd.f32 %v1648, %v1666
  %v1668 = vpop.f32.mrf.mxu0
  %v1669 = vadd.f32 %v1650, %v1668
  %1670 = vdwg.mxu0
  %1671 = vmatpush.bf16.msra.mxu0 %v1216
  %1672 = vmatpush.bf16.msra.mxu0 %v1214
  %1673 = vmatpush.bf16.msra.mxu0 %v1212
  %1674 = vmatpush.bf16.msra.mxu0 %v1210
  %1675 = vmatpush.bf16.msra.mxu0 %v1208
  %1676 = vmatpush.bf16.msra.mxu0 %v1206
  %1677 = vmatpush.bf16.msra.mxu0 %v1204
  %1678 = vmatpush.bf16.msra.mxu0 %v1202
  %1679 = vmatmul.bf16.gmra.mxu0 %v369
  %v1680 = vpop.f32.mrf.mxu0
  %v1681 = vadd.f32 %v1662, %v1680
  %v1682 = vpop.f32.mrf.mxu0
  %v1683 = vadd.f32 %v1664, %v1682
  %1684 = vmatmul.bf16.gmra.mxu0 %v383
  %v1685 = vpop.f32.mrf.mxu0
  %v1686 = vadd.f32 %v1667, %v1685
  %v1687 = vpop.f32.mrf.mxu0
  %v1688 = vadd.f32 %v1669, %v1687
  %1689 = vdwg.mxu0
  %1690 = vmatpush.bf16.msra.mxu0 %v1232
  %1691 = vmatpush.bf16.msra.mxu0 %v1230
  %1692 = vmatpush.bf16.msra.mxu0 %v1228
  %1693 = vmatpush.bf16.msra.mxu0 %v1226
  %1694 = vmatpush.bf16.msra.mxu0 %v1224
  %1695 = vmatpush.bf16.msra.mxu0 %v1222
  %1696 = vmatpush.bf16.msra.mxu0 %v1220
  %1697 = vmatpush.bf16.msra.mxu0 %v1218
  %1698 = vmatmul.bf16.gmra.mxu0 %v370
  %v1699 = vpop.f32.mrf.mxu0
  %v1700 = vadd.f32 %v1681, %v1699
  %v1701 = vpop.f32.mrf.mxu0
  %v1702 = vadd.f32 %v1683, %v1701
  %1703 = vmatmul.bf16.gmra.mxu0 %v384
  %v1704 = vpop.f32.mrf.mxu0
  %v1705 = vadd.f32 %v1686, %v1704
  %v1706 = vpop.f32.mrf.mxu0
  %v1707 = vadd.f32 %v1688, %v1706
  %1708 = vdwg.mxu0
  %1709 = vmatpush.bf16.msra.mxu0 %v1248
  %1710 = vmatpush.bf16.msra.mxu0 %v1246
  %1711 = vmatpush.bf16.msra.mxu0 %v1244
  %1712 = vmatpush.bf16.msra.mxu0 %v1242
  %1713 = vmatpush.bf16.msra.mxu0 %v1240
  %1714 = vmatpush.bf16.msra.mxu0 %v1238
  %1715 = vmatpush.bf16.msra.mxu0 %v1236
  %1716 = vmatpush.bf16.msra.mxu0 %v1234
  %1717 = vmatmul.bf16.gmra.mxu0 %v371
  %v1718 = vpop.f32.mrf.mxu0
  %v1719 = vadd.f32 %v1700, %v1718
  %v1720 = vpop.f32.mrf.mxu0
  %v1721 = vadd.f32 %v1702, %v1720
  %1722 = vmatmul.bf16.gmra.mxu0 %v385
  %v1723 = vpop.f32.mrf.mxu0
  %v1724 = vadd.f32 %v1705, %v1723
  %v1725 = vpop.f32.mrf.mxu0
  %v1726 = vadd.f32 %v1707, %v1725
  %1727 = vdwg.mxu0
  %1728 = vmatpush.bf16.msra.mxu0 %v1264
  %1729 = vmatpush.bf16.msra.mxu0 %v1262
  %1730 = vmatpush.bf16.msra.mxu0 %v1260
  %1731 = vmatpush.bf16.msra.mxu0 %v1258
  %1732 = vmatpush.bf16.msra.mxu0 %v1256
  %1733 = vmatpush.bf16.msra.mxu0 %v1254
  %1734 = vmatpush.bf16.msra.mxu0 %v1252
  %1735 = vmatpush.bf16.msra.mxu0 %v1250
  %1736 = vmatmul.bf16.gmra.mxu0 %v372
  %v1737 = vpop.f32.mrf.mxu0
  %v1738 = vadd.f32 %v1719, %v1737
  %v1739 = vpop.f32.mrf.mxu0
  %v1740 = vadd.f32 %v1721, %v1739
  %1741 = vmatmul.bf16.gmra.mxu0 %v386
  %v1742 = vpop.f32.mrf.mxu0
  %v1743 = vadd.f32 %v1724, %v1742
  %v1744 = vpop.f32.mrf.mxu0
  %v1745 = vadd.f32 %v1726, %v1744
  %1746 = vdwg.mxu0
  %1747 = vmatpush.bf16.msra.mxu0 %v1280
  %1748 = vmatpush.bf16.msra.mxu0 %v1278
  %1749 = vmatpush.bf16.msra.mxu0 %v1276
  %1750 = vmatpush.bf16.msra.mxu0 %v1274
  %1751 = vmatpush.bf16.msra.mxu0 %v1272
  %1752 = vmatpush.bf16.msra.mxu0 %v1270
  %1753 = vmatpush.bf16.msra.mxu0 %v1268
  %1754 = vmatpush.bf16.msra.mxu0 %v1266
  %1755 = vmatmul.bf16.gmra.mxu0 %v373
  %v1756 = vpop.f32.mrf.mxu0
  %v1757 = vadd.f32 %v1738, %v1756
  %v1758 = vpop.f32.mrf.mxu0
  %v1759 = vadd.f32 %v1740, %v1758
  %1760 = vmatmul.bf16.gmra.mxu0 %v387
  %v1761 = vpop.f32.mrf.mxu0
  %v1762 = vadd.f32 %v1743, %v1761
  %v1763 = vpop.f32.mrf.mxu0
  %v1764 = vadd.f32 %v1745, %v1763
  %1765 = vdwg.mxu0
  %1766 = vmatpush.bf16.msra.mxu0 %v1296
  %1767 = vmatpush.bf16.msra.mxu0 %v1294
  %1768 = vmatpush.bf16.msra.mxu0 %v1292
  %1769 = vmatpush.bf16.msra.mxu0 %v1290
  %1770 = vmatpush.bf16.msra.mxu0 %v1288
  %1771 = vmatpush.bf16.msra.mxu0 %v1286
  %1772 = vmatpush.bf16.msra.mxu0 %v1284
  %1773 = vmatpush.bf16.msra.mxu0 %v1282
  %1774 = vmatmul.bf16.gmra.mxu0 %v374
  %v1775 = vpop.f32.mrf.mxu0
  %v1776 = vadd.f32 %v1757, %v1775
  %v1777 = vpop.f32.mrf.mxu0
  %v1778 = vadd.f32 %v1759, %v1777
  %1779 = vmatmul.bf16.gmra.mxu0 %v388
  %v1780 = vpop.f32.mrf.mxu0
  %v1781 = vadd.f32 %v1762, %v1780
  %v1782 = vpop.f32.mrf.mxu0
  %v1783 = vadd.f32 %v1764, %v1782
  %1784 = vdwg.mxu0
  %1785 = vmatpush.bf16.msra.mxu0 %v1312
  %1786 = vmatpush.bf16.msra.mxu0 %v1310
  %1787 = vmatpush.bf16.msra.mxu0 %v1308
  %1788 = vmatpush.bf16.msra.mxu0 %v1306
  %1789 = vmatpush.bf16.msra.mxu0 %v1304
  %1790 = vmatpush.bf16.msra.mxu0 %v1302
  %1791 = vmatpush.bf16.msra.mxu0 %v1300
  %1792 = vmatpush.bf16.msra.mxu0 %v1298
  %1793 = vmatmul.bf16.gmra.mxu0 %v375
  %v1794 = vpop.f32.mrf.mxu0
  %v1795 = vadd.f32 %v1776, %v1794
  %v1796 = vpop.f32.mrf.mxu0
  %v1797 = vadd.f32 %v1778, %v1796
  %1798 = vmatmul.bf16.gmra.mxu0 %v389
  %v1799 = vpop.f32.mrf.mxu0
  %v1800 = vadd.f32 %v1781, %v1799
  %v1801 = vpop.f32.mrf.mxu0
  %v1802 = vadd.f32 %v1783, %v1801
  %1803 = vdwg.mxu0
  %1804 = vmatpush.bf16.msra.mxu0 %v1105
  %1805 = vmatpush.bf16.msra.mxu0 %v1103
  %1806 = vmatpush.bf16.msra.mxu0 %v1101
  %1807 = vmatpush.bf16.msra.mxu0 %v1099
  %1808 = vmatpush.bf16.msra.mxu0 %v1097
  %1809 = vmatpush.bf16.msra.mxu0 %v1095
  %1810 = vmatpush.bf16.msra.mxu0 %v1093
  %1811 = vmatpush.bf16.msra.mxu0 %v1091
  %1812 = vmatmul.bf16.gmra.mxu0 %v362
  %v1813 = vpop.f32.mrf.mxu0
  %v1814 = vadd.f32 %v275, %v1813
  %v1815 = vpop.f32.mrf.mxu0
  %v1816 = vadd.f32 %v275, %v1815
  %1817 = vmatmul.bf16.gmra.mxu0 %v376
  %v1818 = vpop.f32.mrf.mxu0
  %v1819 = vadd.f32 %v275, %v1818
  %v1820 = vpop.f32.mrf.mxu0
  %v1821 = vadd.f32 %v275, %v1820
  %1822 = vdwg.mxu0
  %1823 = vmatpush.bf16.msra.mxu0 %v1121
  %1824 = vmatpush.bf16.msra.mxu0 %v1119
  %1825 = vmatpush.bf16.msra.mxu0 %v1117
  %1826 = vmatpush.bf16.msra.mxu0 %v1115
  %1827 = vmatpush.bf16.msra.mxu0 %v1113
  %1828 = vmatpush.bf16.msra.mxu0 %v1111
  %1829 = vmatpush.bf16.msra.mxu0 %v1109
  %1830 = vmatpush.bf16.msra.mxu0 %v1107
  %1831 = vmatmul.bf16.gmra.mxu0 %v363
  %v1832 = vpop.f32.mrf.mxu0
  %v1833 = vadd.f32 %v1814, %v1832
  %v1834 = vpop.f32.mrf.mxu0
  %v1835 = vadd.f32 %v1816, %v1834
  %1836 = vmatmul.bf16.gmra.mxu0 %v377
  %v1837 = vpop.f32.mrf.mxu0
  %v1838 = vadd.f32 %v1819, %v1837
  %v1839 = vpop.f32.mrf.mxu0
  %v1840 = vadd.f32 %v1821, %v1839
  %1841 = vdwg.mxu0
  %1842 = vmatpush.bf16.msra.mxu0 %v1137
  %1843 = vmatpush.bf16.msra.mxu0 %v1135
  %1844 = vmatpush.bf16.msra.mxu0 %v1133
  %1845 = vmatpush.bf16.msra.mxu0 %v1131
  %1846 = vmatpush.bf16.msra.mxu0 %v1129
  %1847 = vmatpush.bf16.msra.mxu0 %v1127
  %1848 = vmatpush.bf16.msra.mxu0 %v1125
  %1849 = vmatpush.bf16.msra.mxu0 %v1123
  %1850 = vmatmul.bf16.gmra.mxu0 %v364
  %v1851 = vpop.f32.mrf.mxu0
  %v1852 = vadd.f32 %v1833, %v1851
  %v1853 = vpop.f32.mrf.mxu0
  %v1854 = vadd.f32 %v1835, %v1853
  %1855 = vmatmul.bf16.gmra.mxu0 %v378
  %v1856 = vpop.f32.mrf.mxu0
  %v1857 = vadd.f32 %v1838, %v1856
  %v1858 = vpop.f32.mrf.mxu0
  %v1859 = vadd.f32 %v1840, %v1858
  %1860 = vdwg.mxu0
  %1861 = vmatpush.bf16.msra.mxu0 %v1153
  %1862 = vmatpush.bf16.msra.mxu0 %v1151
  %1863 = vmatpush.bf16.msra.mxu0 %v1149
  %1864 = vmatpush.bf16.msra.mxu0 %v1147
  %1865 = vmatpush.bf16.msra.mxu0 %v1145
  %1866 = vmatpush.bf16.msra.mxu0 %v1143
  %1867 = vmatpush.bf16.msra.mxu0 %v1141
  %1868 = vmatpush.bf16.msra.mxu0 %v1139
  %1869 = vmatmul.bf16.gmra.mxu0 %v365
  %v1870 = vpop.f32.mrf.mxu0
  %v1871 = vadd.f32 %v1852, %v1870
  %v1872 = vpop.f32.mrf.mxu0
  %v1873 = vadd.f32 %v1854, %v1872
  %1874 = vmatmul.bf16.gmra.mxu0 %v379
  %v1875 = vpop.f32.mrf.mxu0
  %v1876 = vadd.f32 %v1857, %v1875
  %v1877 = vpop.f32.mrf.mxu0
  %v1878 = vadd.f32 %v1859, %v1877
  %1879 = vdwg.mxu0
  %1880 = vmatpush.bf16.msra.mxu0 %v1169
  %1881 = vmatpush.bf16.msra.mxu0 %v1167
  %1882 = vmatpush.bf16.msra.mxu0 %v1165
  %1883 = vmatpush.bf16.msra.mxu0 %v1163
  %1884 = vmatpush.bf16.msra.mxu0 %v1161
  %1885 = vmatpush.bf16.msra.mxu0 %v1159
  %1886 = vmatpush.bf16.msra.mxu0 %v1157
  %1887 = vmatpush.bf16.msra.mxu0 %v1155
  %1888 = vmatmul.bf16.gmra.mxu0 %v366
  %v1889 = vpop.f32.mrf.mxu0
  %v1890 = vadd.f32 %v1871, %v1889
  %v1891 = vpop.f32.mrf.mxu0
  %v1892 = vadd.f32 %v1873, %v1891
  %1893 = vmatmul.bf16.gmra.mxu0 %v380
  %v1894 = vpop.f32.mrf.mxu0
  %v1895 = vadd.f32 %v1876, %v1894
  %v1896 = vpop.f32.mrf.mxu0
  %v1897 = vadd.f32 %v1878, %v1896
  %1898 = vdwg.mxu0
  %1899 = vmatpush.bf16.msra.mxu0 %v1185
  %1900 = vmatpush.bf16.msra.mxu0 %v1183
  %1901 = vmatpush.bf16.msra.mxu0 %v1181
  %1902 = vmatpush.bf16.msra.mxu0 %v1179
  %1903 = vmatpush.bf16.msra.mxu0 %v1177
  %1904 = vmatpush.bf16.msra.mxu0 %v1175
  %1905 = vmatpush.bf16.msra.mxu0 %v1173
  %1906 = vmatpush.bf16.msra.mxu0 %v1171
  %1907 = vmatmul.bf16.gmra.mxu0 %v367
  %v1908 = vpop.f32.mrf.mxu0
  %v1909 = vadd.f32 %v1890, %v1908
  %v1910 = vpop.f32.mrf.mxu0
  %v1911 = vadd.f32 %v1892, %v1910
  %1912 = vmatmul.bf16.gmra.mxu0 %v381
  %v1913 = vpop.f32.mrf.mxu0
  %v1914 = vadd.f32 %v1895, %v1913
  %v1915 = vpop.f32.mrf.mxu0
  %v1916 = vadd.f32 %v1897, %v1915
  %1917 = vdwg.mxu0
  %1918 = vmatpush.bf16.msra.mxu0 %v1201
  %1919 = vmatpush.bf16.msra.mxu0 %v1199
  %1920 = vmatpush.bf16.msra.mxu0 %v1197
  %1921 = vmatpush.bf16.msra.mxu0 %v1195
  %1922 = vmatpush.bf16.msra.mxu0 %v1193
  %1923 = vmatpush.bf16.msra.mxu0 %v1191
  %1924 = vmatpush.bf16.msra.mxu0 %v1189
  %1925 = vmatpush.bf16.msra.mxu0 %v1187
  %1926 = vmatmul.bf16.gmra.mxu0 %v368
  %v1927 = vpop.f32.mrf.mxu0
  %v1928 = vadd.f32 %v1909, %v1927
  %v1929 = vpop.f32.mrf.mxu0
  %v1930 = vadd.f32 %v1911, %v1929
  %1931 = vmatmul.bf16.gmra.mxu0 %v382
  %v1932 = vpop.f32.mrf.mxu0
  %v1933 = vadd.f32 %v1914, %v1932
  %v1934 = vpop.f32.mrf.mxu0
  %v1935 = vadd.f32 %v1916, %v1934
  %1936 = vdwg.mxu0
  %1937 = vmatpush.bf16.msra.mxu0 %v1217
  %1938 = vmatpush.bf16.msra.mxu0 %v1215
  %1939 = vmatpush.bf16.msra.mxu0 %v1213
  %1940 = vmatpush.bf16.msra.mxu0 %v1211
  %1941 = vmatpush.bf16.msra.mxu0 %v1209
  %1942 = vmatpush.bf16.msra.mxu0 %v1207
  %1943 = vmatpush.bf16.msra.mxu0 %v1205
  %1944 = vmatpush.bf16.msra.mxu0 %v1203
  %1945 = vmatmul.bf16.gmra.mxu0 %v369
  %v1946 = vpop.f32.mrf.mxu0
  %v1947 = vadd.f32 %v1928, %v1946
  %v1948 = vpop.f32.mrf.mxu0
  %v1949 = vadd.f32 %v1930, %v1948
  %1950 = vmatmul.bf16.gmra.mxu0 %v383
  %v1951 = vpop.f32.mrf.mxu0
  %v1952 = vadd.f32 %v1933, %v1951
  %v1953 = vpop.f32.mrf.mxu0
  %v1954 = vadd.f32 %v1935, %v1953
  %1955 = vdwg.mxu0
  %1956 = vmatpush.bf16.msra.mxu0 %v1233
  %1957 = vmatpush.bf16.msra.mxu0 %v1231
  %1958 = vmatpush.bf16.msra.mxu0 %v1229
  %1959 = vmatpush.bf16.msra.mxu0 %v1227
  %1960 = vmatpush.bf16.msra.mxu0 %v1225
  %1961 = vmatpush.bf16.msra.mxu0 %v1223
  %1962 = vmatpush.bf16.msra.mxu0 %v1221
  %1963 = vmatpush.bf16.msra.mxu0 %v1219
  %1964 = vmatmul.bf16.gmra.mxu0 %v370
  %v1965 = vpop.f32.mrf.mxu0
  %v1966 = vadd.f32 %v1947, %v1965
  %v1967 = vpop.f32.mrf.mxu0
  %v1968 = vadd.f32 %v1949, %v1967
  %1969 = vmatmul.bf16.gmra.mxu0 %v384
  %v1970 = vpop.f32.mrf.mxu0
  %v1971 = vadd.f32 %v1952, %v1970
  %v1972 = vpop.f32.mrf.mxu0
  %v1973 = vadd.f32 %v1954, %v1972
  %1974 = vdwg.mxu0
  %1975 = vmatpush.bf16.msra.mxu0 %v1249
  %1976 = vmatpush.bf16.msra.mxu0 %v1247
  %1977 = vmatpush.bf16.msra.mxu0 %v1245
  %1978 = vmatpush.bf16.msra.mxu0 %v1243
  %1979 = vmatpush.bf16.msra.mxu0 %v1241
  %1980 = vmatpush.bf16.msra.mxu0 %v1239
  %1981 = vmatpush.bf16.msra.mxu0 %v1237
  %1982 = vmatpush.bf16.msra.mxu0 %v1235
  %1983 = vmatmul.bf16.gmra.mxu0 %v371
  %v1984 = vpop.f32.mrf.mxu0
  %v1985 = vadd.f32 %v1966, %v1984
  %v1986 = vpop.f32.mrf.mxu0
  %v1987 = vadd.f32 %v1968, %v1986
  %1988 = vmatmul.bf16.gmra.mxu0 %v385
  %v1989 = vpop.f32.mrf.mxu0
  %v1990 = vadd.f32 %v1971, %v1989
  %v1991 = vpop.f32.mrf.mxu0
  %v1992 = vadd.f32 %v1973, %v1991
  %1993 = vdwg.mxu0
  %1994 = vmatpush.bf16.msra.mxu0 %v1265
  %1995 = vmatpush.bf16.msra.mxu0 %v1263
  %1996 = vmatpush.bf16.msra.mxu0 %v1261
  %1997 = vmatpush.bf16.msra.mxu0 %v1259
  %1998 = vmatpush.bf16.msra.mxu0 %v1257
  %1999 = vmatpush.bf16.msra.mxu0 %v1255
  %2000 = vmatpush.bf16.msra.mxu0 %v1253
  %2001 = vmatpush.bf16.msra.mxu0 %v1251
  %2002 = vmatmul.bf16.gmra.mxu0 %v372
  %v2003 = vpop.f32.mrf.mxu0
  %v2004 = vadd.f32 %v1985, %v2003
  %v2005 = vpop.f32.mrf.mxu0
  %v2006 = vadd.f32 %v1987, %v2005
  %2007 = vmatmul.bf16.gmra.mxu0 %v386
  %v2008 = vpop.f32.mrf.mxu0
  %v2009 = vadd.f32 %v1990, %v2008
  %v2010 = vpop.f32.mrf.mxu0
  %v2011 = vadd.f32 %v1992, %v2010
  %2012 = vdwg.mxu0
  %2013 = vmatpush.bf16.msra.mxu0 %v1281
  %2014 = vmatpush.bf16.msra.mxu0 %v1279
  %2015 = vmatpush.bf16.msra.mxu0 %v1277
  %2016 = vmatpush.bf16.msra.mxu0 %v1275
  %2017 = vmatpush.bf16.msra.mxu0 %v1273
  %2018 = vmatpush.bf16.msra.mxu0 %v1271
  %2019 = vmatpush.bf16.msra.mxu0 %v1269
  %2020 = vmatpush.bf16.msra.mxu0 %v1267
  %2021 = vmatmul.bf16.gmra.mxu0 %v373
  %v2022 = vpop.f32.mrf.mxu0
  %v2023 = vadd.f32 %v2004, %v2022
  %v2024 = vpop.f32.mrf.mxu0
  %v2025 = vadd.f32 %v2006, %v2024
  %2026 = vmatmul.bf16.gmra.mxu0 %v387
  %v2027 = vpop.f32.mrf.mxu0
  %v2028 = vadd.f32 %v2009, %v2027
  %v2029 = vpop.f32.mrf.mxu0
  %v2030 = vadd.f32 %v2011, %v2029
  %2031 = vdwg.mxu0
  %2032 = vmatpush.bf16.msra.mxu0 %v1297
  %2033 = vmatpush.bf16.msra.mxu0 %v1295
  %2034 = vmatpush.bf16.msra.mxu0 %v1293
  %2035 = vmatpush.bf16.msra.mxu0 %v1291
  %2036 = vmatpush.bf16.msra.mxu0 %v1289
  %2037 = vmatpush.bf16.msra.mxu0 %v1287
  %2038 = vmatpush.bf16.msra.mxu0 %v1285
  %2039 = vmatpush.bf16.msra.mxu0 %v1283
  %2040 = vmatmul.bf16.gmra.mxu0 %v374
  %v2041 = vpop.f32.mrf.mxu0
  %v2042 = vadd.f32 %v2023, %v2041
  %v2043 = vpop.f32.mrf.mxu0
  %v2044 = vadd.f32 %v2025, %v2043
  %2045 = vmatmul.bf16.gmra.mxu0 %v388
  %v2046 = vpop.f32.mrf.mxu0
  %v2047 = vadd.f32 %v2028, %v2046
  %v2048 = vpop.f32.mrf.mxu0
  %v2049 = vadd.f32 %v2030, %v2048
  %2050 = vdwg.mxu0
  %2051 = vmatpush.bf16.msra.mxu0 %v1313
  %2052 = vmatpush.bf16.msra.mxu0 %v1311
  %2053 = vmatpush.bf16.msra.mxu0 %v1309
  %2054 = vmatpush.bf16.msra.mxu0 %v1307
  %2055 = vmatpush.bf16.msra.mxu0 %v1305
  %2056 = vmatpush.bf16.msra.mxu0 %v1303
  %2057 = vmatpush.bf16.msra.mxu0 %v1301
  %2058 = vmatpush.bf16.msra.mxu0 %v1299
  %2059 = vmatmul.bf16.gmra.mxu0 %v375
  %v2060 = vpop.f32.mrf.mxu0
  %v2061 = vadd.f32 %v2042, %v2060
  %v2062 = vpop.f32.mrf.mxu0
  %v2063 = vadd.f32 %v2044, %v2062
  %2064 = vmatmul.bf16.gmra.mxu0 %v389
  %v2065 = vpop.f32.mrf.mxu0
  %v2066 = vadd.f32 %v2047, %v2065
  %v2067 = vpop.f32.mrf.mxu0
  %v2068 = vadd.f32 %v2049, %v2067
  %2069 = vdwg.mxu0
  %v2070 = vmax.f32 %v1795, 0.0
  %v2071 = vmax.f32 %v2061, 0.0
  %v2072 = vmax.f32 %v1797, 0.0
  %v2073 = vmax.f32 %v2063, 0.0
  %v2074 = vmax.f32 %v1800, 0.0
  %v2075 = vmax.f32 %v2066, 0.0
  %v2076 = vmax.f32 %v1802, 0.0
  %v2077 = vmax.f32 %v2068, 0.0
  %v2078 = vld [vmem:[%s3] sm:$0x3]
  %v2080 = vperm.slane %v2078, 0
  %v2081 = vperm.slane %v2078, 1
  %v2084 = vmul.f32 %v2070, %v2080
  %v2085 = vmul.f32 %v2071, %v2081
  %v2086 = vmul.f32 %v2072, %v2080
  %v2087 = vmul.f32 %v2073, %v2081
  %v2088 = vmul.f32 %v2074, %v2080
  %v2089 = vmul.f32 %v2075, %v2081
  %v2090 = vmul.f32 %v2076, %v2080
  %v2091 = vmul.f32 %v2077, %v2081
  %v2092 = vld [vmem:[%s4] sm:$0x3]
  %v2094 = vperm.slane %v2092, 0
  %v2095 = vperm.slane %v2092, 1
  %v2098 = vadd.f32 %v2084, %v2094
  %v2099 = vadd.f32 %v2085, %v2095
  %v2100 = vadd.f32 %v2086, %v2094
  %v2101 = vadd.f32 %v2087, %v2095
  %v2102 = vadd.f32 %v2088, %v2094
  %v2103 = vadd.f32 %v2089, %v2095
  %v2104 = vadd.f32 %v2090, %v2094
  %v2105 = vadd.f32 %v2091, %v2095
  %2106 = vst [vmem:[%s5] sm:$0xff] %v2098
  %2107 = vst [vmem:[%s5 + $0x8] sm:$0xff] %v2099
  %2108 = vst [vmem:[%s5 + $0x10] sm:$0xff] %v2100
  %2109 = vst [vmem:[%s5 + $0x18] sm:$0xff] %v2101
  %2110 = vst [vmem:[%s5 + $0x20] sm:$0xff] %v2102
  %2111 = vst [vmem:[%s5 + $0x28] sm:$0xff] %v2103
  %2112 = vst [vmem:[%s5 + $0x30] sm:$0xff] %v2104
  %2113 = vst [vmem:[%s5 + $0x38] sm:$0xff] %v2105
  // Predicated region
  $region22: #{alexlike_forward.23} parent=0 // pred_check
    _
  $region23: #{alexlike_forward.23} parent=0 // pred_check_branch
    %2115 = sbr.rel (0) target = $region25
  $region24: #{alexlike_forward.23} parent=0 // pred_region
    _
  $region25: #{alexlike_forward.23} parent=0 // pred_fallthru
    _
  // Predicated region
  $region26: #{alexlike_forward.23} parent=0 // pred_check
    _
  $region27: #{alexlike_forward.23} parent=0 // pred_check_branch
    %2117 = sbr.rel (0) target = $region29
  $region28: #{alexlike_forward.23} parent=0 // pred_region
    _
  $region29: #{alexlike_forward.23} parent=0 // pred_fallthru
    _

// kernel: alexlike_forward.26
$region0: #{alexlike_forward.26}
  #allocation0 [shape = 'u32[]', space=smem, size = 0x4, offset = 0x4, fixed_abs, tag = 'smem constant byte address 0x4 - core index']
  #allocation1 [shape = 'u32[72,128]{1,0:T(1,128)}', space=vmem, size = 0x9000, scoped, tag = 'internal scratch']
  %s0 = inlined_call_operand.vmem [shape: f32[3,8,128], index: 0, kind: input, shape index: {}]
  %s1 = inlined_call_operand.vmem [shape: f32[1,128], index: 1, kind: input, shape index: {}]
  %s2 = inlined_call_operand.vmem [shape: f32[1,128], index: 2, kind: input, shape index: {}]
  %s3 = inlined_call_operand.vmem [shape: f32[8,128], index: 3, kind: output, shape index: {}]
  %s4 = sld [smem:[#allocation0]]
  $region22: #{alexlike_forward.26} parent=0
    _
  %s6 = ssub.s32 1, %s4
  %s7 = scalar_select 0, %s6, %s4
  // Predicated region
  $region2: #{alexlike_forward.26} parent=0 // pred_check
    _
  $region3: #{alexlike_forward.26} parent=0 // pred_check_branch
    %9 = sbr.rel (0) target = $region5
  $region4: #{alexlike_forward.26} parent=0 // pred_region
    _
  $region5: #{alexlike_forward.26} parent=0 // pred_fallthru
    _
  // Predicated region
  $region6: #{alexlike_forward.26} parent=0 // pred_check
    _
  $region7: #{alexlike_forward.26} parent=0 // pred_check_branch
    %11 = sbr.rel (0) target = $region9
  $region8: #{alexlike_forward.26} parent=0 // pred_region
    _
  $region9: #{alexlike_forward.26} parent=0 // pred_fallthru
    _
  // Predicated region
  $region10: #{alexlike_forward.26} parent=0 // pred_check
    _
  $region11: #{alexlike_forward.26} parent=0 // pred_check_branch
    %13 = sbr.rel (0) target = $region13
  $region12: #{alexlike_forward.26} parent=0 // pred_region
    _
  $region13: #{alexlike_forward.26} parent=0 // pred_fallthru
    _
  %v14 = vld [vmem:[%s0] sm:$0xff]
  %s15 = scalar_lea.vmem %s0, 8
  %v16 = vld [vmem:[%s15] sm:$0xff]
  %v17 = vmax.f32 %v14, %v16
  %s18 = scalar_lea.vmem %s0, 16
  %v19 = vld [vmem:[%s18] sm:$0xff]
  %v20 = vmax.f32 %v17, %v19
  %v21 = vmax.f32 %v20, 0.0
  %v22 = vld [vmem:[%s1] sm:$0x1]
  %v24 = vperm.slane %v22, 0
  %v26 = vmul.f32 %v21, %v24
  %v27 = vld [vmem:[%s2] sm:$0x1]
  %v29 = vperm.slane %v27, 0
  %v31 = vadd.f32 %v26, %v29
  %32 = vst [vmem:[%s3] sm:$0xff] %v31
  // Predicated region
  $region14: #{alexlike_forward.26} parent=0 // pred_check
    _
  $region15: #{alexlike_forward.26} parent=0 // pred_check_branch
    %34 = sbr.rel (0) target = $region17
  $region16: #{alexlike_forward.26} parent=0 // pred_region
    _
  $region17: #{alexlike_forward.26} parent=0 // pred_fallthru
    _
  // Predicated region
  $region18: #{alexlike_forward.26} parent=0 // pred_check
    _
  $region19: #{alexlike_forward.26} parent=0 // pred_check_branch
    %36 = sbr.rel (0) target = $region21
  $region20: #{alexlike_forward.26} parent=0 // pred_region
    _
  $region21: #{alexlike_forward.26} parent=0 // pred_fallthru
    _

// kernel: alexlike_forward.29
$region0: #{alexlike_forward.29}
  #allocation0 [shape = 'u32[]', space=smem, size = 0x4, offset = 0x4, fixed_abs, tag = 'smem constant byte address 0x4 - core index']
  #allocation1 [shape = 'u32[72,128]{1,0:T(1,128)}', space=vmem, size = 0x9000, scoped, tag = 'internal scratch']
  %s0 = inlined_call_operand.vmem [shape: bf16[16,256], index: 0, kind: input, shape index: {}]
  %s1 = inlined_call_operand.vmem [shape: bf16[256,128], index: 1, kind: input, shape index: {}]
  %s2 = inlined_call_operand.vmem [shape: f32[1,128], index: 2, kind: input, shape index: {}]
  %s3 = inlined_call_operand.vmem [shape: f32[16,128], index: 3, kind: output, shape index: {}]
  %s4 = sld [smem:[#allocation0]]
  $region22: #{alexlike_forward.29} parent=0
    _
  %s6 = ssub.s32 1, %s4
  %s7 = scalar_select 0, %s6, %s4
  // Predicated region
  $region2: #{alexlike_forward.29} parent=0 // pred_check
    _
  $region3: #{alexlike_forward.29} parent=0 // pred_check_branch
    %9 = sbr.rel (0) target = $region5
  $region4: #{alexlike_forward.29} parent=0 // pred_region
    _
  $region5: #{alexlike_forward.29} parent=0 // pred_fallthru
    _
  // Predicated region
  $region6: #{alexlike_forward.29} parent=0 // pred_check
    _
  $region7: #{alexlike_forward.29} parent=0 // pred_check_branch
    %11 = sbr.rel (0) target = $region9
  $region8: #{alexlike_forward.29} parent=0 // pred_region
    _
  $region9: #{alexlike_forward.29} parent=0 // pred_fallthru
    _
  // Predicated region
  $region10: #{alexlike_forward.29} parent=0 // pred_check
    _
  $region11: #{alexlike_forward.29} parent=0 // pred_check_branch
    %13 = sbr.rel (0) target = $region13
  $region12: #{alexlike_forward.29} parent=0 // pred_region
    _
  $region13: #{alexlike_forward.29} parent=0 // pred_fallthru
    _
  %v14 = vld [vmem:[%s0] sm:$0xff]
  %v15 = vld [vmem:[%s0 + $0x8] sm:$0xff]
  %v16 = vld [vmem:[%s1] sm:$0xf]
  %v17 = vld [vmem:[%s1 + $0x4] sm:$0xf]
  %v18 = vld [vmem:[%s1 + $0x8] sm:$0xf]
  %v19 = vld [vmem:[%s1 + $0xc] sm:$0xf]
  %v20 = vld [vmem:[%s1 + $0x10] sm:$0xf]
  %v21 = vld [vmem:[%s1 + $0x14] sm:$0xf]
  %v22 = vld [vmem:[%s1 + $0x18] sm:$0xf]
  %v23 = vld [vmem:[%s1 + $0x1c] sm:$0xf]
  %v24 = vld [vmem:[%s1 + $0x20] sm:$0xf]
  %v25 = vld [vmem:[%s1 + $0x24] sm:$0xf]
  %v26 = vld [vmem:[%s1 + $0x28] sm:$0xf]
  %v27 = vld [vmem:[%s1 + $0x2c] sm:$0xf]
  %v28 = vld [vmem:[%s1 + $0x30] sm:$0xf]
  %v29 = vld [vmem:[%s1 + $0x34] sm:$0xf]
  %v30 = vld [vmem:[%s1 + $0x38] sm:$0xf]
  %v31 = vld [vmem:[%s1 + $0x3c] sm:$0xf]
  %v32 = vld [vmem:[%s1 + $0x40] sm:$0xf]
  %v33 = vld [vmem:[%s1 + $0x44] sm:$0xf]
  %v34 = vld [vmem:[%s1 + $0x48] sm:$0xf]
  %v35 = vld [vmem:[%s1 + $0x4c] sm:$0xf]
  %v36 = vld [vmem:[%s1 + $0x50] sm:$0xf]
  %v37 = vld [vmem:[%s1 + $0x54] sm:$0xf]
  %v38 = vld [vmem:[%s1 + $0x58] sm:$0xf]
  %v39 = vld [vmem:[%s1 + $0x5c] sm:$0xf]
  %v40 = vld [vmem:[%s1 + $0x60] sm:$0xf]
  %v41 = vld [vmem:[%s1 + $0x64] sm:$0xf]
  %v42 = vld [vmem:[%s1 + $0x68] sm:$0xf]
  %v43 = vld [vmem:[%s1 + $0x6c] sm:$0xf]
  %v44 = vld [vmem:[%s1 + $0x70] sm:$0xf]
  %v45 = vld [vmem:[%s1 + $0x74] sm:$0xf]
  %v46 = vld [vmem:[%s1 + $0x78] sm:$0xf]
  %v47 = vld [vmem:[%s1 + $0x7c] sm:$0xf]
  %v48 = vld [vmem:[%s2] sm:$0x1]
  %v50 = vperm.slane %v48, 0
  %v54 = vunpack.c.l.b16 %v14
  %v55 = vunpack.c.h.b16 %v14
  %v56 = vunpack.c.l.b16 %v15
  %v57 = vunpack.c.h.b16 %v15
  %v58 = vpack.c.b16 %v56, %v54
  %v59 = vpack.c.b16 %v57, %v55
  %v94 = vunpack.c.l.b16 %v16
  %v95 = vunpack.c.l.b16 %v17
  %v96 = vunpack.c.l.b16 %v18
  %v97 = vunpack.c.l.b16 %v19
  %v98 = vunpack.c.l.b16 %v20
  %v99 = vunpack.c.l.b16 %v21
  %v100 = vunpack.c.l.b16 %v22
  %v101 = vunpack.c.l.b16 %v23
  %v102 = vunpack.c.l.b16 %v24
  %v103 = vunpack.c.l.b16 %v25
  %v104 = vunpack.c.l.b16 %v26
  %v105 = vunpack.c.l.b16 %v27
  %v106 = vunpack.c.l.b16 %v28
  %v107 = vunpack.c.l.b16 %v29
  %v108 = vunpack.c.l.b16 %v30
  %v109 = vunpack.c.l.b16 %v31
  %v110 = vunpack.c.l.b16 %v32
  %v111 = vunpack.c.l.b16 %v33
  %v112 = vunpack.c.l.b16 %v34
  %v113 = vunpack.c.l.b16 %v35
  %v114 = vunpack.c.l.b16 %v36
  %v115 = vunpack.c.l.b16 %v37
  %v116 = vunpack.c.l.b16 %v38
  %v117 = vunpack.c.l.b16 %v39
  %v118 = vunpack.c.l.b16 %v40
  %v119 = vunpack.c.l.b16 %v41
  %v120 = vunpack.c.l.b16 %v42
  %v121 = vunpack.c.l.b16 %v43
  %v122 = vunpack.c.l.b16 %v44
  %v123 = vunpack.c.l.b16 %v45
  %v124 = vunpack.c.l.b16 %v46
  %v125 = vunpack.c.l.b16 %v47
  %v126 = vpack.c.b16 %v95, %v94
  %v127 = vpack.c.b16 %v97, %v96
  %v128 = vpack.c.b16 %v99, %v98
  %v129 = vpack.c.b16 %v101, %v100
  %v130 = vpack.c.b16 %v103, %v102
  %v131 = vpack.c.b16 %v105, %v104
  %v132 = vpack.c.b16 %v107, %v106
  %v133 = vpack.c.b16 %v109, %v108
  %v134 = vpack.c.b16 %v111, %v110
  %v135 = vpack.c.b16 %v113, %v112
  %v136 = vpack.c.b16 %v115, %v114
  %v137 = vpack.c.b16 %v117, %v116
  %v138 = vpack.c.b16 %v119, %v118
  %v139 = vpack.c.b16 %v121, %v120
  %v140 = vpack.c.b16 %v123, %v122
  %v141 = vpack.c.b16 %v125, %v124
  %158 = vmatpush.bf16.msra.mxu0 %v133
  %159 = vmatpush.bf16.msra.mxu0 %v132
  %160 = vmatpush.bf16.msra.mxu0 %v131
  %161 = vmatpush.bf16.msra.mxu0 %v130
  %162 = vmatpush.bf16.msra.mxu0 %v129
  %163 = vmatpush.bf16.msra.mxu0 %v128
  %164 = vmatpush.bf16.msra.mxu0 %v127
  %165 = vmatpush.bf16.msra.mxu0 %v126
  %166 = vmatmul.bf16.gmra.mxu0 %v58
  %v167 = vpop.f32.mrf.mxu0
  %v168 = vadd.f32 %v50, %v167
  %v169 = vpop.f32.mrf.mxu0
  %v170 = vadd.f32 %v50, %v169
  %171 = vdwg.mxu0
  %172 = vmatpush.bf16.msra.mxu0 %v141
  %173 = vmatpush.bf16.msra.mxu0 %v140
  %174 = vmatpush.bf16.msra.mxu0 %v139
  %175 = vmatpush.bf16.msra.mxu0 %v138
  %176 = vmatpush.bf16.msra.mxu0 %v137
  %177 = vmatpush.bf16.msra.mxu0 %v136
  %178 = vmatpush.bf16.msra.mxu0 %v135
  %179 = vmatpush.bf16.msra.mxu0 %v134
  %180 = vmatmul.bf16.gmra.mxu0 %v59
  %v181 = vpop.f32.mrf.mxu0
  %v182 = vadd.f32 %v168, %v181
  %v183 = vpop.f32.mrf.mxu0
  %v184 = vadd.f32 %v170, %v183
  %185 = vdwg.mxu0
  %v186 = vmax.f32 %v182, 0.0
  %v187 = vmax.f32 %v184, 0.0
  %188 = vst [vmem:[%s3] sm:$0xff] %v186
  %189 = vst [vmem:[%s3 + $0x8] sm:$0xff] %v187
  // Predicated region
  $region14: #{alexlike_forward.29} parent=0 // pred_check
    _
  $region15: #{alexlike_forward.29} parent=0 // pred_check_branch
    %191 = sbr.rel (0) target = $region17
  $region16: #{alexlike_forward.29} parent=0 // pred_region
    _
  $region17: #{alexlike_forward.29} parent=0 // pred_fallthru
    _
  // Predicated region
  $region18: #{alexlike_forward.29} parent=0 // pred_check
    _
  $region19: #{alexlike_forward.29} parent=0 // pred_check_branch
    %193 = sbr.rel (0) target = $region21
  $region20: #{alexlike_forward.29} parent=0 // pred_region
    _
  $region21: #{alexlike_forward.29} parent=0 // pred_fallthru
    _

// kernel: alexlike_forward.25
$region0: #{alexlike_forward.25}
  #allocation0 [shape = 'u32[]', space=smem, size = 0x4, offset = 0x4, fixed_abs, tag = 'smem constant byte address 0x4 - core index']
  #allocation1 [shape = 'u32[72,128]{1,0:T(1,128)}', space=vmem, size = 0x9000, scoped, tag = 'internal scratch']
  %s0 = inlined_call_operand.vmem [shape: bf16[32,1792], index: 0, kind: input, shape index: {}]
  %s1 = inlined_call_operand.vmem [shape: bf16[1792,128], index: 1, kind: input, shape index: {}]
  %s2 = inlined_call_operand.vmem [shape: f32[1,128], index: 2, kind: input, shape index: {}]
  %s3 = inlined_call_operand.vmem [shape: f32[32,128], index: 3, kind: output, shape index: {}]
  %s4 = sld [smem:[#allocation0]]
  $region22: #{alexlike_forward.25} parent=0
    _
  %s6 = ssub.s32 1, %s4
  %s7 = scalar_select 0, %s6, %s4
  // Predicated region
  $region2: #{alexlike_forward.25} parent=0 // pred_check
    _
  $region3: #{alexlike_forward.25} parent=0 // pred_check_branch
    %9 = sbr.rel (0) target = $region5
  $region4: #{alexlike_forward.25} parent=0 // pred_region
    _
  $region5: #{alexlike_forward.25} parent=0 // pred_fallthru
    _
  // Predicated region
  $region6: #{alexlike_forward.25} parent=0 // pred_check
    _
  $region7: #{alexlike_forward.25} parent=0 // pred_check_branch
    %11 = sbr.rel (0) target = $region9
  $region8: #{alexlike_forward.25} parent=0 // pred_region
    _
  $region9: #{alexlike_forward.25} parent=0 // pred_fallthru
    _
  // Predicated region
  $region10: #{alexlike_forward.25} parent=0 // pred_check
    _
  $region11: #{alexlike_forward.25} parent=0 // pred_check_branch
    %13 = sbr.rel (0) target = $region13
  $region12: #{alexlike_forward.25} parent=0 // pred_region
    _
  $region13: #{alexlike_forward.25} parent=0 // pred_fallthru
    _
  %v14 = vld [vmem:[%s0] sm:$0xff]
  %v15 = vld [vmem:[%s0 + $0x8] sm:$0xff]
  %v16 = vld [vmem:[%s0 + $0x10] sm:$0xff]
  %v17 = vld [vmem:[%s0 + $0x18] sm:$0xff]
  %v18 = vld [vmem:[%s0 + $0x20] sm:$0xff]
  %v19 = vld [vmem:[%s0 + $0x28] sm:$0xff]
  %v20 = vld [vmem:[%s0 + $0x30] sm:$0xff]
  %v21 = vld [vmem:[%s0 + $0x38] sm:$0xff]
  %v22 = vld [vmem:[%s0 + $0x40] sm:$0xff]
  %v23 = vld [vmem:[%s0 + $0x48] sm:$0xff]
  %v24 = vld [vmem:[%s0 + $0x50] sm:$0xff]
  %v25 = vld [vmem:[%s0 + $0x58] sm:$0xff]
  %v26 = vld [vmem:[%s0 + $0x60] sm:$0xff]
  %v27 = vld [vmem:[%s0 + $0x68] sm:$0xff]
  %v28 = vld [vmem:[%s0 + $0x70] sm:$0xff]
  %v29 = vld [vmem:[%s0 + $0x78] sm:$0xff]
  %v30 = vld [vmem:[%s0 + $0x80] sm:$0xff]
  %v31 = vld [vmem:[%s0 + $0x88] sm:$0xff]
  %v32 = vld [vmem:[%s0 + $0x90] sm:$0xff]
  %v33 = vld [vmem:[%s0 + $0x98] sm:$0xff]
  %v34 = vld [vmem:[%s0 + $0xa0] sm:$0xff]
  %v35 = vld [vmem:[%s0 + $0xa8] sm:$0xff]
  %v36 = vld [vmem:[%s0 + $0xb0] sm:$0xff]
  %v37 = vld [vmem:[%s0 + $0xb8] sm:$0xff]
  %v38 = vld [vmem:[%s0 + $0xc0] sm:$0xff]
  %v39 = vld [vmem:[%s0 + $0xc8] sm:$0xff]
  %v40 = vld [vmem:[%s0 + $0xd0] sm:$0xff]
  %v41 = vld [vmem:[%s0 + $0xd8] sm:$0xff]
  %v42 = vld [vmem:[%s1] sm:$0xf]
  %v43 = vld [vmem:[%s1 + $0x4] sm:$0xf]
  %v44 = vld [vmem:[%s1 + $0x8] sm:$0xf]
  %v45 = vld [vmem:[%s1 + $0xc] sm:$0xf]
  %v46 = vld [vmem:[%s1 + $0x10] sm:$0xf]
  %v47 = vld [vmem:[%s1 + $0x14] sm:$0xf]
  %v48 = vld [vmem:[%s1 + $0x18] sm:$0xf]
  %v49 = vld [vmem:[%s1 + $0x1c] sm:$0xf]
  %v50 = vld [vmem:[%s1 + $0x20] sm:$0xf]
  %v51 = vld [vmem:[%s1 + $0x24] sm:$0xf]
  %v52 = vld [vmem:[%s1 + $0x28] sm:$0xf]
  %v53 = vld [vmem:[%s1 + $0x2c] sm:$0xf]
  %v54 = vld [vmem:[%s1 + $0x30] sm:$0xf]
  %v55 = vld [vmem:[%s1 + $0x34] sm:$0xf]
  %v56 = vld [vmem:[%s1 + $0x38] sm:$0xf]
  %v57 = vld [vmem:[%s1 + $0x3c] sm:$0xf]
  %v58 = vld [vmem:[%s1 + $0x40] sm:$0xf]
  %v59 = vld [vmem:[%s1 + $0x44] sm:$0xf]
  %v60 = vld [vmem:[%s1 + $0x48] sm:$0xf]
  %v61 = vld [vmem:[%s1 + $0x4c] sm:$0xf]
  %v62 = vld [vmem:[%s1 + $0x50] sm:$0xf]
  %v63 = vld [vmem:[%s1 + $0x54] sm:$0xf]
  %v64 = vld [vmem:[%s1 + $0x58] sm:$0xf]
  %v65 = vld [vmem:[%s1 + $0x5c] sm:$0xf]
  %v66 = vld [vmem:[%s1 + $0x60] sm:$0xf]
  %v67 = vld [vmem:[%s1 + $0x64] sm:$0xf]
  %v68 = vld [vmem:[%s1 + $0x68] sm:$0xf]
  %v69 = vld [vmem:[%s1 + $0x6c] sm:$0xf]
  %v70 = vld [vmem:[%s1 + $0x70] sm:$0xf]
  %v71 = vld [vmem:[%s1 + $0x74] sm:$0xf]
  %v72 = vld [vmem:[%s1 + $0x78] sm:$0xf]
  %v73 = vld [vmem:[%s1 + $0x7c] sm:$0xf]
  %v74 = vld [vmem:[%s1 + $0x80] sm:$0xf]
  %v75 = vld [vmem:[%s1 + $0x84] sm:$0xf]
  %v76 = vld [vmem:[%s1 + $0x88] sm:$0xf]
  %v77 = vld [vmem:[%s1 + $0x8c] sm:$0xf]
  %v78 = vld [vmem:[%s1 + $0x90] sm:$0xf]
  %v79 = vld [vmem:[%s1 + $0x94] sm:$0xf]
  %v80 = vld [vmem:[%s1 + $0x98] sm:$0xf]
  %v81 = vld [vmem:[%s1 + $0x9c] sm:$0xf]
  %v82 = vld [vmem:[%s1 + $0xa0] sm:$0xf]
  %v83 = vld [vmem:[%s1 + $0xa4] sm:$0xf]
  %v84 = vld [vmem:[%s1 + $0xa8] sm:$0xf]
  %v85 = vld [vmem:[%s1 + $0xac] sm:$0xf]
  %v86 = vld [vmem:[%s1 + $0xb0] sm:$0xf]
  %v87 = vld [vmem:[%s1 + $0xb4] sm:$0xf]
  %v88 = vld [vmem:[%s1 + $0xb8] sm:$0xf]
  %v89 = vld [vmem:[%s1 + $0xbc] sm:$0xf]
  %v90 = vld [vmem:[%s1 + $0xc0] sm:$0xf]
  %v91 = vld [vmem:[%s1 + $0xc4] sm:$0xf]
  %v92 = vld [vmem:[%s1 + $0xc8] sm:$0xf]
  %v93 = vld [vmem:[%s1 + $0xcc] sm:$0xf]
  %v94 = vld [vmem:[%s1 + $0xd0] sm:$0xf]
  %v95 = vld [vmem:[%s1 + $0xd4] sm:$0xf]
  %v96 = vld [vmem:[%s1 + $0xd8] sm:$0xf]
  %v97 = vld [vmem:[%s1 + $0xdc] sm:$0xf]
  %v98 = vld [vmem:[%s1 + $0xe0] sm:$0xf]
  %v99 = vld [vmem:[%s1 + $0xe4] sm:$0xf]
  %v100 = vld [vmem:[%s1 + $0xe8] sm:$0xf]
  %v101 = vld [vmem:[%s1 + $0xec] sm:$0xf]
  %v102 = vld [vmem:[%s1 + $0xf0] sm:$0xf]
  %v103 = vld [vmem:[%s1 + $0xf4] sm:$0xf]
  %v104 = vld [vmem:[%s1 + $0xf8] sm:$0xf]
  %v105 = vld [vmem:[%s1 + $0xfc] sm:$0xf]
  %v106 = vld [vmem:[%s1 + $0x100] sm:$0xf]
  %v107 = vld [vmem:[%s1 + $0x104] sm:$0xf]
  %v108 = vld [vmem:[%s1 + $0x108] sm:$0xf]
  %v109 = vld [vmem:[%s1 + $0x10c] sm:$0xf]
  %v110 = vld [vmem:[%s1 + $0x110] sm:$0xf]
  %v111 = vld [vmem:[%s1 + $0x114] sm:$0xf]
  %v112 = vld [vmem:[%s1 + $0x118] sm:$0xf]
  %v113 = vld [vmem:[%s1 + $0x11c] sm:$0xf]
  %v114 = vld [vmem:[%s1 + $0x120] sm:$0xf]
  %v115 = vld [vmem:[%s1 + $0x124] sm:$0xf]
  %v116 = vld [vmem:[%s1 + $0x128] sm:$0xf]
  %v117 = vld [vmem:[%s1 + $0x12c] sm:$0xf]
  %v118 = vld [vmem:[%s1 + $0x130] sm:$0xf]
  %v119 = vld [vmem:[%s1 + $0x134] sm:$0xf]
  %v120 = vld [vmem:[%s1 + $0x138] sm:$0xf]
  %v121 = vld [vmem:[%s1 + $0x13c] sm:$0xf]
  %v122 = vld [vmem:[%s1 + $0x140] sm:$0xf]
  %v123 = vld [vmem:[%s1 + $0x144] sm:$0xf]
  %v124 = vld [vmem:[%s1 + $0x148] sm:$0xf]
  %v125 = vld [vmem:[%s1 + $0x14c] sm:$0xf]
  %v126 = vld [vmem:[%s1 + $0x150] sm:$0xf]
  %v127 = vld [vmem:[%s1 + $0x154] sm:$0xf]
  %v128 = vld [vmem:[%s1 + $0x158] sm:$0xf]
  %v129 = vld [vmem:[%s1 + $0x15c] sm:$0xf]
  %v130 = vld [vmem:[%s1 + $0x160] sm:$0xf]
  %v131 = vld [vmem:[%s1 + $0x164] sm:$0xf]
  %v132 = vld [vmem:[%s1 + $0x168] sm:$0xf]
  %v133 = vld [vmem:[%s1 + $0x16c] sm:$0xf]
  %v134 = vld [vmem:[%s1 + $0x170] sm:$0xf]
  %v135 = vld [vmem:[%s1 + $0x174] sm:$0xf]
  %v136 = vld [vmem:[%s1 + $0x178] sm:$0xf]
  %v137 = vld [vmem:[%s1 + $0x17c] sm:$0xf]
  %v138 = vld [vmem:[%s1 + $0x180] sm:$0xf]
  %v139 = vld [vmem:[%s1 + $0x184] sm:$0xf]
  %v140 = vld [vmem:[%s1 + $0x188] sm:$0xf]
  %v141 = vld [vmem:[%s1 + $0x18c] sm:$0xf]
  %v142 = vld [vmem:[%s1 + $0x190] sm:$0xf]
  %v143 = vld [vmem:[%s1 + $0x194] sm:$0xf]
  %v144 = vld [vmem:[%s1 + $0x198] sm:$0xf]
  %v145 = vld [vmem:[%s1 + $0x19c] sm:$0xf]
  %v146 = vld [vmem:[%s1 + $0x1a0] sm:$0xf]
  %v147 = vld [vmem:[%s1 + $0x1a4] sm:$0xf]
  %v148 = vld [vmem:[%s1 + $0x1a8] sm:$0xf]
  %v149 = vld [vmem:[%s1 + $0x1ac] sm:$0xf]
  %v150 = vld [vmem:[%s1 + $0x1b0] sm:$0xf]
  %v151 = vld [vmem:[%s1 + $0x1b4] sm:$0xf]
  %v152 = vld [vmem:[%s1 + $0x1b8] sm:$0xf]
  %v153 = vld [vmem:[%s1 + $0x1bc] sm:$0xf]
  %v154 = vld [vmem:[%s1 + $0x1c0] sm:$0xf]
  %v155 = vld [vmem:[%s1 + $0x1c4] sm:$0xf]
  %v156 = vld [vmem:[%s1 + $0x1c8] sm:$0xf]
  %v157 = vld [vmem:[%s1 + $0x1cc] sm:$0xf]
  %v158 = vld [vmem:[%s1 + $0x1d0] sm:$0xf]
  %v159 = vld [vmem:[%s1 + $0x1d4] sm:$0xf]
  %v160 = vld [vmem:[%s1 + $0x1d8] sm:$0xf]
  %v161 = vld [vmem:[%s1 + $0x1dc] sm:$0xf]
  %v162 = vld [vmem:[%s1 + $0x1e0] sm:$0xf]
  %v163 = vld [vmem:[%s1 + $0x1e4] sm:$0xf]
  %v164 = vld [vmem:[%s1 + $0x1e8] sm:$0xf]
  %v165 = vld [vmem:[%s1 + $0x1ec] sm:$0xf]
  %v166 = vld [vmem:[%s1 + $0x1f0] sm:$0xf]
  %v167 = vld [vmem:[%s1 + $0x1f4] sm:$0xf]
  %v168 = vld [vmem:[%s1 + $0x1f8] sm:$0xf]
  %v169 = vld [vmem:[%s1 + $0x1fc] sm:$0xf]
  %v170 = vld [vmem:[%s1 + $0x200] sm:$0xf]
  %v171 = vld [vmem:[%s1 + $0x204] sm:$0xf]
  %v172 = vld [vmem:[%s1 + $0x208] sm:$0xf]
  %v173 = vld [vmem:[%s1 + $0x20c] sm:$0xf]
  %v174 = vld [vmem:[%s1 + $0x210] sm:$0xf]
  %v175 = vld [vmem:[%s1 + $0x214] sm:$0xf]
  %v176 = vld [vmem:[%s1 + $0x218] sm:$0xf]
  %v177 = vld [vmem:[%s1 + $0x21c] sm:$0xf]
  %v178 = vld [vmem:[%s1 + $0x220] sm:$0xf]
  %v179 = vld [vmem:[%s1 + $0x224] sm:$0xf]
  %v180 = vld [vmem:[%s1 + $0x228] sm:$0xf]
  %v181 = vld [vmem:[%s1 + $0x22c] sm:$0xf]
  %v182 = vld [vmem:[%s1 + $0x230] sm:$0xf]
  %v183 = vld [vmem:[%s1 + $0x234] sm:$0xf]
  %v184 = vld [vmem:[%s1 + $0x238] sm:$0xf]
  %v185 = vld [vmem:[%s1 + $0x23c] sm:$0xf]
  %v186 = vld [vmem:[%s1 + $0x240] sm:$0xf]
  %v187 = vld [vmem:[%s1 + $0x244] sm:$0xf]
  %v188 = vld [vmem:[%s1 + $0x248] sm:$0xf]
  %v189 = vld [vmem:[%s1 + $0x24c] sm:$0xf]
  %v190 = vld [vmem:[%s1 + $0x250] sm:$0xf]
  %v191 = vld [vmem:[%s1 + $0x254] sm:$0xf]
  %v192 = vld [vmem:[%s1 + $0x258] sm:$0xf]
  %v193 = vld [vmem:[%s1 + $0x25c] sm:$0xf]
  %v194 = vld [vmem:[%s1 + $0x260] sm:$0xf]
  %v195 = vld [vmem:[%s1 + $0x264] sm:$0xf]
  %v196 = vld [vmem:[%s1 + $0x268] sm:$0xf]
  %v197 = vld [vmem:[%s1 + $0x26c] sm:$0xf]
  %v198 = vld [vmem:[%s1 + $0x270] sm:$0xf]
  %v199 = vld [vmem:[%s1 + $0x274] sm:$0xf]
  %v200 = vld [vmem:[%s1 + $0x278] sm:$0xf]
  %v201 = vld [vmem:[%s1 + $0x27c] sm:$0xf]
  %v202 = vld [vmem:[%s1 + $0x280] sm:$0xf]
  %v203 = vld [vmem:[%s1 + $0x284] sm:$0xf]
  %v204 = vld [vmem:[%s1 + $0x288] sm:$0xf]
  %v205 = vld [vmem:[%s1 + $0x28c] sm:$0xf]
  %v206 = vld [vmem:[%s1 + $0x290] sm:$0xf]
  %v207 = vld [vmem:[%s1 + $0x294] sm:$0xf]
  %v208 = vld [vmem:[%s1 + $0x298] sm:$0xf]
  %v209 = vld [vmem:[%s1 + $0x29c] sm:$0xf]
  %v210 = vld [vmem:[%s1 + $0x2a0] sm:$0xf]
  %v211 = vld [vmem:[%s1 + $0x2a4] sm:$0xf]
  %v212 = vld [vmem:[%s1 + $0x2a8] sm:$0xf]
  %v213 = vld [vmem:[%s1 + $0x2ac] sm:$0xf]
  %v214 = vld [vmem:[%s1 + $0x2b0] sm:$0xf]
  %v215 = vld [vmem:[%s1 + $0x2b4] sm:$0xf]
  %v216 = vld [vmem:[%s1 + $0x2b8] sm:$0xf]
  %v217 = vld [vmem:[%s1 + $0x2bc] sm:$0xf]
  %v218 = vld [vmem:[%s1 + $0x2c0] sm:$0xf]
  %v219 = vld [vmem:[%s1 + $0x2c4] sm:$0xf]
  %v220 = vld [vmem:[%s1 + $0x2c8] sm:$0xf]
  %v221 = vld [vmem:[%s1 + $0x2cc] sm:$0xf]
  %v222 = vld [vmem:[%s1 + $0x2d0] sm:$0xf]
  %v223 = vld [vmem:[%s1 + $0x2d4] sm:$0xf]
  %v224 = vld [vmem:[%s1 + $0x2d8] sm:$0xf]
  %v225 = vld [vmem:[%s1 + $0x2dc] sm:$0xf]
  %v226 = vld [vmem:[%s1 + $0x2e0] sm:$0xf]
  %v227 = vld [vmem:[%s1 + $0x2e4] sm:$0xf]
  %v228 = vld [vmem:[%s1 + $0x2e8] sm:$0xf]
  %v229 = vld [vmem:[%s1 + $0x2ec] sm:$0xf]
  %v230 = vld [vmem:[%s1 + $0x2f0] sm:$0xf]
  %v231 = vld [vmem:[%s1 + $0x2f4] sm:$0xf]
  %v232 = vld [vmem:[%s1 + $0x2f8] sm:$0xf]
  %v233 = vld [vmem:[%s1 + $0x2fc] sm:$0xf]
  %v234 = vld [vmem:[%s1 + $0x300] sm:$0xf]
  %v235 = vld [vmem:[%s1 + $0x304] sm:$0xf]
  %v236 = vld [vmem:[%s1 + $0x308] sm:$0xf]
  %v237 = vld [vmem:[%s1 + $0x30c] sm:$0xf]
  %v238 = vld [vmem:[%s1 + $0x310] sm:$0xf]
  %v239 = vld [vmem:[%s1 + $0x314] sm:$0xf]
  %v240 = vld [vmem:[%s1 + $0x318] sm:$0xf]
  %v241 = vld [vmem:[%s1 + $0x31c] sm:$0xf]
  %v242 = vld [vmem:[%s1 + $0x320] sm:$0xf]
  %v243 = vld [vmem:[%s1 + $0x324] sm:$0xf]
  %v244 = vld [vmem:[%s1 + $0x328] sm:$0xf]
  %v245 = vld [vmem:[%s1 + $0x32c] sm:$0xf]
  %v246 = vld [vmem:[%s1 + $0x330] sm:$0xf]
  %v247 = vld [vmem:[%s1 + $0x334] sm:$0xf]
  %v248 = vld [vmem:[%s1 + $0x338] sm:$0xf]
  %v249 = vld [vmem:[%s1 + $0x33c] sm:$0xf]
  %v250 = vld [vmem:[%s1 + $0x340] sm:$0xf]
  %v251 = vld [vmem:[%s1 + $0x344] sm:$0xf]
  %v252 = vld [vmem:[%s1 + $0x348] sm:$0xf]
  %v253 = vld [vmem:[%s1 + $0x34c] sm:$0xf]
  %v254 = vld [vmem:[%s1 + $0x350] sm:$0xf]
  %v255 = vld [vmem:[%s1 + $0x354] sm:$0xf]
  %v256 = vld [vmem:[%s1 + $0x358] sm:$0xf]
  %v257 = vld [vmem:[%s1 + $0x35c] sm:$0xf]
  %v258 = vld [vmem:[%s1 + $0x360] sm:$0xf]
  %v259 = vld [vmem:[%s1 + $0x364] sm:$0xf]
  %v260 = vld [vmem:[%s1 + $0x368] sm:$0xf]
  %v261 = vld [vmem:[%s1 + $0x36c] sm:$0xf]
  %v262 = vld [vmem:[%s1 + $0x370] sm:$0xf]
  %v263 = vld [vmem:[%s1 + $0x374] sm:$0xf]
  %v264 = vld [vmem:[%s1 + $0x378] sm:$0xf]
  %v265 = vld [vmem:[%s1 + $0x37c] sm:$0xf]
  %v266 = vld [vmem:[%s2] sm:$0x1]
  %v268 = vperm.slane %v266, 0
  %v298 = vunpack.c.l.b16 %v14
  %v299 = vunpack.c.h.b16 %v14
  %v300 = vunpack.c.l.b16 %v15
  %v301 = vunpack.c.h.b16 %v15
  %v302 = vunpack.c.l.b16 %v16
  %v303 = vunpack.c.h.b16 %v16
  %v304 = vunpack.c.l.b16 %v17
  %v305 = vunpack.c.h.b16 %v17
  %v306 = vunpack.c.l.b16 %v18
  %v307 = vunpack.c.h.b16 %v18
  %v308 = vunpack.c.l.b16 %v19
  %v309 = vunpack.c.h.b16 %v19
  %v310 = vunpack.c.l.b16 %v20
  %v311 = vunpack.c.h.b16 %v20
  %v312 = vunpack.c.l.b16 %v21
  %v313 = vunpack.c.h.b16 %v21
  %v314 = vunpack.c.l.b16 %v22
  %v315 = vunpack.c.h.b16 %v22
  %v316 = vunpack.c.l.b16 %v23
  %v317 = vunpack.c.h.b16 %v23
  %v318 = vunpack.c.l.b16 %v24
  %v319 = vunpack.c.h.b16 %v24
  %v320 = vunpack.c.l.b16 %v25
  %v321 = vunpack.c.h.b16 %v25
  %v322 = vunpack.c.l.b16 %v26
  %v323 = vunpack.c.h.b16 %v26
  %v324 = vunpack.c.l.b16 %v27
  %v325 = vunpack.c.h.b16 %v27
  %v326 = vunpack.c.l.b16 %v28
  %v327 = vunpack.c.h.b16 %v28
  %v328 = vunpack.c.l.b16 %v29
  %v329 = vunpack.c.h.b16 %v29
  %v330 = vunpack.c.l.b16 %v30
  %v331 = vunpack.c.h.b16 %v30
  %v332 = vunpack.c.l.b16 %v31
  %v333 = vunpack.c.h.b16 %v31
  %v334 = vunpack.c.l.b16 %v32
  %v335 = vunpack.c.h.b16 %v32
  %v336 = vunpack.c.l.b16 %v33
  %v337 = vunpack.c.h.b16 %v33
  %v338 = vunpack.c.l.b16 %v34
  %v339 = vunpack.c.h.b16 %v34
  %v340 = vunpack.c.l.b16 %v35
  %v341 = vunpack.c.h.b16 %v35
  %v342 = vunpack.c.l.b16 %v36
  %v343 = vunpack.c.h.b16 %v36
  %v344 = vunpack.c.l.b16 %v37
  %v345 = vunpack.c.h.b16 %v37
  %v346 = vunpack.c.l.b16 %v38
  %v347 = vunpack.c.h.b16 %v38
  %v348 = vunpack.c.l.b16 %v39
  %v349 = vunpack.c.h.b16 %v39
  %v350 = vunpack.c.l.b16 %v40
  %v351 = vunpack.c.h.b16 %v40
  %v352 = vunpack.c.l.b16 %v41
  %v353 = vunpack.c.h.b16 %v41
  %v354 = vpack.c.b16 %v312, %v298
  %v355 = vpack.c.b16 %v313, %v299
  %v356 = vpack.c.b16 %v314, %v300
  %v357 = vpack.c.b16 %v315, %v301
  %v358 = vpack.c.b16 %v316, %v302
  %v359 = vpack.c.b16 %v317, %v303
  %v360 = vpack.c.b16 %v318, %v304
  %v361 = vpack.c.b16 %v319, %v305
  %v362 = vpack.c.b16 %v320, %v306
  %v363 = vpack.c.b16 %v321, %v307
  %v364 = vpack.c.b16 %v322, %v308
  %v365 = vpack.c.b16 %v323, %v309
  %v366 = vpack.c.b16 %v324, %v310
  %v367 = vpack.c.b16 %v325, %v311
  %v368 = vpack.c.b16 %v340, %v326
  %v369 = vpack.c.b16 %v341, %v327
  %v370 = vpack.c.b16 %v342, %v328
  %v371 = vpack.c.b16 %v343, %v329
  %v372 = vpack.c.b16 %v344, %v330
  %v373 = vpack.c.b16 %v345, %v331
  %v374 = vpack.c.b16 %v346, %v332
  %v375 = vpack.c.b16 %v347, %v333
  %v376 = vpack.c.b16 %v348, %v334
  %v377 = vpack.c.b16 %v349, %v335
  %v378 = vpack.c.b16 %v350, %v336
  %v379 = vpack.c.b16 %v351, %v337
  %v380 = vpack.c.b16 %v352, %v338
  %v381 = vpack.c.b16 %v353, %v339
  %v634 = vunpack.c.l.b16 %v42
  %v635 = vunpack.c.l.b16 %v43
  %v636 = vunpack.c.l.b16 %v44
  %v637 = vunpack.c.l.b16 %v45
  %v638 = vunpack.c.l.b16 %v46
  %v639 = vunpack.c.l.b16 %v47
  %v640 = vunpack.c.l.b16 %v48
  %v641 = vunpack.c.l.b16 %v49
  %v642 = vunpack.c.l.b16 %v50
  %v643 = vunpack.c.l.b16 %v51
  %v644 = vunpack.c.l.b16 %v52
  %v645 = vunpack.c.l.b16 %v53
  %v646 = vunpack.c.l.b16 %v54
  %v647 = vunpack.c.l.b16 %v55
  %v648 = vunpack.c.l.b16 %v56
  %v649 = vunpack.c.l.b16 %v57
  %v650 = vunpack.c.l.b16 %v58
  %v651 = vunpack.c.l.b16 %v59
  %v652 = vunpack.c.l.b16 %v60
  %v653 = vunpack.c.l.b16 %v61
  %v654 = vunpack.c.l.b16 %v62
  %v655 = vunpack.c.l.b16 %v63
  %v656 = vunpack.c.l.b16 %v64
  %v657 = vunpack.c.l.b16 %v65
  %v658 = vunpack.c.l.b16 %v66
  %v659 = vunpack.c.l.b16 %v67
  %v660 = vunpack.c.l.b16 %v68
  %v661 = vunpack.c.l.b16 %v69
  %v662 = vunpack.c.l.b16 %v70
  %v663 = vunpack.c.l.b16 %v71
  %v664 = vunpack.c.l.b16 %v72
  %v665 = vunpack.c.l.b16 %v73
  %v666 = vunpack.c.l.b16 %v74
  %v667 = vunpack.c.l.b16 %v75
  %v668 = vunpack.c.l.b16 %v76
  %v669 = vunpack.c.l.b16 %v77
  %v670 = vunpack.c.l.b16 %v78
  %v671 = vunpack.c.l.b16 %v79
  %v672 = vunpack.c.l.b16 %v80
  %v673 = vunpack.c.l.b16 %v81
  %v674 = vunpack.c.l.b16 %v82
  %v675 = vunpack.c.l.b16 %v83
  %v676 = vunpack.c.l.b16 %v84
  %v677 = vunpack.c.l.b16 %v85
  %v678 = vunpack.c.l.b16 %v86
  %v679 = vunpack.c.l.b16 %v87
  %v680 = vunpack.c.l.b16 %v88
  %v681 = vunpack.c.l.b16 %v89
  %v682 = vunpack.c.l.b16 %v90
  %v683 = vunpack.c.l.b16 %v91
  %v684 = vunpack.c.l.b16 %v92
  %v685 = vunpack.c.l.b16 %v93
  %v686 = vunpack.c.l.b16 %v94
  %v687 = vunpack.c.l.b16 %v95
  %v688 = vunpack.c.l.b16 %v96
  %v689 = vunpack.c.l.b16 %v97
  %v690 = vunpack.c.l.b16 %v98
  %v691 = vunpack.c.l.b16 %v99
  %v692 = vunpack.c.l.b16 %v100
  %v693 = vunpack.c.l.b16 %v101
  %v694 = vunpack.c.l.b16 %v102
  %v695 = vunpack.c.l.b16 %v103
  %v696 = vunpack.c.l.b16 %v104
  %v697 = vunpack.c.l.b16 %v105
  %v698 = vunpack.c.l.b16 %v106
  %v699 = vunpack.c.l.b16 %v107
  %v700 = vunpack.c.l.b16 %v108
  %v701 = vunpack.c.l.b16 %v109
  %v702 = vunpack.c.l.b16 %v110
  %v703 = vunpack.c.l.b16 %v111
  %v704 = vunpack.c.l.b16 %v112
  %v705 = vunpack.c.l.b16 %v113
  %v706 = vunpack.c.l.b16 %v114
  %v707 = vunpack.c.l.b16 %v115
  %v708 = vunpack.c.l.b16 %v116
  %v709 = vunpack.c.l.b16 %v117
  %v710 = vunpack.c.l.b16 %v118
  %v711 = vunpack.c.l.b16 %v119
  %v712 = vunpack.c.l.b16 %v120
  %v713 = vunpack.c.l.b16 %v121
  %v714 = vunpack.c.l.b16 %v122
  %v715 = vunpack.c.l.b16 %v123
  %v716 = vunpack.c.l.b16 %v124
  %v717 = vunpack.c.l.b16 %v125
  %v718 = vunpack.c.l.b16 %v126
  %v719 = vunpack.c.l.b16 %v127
  %v720 = vunpack.c.l.b16 %v128
  %v721 = vunpack.c.l.b16 %v129
  %v722 = vunpack.c.l.b16 %v130
  %v723 = vunpack.c.l.b16 %v131
  %v724 = vunpack.c.l.b16 %v132
  %v725 = vunpack.c.l.b16 %v133
  %v726 = vunpack.c.l.b16 %v134
  %v727 = vunpack.c.l.b16 %v135
  %v728 = vunpack.c.l.b16 %v136
  %v729 = vunpack.c.l.b16 %v137
  %v730 = vunpack.c.l.b16 %v138
  %v731 = vunpack.c.l.b16 %v139
  %v732 = vunpack.c.l.b16 %v140
  %v733 = vunpack.c.l.b16 %v141
  %v734 = vunpack.c.l.b16 %v142
  %v735 = vunpack.c.l.b16 %v143
  %v736 = vunpack.c.l.b16 %v144
  %v737 = vunpack.c.l.b16 %v145
  %v738 = vunpack.c.l.b16 %v146
  %v739 = vunpack.c.l.b16 %v147
  %v740 = vunpack.c.l.b16 %v148
  %v741 = vunpack.c.l.b16 %v149
  %v742 = vunpack.c.l.b16 %v150
  %v743 = vunpack.c.l.b16 %v151
  %v744 = vunpack.c.l.b16 %v152
  %v745 = vunpack.c.l.b16 %v153
  %v746 = vunpack.c.l.b16 %v154
  %v747 = vunpack.c.l.b16 %v155
  %v748 = vunpack.c.l.b16 %v156
  %v749 = vunpack.c.l.b16 %v157
  %v750 = vunpack.c.l.b16 %v158
  %v751 = vunpack.c.l.b16 %v159
  %v752 = vunpack.c.l.b16 %v160
  %v753 = vunpack.c.l.b16 %v161
  %v754 = vunpack.c.l.b16 %v162
  %v755 = vunpack.c.l.b16 %v163
  %v756 = vunpack.c.l.b16 %v164
  %v757 = vunpack.c.l.b16 %v165
  %v758 = vunpack.c.l.b16 %v166
  %v759 = vunpack.c.l.b16 %v167
  %v760 = vunpack.c.l.b16 %v168
  %v761 = vunpack.c.l.b16 %v169
  %v762 = vunpack.c.l.b16 %v170
  %v763 = vunpack.c.l.b16 %v171
  %v764 = vunpack.c.l.b16 %v172
  %v765 = vunpack.c.l.b16 %v173
  %v766 = vunpack.c.l.b16 %v174
  %v767 = vunpack.c.l.b16 %v175
  %v768 = vunpack.c.l.b16 %v176
  %v769 = vunpack.c.l.b16 %v177
  %v770 = vunpack.c.l.b16 %v178
  %v771 = vunpack.c.l.b16 %v179
  %v772 = vunpack.c.l.b16 %v180
  %v773 = vunpack.c.l.b16 %v181
  %v774 = vunpack.c.l.b16 %v182
  %v775 = vunpack.c.l.b16 %v183
  %v776 = vunpack.c.l.b16 %v184
  %v777 = vunpack.c.l.b16 %v185
  %v778 = vunpack.c.l.b16 %v186
  %v779 = vunpack.c.l.b16 %v187
  %v780 = vunpack.c.l.b16 %v188
  %v781 = vunpack.c.l.b16 %v189
  %v782 = vunpack.c.l.b16 %v190
  %v783 = vunpack.c.l.b16 %v191
  %v784 = vunpack.c.l.b16 %v192
  %v785 = vunpack.c.l.b16 %v193
  %v786 = vunpack.c.l.b16 %v194
  %v787 = vunpack.c.l.b16 %v195
  %v788 = vunpack.c.l.b16 %v196
  %v789 = vunpack.c.l.b16 %v197
  %v790 = vunpack.c.l.b16 %v198
  %v791 = vunpack.c.l.b16 %v199
  %v792 = vunpack.c.l.b16 %v200
  %v793 = vunpack.c.l.b16 %v201
  %v794 = vunpack.c.l.b16 %v202
  %v795 = vunpack.c.l.b16 %v203
  %v796 = vunpack.c.l.b16 %v204
  %v797 = vunpack.c.l.b16 %v205
  %v798 = vunpack.c.l.b16 %v206
  %v799 = vunpack.c.l.b16 %v207
  %v800 = vunpack.c.l.b16 %v208
  %v801 = vunpack.c.l.b16 %v209
  %v802 = vunpack.c.l.b16 %v210
  %v803 = vunpack.c.l.b16 %v211
  %v804 = vunpack.c.l.b16 %v212
  %v805 = vunpack.c.l.b16 %v213
  %v806 = vunpack.c.l.b16 %v214
  %v807 = vunpack.c.l.b16 %v215
  %v808 = vunpack.c.l.b16 %v216
  %v809 = vunpack.c.l.b16 %v217
  %v810 = vunpack.c.l.b16 %v218
  %v811 = vunpack.c.l.b16 %v219
  %v812 = vunpack.c.l.b16 %v220
  %v813 = vunpack.c.l.b16 %v221
  %v814 = vunpack.c.l.b16 %v222
  %v815 = vunpack.c.l.b16 %v223
  %v816 = vunpack.c.l.b16 %v224
  %v817 = vunpack.c.l.b16 %v225
  %v818 = vunpack.c.l.b16 %v226
  %v819 = vunpack.c.l.b16 %v227
  %v820 = vunpack.c.l.b16 %v228
  %v821 = vunpack.c.l.b16 %v229
  %v822 = vunpack.c.l.b16 %v230
  %v823 = vunpack.c.l.b16 %v231
  %v824 = vunpack.c.l.b16 %v232
  %v825 = vunpack.c.l.b16 %v233
  %v826 = vunpack.c.l.b16 %v234
  %v827 = vunpack.c.l.b16 %v235
  %v828 = vunpack.c.l.b16 %v236
  %v829 = vunpack.c.l.b16 %v237
  %v830 = vunpack.c.l.b16 %v238
  %v831 = vunpack.c.l.b16 %v239
  %v832 = vunpack.c.l.b16 %v240
  %v833 = vunpack.c.l.b16 %v241
  %v834 = vunpack.c.l.b16 %v242
  %v835 = vunpack.c.l.b16 %v243
  %v836 = vunpack.c.l.b16 %v244
  %v837 = vunpack.c.l.b16 %v245
  %v838 = vunpack.c.l.b16 %v246
  %v839 = vunpack.c.l.b16 %v247
  %v840 = vunpack.c.l.b16 %v248
  %v841 = vunpack.c.l.b16 %v249
  %v842 = vunpack.c.l.b16 %v250
  %v843 = vunpack.c.l.b16 %v251
  %v844 = vunpack.c.l.b16 %v252
  %v845 = vunpack.c.l.b16 %v253
  %v846 = vunpack.c.l.b16 %v254
  %v847 = vunpack.c.l.b16 %v255
  %v848 = vunpack.c.l.b16 %v256
  %v849 = vunpack.c.l.b16 %v257
  %v850 = vunpack.c.l.b16 %v258
  %v851 = vunpack.c.l.b16 %v259
  %v852 = vunpack.c.l.b16 %v260
  %v853 = vunpack.c.l.b16 %v261
  %v854 = vunpack.c.l.b16 %v262
  %v855 = vunpack.c.l.b16 %v263
  %v856 = vunpack.c.l.b16 %v264
  %v857 = vunpack.c.l.b16 %v265
  %v858 = vpack.c.b16 %v635, %v634
  %v859 = vpack.c.b16 %v637, %v636
  %v860 = vpack.c.b16 %v639, %v638
  %v861 = vpack.c.b16 %v641, %v640
  %v862 = vpack.c.b16 %v643, %v642
  %v863 = vpack.c.b16 %v645, %v644
  %v864 = vpack.c.b16 %v647, %v646
  %v865 = vpack.c.b16 %v649, %v648
  %v866 = vpack.c.b16 %v651, %v650
  %v867 = vpack.c.b16 %v653, %v652
  %v868 = vpack.c.b16 %v655, %v654
  %v869 = vpack.c.b16 %v657, %v656
  %v870 = vpack.c.b16 %v659, %v658
  %v871 = vpack.c.b16 %v661, %v660
  %v872 = vpack.c.b16 %v663, %v662
  %v873 = vpack.c.b16 %v665, %v664
  %v874 = vpack.c.b16 %v667, %v666
  %v875 = vpack.c.b16 %v669, %v668
  %v876 = vpack.c.b16 %v671, %v670
  %v877 = vpack.c.b16 %v673, %v672
  %v878 = vpack.c.b16 %v675, %v674
  %v879 = vpack.c.b16 %v677, %v676
  %v880 = vpack.c.b16 %v679, %v678
  %v881 = vpack.c.b16 %v681, %v680
  %v882 = vpack.c.b16 %v683, %v682
  %v883 = vpack.c.b16 %v685, %v684
  %v884 = vpack.c.b16 %v687, %v686
  %v885 = vpack.c.b16 %v689, %v688
  %v886 = vpack.c.b16 %v691, %v690
  %v887 = vpack.c.b16 %v693, %v692
  %v888 = vpack.c.b16 %v695, %v694
  %v889 = vpack.c.b16 %v697, %v696
  %v890 = vpack.c.b16 %v699, %v698
  %v891 = vpack.c.b16 %v701, %v700
  %v892 = vpack.c.b16 %v703, %v702
  %v893 = vpack.c.b16 %v705, %v704
  %v894 = vpack.c.b16 %v707, %v706
  %v895 = vpack.c.b16 %v709, %v708
  %v896 = vpack.c.b16 %v711, %v710
  %v897 = vpack.c.b16 %v713, %v712
  %v898 = vpack.c.b16 %v715, %v714
  %v899 = vpack.c.b16 %v717, %v716
  %v900 = vpack.c.b16 %v719, %v718
  %v901 = vpack.c.b16 %v721, %v720
  %v902 = vpack.c.b16 %v723, %v722
  %v903 = vpack.c.b16 %v725, %v724
  %v904 = vpack.c.b16 %v727, %v726
  %v905 = vpack.c.b16 %v729, %v728
  %v906 = vpack.c.b16 %v731, %v730
  %v907 = vpack.c.b16 %v733, %v732
  %v908 = vpack.c.b16 %v735, %v734
  %v909 = vpack.c.b16 %v737, %v736
  %v910 = vpack.c.b16 %v739, %v738
  %v911 = vpack.c.b16 %v741, %v740
  %v912 = vpack.c.b16 %v743, %v742
  %v913 = vpack.c.b16 %v745, %v744
  %v914 = vpack.c.b16 %v747, %v746
  %v915 = vpack.c.b16 %v749, %v748
  %v916 = vpack.c.b16 %v751, %v750
  %v917 = vpack.c.b16 %v753, %v752
  %v918 = vpack.c.b16 %v755, %v754
  %v919 = vpack.c.b16 %v757, %v756
  %v920 = vpack.c.b16 %v759, %v758
  %v921 = vpack.c.b16 %v761, %v760
  %v922 = vpack.c.b16 %v763, %v762
  %v923 = vpack.c.b16 %v765, %v764
  %v924 = vpack.c.b16 %v767, %v766
  %v925 = vpack.c.b16 %v769, %v768
  %v926 = vpack.c.b16 %v771, %v770
  %v927 = vpack.c.b16 %v773, %v772
  %v928 = vpack.c.b16 %v775, %v774
  %v929 = vpack.c.b16 %v777, %v776
  %v930 = vpack.c.b16 %v779, %v778
  %v931 = vpack.c.b16 %v781, %v780
  %v932 = vpack.c.b16 %v783, %v782
  %v933 = vpack.c.b16 %v785, %v784
  %v934 = vpack.c.b16 %v787, %v786
  %v935 = vpack.c.b16 %v789, %v788
  %v936 = vpack.c.b16 %v791, %v790
  %v937 = vpack.c.b16 %v793, %v792
  %v938 = vpack.c.b16 %v795, %v794
  %v939 = vpack.c.b16 %v797, %v796
  %v940 = vpack.c.b16 %v799, %v798
  %v941 = vpack.c.b16 %v801, %v800
  %v942 = vpack.c.b16 %v803, %v802
  %v943 = vpack.c.b16 %v805, %v804
  %v944 = vpack.c.b16 %v807, %v806
  %v945 = vpack.c.b16 %v809, %v808
  %v946 = vpack.c.b16 %v811, %v810
  %v947 = vpack.c.b16 %v813, %v812
  %v948 = vpack.c.b16 %v815, %v814
  %v949 = vpack.c.b16 %v817, %v816
  %v950 = vpack.c.b16 %v819, %v818
  %v951 = vpack.c.b16 %v821, %v820
  %v952 = vpack.c.b16 %v823, %v822
  %v953 = vpack.c.b16 %v825, %v824
  %v954 = vpack.c.b16 %v827, %v826
  %v955 = vpack.c.b16 %v829, %v828
  %v956 = vpack.c.b16 %v831, %v830
  %v957 = vpack.c.b16 %v833, %v832
  %v958 = vpack.c.b16 %v835, %v834
  %v959 = vpack.c.b16 %v837, %v836
  %v960 = vpack.c.b16 %v839, %v838
  %v961 = vpack.c.b16 %v841, %v840
  %v962 = vpack.c.b16 %v843, %v842
  %v963 = vpack.c.b16 %v845, %v844
  %v964 = vpack.c.b16 %v847, %v846
  %v965 = vpack.c.b16 %v849, %v848
  %v966 = vpack.c.b16 %v851, %v850
  %v967 = vpack.c.b16 %v853, %v852
  %v968 = vpack.c.b16 %v855, %v854
  %v969 = vpack.c.b16 %v857, %v856
  %1082 = vmatpush.bf16.msra.mxu0 %v865
  %1083 = vmatpush.bf16.msra.mxu0 %v864
  %1084 = vmatpush.bf16.msra.mxu0 %v863
  %1085 = vmatpush.bf16.msra.mxu0 %v862
  %1086 = vmatpush.bf16.msra.mxu0 %v861
  %1087 = vmatpush.bf16.msra.mxu0 %v860
  %1088 = vmatpush.bf16.msra.mxu0 %v859
  %1089 = vmatpush.bf16.msra.mxu0 %v858
  %1090 = vmatmul.bf16.gmra.mxu0 %v354
  %v1091 = vpop.f32.mrf.mxu0
  %v1092 = vadd.f32 %v268, %v1091
  %v1093 = vpop.f32.mrf.mxu0
  %v1094 = vadd.f32 %v268, %v1093
  %1095 = vmatmul.bf16.gmra.mxu0 %v368
  %v1096 = vpop.f32.mrf.mxu0
  %v1097 = vadd.f32 %v268, %v1096
  %v1098 = vpop.f32.mrf.mxu0
  %v1099 = vadd.f32 %v268, %v1098
  %1100 = vdwg.mxu0
  %1101 = vmatpush.bf16.msra.mxu0 %v873
  %1102 = vmatpush.bf16.msra.mxu0 %v872
  %1103 = vmatpush.bf16.msra.mxu0 %v871
  %1104 = vmatpush.bf16.msra.mxu0 %v870
  %1105 = vmatpush.bf16.msra.mxu0 %v869
  %1106 = vmatpush.bf16.msra.mxu0 %v868
  %1107 = vmatpush.bf16.msra.mxu0 %v867
  %1108 = vmatpush.bf16.msra.mxu0 %v866
  %1109 = vmatmul.bf16.gmra.mxu0 %v355
  %v1110 = vpop.f32.mrf.mxu0
  %v1111 = vadd.f32 %v1092, %v1110
  %v1112 = vpop.f32.mrf.mxu0
  %v1113 = vadd.f32 %v1094, %v1112
  %1114 = vmatmul.bf16.gmra.mxu0 %v369
  %v1115 = vpop.f32.mrf.mxu0
  %v1116 = vadd.f32 %v1097, %v1115
  %v1117 = vpop.f32.mrf.mxu0
  %v1118 = vadd.f32 %v1099, %v1117
  %1119 = vdwg.mxu0
  %1120 = vmatpush.bf16.msra.mxu0 %v881
  %1121 = vmatpush.bf16.msra.mxu0 %v880
  %1122 = vmatpush.bf16.msra.mxu0 %v879
  %1123 = vmatpush.bf16.msra.mxu0 %v878
  %1124 = vmatpush.bf16.msra.mxu0 %v877
  %1125 = vmatpush.bf16.msra.mxu0 %v876
  %1126 = vmatpush.bf16.msra.mxu0 %v875
  %1127 = vmatpush.bf16.msra.mxu0 %v874
  %1128 = vmatmul.bf16.gmra.mxu0 %v356
  %v1129 = vpop.f32.mrf.mxu0
  %v1130 = vadd.f32 %v1111, %v1129
  %v1131 = vpop.f32.mrf.mxu0
  %v1132 = vadd.f32 %v1113, %v1131
  %1133 = vmatmul.bf16.gmra.mxu0 %v370
  %v1134 = vpop.f32.mrf.mxu0
  %v1135 = vadd.f32 %v1116, %v1134
  %v1136 = vpop.f32.mrf.mxu0
  %v1137 = vadd.f32 %v1118, %v1136
  %1138 = vdwg.mxu0
  %1139 = vmatpush.bf16.msra.mxu0 %v889
  %1140 = vmatpush.bf16.msra.mxu0 %v888
  %1141 = vmatpush.bf16.msra.mxu0 %v887
  %1142 = vmatpush.bf16.msra.mxu0 %v886
  %1143 = vmatpush.bf16.msra.mxu0 %v885
  %1144 = vmatpush.bf16.msra.mxu0 %v884
  %1145 = vmatpush.bf16.msra.mxu0 %v883
  %1146 = vmatpush.bf16.msra.mxu0 %v882
  %1147 = vmatmul.bf16.gmra.mxu0 %v357
  %v1148 = vpop.f32.mrf.mxu0
  %v1149 = vadd.f32 %v1130, %v1148
  %v1150 = vpop.f32.mrf.mxu0
  %v1151 = vadd.f32 %v1132, %v1150
  %1152 = vmatmul.bf16.gmra.mxu0 %v371
  %v1153 = vpop.f32.mrf.mxu0
  %v1154 = vadd.f32 %v1135, %v1153
  %v1155 = vpop.f32.mrf.mxu0
  %v1156 = vadd.f32 %v1137, %v1155
  %1157 = vdwg.mxu0
  %1158 = vmatpush.bf16.msra.mxu0 %v897
  %1159 = vmatpush.bf16.msra.mxu0 %v896
  %1160 = vmatpush.bf16.msra.mxu0 %v895
  %1161 = vmatpush.bf16.msra.mxu0 %v894
  %1162 = vmatpush.bf16.msra.mxu0 %v893
  %1163 = vmatpush.bf16.msra.mxu0 %v892
  %1164 = vmatpush.bf16.msra.mxu0 %v891
  %1165 = vmatpush.bf16.msra.mxu0 %v890
  %1166 = vmatmul.bf16.gmra.mxu0 %v358
  %v1167 = vpop.f32.mrf.mxu0
  %v1168 = vadd.f32 %v1149, %v1167
  %v1169 = vpop.f32.mrf.mxu0
  %v1170 = vadd.f32 %v1151, %v1169
  %1171 = vmatmul.bf16.gmra.mxu0 %v372
  %v1172 = vpop.f32.mrf.mxu0
  %v1173 = vadd.f32 %v1154, %v1172
  %v1174 = vpop.f32.mrf.mxu0
  %v1175 = vadd.f32 %v1156, %v1174
  %1176 = vdwg.mxu0
  %1177 = vmatpush.bf16.msra.mxu0 %v905
  %1178 = vmatpush.bf16.msra.mxu0 %v904
  %1179 = vmatpush.bf16.msra.mxu0 %v903
  %1180 = vmatpush.bf16.msra.mxu0 %v902
  %1181 = vmatpush.bf16.msra.mxu0 %v901
  %1182 = vmatpush.bf16.msra.mxu0 %v900
  %1183 = vmatpush.bf16.msra.mxu0 %v899
  %1184 = vmatpush.bf16.msra.mxu0 %v898
  %1185 = vmatmul.bf16.gmra.mxu0 %v359
  %v1186 = vpop.f32.mrf.mxu0
  %v1187 = vadd.f32 %v1168, %v1186
  %v1188 = vpop.f32.mrf.mxu0
  %v1189 = vadd.f32 %v1170, %v1188
  %1190 = vmatmul.bf16.gmra.mxu0 %v373
  %v1191 = vpop.f32.mrf.mxu0
  %v1192 = vadd.f32 %v1173, %v1191
  %v1193 = vpop.f32.mrf.mxu0
  %v1194 = vadd.f32 %v1175, %v1193
  %1195 = vdwg.mxu0
  %1196 = vmatpush.bf16.msra.mxu0 %v913
  %1197 = vmatpush.bf16.msra.mxu0 %v912
  %1198 = vmatpush.bf16.msra.mxu0 %v911
  %1199 = vmatpush.bf16.msra.mxu0 %v910
  %1200 = vmatpush.bf16.msra.mxu0 %v909
  %1201 = vmatpush.bf16.msra.mxu0 %v908
  %1202 = vmatpush.bf16.msra.mxu0 %v907
  %1203 = vmatpush.bf16.msra.mxu0 %v906
  %1204 = vmatmul.bf16.gmra.mxu0 %v360
  %v1205 = vpop.f32.mrf.mxu0
  %v1206 = vadd.f32 %v1187, %v1205
  %v1207 = vpop.f32.mrf.mxu0
  %v1208 = vadd.f32 %v1189, %v1207
  %1209 = vmatmul.bf16.gmra.mxu0 %v374
  %v1210 = vpop.f32.mrf.mxu0
  %v1211 = vadd.f32 %v1192, %v1210
  %v1212 = vpop.f32.mrf.mxu0
  %v1213 = vadd.f32 %v1194, %v1212
  %1214 = vdwg.mxu0
  %1215 = vmatpush.bf16.msra.mxu0 %v921
  %1216 = vmatpush.bf16.msra.mxu0 %v920
  %1217 = vmatpush.bf16.msra.mxu0 %v919
  %1218 = vmatpush.bf16.msra.mxu0 %v918
  %1219 = vmatpush.bf16.msra.mxu0 %v917
  %1220 = vmatpush.bf16.msra.mxu0 %v916
  %1221 = vmatpush.bf16.msra.mxu0 %v915
  %1222 = vmatpush.bf16.msra.mxu0 %v914
  %1223 = vmatmul.bf16.gmra.mxu0 %v361
  %v1224 = vpop.f32.mrf.mxu0
  %v1225 = vadd.f32 %v1206, %v1224
  %v1226 = vpop.f32.mrf.mxu0
  %v1227 = vadd.f32 %v1208, %v1226
  %1228 = vmatmul.bf16.gmra.mxu0 %v375
  %v1229 = vpop.f32.mrf.mxu0
  %v1230 = vadd.f32 %v1211, %v1229
  %v1231 = vpop.f32.mrf.mxu0
  %v1232 = vadd.f32 %v1213, %v1231
  %1233 = vdwg.mxu0
  %1234 = vmatpush.bf16.msra.mxu0 %v929
  %1235 = vmatpush.bf16.msra.mxu0 %v928
  %1236 = vmatpush.bf16.msra.mxu0 %v927
  %1237 = vmatpush.bf16.msra.mxu0 %v926
  %1238 = vmatpush.bf16.msra.mxu0 %v925
  %1239 = vmatpush.bf16.msra.mxu0 %v924
  %1240 = vmatpush.bf16.msra.mxu0 %v923
  %1241 = vmatpush.bf16.msra.mxu0 %v922
  %1242 = vmatmul.bf16.gmra.mxu0 %v362
  %v1243 = vpop.f32.mrf.mxu0
  %v1244 = vadd.f32 %v1225, %v1243
  %v1245 = vpop.f32.mrf.mxu0
  %v1246 = vadd.f32 %v1227, %v1245
  %1247 = vmatmul.bf16.gmra.mxu0 %v376
  %v1248 = vpop.f32.mrf.mxu0
  %v1249 = vadd.f32 %v1230, %v1248
  %v1250 = vpop.f32.mrf.mxu0
  %v1251 = vadd.f32 %v1232, %v1250
  %1252 = vdwg.mxu0
  %1253 = vmatpush.bf16.msra.mxu0 %v937
  %1254 = vmatpush.bf16.msra.mxu0 %v936
  %1255 = vmatpush.bf16.msra.mxu0 %v935
  %1256 = vmatpush.bf16.msra.mxu0 %v934
  %1257 = vmatpush.bf16.msra.mxu0 %v933
  %1258 = vmatpush.bf16.msra.mxu0 %v932
  %1259 = vmatpush.bf16.msra.mxu0 %v931
  %1260 = vmatpush.bf16.msra.mxu0 %v930
  %1261 = vmatmul.bf16.gmra.mxu0 %v363
  %v1262 = vpop.f32.mrf.mxu0
  %v1263 = vadd.f32 %v1244, %v1262
  %v1264 = vpop.f32.mrf.mxu0
  %v1265 = vadd.f32 %v1246, %v1264
  %1266 = vmatmul.bf16.gmra.mxu0 %v377
  %v1267 = vpop.f32.mrf.mxu0
  %v1268 = vadd.f32 %v1249, %v1267
  %v1269 = vpop.f32.mrf.mxu0
  %v1270 = vadd.f32 %v1251, %v1269
  %1271 = vdwg.mxu0
  %1272 = vmatpush.bf16.msra.mxu0 %v945
  %1273 = vmatpush.bf16.msra.mxu0 %v944
  %1274 = vmatpush.bf16.msra.mxu0 %v943
  %1275 = vmatpush.bf16.msra.mxu0 %v942
  %1276 = vmatpush.bf16.msra.mxu0 %v941
  %1277 = vmatpush.bf16.msra.mxu0 %v940
  %1278 = vmatpush.bf16.msra.mxu0 %v939
  %1279 = vmatpush.bf16.msra.mxu0 %v938
  %1280 = vmatmul.bf16.gmra.mxu0 %v364
  %v1281 = vpop.f32.mrf.mxu0
  %v1282 = vadd.f32 %v1263, %v1281
  %v1283 = vpop.f32.mrf.mxu0
  %v1284 = vadd.f32 %v1265, %v1283
  %1285 = vmatmul.bf16.gmra.mxu0 %v378
  %v1286 = vpop.f32.mrf.mxu0
  %v1287 = vadd.f32 %v1268, %v1286
  %v1288 = vpop.f32.mrf.mxu0
  %v1289 = vadd.f32 %v1270, %v1288
  %1290 = vdwg.mxu0
  %1291 = vmatpush.bf16.msra.mxu0 %v953
  %1292 = vmatpush.bf16.msra.mxu0 %v952
  %1293 = vmatpush.bf16.msra.mxu0 %v951
  %1294 = vmatpush.bf16.msra.mxu0 %v950
  %1295 = vmatpush.bf16.msra.mxu0 %v949
  %1296 = vmatpush.bf16.msra.mxu0 %v948
  %1297 = vmatpush.bf16.msra.mxu0 %v947
  %1298 = vmatpush.bf16.msra.mxu0 %v946
  %1299 = vmatmul.bf16.gmra.mxu0 %v365
  %v1300 = vpop.f32.mrf.mxu0
  %v1301 = vadd.f32 %v1282, %v1300
  %v1302 = vpop.f32.mrf.mxu0
  %v1303 = vadd.f32 %v1284, %v1302
  %1304 = vmatmul.bf16.gmra.mxu0 %v379
  %v1305 = vpop.f32.mrf.mxu0
  %v1306 = vadd.f32 %v1287, %v1305
  %v1307 = vpop.f32.mrf.mxu0
  %v1308 = vadd.f32 %v1289, %v1307
  %1309 = vdwg.mxu0
  %1310 = vmatpush.bf16.msra.mxu0 %v961
  %1311 = vmatpush.bf16.msra.mxu0 %v960
  %1312 = vmatpush.bf16.msra.mxu0 %v959
  %1313 = vmatpush.bf16.msra.mxu0 %v958
  %1314 = vmatpush.bf16.msra.mxu0 %v957
  %1315 = vmatpush.bf16.msra.mxu0 %v956
  %1316 = vmatpush.bf16.msra.mxu0 %v955
  %1317 = vmatpush.bf16.msra.mxu0 %v954
  %1318 = vmatmul.bf16.gmra.mxu0 %v366
  %v1319 = vpop.f32.mrf.mxu0
  %v1320 = vadd.f32 %v1301, %v1319
  %v1321 = vpop.f32.mrf.mxu0
  %v1322 = vadd.f32 %v1303, %v1321
  %1323 = vmatmul.bf16.gmra.mxu0 %v380
  %v1324 = vpop.f32.mrf.mxu0
  %v1325 = vadd.f32 %v1306, %v1324
  %v1326 = vpop.f32.mrf.mxu0
  %v1327 = vadd.f32 %v1308, %v1326
  %1328 = vdwg.mxu0
  %1329 = vmatpush.bf16.msra.mxu0 %v969
  %1330 = vmatpush.bf16.msra.mxu0 %v968
  %1331 = vmatpush.bf16.msra.mxu0 %v967
  %1332 = vmatpush.bf16.msra.mxu0 %v966
  %1333 = vmatpush.bf16.msra.mxu0 %v965
  %1334 = vmatpush.bf16.msra.mxu0 %v964
  %1335 = vmatpush.bf16.msra.mxu0 %v963
  %1336 = vmatpush.bf16.msra.mxu0 %v962
  %1337 = vmatmul.bf16.gmra.mxu0 %v367
  %v1338 = vpop.f32.mrf.mxu0
  %v1339 = vadd.f32 %v1320, %v1338
  %v1340 = vpop.f32.mrf.mxu0
  %v1341 = vadd.f32 %v1322, %v1340
  %1342 = vmatmul.bf16.gmra.mxu0 %v381
  %v1343 = vpop.f32.mrf.mxu0
  %v1344 = vadd.f32 %v1325, %v1343
  %v1345 = vpop.f32.mrf.mxu0
  %v1346 = vadd.f32 %v1327, %v1345
  %1347 = vdwg.mxu0
  %1348 = vst [vmem:[%s3] sm:$0xff] %v1339
  %1349 = vst [vmem:[%s3 + $0x8] sm:$0xff] %v1341
  %1350 = vst [vmem:[%s3 + $0x10] sm:$0xff] %v1344
  %1351 = vst [vmem:[%s3 + $0x18] sm:$0xff] %v1346
  // Predicated region
  $region14: #{alexlike_forward.25} parent=0 // pred_check
    _
  $region15: #{alexlike_forward.25} parent=0 // pred_check_branch
    %1353 = sbr.rel (0) target = $region17
  $region16: #{alexlike_forward.25} parent=0 // pred_region
    _
  $region17: #{alexlike_forward.25} parent=0 // pred_fallthru
    _
  // Predicated region
  $region18: #{alexlike_forward.25} parent=0 // pred_check
    _
  $region19: #{alexlike_forward.25} parent=0 // pred_check_branch
    %1355 = sbr.rel (0) target = $region21
  $region20: #{alexlike_forward.25} parent=0 // pred_region
    _
  $region21: #{alexlike_forward.25} parent=0 // pred_fallthru
    _

// kernel: alexlike_forward.30
$region0: #{alexlike_forward.30}
  #allocation0 [shape = 'u32[]', space=smem, size = 0x4, offset = 0x4, fixed_abs, tag = 'smem constant byte address 0x4 - core index']
  #allocation1 [shape = 'u32[72,128]{1,0:T(1,128)}', space=vmem, size = 0x9000, scoped, tag = 'internal scratch']
  %s0 = inlined_call_operand.vmem [shape: bf16[16,128], index: 0, kind: input, shape index: {}]
  %s1 = inlined_call_operand.vmem [shape: bf16[128,128], index: 1, kind: input, shape index: {}]
  %s2 = inlined_call_operand.vmem [shape: f32[1,128], index: 2, kind: input, shape index: {}]
  %s3 = inlined_call_operand.vmem [shape: f32[16,128], index: 3, kind: output, shape index: {}]
  %s4 = sld [smem:[#allocation0]]
  $region22: #{alexlike_forward.30} parent=0
    _
  %s6 = ssub.s32 1, %s4
  %s7 = scalar_select 0, %s6, %s4
  // Predicated region
  $region2: #{alexlike_forward.30} parent=0 // pred_check
    _
  $region3: #{alexlike_forward.30} parent=0 // pred_check_branch
    %9 = sbr.rel (0) target = $region5
  $region4: #{alexlike_forward.30} parent=0 // pred_region
    _
  $region5: #{alexlike_forward.30} parent=0 // pred_fallthru
    _
  // Predicated region
  $region6: #{alexlike_forward.30} parent=0 // pred_check
    _
  $region7: #{alexlike_forward.30} parent=0 // pred_check_branch
    %11 = sbr.rel (0) target = $region9
  $region8: #{alexlike_forward.30} parent=0 // pred_region
    _
  $region9: #{alexlike_forward.30} parent=0 // pred_fallthru
    _
  // Predicated region
  $region10: #{alexlike_forward.30} parent=0 // pred_check
    _
  $region11: #{alexlike_forward.30} parent=0 // pred_check_branch
    %13 = sbr.rel (0) target = $region13
  $region12: #{alexlike_forward.30} parent=0 // pred_region
    _
  $region13: #{alexlike_forward.30} parent=0 // pred_fallthru
    _
  %v14 = vld [vmem:[%s0] sm:$0xf]
  %v15 = vld [vmem:[%s0 + $0x4] sm:$0xf]
  %v16 = vld [vmem:[%s1] sm:$0xf]
  %v17 = vld [vmem:[%s1 + $0x4] sm:$0xf]
  %v18 = vld [vmem:[%s1 + $0x8] sm:$0xf]
  %v19 = vld [vmem:[%s1 + $0xc] sm:$0xf]
  %v20 = vld [vmem:[%s1 + $0x10] sm:$0xf]
  %v21 = vld [vmem:[%s1 + $0x14] sm:$0xf]
  %v22 = vld [vmem:[%s1 + $0x18] sm:$0xf]
  %v23 = vld [vmem:[%s1 + $0x1c] sm:$0xf]
  %v24 = vld [vmem:[%s1 + $0x20] sm:$0xf]
  %v25 = vld [vmem:[%s1 + $0x24] sm:$0xf]
  %v26 = vld [vmem:[%s1 + $0x28] sm:$0xf]
  %v27 = vld [vmem:[%s1 + $0x2c] sm:$0xf]
  %v28 = vld [vmem:[%s1 + $0x30] sm:$0xf]
  %v29 = vld [vmem:[%s1 + $0x34] sm:$0xf]
  %v30 = vld [vmem:[%s1 + $0x38] sm:$0xf]
  %v31 = vld [vmem:[%s1 + $0x3c] sm:$0xf]
  %v32 = vld [vmem:[%s2] sm:$0x1]
  %v34 = vperm.slane %v32, 0
  %v38 = vunpack.c.l.b16 %v14
  %v39 = vunpack.c.l.b16 %v15
  %v40 = vpack.c.b16 %v39, %v38
  %v58 = vunpack.c.l.b16 %v16
  %v59 = vunpack.c.l.b16 %v17
  %v60 = vunpack.c.l.b16 %v18
  %v61 = vunpack.c.l.b16 %v19
  %v62 = vunpack.c.l.b16 %v20
  %v63 = vunpack.c.l.b16 %v21
  %v64 = vunpack.c.l.b16 %v22
  %v65 = vunpack.c.l.b16 %v23
  %v66 = vunpack.c.l.b16 %v24
  %v67 = vunpack.c.l.b16 %v25
  %v68 = vunpack.c.l.b16 %v26
  %v69 = vunpack.c.l.b16 %v27
  %v70 = vunpack.c.l.b16 %v28
  %v71 = vunpack.c.l.b16 %v29
  %v72 = vunpack.c.l.b16 %v30
  %v73 = vunpack.c.l.b16 %v31
  %v74 = vpack.c.b16 %v59, %v58
  %v75 = vpack.c.b16 %v61, %v60
  %v76 = vpack.c.b16 %v63, %v62
  %v77 = vpack.c.b16 %v65, %v64
  %v78 = vpack.c.b16 %v67, %v66
  %v79 = vpack.c.b16 %v69, %v68
  %v80 = vpack.c.b16 %v71, %v70
  %v81 = vpack.c.b16 %v73, %v72
  %90 = vmatpush.bf16.msra.mxu0 %v81
  %91 = vmatpush.bf16.msra.mxu0 %v80
  %92 = vmatpush.bf16.msra.mxu0 %v79
  %93 = vmatpush.bf16.msra.mxu0 %v78
  %94 = vmatpush.bf16.msra.mxu0 %v77
  %95 = vmatpush.bf16.msra.mxu0 %v76
  %96 = vmatpush.bf16.msra.mxu0 %v75
  %97 = vmatpush.bf16.msra.mxu0 %v74
  %98 = vmatmul.bf16.gmra.mxu0 %v40
  %v99 = vpop.f32.mrf.mxu0
  %v100 = vadd.f32 %v34, %v99
  %v101 = vpop.f32.mrf.mxu0
  %v102 = vadd.f32 %v34, %v101
  %103 = vdwg.mxu0
  %v104 = vmax.f32 %v100, 0.0
  %v105 = vmax.f32 %v102, 0.0
  %106 = vst [vmem:[%s3] sm:$0xff] %v104
  %107 = vst [vmem:[%s3 + $0x8] sm:$0xff] %v105
  // Predicated region
  $region14: #{alexlike_forward.30} parent=0 // pred_check
    _
  $region15: #{alexlike_forward.30} parent=0 // pred_check_branch
    %109 = sbr.rel (0) target = $region17
  $region16: #{alexlike_forward.30} parent=0 // pred_region
    _
  $region17: #{alexlike_forward.30} parent=0 // pred_fallthru
    _
  // Predicated region
  $region18: #{alexlike_forward.30} parent=0 // pred_check
    _
  $region19: #{alexlike_forward.30} parent=0 // pred_check_branch
    %111 = sbr.rel (0) target = $region21
  $region20: #{alexlike_forward.30} parent=0 // pred_region
    _
  $region21: #{alexlike_forward.30} parent=0 // pred_fallthru
    _

</llo_original>
